<compile_context>
chip_gen: v7x
topology: tpu7x:2x2x1
jax: 0.10.0
libtpu: 0.0.40
codegen_flags: <defaults>
</compile_context>

<pallas_src>
import functools

import jax
import jax.numpy as jnp
from jax.experimental import pallas as pl
from jax.experimental.pallas import tpu as pltpu

_VMEM_LIMIT = 32 * 1024 * 1024  # conservative explicit budget (v7x has 64 MiB total VMEM)


def _cparams(dims):
    return pltpu.CompilerParams(dimension_semantics=dims,
                                vmem_limit_bytes=_VMEM_LIMIT)


# --------------------------------------------------------------------------
# Kernel 1: [optional LIF] -> (x @ w + b) -> [optional LIF], time-recurrent.
# Grid = (pixel_tiles [parallel], T [arbitrary]); membranes live in VMEM scratch.
# --------------------------------------------------------------------------
def _seq_mm_kernel(x_ref, w_ref, b_ref, o_ref, *scratch, inv_tau, pre_lif,
                   post_lif, v_th_pre, v_th_post):
    if pre_lif or post_lif:
        @pl.when(pl.program_id(1) == 0)
        def _():
            for s in scratch:
                s[...] = jnp.zeros_like(s)

    x = x_ref[0]
    si = 0
    if pre_lif:
        vm = scratch[si]
        si += 1
        v = vm[...] + (x.astype(jnp.float32) - vm[...]) * inv_tau
        spk = (v >= v_th_pre).astype(jnp.float32)
        vm[...] = v * (1.0 - spk)          # hard reset to 0
        x = spk
    y = jnp.dot(x.astype(jnp.bfloat16), w_ref[...],
                preferred_element_type=jnp.float32) + b_ref[...]
    if post_lif:
        vm = scratch[si]
        si += 1
        v = vm[...] + (y - vm[...]) * inv_tau
        spk = (v >= v_th_post).astype(jnp.float32)
        vm[...] = v * (1.0 - spk)
        y = spk
    o_ref[0] = y.astype(o_ref.dtype)


def seq_spiking_matmul(x, w, b, *, pre_lif=False, post_lif=False, v_th_pre=1.0,
                       v_th_post=1.0, tau=2.0, out_dtype=jnp.float32, tile_p=512):
    """x: (T, P, K) -> (T, P, N); optional LIF fused before/after the matmul."""
    T, P, K = x.shape
    K2, N = w.shape
    assert K == K2
    tp = min(tile_p, P)
    scratch = []
    if pre_lif:
        scratch.append(pltpu.VMEM((tp, K), jnp.float32))
    if post_lif:
        scratch.append(pltpu.VMEM((tp, N), jnp.float32))
    kernel = functools.partial(_seq_mm_kernel, inv_tau=1.0 / tau, pre_lif=pre_lif,
                               post_lif=post_lif, v_th_pre=v_th_pre,
                               v_th_post=v_th_post)
    return pl.pallas_call(
        kernel,
        out_shape=jax.ShapeDtypeStruct((T, P, N), out_dtype),
        grid=(pl.cdiv(P, tp), T),
        in_specs=[
            pl.BlockSpec((1, tp, K), lambda p, t: (t, p, 0)),
            pl.BlockSpec((K, N), lambda p, t: (0, 0)),
            pl.BlockSpec((1, N), lambda p, t: (0, 0)),
        ],
        out_specs=pl.BlockSpec((1, tp, N), lambda p, t: (t, p, 0)),
        scratch_shapes=scratch,
        compiler_params=_cparams(("parallel", "arbitrary")),
    )(x, w.astype(jnp.bfloat16), b.reshape(1, N).astype(jnp.float32))


# --------------------------------------------------------------------------
# Kernel 2: (x @ w + b) + residual  (no time recurrence; flat pixel rows)
# --------------------------------------------------------------------------
def _mm_bias_res_kernel(x_ref, w_ref, b_ref, r_ref, o_ref):
    y = jnp.dot(x_ref[...].astype(jnp.bfloat16), w_ref[...],
                preferred_element_type=jnp.float32)
    o_ref[...] = (y + b_ref[...] + r_ref[...].astype(jnp.float32)).astype(o_ref.dtype)


def matmul_bias_residual(x, w, b, res, *, tile_m=512):
    M, K = x.shape
    K2, N = w.shape
    assert K == K2 and res.shape == (M, N)
    tm = min(tile_m, M)
    return pl.pallas_call(
        _mm_bias_res_kernel,
        out_shape=jax.ShapeDtypeStruct((M, N), jnp.float32),
        grid=(pl.cdiv(M, tm),),
        in_specs=[
            pl.BlockSpec((tm, K), lambda i: (i, 0)),
            pl.BlockSpec((K, N), lambda i: (0, 0)),
            pl.BlockSpec((1, N), lambda i: (0, 0)),
            pl.BlockSpec((tm, N), lambda i: (i, 0)),
        ],
        out_specs=pl.BlockSpec((tm, N), lambda i: (i, 0)),
        compiler_params=_cparams(("parallel",)),
    )(x, w.astype(jnp.bfloat16), b.reshape(1, N).astype(jnp.float32), res)


# --------------------------------------------------------------------------
# Kernel 3: depthwise 3x3 conv, zero padding built inside the kernel (VMEM scratch;
# no padded HBM tensor). The BNAndPad border value is folded into the downstream bias.
# --------------------------------------------------------------------------
def _dwconv3x3_kernel(x_ref, w_ref, o_ref, pad_ref):
    nb, H, W, C = o_ref.shape
    pad_ref[...] = jnp.zeros_like(pad_ref)
    pad_ref[:, 1:H + 1, 1:W + 1, :] = x_ref[...].astype(jnp.float32)
    acc = jnp.zeros((nb, H, W, C), jnp.float32)
    for dh in range(3):
        for dw in range(3):
            wv = w_ref[dh, dw, :].reshape(1, 1, 1, C)
            acc = acc + pad_ref[:, dh:dh + H, dw:dw + W, :] * wv
    o_ref[...] = acc.astype(o_ref.dtype)


def dwconv3x3(x, w, *, out_dtype=jnp.float32, tile_b=8):
    """x: (NB, H, W, C) channels-last; w: (3, 3, C)."""
    NB, H, W, C = x.shape
    tb = min(tile_b, NB)
    return pl.pallas_call(
        _dwconv3x3_kernel,
        out_shape=jax.ShapeDtypeStruct((NB, H, W, C), out_dtype),
        grid=(pl.cdiv(NB, tb),),
        in_specs=[
            pl.BlockSpec((tb, H, W, C), lambda i: (i, 0, 0, 0)),
            pl.BlockSpec((3, 3, C), lambda i: (0, 0, 0)),
        ],
        out_specs=pl.BlockSpec((tb, H, W, C), lambda i: (i, 0, 0, 0)),
        scratch_shapes=[pltpu.VMEM((tb, H + 2, W + 2, C), jnp.float32)],
        compiler_params=_cparams(("parallel",)),
    )(x, w.astype(jnp.float32))


# --------------------------------------------------------------------------
# Kernel 4: linear attention (all heads at once via block-diagonal head mask)
# + attn_lif (time-recurrent membrane in VMEM) + proj RepConv stage-1 1x1 conv.
# --------------------------------------------------------------------------
def _attn_lif_proj_kernel(s_ref, mask_ref, wp_ref, o_ref, vm_ref, *, scale,
                          inv_tau, v_th):
    @pl.when(pl.program_id(1) == 0)
    def _():
        vm_ref[...] = jnp.zeros_like(vm_ref)

    C = mask_ref.shape[0]
    s = s_ref[0, 0]                                   # (N, 3C) spikes, bf16
    q = s[:, 0 * C:1 * C]
    k = s[:, 1 * C:2 * C]
    v = s[:, 2 * C:3 * C]
    # kv[c1, c2] = sum_n k[n, c1] * v[n, c2]; head-block-diag mask keeps heads separate.
    kv = jax.lax.dot_general(k, v, (((0,), (0,)), ((), ())),
                             preferred_element_type=jnp.float32)
    kv = (kv * mask_ref[...]).astype(jnp.bfloat16)     # integer-valued -> exact in bf16
    y = jnp.dot(q, kv, preferred_element_type=jnp.float32) * scale
    # attn_lif (tau=2, v_threshold=0.5, hard reset to 0)
    vm = vm_ref[...] + (y - vm_ref[...]) * inv_tau
    spk = (vm >= v_th).astype(jnp.float32)
    vm_ref[...] = vm * (1.0 - spk)
    # proj RepConv stage-1 1x1 conv (BNAndPad scale folded into wp)
    o_ref[0, 0] = jnp.dot(spk.astype(jnp.bfloat16), wp_ref[...],
                          preferred_element_type=jnp.float32)


def attention_lif_proj(s, mask, wp, *, scale=0.125, tau=2.0, v_th=0.5):
    """s: (T, B, N, 3C) fused q/k/v spikes -> (T, B, N, C) proj-stage1(attn_lif(attn))."""
    T, B, N, C3 = s.shape
    C = C3 // 3
    kernel = functools.partial(_attn_lif_proj_kernel, scale=scale,
                               inv_tau=1.0 / tau, v_th=v_th)
    return pl.pallas_call(
        kernel,
        out_shape=jax.ShapeDtypeStruct((T, B, N, C), jnp.float32),
        grid=(B, T),
        in_specs=[
            pl.BlockSpec((1, 1, N, C3), lambda b, t: (t, b, 0, 0)),
            pl.BlockSpec((C, C), lambda b, t: (0, 0)),
            pl.BlockSpec((C, C), lambda b, t: (0, 0)),
        ],
        out_specs=pl.BlockSpec((1, 1, N, C), lambda b, t: (t, b, 0, 0)),
        scratch_shapes=[pltpu.VMEM((N, C), jnp.float32)],
        compiler_params=_cparams(("parallel", "arbitrary")),
    )(s, mask.astype(jnp.float32), wp.astype(jnp.bfloat16))


# ------------------------------- MS_Block forward --------------------------------
def ms_block(x, params):
    """x: (T, B, C, H, W) float32 -> same shape. x = x + attn(x); x = x + mlp(x)."""
    T, B, C, H, W = x.shape
    N, P, M = H * W, B * H * W, T * B * H * W
    a, m = params['attn'], params['mlp']

    x_cl = jnp.transpose(x, (0, 1, 3, 4, 2))                     # (T, B, H, W, C)

    # ----- MS attention branch (residual fused into the final matmul) -----
    # head_lif fused with the q/k/v-fused RepConv stage-1 1x1 conv (no bias: BNAndPad
    # bias is folded downstream through the depthwise taps).
    z1 = seq_spiking_matmul(x_cl.reshape(T, P, C), a['w1_qkv'],
                            jnp.zeros((3 * C,), jnp.float32), pre_lif=True)
    # depthwise 3x3 over the fused 3C channels (zero pad handled in-kernel)
    y2 = dwconv3x3(z1.reshape(T * B, H, W, 3 * C), a['wd_qkv'],
                   out_dtype=jnp.bfloat16)
    # stage-2 1x1 conv (+ folded BNs + folded border bias) fused with q/k/v LIFs
    qkv = seq_spiking_matmul(y2.reshape(T, P, 3 * C), a['w2_qkv'], a['b2_qkv'],
                             post_lif=True, out_dtype=jnp.bfloat16)
    # linear attention (all heads) + attn_lif + proj RepConv stage-1 1x1 conv
    z1p = attention_lif_proj(qkv.reshape(T, B, N, 3 * C), a['mask'], a['w1_proj'])
    y2p = dwconv3x3(z1p.reshape(T * B, H, W, C), a['wd_proj'], out_dtype=jnp.bfloat16)
    # proj stage-2 1x1 conv (+BN) + residual add
    x1 = matmul_bias_residual(y2p.reshape(M, C), a['w2_proj'], a['b2_proj'],
                              x_cl.reshape(M, C))                # (M, C) = x + attn(x)

    # ----- MS MLP branch (residual fused into the final matmul) -----
    # fc1_lif + fc1 conv/bn + fc2_lif fused in one pass -> hidden spikes
    s2 = seq_spiking_matmul(x1.reshape(T, P, C), m['w1'], m['b1'],
                            pre_lif=True, post_lif=True, out_dtype=jnp.bfloat16)
    # fc2 conv/bn + residual add
    out = matmul_bias_residual(s2.reshape(M, s2.shape[-1]), m['w2'], m['b2'], x1)

    return jnp.transpose(out.reshape(T, B, H, W, C), (0, 1, 4, 2, 3))


# --------------------------- parameter init / folding -----------------------------
def bn_fold(gamma, beta, mean, var, eps=1e-5):
    s = gamma / jnp.sqrt(var + eps)
    return s, beta - mean * s


def init_bn(key, C):
    k1, k2, k3, k4 = jax.random.split(key, 4)
    gamma = jax.random.uniform(k1, (C,), minval=0.5, maxval=1.5)
    beta = 0.1 * jax.random.normal(k2, (C,))
    mean = 0.1 * jax.random.normal(k3, (C,))
    var = jax.random.uniform(k4, (C,), minval=0.5, maxval=1.5)
    return bn_fold(gamma, beta, mean, var)


def init_repconv_raw(key, C):
    """Raw params of RepConv(dim, dim) followed by an outer BatchNorm2d."""
    ks = jax.random.split(key, 6)
    w1 = 0.2 * jax.random.normal(ks[0], (C, C))        # 1x1 conv (out, in)
    s1, b1 = init_bn(ks[1], C)                         # BNAndPadLayer
    wd = 0.3 * jax.random.normal(ks[2], (C, 3, 3))     # depthwise (C, 1, 3, 3)
    w2 = 0.2 * jax.random.normal(ks[3], (C, C))        # 1x1 conv (out, in)
    s2, b2 = init_bn(ks[4], C)                         # BN inside 3x3 branch
    s3, b3 = init_bn(ks[5], C)                         # outer BatchNorm2d
    return dict(w1=w1, s1=s1, b1=b1, wd=wd, w2=w2, s23=s2 * s3, b23=b2 * s3 + b3)


def fold_repconv(r):
    """Fold RepConv(+BN) into kernel-ready weights:
       * BN scales folded into the 1x1 weight columns,
       * BNAndPad border value folded through the depthwise taps into the stage-2 bias."""
    w1 = r['w1'].T * r['s1'][None, :]                  # (Cin, Cout)
    wd = jnp.transpose(r['wd'], (1, 2, 0))             # (3, 3, C)
    w2 = r['w2'].T * r['s23'][None, :]                 # (Cin, Cout)
    c0 = r['b1'] * jnp.sum(wd, axis=(0, 1))            # border bias after dwconv
    b2 = r['b23'] + c0 @ w2
    return dict(w1=w1, wd=wd, w2=w2, b2=b2)


def init_params(key, C, heads, mlp_ratio=4.0):
    hid = int(C * mlp_ratio)
    keys = jax.random.split(key, 6)
    fq = fold_repconv(init_repconv_raw(keys[0], C))
    fk = fold_repconv(init_repconv_raw(keys[1], C))
    fv = fold_repconv(init_repconv_raw(keys[2], C))
    fp = fold_repconv(init_repconv_raw(keys[3], C))

    # fuse q/k/v branches along the output-channel axis (stage-2 is block-diagonal)
    w1_qkv = jnp.concatenate([fq['w1'], fk['w1'], fv['w1']], axis=1)   # (C, 3C)
    wd_qkv = jnp.concatenate([fq['wd'], fk['wd'], fv['wd']], axis=2)   # (3, 3, 3C)
    w2_qkv = jnp.zeros((3 * C, 3 * C), jnp.float32)
    w2_qkv = (w2_qkv.at[0:C, 0:C].set(fq['w2'])
                    .at[C:2 * C, C:2 * C].set(fk['w2'])
                    .at[2 * C:3 * C, 2 * C:3 * C].set(fv['w2']))
    b2_qkv = jnp.concatenate([fq['b2'], fk['b2'], fv['b2']])

    head_id = jnp.arange(C) // (C // heads)
    mask = (head_id[:, None] == head_id[None, :]).astype(jnp.float32)  # (C, C)

    attn = dict(w1_qkv=w1_qkv, wd_qkv=wd_qkv, w2_qkv=w2_qkv, b2_qkv=b2_qkv,
                mask=mask, w1_proj=fp['w1'], wd_proj=fp['wd'],
                w2_proj=fp['w2'], b2_proj=fp['b2'])

    kw1, kb1, kbn1 = jax.random.split(keys[4], 3)
    kw2, kb2, kbn2 = jax.random.split(keys[5], 3)
    w1 = 0.2 * jax.random.normal(kw1, (hid, C))        # Conv1d weight (out, in, 1)
    bc1 = 0.1 * jax.random.normal(kb1, (hid,))         # Conv1d bias
    s1, bf1 = init_bn(kbn1, hid)
    w2 = 0.2 * jax.random.normal(kw2, (C, hid))
    bc2 = 0.1 * jax.random.normal(kb2, (C,))
    s2, bf2 = init_bn(kbn2, C)
    mlp = dict(w1=w1.T * s1[None, :], b1=bf1 + bc1 * s1,
               w2=w2.T * s2[None, :], b2=bf2 + bc2 * s2)
    return dict(attn=attn, mlp=mlp)


# --------------------------------- main -------------------------------------------
if __name__ == "__main__":
    T, B, C, H, W = 2, 2, 32, 8, 8       # dim=32, num_heads=4, mlp_hidden=128
    heads = 4
    key = jax.random.PRNGKey(0)
    kx, kp = jax.random.split(key)
    x = 2.0 * jax.random.normal(kx, (T, B, C, H, W), dtype=jnp.float32)
    params = init_params(kp, C, heads)

    y = jax.jit(ms_block)(x, params)
    y = jax.block_until_ready(y)
    assert y.shape == (T, B, C, H, W)
    assert bool(jnp.all(jnp.isfinite(y)))
    print("KERNEL_OK")
</pallas_src>

<mosaic_0001>
module attributes {stable_mosaic.version = 11 : i64} {
  func.func @_seq_mm_kernel(%arg0: i32, %arg1: i32, %arg2: memref<1x128x32xf32, #tpu.memory_space<vmem>>, %arg3: memref<32x96xbf16, #tpu.memory_space<vmem>>, %arg4: memref<1x96xf32, #tpu.memory_space<vmem>>, %arg5: memref<1x128x96xf32, #tpu.memory_space<vmem>>, %arg6: memref<128x32xf32, #tpu.memory_space<vmem>>) attributes {dimension_semantics = [#tpu.dimension_semantics<parallel>, #tpu.dimension_semantics<arbitrary>], iteration_bounds = array<i64: 1, 2>, scalar_prefetch = 0 : i64, scratch_operands = 1 : i64, tpu.core_type = #tpu.core_type<tc>, window_params = [{transform_indices = @transform_0, window_bounds = array<i64: 1, 128, 32>}, {pipeline_mode = #tpu.pipeline_mode<synchronous>, transform_indices = @transform_1, window_bounds = array<i64: 32, 96>}, {pipeline_mode = #tpu.pipeline_mode<synchronous>, transform_indices = @transform_2, window_bounds = array<i64: 1, 96>}, {transform_indices = @transform_3, window_bounds = array<i64: 1, 128, 96>}]} {
    %c0_i32 = arith.constant 0 : i32
    %0 = arith.cmpi eq, %arg1, %c0_i32 : i32
    %1 = arith.extui %0 : i1 to i32
    %c0_i32_0 = arith.constant 0 : i32
    %2 = arith.cmpi ne, %1, %c0_i32_0 : i32
    scf.if %2 {
      %cst_19 = arith.constant 0.000000e+00 : f32
      %28 = vector.broadcast %cst_19 : f32 to vector<128x32xf32>
      %c0_20 = arith.constant 0 : index
      %c0_21 = arith.constant 0 : index
      %29 = vector.load %arg6[%c0_20, %c0_21] : memref<128x32xf32, #tpu.memory_space<vmem>>, vector<128x32xf32>
      tpu.vector_store %arg6[%c0_20, %c0_21], %28 {strides = array<i32>} : memref<128x32xf32, #tpu.memory_space<vmem>>, vector<128x32xf32>,
    } else {
    }
    %c0 = arith.constant 0 : index
    %c0_1 = arith.constant 0 : index
    %c0_2 = arith.constant 0 : index
    %3 = vector.load %arg2[%c0, %c0_1, %c0_2] : memref<1x128x32xf32, #tpu.memory_space<vmem>>, vector<1x128x32xf32>
    %4 = vector.shape_cast %3 : vector<1x128x32xf32> to vector<128x32xf32>
    %c0_3 = arith.constant 0 : index
    %c0_4 = arith.constant 0 : index
    %5 = vector.load %arg6[%c0_3, %c0_4] : memref<128x32xf32, #tpu.memory_space<vmem>>, vector<128x32xf32>
    %c0_5 = arith.constant 0 : index
    %c0_6 = arith.constant 0 : index
    %6 = vector.load %arg6[%c0_5, %c0_6] : memref<128x32xf32, #tpu.memory_space<vmem>>, vector<128x32xf32>
    %7 = arith.subf %4, %6 : vector<128x32xf32>
    %cst = arith.constant 5.000000e-01 : f32
    %8 = vector.broadcast %cst : f32 to vector<128x32xf32>
    %9 = arith.mulf %7, %8 : vector<128x32xf32>
    %10 = arith.addf %5, %9 : vector<128x32xf32>
    %cst_7 = arith.constant 1.000000e+00 : f32
    %11 = vector.broadcast %cst_7 : f32 to vector<128x32xf32>
    %12 = arith.cmpf oge, %10, %11 : vector<128x32xf32>
    %13 = arith.extui %12 : vector<128x32xi1> to vector<128x32xi32>
    %14 = arith.sitofp %13 : vector<128x32xi32> to vector<128x32xf32>
    %cst_8 = arith.constant 1.000000e+00 : f32
    %15 = vector.broadcast %cst_8 : f32 to vector<128x32xf32>
    %16 = arith.subf %15, %14 : vector<128x32xf32>
    %17 = arith.mulf %10, %16 : vector<128x32xf32>
    %c0_9 = arith.constant 0 : index
    %c0_10 = arith.constant 0 : index
    %18 = vector.load %arg6[%c0_9, %c0_10] : memref<128x32xf32, #tpu.memory_space<vmem>>, vector<128x32xf32>
    tpu.vector_store %arg6[%c0_9, %c0_10], %17 {strides = array<i32>} : memref<128x32xf32, #tpu.memory_space<vmem>>, vector<128x32xf32>,
    %19 = arith.truncf %14 : vector<128x32xf32> to vector<128x32xbf16>
    %c0_11 = arith.constant 0 : index
    %c0_12 = arith.constant 0 : index
    %20 = vector.load %arg3[%c0_11, %c0_12] : memref<32x96xbf16, #tpu.memory_space<vmem>>, vector<32x96xbf16>
    %cst_13 = arith.constant dense<0.000000e+00> : vector<128x96xf32>
    %21 = tpu.matmul %19, %20, %cst_13 {dimension_numbers = #tpu.dot_dimension_numbers<[1], [0], [0], [1], [0, 0, 1, 1], [], []>} : vector<128x32xbf16>, vector<32x96xbf16>, vector<128x96xf32> -> vector<128x96xf32>
    %c0_14 = arith.constant 0 : index
    %c0_15 = arith.constant 0 : index
    %22 = vector.load %arg4[%c0_14, %c0_15] : memref<1x96xf32, #tpu.memory_space<vmem>>, vector<1x96xf32>
    %23 = vector.broadcast %22 : vector<1x96xf32> to vector<128x96xf32>
    %24 = arith.addf %21, %23 : vector<128x96xf32>
    %c0_16 = arith.constant 0 : index
    %c0_17 = arith.constant 0 : index
    %c0_18 = arith.constant 0 : index
    %25 = vector.load %arg5[%c0_16, %c0_17, %c0_18] : memref<1x128x96xf32, #tpu.memory_space<vmem>>, vector<1x128x96xf32>
    %26 = vector.shape_cast %25 : vector<1x128x96xf32> to vector<128x96xf32>
    %27 = vector.shape_cast %24 : vector<128x96xf32> to vector<1x128x96xf32>
    tpu.vector_store %arg5[%c0_16, %c0_17, %c0_18], %27 {strides = array<i32>} : memref<1x128x96xf32, #tpu.memory_space<vmem>>, vector<1x128x96xf32>,
    return
  }
  func.func @transform_0(%arg0: i32, %arg1: i32) -> (i32, i32, i32) {
    %c0_i32 = arith.constant 0 : i32
    %c0_i32_0 = arith.constant 0 : i32
    return %arg1, %arg0, %c0_i32 : i32, i32, i32
  }
  func.func @transform_1(%arg0: i32, %arg1: i32) -> (i32, i32) {
    %c0_i32 = arith.constant 0 : i32
    %c0_i32_0 = arith.constant 0 : i32
    %c0_i32_1 = arith.constant 0 : i32
    return %c0_i32, %c0_i32_0 : i32, i32
  }
  func.func @transform_2(%arg0: i32, %arg1: i32) -> (i32, i32) {
    %c0_i32 = arith.constant 0 : i32
    %c0_i32_0 = arith.constant 0 : i32
    %c0_i32_1 = arith.constant 0 : i32
    return %c0_i32, %c0_i32_0 : i32, i32
  }
  func.func @transform_3(%arg0: i32, %arg1: i32) -> (i32, i32, i32) {
    %c0_i32 = arith.constant 0 : i32
    %c0_i32_0 = arith.constant 0 : i32
    return %arg1, %arg0, %c0_i32 : i32, i32, i32
  }
}

module attributes {stable_mosaic.version = 11 : i64} {
  func.func @_seq_mm_kernel(%arg0: i32, %arg1: i32, %arg2: memref<1x128x96xbf16, #tpu.memory_space<vmem>>, %arg3: memref<96x96xbf16, #tpu.memory_space<vmem>>, %arg4: memref<1x96xf32, #tpu.memory_space<vmem>>, %arg5: memref<1x128x96xbf16, #tpu.memory_space<vmem>>, %arg6: memref<128x96xf32, #tpu.memory_space<vmem>>) attributes {dimension_semantics = [#tpu.dimension_semantics<parallel>, #tpu.dimension_semantics<arbitrary>], iteration_bounds = array<i64: 1, 2>, scalar_prefetch = 0 : i64, scratch_operands = 1 : i64, tpu.core_type = #tpu.core_type<tc>, window_params = [{transform_indices = @transform_0, window_bounds = array<i64: 1, 128, 96>}, {pipeline_mode = #tpu.pipeline_mode<synchronous>, transform_indices = @transform_1, window_bounds = array<i64: 96, 96>}, {pipeline_mode = #tpu.pipeline_mode<synchronous>, transform_indices = @transform_2, window_bounds = array<i64: 1, 96>}, {transform_indices = @transform_3, window_bounds = array<i64: 1, 128, 96>}]} {
    %c0_i32 = arith.constant 0 : i32
    %0 = arith.cmpi eq, %arg1, %c0_i32 : i32
    %1 = arith.extui %0 : i1 to i32
    %c0_i32_0 = arith.constant 0 : i32
    %2 = arith.cmpi ne, %1, %c0_i32_0 : i32
    scf.if %2 {
      %cst_19 = arith.constant 0.000000e+00 : f32
      %28 = vector.broadcast %cst_19 : f32 to vector<128x96xf32>
      %c0_20 = arith.constant 0 : index
      %c0_21 = arith.constant 0 : index
      %29 = vector.load %arg6[%c0_20, %c0_21] : memref<128x96xf32, #tpu.memory_space<vmem>>, vector<128x96xf32>
      tpu.vector_store %arg6[%c0_20, %c0_21], %28 {strides = array<i32>} : memref<128x96xf32, #tpu.memory_space<vmem>>, vector<128x96xf32>,
    } else {
    }
    %c0 = arith.constant 0 : index
    %c0_1 = arith.constant 0 : index
    %c0_2 = arith.constant 0 : index
    %3 = vector.load %arg2[%c0, %c0_1, %c0_2] : memref<1x128x96xbf16, #tpu.memory_space<vmem>>, vector<1x128x96xbf16>
    %4 = vector.shape_cast %3 : vector<1x128x96xbf16> to vector<128x96xbf16>
    %c0_3 = arith.constant 0 : index
    %c0_4 = arith.constant 0 : index
    %5 = vector.load %arg3[%c0_3, %c0_4] : memref<96x96xbf16, #tpu.memory_space<vmem>>, vector<96x96xbf16>
    %cst = arith.constant dense<0.000000e+00> : vector<128x96xf32>
    %6 = tpu.matmul %4, %5, %cst {dimension_numbers = #tpu.dot_dimension_numbers<[1], [0], [0], [1], [0, 0, 1, 1], [], []>} : vector<128x96xbf16>, vector<96x96xbf16>, vector<128x96xf32> -> vector<128x96xf32>
    %c0_5 = arith.constant 0 : index
    %c0_6 = arith.constant 0 : index
    %7 = vector.load %arg4[%c0_5, %c0_6] : memref<1x96xf32, #tpu.memory_space<vmem>>, vector<1x96xf32>
    %8 = vector.broadcast %7 : vector<1x96xf32> to vector<128x96xf32>
    %9 = arith.addf %6, %8 : vector<128x96xf32>
    %c0_7 = arith.constant 0 : index
    %c0_8 = arith.constant 0 : index
    %10 = vector.load %arg6[%c0_7, %c0_8] : memref<128x96xf32, #tpu.memory_space<vmem>>, vector<128x96xf32>
    %c0_9 = arith.constant 0 : index
    %c0_10 = arith.constant 0 : index
    %11 = vector.load %arg6[%c0_9, %c0_10] : memref<128x96xf32, #tpu.memory_space<vmem>>, vector<128x96xf32>
    %12 = arith.subf %9, %11 : vector<128x96xf32>
    %cst_11 = arith.constant 5.000000e-01 : f32
    %13 = vector.broadcast %cst_11 : f32 to vector<128x96xf32>
    %14 = arith.mulf %12, %13 : vector<128x96xf32>
    %15 = arith.addf %10, %14 : vector<128x96xf32>
    %cst_12 = arith.constant 1.000000e+00 : f32
    %16 = vector.broadcast %cst_12 : f32 to vector<128x96xf32>
    %17 = arith.cmpf oge, %15, %16 : vector<128x96xf32>
    %18 = arith.extui %17 : vector<128x96xi1> to vector<128x96xi32>
    %19 = arith.sitofp %18 : vector<128x96xi32> to vector<128x96xf32>
    %cst_13 = arith.constant 1.000000e+00 : f32
    %20 = vector.broadcast %cst_13 : f32 to vector<128x96xf32>
    %21 = arith.subf %20, %19 : vector<128x96xf32>
    %22 = arith.mulf %15, %21 : vector<128x96xf32>
    %c0_14 = arith.constant 0 : index
    %c0_15 = arith.constant 0 : index
    %23 = vector.load %arg6[%c0_14, %c0_15] : memref<128x96xf32, #tpu.memory_space<vmem>>, vector<128x96xf32>
    tpu.vector_store %arg6[%c0_14, %c0_15], %22 {strides = array<i32>} : memref<128x96xf32, #tpu.memory_space<vmem>>, vector<128x96xf32>,
    %24 = arith.truncf %19 : vector<128x96xf32> to vector<128x96xbf16>
    %c0_16 = arith.constant 0 : index
    %c0_17 = arith.constant 0 : index
    %c0_18 = arith.constant 0 : index
    %25 = vector.load %arg5[%c0_16, %c0_17, %c0_18] : memref<1x128x96xbf16, #tpu.memory_space<vmem>>, vector<1x128x96xbf16>
    %26 = vector.shape_cast %25 : vector<1x128x96xbf16> to vector<128x96xbf16>
    %27 = vector.shape_cast %24 : vector<128x96xbf16> to vector<1x128x96xbf16>
    tpu.vector_store %arg5[%c0_16, %c0_17, %c0_18], %27 {strides = array<i32>} : memref<1x128x96xbf16, #tpu.memory_space<vmem>>, vector<1x128x96xbf16>,
    return
  }
  func.func @transform_0(%arg0: i32, %arg1: i32) -> (i32, i32, i32) {
    %c0_i32 = arith.constant 0 : i32
    %c0_i32_0 = arith.constant 0 : i32
    return %arg1, %arg0, %c0_i32 : i32, i32, i32
  }
  func.func @transform_1(%arg0: i32, %arg1: i32) -> (i32, i32) {
    %c0_i32 = arith.constant 0 : i32
    %c0_i32_0 = arith.constant 0 : i32
    %c0_i32_1 = arith.constant 0 : i32
    return %c0_i32, %c0_i32_0 : i32, i32
  }
  func.func @transform_2(%arg0: i32, %arg1: i32) -> (i32, i32) {
    %c0_i32 = arith.constant 0 : i32
    %c0_i32_0 = arith.constant 0 : i32
    %c0_i32_1 = arith.constant 0 : i32
    return %c0_i32, %c0_i32_0 : i32, i32
  }
  func.func @transform_3(%arg0: i32, %arg1: i32) -> (i32, i32, i32) {
    %c0_i32 = arith.constant 0 : i32
    %c0_i32_0 = arith.constant 0 : i32
    return %arg1, %arg0, %c0_i32 : i32, i32, i32
  }
}

module attributes {stable_mosaic.version = 11 : i64} {
  func.func @_dwconv3x3_kernel(%arg0: i32, %arg1: memref<4x8x8x96xf32, #tpu.memory_space<vmem>>, %arg2: memref<3x3x96xf32, #tpu.memory_space<vmem>>, %arg3: memref<4x8x8x96xbf16, #tpu.memory_space<vmem>>, %arg4: memref<4x10x10x96xf32, #tpu.memory_space<vmem>>) attributes {dimension_semantics = [#tpu.dimension_semantics<parallel>], iteration_bounds = array<i64: 1>, scalar_prefetch = 0 : i64, scratch_operands = 1 : i64, tpu.core_type = #tpu.core_type<tc>, window_params = [{transform_indices = @transform_0, window_bounds = array<i64: 4, 8, 8, 96>}, {pipeline_mode = #tpu.pipeline_mode<synchronous>, transform_indices = @transform_1, window_bounds = array<i64: 3, 3, 96>}, {transform_indices = @transform_2, window_bounds = array<i64: 4, 8, 8, 96>}]} {
    %cst = arith.constant 0.000000e+00 : f32
    %0 = vector.broadcast %cst : f32 to vector<4x10x10x96xf32>
    %c0 = arith.constant 0 : index
    %c0_0 = arith.constant 0 : index
    %c0_1 = arith.constant 0 : index
    %c0_2 = arith.constant 0 : index
    %1 = vector.load %arg4[%c0, %c0_0, %c0_1, %c0_2] : memref<4x10x10x96xf32, #tpu.memory_space<vmem>>, vector<4x10x10x96xf32>
    tpu.vector_store %arg4[%c0, %c0_0, %c0_1, %c0_2], %0 {strides = array<i32>} : memref<4x10x10x96xf32, #tpu.memory_space<vmem>>, vector<4x10x10x96xf32>,
    %c0_3 = arith.constant 0 : index
    %c0_4 = arith.constant 0 : index
    %c0_5 = arith.constant 0 : index
    %c0_6 = arith.constant 0 : index
    %2 = vector.load %arg1[%c0_3, %c0_4, %c0_5, %c0_6] : memref<4x8x8x96xf32, #tpu.memory_space<vmem>>, vector<4x8x8x96xf32>
    %c0_7 = arith.constant 0 : index
    %c1 = arith.constant 1 : index
    %c1_8 = arith.constant 1 : index
    %c0_9 = arith.constant 0 : index
    %3 = vector.load %arg4[%c0_7, %c1, %c1_8, %c0_9] : memref<4x10x10x96xf32, #tpu.memory_space<vmem>>, vector<4x8x8x96xf32>
    tpu.vector_store %arg4[%c0_7, %c1, %c1_8, %c0_9], %2 {strides = array<i32>} : memref<4x10x10x96xf32, #tpu.memory_space<vmem>>, vector<4x8x8x96xf32>,
    %cst_10 = arith.constant 0.000000e+00 : f32
    %4 = vector.broadcast %cst_10 : f32 to vector<4x8x8x96xf32>
    %c0_11 = arith.constant 0 : index
    %c0_12 = arith.constant 0 : index
    %c0_13 = arith.constant 0 : index
    %5 = vector.load %arg2[%c0_11, %c0_12, %c0_13] : memref<3x3x96xf32, #tpu.memory_space<vmem>>, vector<1x1x96xf32>
    %6 = vector.shape_cast %5 : vector<1x1x96xf32> to vector<96xf32>
    %7 = vector.shape_cast %6 : vector<96xf32> to vector<1x1x1x96xf32>
    %c0_14 = arith.constant 0 : index
    %c0_15 = arith.constant 0 : index
    %c0_16 = arith.constant 0 : index
    %c0_17 = arith.constant 0 : index
    %8 = vector.load %arg4[%c0_14, %c0_15, %c0_16, %c0_17] : memref<4x10x10x96xf32, #tpu.memory_space<vmem>>, vector<4x8x8x96xf32>
    %9 = vector.broadcast %7 : vector<1x1x1x96xf32> to vector<4x8x8x96xf32>
    %10 = arith.mulf %8, %9 : vector<4x8x8x96xf32>
    %11 = arith.addf %4, %10 : vector<4x8x8x96xf32>
    %c0_18 = arith.constant 0 : index
    %c1_19 = arith.constant 1 : index
    %c0_20 = arith.constant 0 : index
    %12 = vector.load %arg2[%c0_18, %c1_19, %c0_20] : memref<3x3x96xf32, #tpu.memory_space<vmem>>, vector<1x1x96xf32>
    %13 = vector.shape_cast %12 : vector<1x1x96xf32> to vector<96xf32>
    %14 = vector.shape_cast %13 : vector<96xf32> to vector<1x1x1x96xf32>
    %c0_21 = arith.constant 0 : index
    %c0_22 = arith.constant 0 : index
    %c1_23 = arith.constant 1 : index
    %c0_24 = arith.constant 0 : index
    %15 = vector.load %arg4[%c0_21, %c0_22, %c1_23, %c0_24] : memref<4x10x10x96xf32, #tpu.memory_space<vmem>>, vector<4x8x8x96xf32>
    %16 = vector.broadcast %14 : vector<1x1x1x96xf32> to vector<4x8x8x96xf32>
    %17 = arith.mulf %15, %16 : vector<4x8x8x96xf32>
    %18 = arith.addf %11, %17 : vector<4x8x8x96xf32>
    %c0_25 = arith.constant 0 : index
    %c2 = arith.constant 2 : index
    %c0_26 = arith.constant 0 : index
    %19 = vector.load %arg2[%c0_25, %c2, %c0_26] : memref<3x3x96xf32, #tpu.memory_space<vmem>>, vector<1x1x96xf32>
    %20 = vector.shape_cast %19 : vector<1x1x96xf32> to vector<96xf32>
    %21 = vector.shape_cast %20 : vector<96xf32> to vector<1x1x1x96xf32>
    %c0_27 = arith.constant 0 : index
    %c0_28 = arith.constant 0 : index
    %c2_29 = arith.constant 2 : index
    %c0_30 = arith.constant 0 : index
    %22 = vector.load %arg4[%c0_27, %c0_28, %c2_29, %c0_30] : memref<4x10x10x96xf32, #tpu.memory_space<vmem>>, vector<4x8x8x96xf32>
    %23 = vector.broadcast %21 : vector<1x1x1x96xf32> to vector<4x8x8x96xf32>
    %24 = arith.mulf %22, %23 : vector<4x8x8x96xf32>
    %25 = arith.addf %18, %24 : vector<4x8x8x96xf32>
    %c1_31 = arith.constant 1 : index
    %c0_32 = arith.constant 0 : index
    %c0_33 = arith.constant 0 : index
    %26 = vector.load %arg2[%c1_31, %c0_32, %c0_33] : memref<3x3x96xf32, #tpu.memory_space<vmem>>, vector<1x1x96xf32>
    %27 = vector.shape_cast %26 : vector<1x1x96xf32> to vector<96xf32>
    %28 = vector.shape_cast %27 : vector<96xf32> to vector<1x1x1x96xf32>
    %c0_34 = arith.constant 0 : index
    %c1_35 = arith.constant 1 : index
    %c0_36 = arith.constant 0 : index
    %c0_37 = arith.constant 0 : index
    %29 = vector.load %arg4[%c0_34, %c1_35, %c0_36, %c0_37] : memref<4x10x10x96xf32, #tpu.memory_space<vmem>>, vector<4x8x8x96xf32>
    %30 = vector.broadcast %28 : vector<1x1x1x96xf32> to vector<4x8x8x96xf32>
    %31 = arith.mulf %29, %30 : vector<4x8x8x96xf32>
    %32 = arith.addf %25, %31 : vector<4x8x8x96xf32>
    %c1_38 = arith.constant 1 : index
    %c1_39 = arith.constant 1 : index
    %c0_40 = arith.constant 0 : index
    %33 = vector.load %arg2[%c1_38, %c1_39, %c0_40] : memref<3x3x96xf32, #tpu.memory_space<vmem>>, vector<1x1x96xf32>
    %34 = vector.shape_cast %33 : vector<1x1x96xf32> to vector<96xf32>
    %35 = vector.shape_cast %34 : vector<96xf32> to vector<1x1x1x96xf32>
    %c0_41 = arith.constant 0 : index
    %c1_42 = arith.constant 1 : index
    %c1_43 = arith.constant 1 : index
    %c0_44 = arith.constant 0 : index
    %36 = vector.load %arg4[%c0_41, %c1_42, %c1_43, %c0_44] : memref<4x10x10x96xf32, #tpu.memory_space<vmem>>, vector<4x8x8x96xf32>
    %37 = vector.broadcast %35 : vector<1x1x1x96xf32> to vector<4x8x8x96xf32>
    %38 = arith.mulf %36, %37 : vector<4x8x8x96xf32>
    %39 = arith.addf %32, %38 : vector<4x8x8x96xf32>
    %c1_45 = arith.constant 1 : index
    %c2_46 = arith.constant 2 : index
    %c0_47 = arith.constant 0 : index
    %40 = vector.load %arg2[%c1_45, %c2_46, %c0_47] : memref<3x3x96xf32, #tpu.memory_space<vmem>>, vector<1x1x96xf32>
    %41 = vector.shape_cast %40 : vector<1x1x96xf32> to vector<96xf32>
    %42 = vector.shape_cast %41 : vector<96xf32> to vector<1x1x1x96xf32>
    %c0_48 = arith.constant 0 : index
    %c1_49 = arith.constant 1 : index
    %c2_50 = arith.constant 2 : index
    %c0_51 = arith.constant 0 : index
    %43 = vector.load %arg4[%c0_48, %c1_49, %c2_50, %c0_51] : memref<4x10x10x96xf32, #tpu.memory_space<vmem>>, vector<4x8x8x96xf32>
    %44 = vector.broadcast %42 : vector<1x1x1x96xf32> to vector<4x8x8x96xf32>
    %45 = arith.mulf %43, %44 : vector<4x8x8x96xf32>
    %46 = arith.addf %39, %45 : vector<4x8x8x96xf32>
    %c2_52 = arith.constant 2 : index
    %c0_53 = arith.constant 0 : index
    %c0_54 = arith.constant 0 : index
    %47 = vector.load %arg2[%c2_52, %c0_53, %c0_54] : memref<3x3x96xf32, #tpu.memory_space<vmem>>, vector<1x1x96xf32>
    %48 = vector.shape_cast %47 : vector<1x1x96xf32> to vector<96xf32>
    %49 = vector.shape_cast %48 : vector<96xf32> to vector<1x1x1x96xf32>
    %c0_55 = arith.constant 0 : index
    %c2_56 = arith.constant 2 : index
    %c0_57 = arith.constant 0 : index
    %c0_58 = arith.constant 0 : index
    %50 = vector.load %arg4[%c0_55, %c2_56, %c0_57, %c0_58] : memref<4x10x10x96xf32, #tpu.memory_space<vmem>>, vector<4x8x8x96xf32>
    %51 = vector.broadcast %49 : vector<1x1x1x96xf32> to vector<4x8x8x96xf32>
    %52 = arith.mulf %50, %51 : vector<4x8x8x96xf32>
    %53 = arith.addf %46, %52 : vector<4x8x8x96xf32>
    %c2_59 = arith.constant 2 : index
    %c1_60 = arith.constant 1 : index
    %c0_61 = arith.constant 0 : index
    %54 = vector.load %arg2[%c2_59, %c1_60, %c0_61] : memref<3x3x96xf32, #tpu.memory_space<vmem>>, vector<1x1x96xf32>
    %55 = vector.shape_cast %54 : vector<1x1x96xf32> to vector<96xf32>
    %56 = vector.shape_cast %55 : vector<96xf32> to vector<1x1x1x96xf32>
    %c0_62 = arith.constant 0 : index
    %c2_63 = arith.constant 2 : index
    %c1_64 = arith.constant 1 : index
    %c0_65 = arith.constant 0 : index
    %57 = vector.load %arg4[%c0_62, %c2_63, %c1_64, %c0_65] : memref<4x10x10x96xf32, #tpu.memory_space<vmem>>, vector<4x8x8x96xf32>
    %58 = vector.broadcast %56 : vector<1x1x1x96xf32> to vector<4x8x8x96xf32>
    %59 = arith.mulf %57, %58 : vector<4x8x8x96xf32>
    %60 = arith.addf %53, %59 : vector<4x8x8x96xf32>
    %c2_66 = arith.constant 2 : index
    %c2_67 = arith.constant 2 : index
    %c0_68 = arith.constant 0 : index
    %61 = vector.load %arg2[%c2_66, %c2_67, %c0_68] : memref<3x3x96xf32, #tpu.memory_space<vmem>>, vector<1x1x96xf32>
    %62 = vector.shape_cast %61 : vector<1x1x96xf32> to vector<96xf32>
    %63 = vector.shape_cast %62 : vector<96xf32> to vector<1x1x1x96xf32>
    %c0_69 = arith.constant 0 : index
    %c2_70 = arith.constant 2 : index
    %c2_71 = arith.constant 2 : index
    %c0_72 = arith.constant 0 : index
    %64 = vector.load %arg4[%c0_69, %c2_70, %c2_71, %c0_72] : memref<4x10x10x96xf32, #tpu.memory_space<vmem>>, vector<4x8x8x96xf32>
    %65 = vector.broadcast %63 : vector<1x1x1x96xf32> to vector<4x8x8x96xf32>
    %66 = arith.mulf %64, %65 : vector<4x8x8x96xf32>
    %67 = arith.addf %60, %66 : vector<4x8x8x96xf32>
    %68 = arith.truncf %67 : vector<4x8x8x96xf32> to vector<4x8x8x96xbf16>
    %c0_73 = arith.constant 0 : index
    %c0_74 = arith.constant 0 : index
    %c0_75 = arith.constant 0 : index
    %c0_76 = arith.constant 0 : index
    %69 = vector.load %arg3[%c0_73, %c0_74, %c0_75, %c0_76] : memref<4x8x8x96xbf16, #tpu.memory_space<vmem>>, vector<4x8x8x96xbf16>
    tpu.vector_store %arg3[%c0_73, %c0_74, %c0_75, %c0_76], %68 {strides = array<i32>} : memref<4x8x8x96xbf16, #tpu.memory_space<vmem>>, vector<4x8x8x96xbf16>,
    return
  }
  func.func @transform_0(%arg0: i32) -> (i32, i32, i32, i32) {
    %c0_i32 = arith.constant 0 : i32
    %c0_i32_0 = arith.constant 0 : i32
    %c0_i32_1 = arith.constant 0 : i32
    %c0_i32_2 = arith.constant 0 : i32
    return %arg0, %c0_i32, %c0_i32_0, %c0_i32_1 : i32, i32, i32, i32
  }
  func.func @transform_1(%arg0: i32) -> (i32, i32, i32) {
    %c0_i32 = arith.constant 0 : i32
    %c0_i32_0 = arith.constant 0 : i32
    %c0_i32_1 = arith.constant 0 : i32
    %c0_i32_2 = arith.constant 0 : i32
    return %c0_i32, %c0_i32_0, %c0_i32_1 : i32, i32, i32
  }
  func.func @transform_2(%arg0: i32) -> (i32, i32, i32, i32) {
    %c0_i32 = arith.constant 0 : i32
    %c0_i32_0 = arith.constant 0 : i32
    %c0_i32_1 = arith.constant 0 : i32
    %c0_i32_2 = arith.constant 0 : i32
    return %arg0, %c0_i32, %c0_i32_0, %c0_i32_1 : i32, i32, i32, i32
  }
}

module attributes {stable_mosaic.version = 11 : i64} {
  func.func @_attn_lif_proj_kernel(%arg0: i32, %arg1: i32, %arg2: memref<1x1x64x96xbf16, #tpu.memory_space<vmem>>, %arg3: memref<32x32xf32, #tpu.memory_space<vmem>>, %arg4: memref<32x32xbf16, #tpu.memory_space<vmem>>, %arg5: memref<1x1x64x32xf32, #tpu.memory_space<vmem>>, %arg6: memref<64x32xf32, #tpu.memory_space<vmem>>) attributes {dimension_semantics = [#tpu.dimension_semantics<parallel>, #tpu.dimension_semantics<arbitrary>], iteration_bounds = array<i64: 2, 2>, scalar_prefetch = 0 : i64, scratch_operands = 1 : i64, tpu.core_type = #tpu.core_type<tc>, window_params = [{transform_indices = @transform_0, window_bounds = array<i64: 1, 1, 64, 96>}, {pipeline_mode = #tpu.pipeline_mode<synchronous>, transform_indices = @transform_1, window_bounds = array<i64: 32, 32>}, {pipeline_mode = #tpu.pipeline_mode<synchronous>, transform_indices = @transform_2, window_bounds = array<i64: 32, 32>}, {transform_indices = @transform_3, window_bounds = array<i64: 1, 1, 64, 32>}]} {
    %c0_i32 = arith.constant 0 : i32
    %0 = arith.cmpi eq, %arg1, %c0_i32 : i32
    %1 = arith.extui %0 : i1 to i32
    %c0_i32_0 = arith.constant 0 : i32
    %2 = arith.cmpi ne, %1, %c0_i32_0 : i32
    scf.if %2 {
      %cst_24 = arith.constant 0.000000e+00 : f32
      %35 = vector.broadcast %cst_24 : f32 to vector<64x32xf32>
      %c0_25 = arith.constant 0 : index
      %c0_26 = arith.constant 0 : index
      %36 = vector.load %arg6[%c0_25, %c0_26] : memref<64x32xf32, #tpu.memory_space<vmem>>, vector<64x32xf32>
      tpu.vector_store %arg6[%c0_25, %c0_26], %35 {strides = array<i32>} : memref<64x32xf32, #tpu.memory_space<vmem>>, vector<64x32xf32>,
    } else {
    }
    %c0 = arith.constant 0 : index
    %c0_1 = arith.constant 0 : index
    %c0_2 = arith.constant 0 : index
    %c0_3 = arith.constant 0 : index
    %3 = vector.load %arg2[%c0, %c0_1, %c0_2, %c0_3] : memref<1x1x64x96xbf16, #tpu.memory_space<vmem>>, vector<1x1x64x96xbf16>
    %4 = vector.shape_cast %3 : vector<1x1x64x96xbf16> to vector<64x96xbf16>
    %5 = vector.extract_strided_slice %4 {offsets = [0, 0], sizes = [64, 32], strides = [1, 1]} : vector<64x96xbf16> to vector<64x32xbf16>
    %6 = vector.extract_strided_slice %4 {offsets = [0, 32], sizes = [64, 32], strides = [1, 1]} : vector<64x96xbf16> to vector<64x32xbf16>
    %7 = vector.extract_strided_slice %4 {offsets = [0, 64], sizes = [64, 32], strides = [1, 1]} : vector<64x96xbf16> to vector<64x32xbf16>
    %cst = arith.constant dense<0.000000e+00> : vector<32x32xf32>
    %8 = tpu.matmul %6, %7, %cst {dimension_numbers = #tpu.dot_dimension_numbers<[0], [0], [1], [1], [0, 1, 1, 1], [], []>} : vector<64x32xbf16>, vector<64x32xbf16>, vector<32x32xf32> -> vector<32x32xf32>
    %c0_4 = arith.constant 0 : index
    %c0_5 = arith.constant 0 : index
    %9 = vector.load %arg3[%c0_4, %c0_5] : memref<32x32xf32, #tpu.memory_space<vmem>>, vector<32x32xf32>
    %10 = arith.mulf %8, %9 : vector<32x32xf32>
    %11 = arith.truncf %10 : vector<32x32xf32> to vector<32x32xbf16>
    %cst_6 = arith.constant dense<0.000000e+00> : vector<64x32xf32>
    %12 = tpu.matmul %5, %11, %cst_6 {dimension_numbers = #tpu.dot_dimension_numbers<[1], [0], [0], [1], [0, 0, 1, 1], [], []>} : vector<64x32xbf16>, vector<32x32xbf16>, vector<64x32xf32> -> vector<64x32xf32>
    %cst_7 = arith.constant 1.250000e-01 : f32
    %13 = vector.broadcast %cst_7 : f32 to vector<64x32xf32>
    %14 = arith.mulf %12, %13 : vector<64x32xf32>
    %c0_8 = arith.constant 0 : index
    %c0_9 = arith.constant 0 : index
    %15 = vector.load %arg6[%c0_8, %c0_9] : memref<64x32xf32, #tpu.memory_space<vmem>>, vector<64x32xf32>
    %c0_10 = arith.constant 0 : index
    %c0_11 = arith.constant 0 : index
    %16 = vector.load %arg6[%c0_10, %c0_11] : memref<64x32xf32, #tpu.memory_space<vmem>>, vector<64x32xf32>
    %17 = arith.subf %14, %16 : vector<64x32xf32>
    %cst_12 = arith.constant 5.000000e-01 : f32
    %18 = vector.broadcast %cst_12 : f32 to vector<64x32xf32>
    %19 = arith.mulf %17, %18 : vector<64x32xf32>
    %20 = arith.addf %15, %19 : vector<64x32xf32>
    %cst_13 = arith.constant 5.000000e-01 : f32
    %21 = vector.broadcast %cst_13 : f32 to vector<64x32xf32>
    %22 = arith.cmpf oge, %20, %21 : vector<64x32xf32>
    %23 = arith.extui %22 : vector<64x32xi1> to vector<64x32xi32>
    %24 = arith.sitofp %23 : vector<64x32xi32> to vector<64x32xf32>
    %cst_14 = arith.constant 1.000000e+00 : f32
    %25 = vector.broadcast %cst_14 : f32 to vector<64x32xf32>
    %26 = arith.subf %25, %24 : vector<64x32xf32>
    %27 = arith.mulf %20, %26 : vector<64x32xf32>
    %c0_15 = arith.constant 0 : index
    %c0_16 = arith.constant 0 : index
    %28 = vector.load %arg6[%c0_15, %c0_16] : memref<64x32xf32, #tpu.memory_space<vmem>>, vector<64x32xf32>
    tpu.vector_store %arg6[%c0_15, %c0_16], %27 {strides = array<i32>} : memref<64x32xf32, #tpu.memory_space<vmem>>, vector<64x32xf32>,
    %29 = arith.truncf %24 : vector<64x32xf32> to vector<64x32xbf16>
    %c0_17 = arith.constant 0 : index
    %c0_18 = arith.constant 0 : index
    %30 = vector.load %arg4[%c0_17, %c0_18] : memref<32x32xbf16, #tpu.memory_space<vmem>>, vector<32x32xbf16>
    %cst_19 = arith.constant dense<0.000000e+00> : vector<64x32xf32>
    %31 = tpu.matmul %29, %30, %cst_19 {dimension_numbers = #tpu.dot_dimension_numbers<[1], [0], [0], [1], [0, 0, 1, 1], [], []>} : vector<64x32xbf16>, vector<32x32xbf16>, vector<64x32xf32> -> vector<64x32xf32>
    %c0_20 = arith.constant 0 : index
    %c0_21 = arith.constant 0 : index
    %c0_22 = arith.constant 0 : index
    %c0_23 = arith.constant 0 : index
    %32 = vector.load %arg5[%c0_20, %c0_21, %c0_22, %c0_23] : memref<1x1x64x32xf32, #tpu.memory_space<vmem>>, vector<1x1x64x32xf32>
    %33 = vector.shape_cast %32 : vector<1x1x64x32xf32> to vector<64x32xf32>
    %34 = vector.shape_cast %31 : vector<64x32xf32> to vector<1x1x64x32xf32>
    tpu.vector_store %arg5[%c0_20, %c0_21, %c0_22, %c0_23], %34 {strides = array<i32>} : memref<1x1x64x32xf32, #tpu.memory_space<vmem>>, vector<1x1x64x32xf32>,
    return
  }
  func.func @transform_0(%arg0: i32, %arg1: i32) -> (i32, i32, i32, i32) {
    %c0_i32 = arith.constant 0 : i32
    %c0_i32_0 = arith.constant 0 : i32
    %c0_i32_1 = arith.constant 0 : i32
    return %arg1, %arg0, %c0_i32, %c0_i32_0 : i32, i32, i32, i32
  }
  func.func @transform_1(%arg0: i32, %arg1: i32) -> (i32, i32) {
    %c0_i32 = arith.constant 0 : i32
    %c0_i32_0 = arith.constant 0 : i32
    %c0_i32_1 = arith.constant 0 : i32
    return %c0_i32, %c0_i32_0 : i32, i32
  }
  func.func @transform_2(%arg0: i32, %arg1: i32) -> (i32, i32) {
    %c0_i32 = arith.constant 0 : i32
    %c0_i32_0 = arith.constant 0 : i32
    %c0_i32_1 = arith.constant 0 : i32
    return %c0_i32, %c0_i32_0 : i32, i32
  }
  func.func @transform_3(%arg0: i32, %arg1: i32) -> (i32, i32, i32, i32) {
    %c0_i32 = arith.constant 0 : i32
    %c0_i32_0 = arith.constant 0 : i32
    %c0_i32_1 = arith.constant 0 : i32
    return %arg1, %arg0, %c0_i32, %c0_i32_0 : i32, i32, i32, i32
  }
}

module attributes {stable_mosaic.version = 11 : i64} {
  func.func @_mm_bias_res_kernel(%arg0: i32, %arg1: memref<256x32xbf16, #tpu.memory_space<vmem>>, %arg2: memref<32x32xbf16, #tpu.memory_space<vmem>>, %arg3: memref<1x32xf32, #tpu.memory_space<vmem>>, %arg4: memref<256x32xf32, #tpu.memory_space<vmem>>, %arg5: memref<256x32xf32, #tpu.memory_space<vmem>>) attributes {dimension_semantics = [#tpu.dimension_semantics<parallel>], iteration_bounds = array<i64: 1>, scalar_prefetch = 0 : i64, scratch_operands = 0 : i64, tpu.core_type = #tpu.core_type<tc>, window_params = [{transform_indices = @transform_0, window_bounds = array<i64: 256, 32>}, {pipeline_mode = #tpu.pipeline_mode<synchronous>, transform_indices = @transform_1, window_bounds = array<i64: 32, 32>}, {pipeline_mode = #tpu.pipeline_mode<synchronous>, transform_indices = @transform_2, window_bounds = array<i64: 1, 32>}, {transform_indices = @transform_3, window_bounds = array<i64: 256, 32>}, {transform_indices = @transform_4, window_bounds = array<i64: 256, 32>}]} {
    %c0 = arith.constant 0 : index
    %c0_0 = arith.constant 0 : index
    %0 = vector.load %arg1[%c0, %c0_0] : memref<256x32xbf16, #tpu.memory_space<vmem>>, vector<256x32xbf16>
    %c0_1 = arith.constant 0 : index
    %c0_2 = arith.constant 0 : index
    %1 = vector.load %arg2[%c0_1, %c0_2] : memref<32x32xbf16, #tpu.memory_space<vmem>>, vector<32x32xbf16>
    %cst = arith.constant dense<0.000000e+00> : vector<256x32xf32>
    %2 = tpu.matmul %0, %1, %cst {dimension_numbers = #tpu.dot_dimension_numbers<[1], [0], [0], [1], [0, 0, 1, 1], [], []>} : vector<256x32xbf16>, vector<32x32xbf16>, vector<256x32xf32> -> vector<256x32xf32>
    %c0_3 = arith.constant 0 : index
    %c0_4 = arith.constant 0 : index
    %3 = vector.load %arg3[%c0_3, %c0_4] : memref<1x32xf32, #tpu.memory_space<vmem>>, vector<1x32xf32>
    %4 = vector.broadcast %3 : vector<1x32xf32> to vector<256x32xf32>
    %5 = arith.addf %2, %4 : vector<256x32xf32>
    %c0_5 = arith.constant 0 : index
    %c0_6 = arith.constant 0 : index
    %6 = vector.load %arg4[%c0_5, %c0_6] : memref<256x32xf32, #tpu.memory_space<vmem>>, vector<256x32xf32>
    %7 = arith.addf %5, %6 : vector<256x32xf32>
    %c0_7 = arith.constant 0 : index
    %c0_8 = arith.constant 0 : index
    %8 = vector.load %arg5[%c0_7, %c0_8] : memref<256x32xf32, #tpu.memory_space<vmem>>, vector<256x32xf32>
    tpu.vector_store %arg5[%c0_7, %c0_8], %7 {strides = array<i32>} : memref<256x32xf32, #tpu.memory_space<vmem>>, vector<256x32xf32>,
    return
  }
  func.func @transform_0(%arg0: i32) -> (i32, i32) {
    %c0_i32 = arith.constant 0 : i32
    %c0_i32_0 = arith.constant 0 : i32
    return %arg0, %c0_i32 : i32, i32
  }
  func.func @transform_1(%arg0: i32) -> (i32, i32) {
    %c0_i32 = arith.constant 0 : i32
    %c0_i32_0 = arith.constant 0 : i32
    %c0_i32_1 = arith.constant 0 : i32
    return %c0_i32, %c0_i32_0 : i32, i32
  }
  func.func @transform_2(%arg0: i32) -> (i32, i32) {
    %c0_i32 = arith.constant 0 : i32
    %c0_i32_0 = arith.constant 0 : i32
    %c0_i32_1 = arith.constant 0 : i32
    return %c0_i32, %c0_i32_0 : i32, i32
  }
  func.func @transform_3(%arg0: i32) -> (i32, i32) {
    %c0_i32 = arith.constant 0 : i32
    %c0_i32_0 = arith.constant 0 : i32
    return %arg0, %c0_i32 : i32, i32
  }
  func.func @transform_4(%arg0: i32) -> (i32, i32) {
    %c0_i32 = arith.constant 0 : i32
    %c0_i32_0 = arith.constant 0 : i32
    return %arg0, %c0_i32 : i32, i32
  }
}

module attributes {stable_mosaic.version = 11 : i64} {
  func.func @_dwconv3x3_kernel(%arg0: i32, %arg1: memref<4x8x8x32xf32, #tpu.memory_space<vmem>>, %arg2: memref<3x3x32xf32, #tpu.memory_space<vmem>>, %arg3: memref<4x8x8x32xbf16, #tpu.memory_space<vmem>>, %arg4: memref<4x10x10x32xf32, #tpu.memory_space<vmem>>) attributes {dimension_semantics = [#tpu.dimension_semantics<parallel>], iteration_bounds = array<i64: 1>, scalar_prefetch = 0 : i64, scratch_operands = 1 : i64, tpu.core_type = #tpu.core_type<tc>, window_params = [{transform_indices = @transform_0, window_bounds = array<i64: 4, 8, 8, 32>}, {pipeline_mode = #tpu.pipeline_mode<synchronous>, transform_indices = @transform_1, window_bounds = array<i64: 3, 3, 32>}, {transform_indices = @transform_2, window_bounds = array<i64: 4, 8, 8, 32>}]} {
    %cst = arith.constant 0.000000e+00 : f32
    %0 = vector.broadcast %cst : f32 to vector<4x10x10x32xf32>
    %c0 = arith.constant 0 : index
    %c0_0 = arith.constant 0 : index
    %c0_1 = arith.constant 0 : index
    %c0_2 = arith.constant 0 : index
    %1 = vector.load %arg4[%c0, %c0_0, %c0_1, %c0_2] : memref<4x10x10x32xf32, #tpu.memory_space<vmem>>, vector<4x10x10x32xf32>
    tpu.vector_store %arg4[%c0, %c0_0, %c0_1, %c0_2], %0 {strides = array<i32>} : memref<4x10x10x32xf32, #tpu.memory_space<vmem>>, vector<4x10x10x32xf32>,
    %c0_3 = arith.constant 0 : index
    %c0_4 = arith.constant 0 : index
    %c0_5 = arith.constant 0 : index
    %c0_6 = arith.constant 0 : index
    %2 = vector.load %arg1[%c0_3, %c0_4, %c0_5, %c0_6] : memref<4x8x8x32xf32, #tpu.memory_space<vmem>>, vector<4x8x8x32xf32>
    %c0_7 = arith.constant 0 : index
    %c1 = arith.constant 1 : index
    %c1_8 = arith.constant 1 : index
    %c0_9 = arith.constant 0 : index
    %3 = vector.load %arg4[%c0_7, %c1, %c1_8, %c0_9] : memref<4x10x10x32xf32, #tpu.memory_space<vmem>>, vector<4x8x8x32xf32>
    tpu.vector_store %arg4[%c0_7, %c1, %c1_8, %c0_9], %2 {strides = array<i32>} : memref<4x10x10x32xf32, #tpu.memory_space<vmem>>, vector<4x8x8x32xf32>,
    %cst_10 = arith.constant 0.000000e+00 : f32
    %4 = vector.broadcast %cst_10 : f32 to vector<4x8x8x32xf32>
    %c0_11 = arith.constant 0 : index
    %c0_12 = arith.constant 0 : index
    %c0_13 = arith.constant 0 : index
    %5 = vector.load %arg2[%c0_11, %c0_12, %c0_13] : memref<3x3x32xf32, #tpu.memory_space<vmem>>, vector<1x1x32xf32>
    %6 = vector.shape_cast %5 : vector<1x1x32xf32> to vector<32xf32>
    %7 = vector.shape_cast %6 : vector<32xf32> to vector<1x1x1x32xf32>
    %c0_14 = arith.constant 0 : index
    %c0_15 = arith.constant 0 : index
    %c0_16 = arith.constant 0 : index
    %c0_17 = arith.constant 0 : index
    %8 = vector.load %arg4[%c0_14, %c0_15, %c0_16, %c0_17] : memref<4x10x10x32xf32, #tpu.memory_space<vmem>>, vector<4x8x8x32xf32>
    %9 = vector.broadcast %7 : vector<1x1x1x32xf32> to vector<4x8x8x32xf32>
    %10 = arith.mulf %8, %9 : vector<4x8x8x32xf32>
    %11 = arith.addf %4, %10 : vector<4x8x8x32xf32>
    %c0_18 = arith.constant 0 : index
    %c1_19 = arith.constant 1 : index
    %c0_20 = arith.constant 0 : index
    %12 = vector.load %arg2[%c0_18, %c1_19, %c0_20] : memref<3x3x32xf32, #tpu.memory_space<vmem>>, vector<1x1x32xf32>
    %13 = vector.shape_cast %12 : vector<1x1x32xf32> to vector<32xf32>
    %14 = vector.shape_cast %13 : vector<32xf32> to vector<1x1x1x32xf32>
    %c0_21 = arith.constant 0 : index
    %c0_22 = arith.constant 0 : index
    %c1_23 = arith.constant 1 : index
    %c0_24 = arith.constant 0 : index
    %15 = vector.load %arg4[%c0_21, %c0_22, %c1_23, %c0_24] : memref<4x10x10x32xf32, #tpu.memory_space<vmem>>, vector<4x8x8x32xf32>
    %16 = vector.broadcast %14 : vector<1x1x1x32xf32> to vector<4x8x8x32xf32>
    %17 = arith.mulf %15, %16 : vector<4x8x8x32xf32>
    %18 = arith.addf %11, %17 : vector<4x8x8x32xf32>
    %c0_25 = arith.constant 0 : index
    %c2 = arith.constant 2 : index
    %c0_26 = arith.constant 0 : index
    %19 = vector.load %arg2[%c0_25, %c2, %c0_26] : memref<3x3x32xf32, #tpu.memory_space<vmem>>, vector<1x1x32xf32>
    %20 = vector.shape_cast %19 : vector<1x1x32xf32> to vector<32xf32>
    %21 = vector.shape_cast %20 : vector<32xf32> to vector<1x1x1x32xf32>
    %c0_27 = arith.constant 0 : index
    %c0_28 = arith.constant 0 : index
    %c2_29 = arith.constant 2 : index
    %c0_30 = arith.constant 0 : index
    %22 = vector.load %arg4[%c0_27, %c0_28, %c2_29, %c0_30] : memref<4x10x10x32xf32, #tpu.memory_space<vmem>>, vector<4x8x8x32xf32>
    %23 = vector.broadcast %21 : vector<1x1x1x32xf32> to vector<4x8x8x32xf32>
    %24 = arith.mulf %22, %23 : vector<4x8x8x32xf32>
    %25 = arith.addf %18, %24 : vector<4x8x8x32xf32>
    %c1_31 = arith.constant 1 : index
    %c0_32 = arith.constant 0 : index
    %c0_33 = arith.constant 0 : index
    %26 = vector.load %arg2[%c1_31, %c0_32, %c0_33] : memref<3x3x32xf32, #tpu.memory_space<vmem>>, vector<1x1x32xf32>
    %27 = vector.shape_cast %26 : vector<1x1x32xf32> to vector<32xf32>
    %28 = vector.shape_cast %27 : vector<32xf32> to vector<1x1x1x32xf32>
    %c0_34 = arith.constant 0 : index
    %c1_35 = arith.constant 1 : index
    %c0_36 = arith.constant 0 : index
    %c0_37 = arith.constant 0 : index
    %29 = vector.load %arg4[%c0_34, %c1_35, %c0_36, %c0_37] : memref<4x10x10x32xf32, #tpu.memory_space<vmem>>, vector<4x8x8x32xf32>
    %30 = vector.broadcast %28 : vector<1x1x1x32xf32> to vector<4x8x8x32xf32>
    %31 = arith.mulf %29, %30 : vector<4x8x8x32xf32>
    %32 = arith.addf %25, %31 : vector<4x8x8x32xf32>
    %c1_38 = arith.constant 1 : index
    %c1_39 = arith.constant 1 : index
    %c0_40 = arith.constant 0 : index
    %33 = vector.load %arg2[%c1_38, %c1_39, %c0_40] : memref<3x3x32xf32, #tpu.memory_space<vmem>>, vector<1x1x32xf32>
    %34 = vector.shape_cast %33 : vector<1x1x32xf32> to vector<32xf32>
    %35 = vector.shape_cast %34 : vector<32xf32> to vector<1x1x1x32xf32>
    %c0_41 = arith.constant 0 : index
    %c1_42 = arith.constant 1 : index
    %c1_43 = arith.constant 1 : index
    %c0_44 = arith.constant 0 : index
    %36 = vector.load %arg4[%c0_41, %c1_42, %c1_43, %c0_44] : memref<4x10x10x32xf32, #tpu.memory_space<vmem>>, vector<4x8x8x32xf32>
    %37 = vector.broadcast %35 : vector<1x1x1x32xf32> to vector<4x8x8x32xf32>
    %38 = arith.mulf %36, %37 : vector<4x8x8x32xf32>
    %39 = arith.addf %32, %38 : vector<4x8x8x32xf32>
    %c1_45 = arith.constant 1 : index
    %c2_46 = arith.constant 2 : index
    %c0_47 = arith.constant 0 : index
    %40 = vector.load %arg2[%c1_45, %c2_46, %c0_47] : memref<3x3x32xf32, #tpu.memory_space<vmem>>, vector<1x1x32xf32>
    %41 = vector.shape_cast %40 : vector<1x1x32xf32> to vector<32xf32>
    %42 = vector.shape_cast %41 : vector<32xf32> to vector<1x1x1x32xf32>
    %c0_48 = arith.constant 0 : index
    %c1_49 = arith.constant 1 : index
    %c2_50 = arith.constant 2 : index
    %c0_51 = arith.constant 0 : index
    %43 = vector.load %arg4[%c0_48, %c1_49, %c2_50, %c0_51] : memref<4x10x10x32xf32, #tpu.memory_space<vmem>>, vector<4x8x8x32xf32>
    %44 = vector.broadcast %42 : vector<1x1x1x32xf32> to vector<4x8x8x32xf32>
    %45 = arith.mulf %43, %44 : vector<4x8x8x32xf32>
    %46 = arith.addf %39, %45 : vector<4x8x8x32xf32>
    %c2_52 = arith.constant 2 : index
    %c0_53 = arith.constant 0 : index
    %c0_54 = arith.constant 0 : index
    %47 = vector.load %arg2[%c2_52, %c0_53, %c0_54] : memref<3x3x32xf32, #tpu.memory_space<vmem>>, vector<1x1x32xf32>
    %48 = vector.shape_cast %47 : vector<1x1x32xf32> to vector<32xf32>
    %49 = vector.shape_cast %48 : vector<32xf32> to vector<1x1x1x32xf32>
    %c0_55 = arith.constant 0 : index
    %c2_56 = arith.constant 2 : index
    %c0_57 = arith.constant 0 : index
    %c0_58 = arith.constant 0 : index
    %50 = vector.load %arg4[%c0_55, %c2_56, %c0_57, %c0_58] : memref<4x10x10x32xf32, #tpu.memory_space<vmem>>, vector<4x8x8x32xf32>
    %51 = vector.broadcast %49 : vector<1x1x1x32xf32> to vector<4x8x8x32xf32>
    %52 = arith.mulf %50, %51 : vector<4x8x8x32xf32>
    %53 = arith.addf %46, %52 : vector<4x8x8x32xf32>
    %c2_59 = arith.constant 2 : index
    %c1_60 = arith.constant 1 : index
    %c0_61 = arith.constant 0 : index
    %54 = vector.load %arg2[%c2_59, %c1_60, %c0_61] : memref<3x3x32xf32, #tpu.memory_space<vmem>>, vector<1x1x32xf32>
    %55 = vector.shape_cast %54 : vector<1x1x32xf32> to vector<32xf32>
    %56 = vector.shape_cast %55 : vector<32xf32> to vector<1x1x1x32xf32>
    %c0_62 = arith.constant 0 : index
    %c2_63 = arith.constant 2 : index
    %c1_64 = arith.constant 1 : index
    %c0_65 = arith.constant 0 : index
    %57 = vector.load %arg4[%c0_62, %c2_63, %c1_64, %c0_65] : memref<4x10x10x32xf32, #tpu.memory_space<vmem>>, vector<4x8x8x32xf32>
    %58 = vector.broadcast %56 : vector<1x1x1x32xf32> to vector<4x8x8x32xf32>
    %59 = arith.mulf %57, %58 : vector<4x8x8x32xf32>
    %60 = arith.addf %53, %59 : vector<4x8x8x32xf32>
    %c2_66 = arith.constant 2 : index
    %c2_67 = arith.constant 2 : index
    %c0_68 = arith.constant 0 : index
    %61 = vector.load %arg2[%c2_66, %c2_67, %c0_68] : memref<3x3x32xf32, #tpu.memory_space<vmem>>, vector<1x1x32xf32>
    %62 = vector.shape_cast %61 : vector<1x1x32xf32> to vector<32xf32>
    %63 = vector.shape_cast %62 : vector<32xf32> to vector<1x1x1x32xf32>
    %c0_69 = arith.constant 0 : index
    %c2_70 = arith.constant 2 : index
    %c2_71 = arith.constant 2 : index
    %c0_72 = arith.constant 0 : index
    %64 = vector.load %arg4[%c0_69, %c2_70, %c2_71, %c0_72] : memref<4x10x10x32xf32, #tpu.memory_space<vmem>>, vector<4x8x8x32xf32>
    %65 = vector.broadcast %63 : vector<1x1x1x32xf32> to vector<4x8x8x32xf32>
    %66 = arith.mulf %64, %65 : vector<4x8x8x32xf32>
    %67 = arith.addf %60, %66 : vector<4x8x8x32xf32>
    %68 = arith.truncf %67 : vector<4x8x8x32xf32> to vector<4x8x8x32xbf16>
    %c0_73 = arith.constant 0 : index
    %c0_74 = arith.constant 0 : index
    %c0_75 = arith.constant 0 : index
    %c0_76 = arith.constant 0 : index
    %69 = vector.load %arg3[%c0_73, %c0_74, %c0_75, %c0_76] : memref<4x8x8x32xbf16, #tpu.memory_space<vmem>>, vector<4x8x8x32xbf16>
    tpu.vector_store %arg3[%c0_73, %c0_74, %c0_75, %c0_76], %68 {strides = array<i32>} : memref<4x8x8x32xbf16, #tpu.memory_space<vmem>>, vector<4x8x8x32xbf16>,
    return
  }
  func.func @transform_0(%arg0: i32) -> (i32, i32, i32, i32) {
    %c0_i32 = arith.constant 0 : i32
    %c0_i32_0 = arith.constant 0 : i32
    %c0_i32_1 = arith.constant 0 : i32
    %c0_i32_2 = arith.constant 0 : i32
    return %arg0, %c0_i32, %c0_i32_0, %c0_i32_1 : i32, i32, i32, i32
  }
  func.func @transform_1(%arg0: i32) -> (i32, i32, i32) {
    %c0_i32 = arith.constant 0 : i32
    %c0_i32_0 = arith.constant 0 : i32
    %c0_i32_1 = arith.constant 0 : i32
    %c0_i32_2 = arith.constant 0 : i32
    return %c0_i32, %c0_i32_0, %c0_i32_1 : i32, i32, i32
  }
  func.func @transform_2(%arg0: i32) -> (i32, i32, i32, i32) {
    %c0_i32 = arith.constant 0 : i32
    %c0_i32_0 = arith.constant 0 : i32
    %c0_i32_1 = arith.constant 0 : i32
    %c0_i32_2 = arith.constant 0 : i32
    return %arg0, %c0_i32, %c0_i32_0, %c0_i32_1 : i32, i32, i32, i32
  }
}

module attributes {stable_mosaic.version = 11 : i64} {
  func.func @_seq_mm_kernel(%arg0: i32, %arg1: i32, %arg2: memref<1x128x32xf32, #tpu.memory_space<vmem>>, %arg3: memref<32x128xbf16, #tpu.memory_space<vmem>>, %arg4: memref<1x128xf32, #tpu.memory_space<vmem>>, %arg5: memref<1x128x128xbf16, #tpu.memory_space<vmem>>, %arg6: memref<128x32xf32, #tpu.memory_space<vmem>>, %arg7: memref<128x128xf32, #tpu.memory_space<vmem>>) attributes {dimension_semantics = [#tpu.dimension_semantics<parallel>, #tpu.dimension_semantics<arbitrary>], iteration_bounds = array<i64: 1, 2>, scalar_prefetch = 0 : i64, scratch_operands = 2 : i64, tpu.core_type = #tpu.core_type<tc>, window_params = [{transform_indices = @transform_0, window_bounds = array<i64: 1, 128, 32>}, {pipeline_mode = #tpu.pipeline_mode<synchronous>, transform_indices = @transform_1, window_bounds = array<i64: 32, 128>}, {pipeline_mode = #tpu.pipeline_mode<synchronous>, transform_indices = @transform_2, window_bounds = array<i64: 1, 128>}, {transform_indices = @transform_3, window_bounds = array<i64: 1, 128, 128>}]} {
    %c0_i32 = arith.constant 0 : i32
    %0 = arith.cmpi eq, %arg1, %c0_i32 : i32
    %1 = arith.extui %0 : i1 to i32
    %c0_i32_0 = arith.constant 0 : i32
    %2 = arith.cmpi ne, %1, %c0_i32_0 : i32
    scf.if %2 {
      %cst_28 = arith.constant 0.000000e+00 : f32
      %43 = vector.broadcast %cst_28 : f32 to vector<128x32xf32>
      %c0_29 = arith.constant 0 : index
      %c0_30 = arith.constant 0 : index
      %44 = vector.load %arg6[%c0_29, %c0_30] : memref<128x32xf32, #tpu.memory_space<vmem>>, vector<128x32xf32>
      tpu.vector_store %arg6[%c0_29, %c0_30], %43 {strides = array<i32>} : memref<128x32xf32, #tpu.memory_space<vmem>>, vector<128x32xf32>,
      %cst_31 = arith.constant 0.000000e+00 : f32
      %45 = vector.broadcast %cst_31 : f32 to vector<128x128xf32>
      %c0_32 = arith.constant 0 : index
      %c0_33 = arith.constant 0 : index
      %46 = vector.load %arg7[%c0_32, %c0_33] : memref<128x128xf32, #tpu.memory_space<vmem>>, vector<128x128xf32>
      tpu.vector_store %arg7[%c0_32, %c0_33], %45 {strides = array<i32>} : memref<128x128xf32, #tpu.memory_space<vmem>>, vector<128x128xf32>,
    } else {
    }
    %c0 = arith.constant 0 : index
    %c0_1 = arith.constant 0 : index
    %c0_2 = arith.constant 0 : index
    %3 = vector.load %arg2[%c0, %c0_1, %c0_2] : memref<1x128x32xf32, #tpu.memory_space<vmem>>, vector<1x128x32xf32>
    %4 = vector.shape_cast %3 : vector<1x128x32xf32> to vector<128x32xf32>
    %c0_3 = arith.constant 0 : index
    %c0_4 = arith.constant 0 : index
    %5 = vector.load %arg6[%c0_3, %c0_4] : memref<128x32xf32, #tpu.memory_space<vmem>>, vector<128x32xf32>
    %c0_5 = arith.constant 0 : index
    %c0_6 = arith.constant 0 : index
    %6 = vector.load %arg6[%c0_5, %c0_6] : memref<128x32xf32, #tpu.memory_space<vmem>>, vector<128x32xf32>
    %7 = arith.subf %4, %6 : vector<128x32xf32>
    %cst = arith.constant 5.000000e-01 : f32
    %8 = vector.broadcast %cst : f32 to vector<128x32xf32>
    %9 = arith.mulf %7, %8 : vector<128x32xf32>
    %10 = arith.addf %5, %9 : vector<128x32xf32>
    %cst_7 = arith.constant 1.000000e+00 : f32
    %11 = vector.broadcast %cst_7 : f32 to vector<128x32xf32>
    %12 = arith.cmpf oge, %10, %11 : vector<128x32xf32>
    %13 = arith.extui %12 : vector<128x32xi1> to vector<128x32xi32>
    %14 = arith.sitofp %13 : vector<128x32xi32> to vector<128x32xf32>
    %cst_8 = arith.constant 1.000000e+00 : f32
    %15 = vector.broadcast %cst_8 : f32 to vector<128x32xf32>
    %16 = arith.subf %15, %14 : vector<128x32xf32>
    %17 = arith.mulf %10, %16 : vector<128x32xf32>
    %c0_9 = arith.constant 0 : index
    %c0_10 = arith.constant 0 : index
    %18 = vector.load %arg6[%c0_9, %c0_10] : memref<128x32xf32, #tpu.memory_space<vmem>>, vector<128x32xf32>
    tpu.vector_store %arg6[%c0_9, %c0_10], %17 {strides = array<i32>} : memref<128x32xf32, #tpu.memory_space<vmem>>, vector<128x32xf32>,
    %19 = arith.truncf %14 : vector<128x32xf32> to vector<128x32xbf16>
    %c0_11 = arith.constant 0 : index
    %c0_12 = arith.constant 0 : index
    %20 = vector.load %arg3[%c0_11, %c0_12] : memref<32x128xbf16, #tpu.memory_space<vmem>>, vector<32x128xbf16>
    %cst_13 = arith.constant dense<0.000000e+00> : vector<128x128xf32>
    %21 = tpu.matmul %19, %20, %cst_13 {dimension_numbers = #tpu.dot_dimension_numbers<[1], [0], [0], [1], [0, 0, 1, 1], [], []>} : vector<128x32xbf16>, vector<32x128xbf16>, vector<128x128xf32> -> vector<128x128xf32>
    %c0_14 = arith.constant 0 : index
    %c0_15 = arith.constant 0 : index
    %22 = vector.load %arg4[%c0_14, %c0_15] : memref<1x128xf32, #tpu.memory_space<vmem>>, vector<1x128xf32>
    %23 = vector.broadcast %22 : vector<1x128xf32> to vector<128x128xf32>
    %24 = arith.addf %21, %23 : vector<128x128xf32>
    %c0_16 = arith.constant 0 : index
    %c0_17 = arith.constant 0 : index
    %25 = vector.load %arg7[%c0_16, %c0_17] : memref<128x128xf32, #tpu.memory_space<vmem>>, vector<128x128xf32>
    %c0_18 = arith.constant 0 : index
    %c0_19 = arith.constant 0 : index
    %26 = vector.load %arg7[%c0_18, %c0_19] : memref<128x128xf32, #tpu.memory_space<vmem>>, vector<128x128xf32>
    %27 = arith.subf %24, %26 : vector<128x128xf32>
    %cst_20 = arith.constant 5.000000e-01 : f32
    %28 = vector.broadcast %cst_20 : f32 to vector<128x128xf32>
    %29 = arith.mulf %27, %28 : vector<128x128xf32>
    %30 = arith.addf %25, %29 : vector<128x128xf32>
    %cst_21 = arith.constant 1.000000e+00 : f32
    %31 = vector.broadcast %cst_21 : f32 to vector<128x128xf32>
    %32 = arith.cmpf oge, %30, %31 : vector<128x128xf32>
    %33 = arith.extui %32 : vector<128x128xi1> to vector<128x128xi32>
    %34 = arith.sitofp %33 : vector<128x128xi32> to vector<128x128xf32>
    %cst_22 = arith.constant 1.000000e+00 : f32
    %35 = vector.broadcast %cst_22 : f32 to vector<128x128xf32>
    %36 = arith.subf %35, %34 : vector<128x128xf32>
    %37 = arith.mulf %30, %36 : vector<128x128xf32>
    %c0_23 = arith.constant 0 : index
    %c0_24 = arith.constant 0 : index
    %38 = vector.load %arg7[%c0_23, %c0_24] : memref<128x128xf32, #tpu.memory_space<vmem>>, vector<128x128xf32>
    tpu.vector_store %arg7[%c0_23, %c0_24], %37 {strides = array<i32>} : memref<128x128xf32, #tpu.memory_space<vmem>>, vector<128x128xf32>,
    %39 = arith.truncf %34 : vector<128x128xf32> to vector<128x128xbf16>
    %c0_25 = arith.constant 0 : index
    %c0_26 = arith.constant 0 : index
    %c0_27 = arith.constant 0 : index
    %40 = vector.load %arg5[%c0_25, %c0_26, %c0_27] : memref<1x128x128xbf16, #tpu.memory_space<vmem>>, vector<1x128x128xbf16>
    %41 = vector.shape_cast %40 : vector<1x128x128xbf16> to vector<128x128xbf16>
    %42 = vector.shape_cast %39 : vector<128x128xbf16> to vector<1x128x128xbf16>
    tpu.vector_store %arg5[%c0_25, %c0_26, %c0_27], %42 {strides = array<i32>} : memref<1x128x128xbf16, #tpu.memory_space<vmem>>, vector<1x128x128xbf16>,
    return
  }
  func.func @transform_0(%arg0: i32, %arg1: i32) -> (i32, i32, i32) {
    %c0_i32 = arith.constant 0 : i32
    %c0_i32_0 = arith.constant 0 : i32
    return %arg1, %arg0, %c0_i32 : i32, i32, i32
  }
  func.func @transform_1(%arg0: i32, %arg1: i32) -> (i32, i32) {
    %c0_i32 = arith.constant 0 : i32
    %c0_i32_0 = arith.constant 0 : i32
    %c0_i32_1 = arith.constant 0 : i32
    return %c0_i32, %c0_i32_0 : i32, i32
  }
  func.func @transform_2(%arg0: i32, %arg1: i32) -> (i32, i32) {
    %c0_i32 = arith.constant 0 : i32
    %c0_i32_0 = arith.constant 0 : i32
    %c0_i32_1 = arith.constant 0 : i32
    return %c0_i32, %c0_i32_0 : i32, i32
  }
  func.func @transform_3(%arg0: i32, %arg1: i32) -> (i32, i32, i32) {
    %c0_i32 = arith.constant 0 : i32
    %c0_i32_0 = arith.constant 0 : i32
    return %arg1, %arg0, %c0_i32 : i32, i32, i32
  }
}

module attributes {stable_mosaic.version = 11 : i64} {
  func.func @_mm_bias_res_kernel(%arg0: i32, %arg1: memref<256x128xbf16, #tpu.memory_space<vmem>>, %arg2: memref<128x32xbf16, #tpu.memory_space<vmem>>, %arg3: memref<1x32xf32, #tpu.memory_space<vmem>>, %arg4: memref<256x32xf32, #tpu.memory_space<vmem>>, %arg5: memref<256x32xf32, #tpu.memory_space<vmem>>) attributes {dimension_semantics = [#tpu.dimension_semantics<parallel>], iteration_bounds = array<i64: 1>, scalar_prefetch = 0 : i64, scratch_operands = 0 : i64, tpu.core_type = #tpu.core_type<tc>, window_params = [{transform_indices = @transform_0, window_bounds = array<i64: 256, 128>}, {pipeline_mode = #tpu.pipeline_mode<synchronous>, transform_indices = @transform_1, window_bounds = array<i64: 128, 32>}, {pipeline_mode = #tpu.pipeline_mode<synchronous>, transform_indices = @transform_2, window_bounds = array<i64: 1, 32>}, {transform_indices = @transform_3, window_bounds = array<i64: 256, 32>}, {transform_indices = @transform_4, window_bounds = array<i64: 256, 32>}]} {
    %c0 = arith.constant 0 : index
    %c0_0 = arith.constant 0 : index
    %0 = vector.load %arg1[%c0, %c0_0] : memref<256x128xbf16, #tpu.memory_space<vmem>>, vector<256x128xbf16>
    %c0_1 = arith.constant 0 : index
    %c0_2 = arith.constant 0 : index
    %1 = vector.load %arg2[%c0_1, %c0_2] : memref<128x32xbf16, #tpu.memory_space<vmem>>, vector<128x32xbf16>
    %cst = arith.constant dense<0.000000e+00> : vector<256x32xf32>
    %2 = tpu.matmul %0, %1, %cst {dimension_numbers = #tpu.dot_dimension_numbers<[1], [0], [0], [1], [0, 0, 1, 1], [], []>} : vector<256x128xbf16>, vector<128x32xbf16>, vector<256x32xf32> -> vector<256x32xf32>
    %c0_3 = arith.constant 0 : index
    %c0_4 = arith.constant 0 : index
    %3 = vector.load %arg3[%c0_3, %c0_4] : memref<1x32xf32, #tpu.memory_space<vmem>>, vector<1x32xf32>
    %4 = vector.broadcast %3 : vector<1x32xf32> to vector<256x32xf32>
    %5 = arith.addf %2, %4 : vector<256x32xf32>
    %c0_5 = arith.constant 0 : index
    %c0_6 = arith.constant 0 : index
    %6 = vector.load %arg4[%c0_5, %c0_6] : memref<256x32xf32, #tpu.memory_space<vmem>>, vector<256x32xf32>
    %7 = arith.addf %5, %6 : vector<256x32xf32>
    %c0_7 = arith.constant 0 : index
    %c0_8 = arith.constant 0 : index
    %8 = vector.load %arg5[%c0_7, %c0_8] : memref<256x32xf32, #tpu.memory_space<vmem>>, vector<256x32xf32>
    tpu.vector_store %arg5[%c0_7, %c0_8], %7 {strides = array<i32>} : memref<256x32xf32, #tpu.memory_space<vmem>>, vector<256x32xf32>,
    return
  }
  func.func @transform_0(%arg0: i32) -> (i32, i32) {
    %c0_i32 = arith.constant 0 : i32
    %c0_i32_0 = arith.constant 0 : i32
    return %arg0, %c0_i32 : i32, i32
  }
  func.func @transform_1(%arg0: i32) -> (i32, i32) {
    %c0_i32 = arith.constant 0 : i32
    %c0_i32_0 = arith.constant 0 : i32
    %c0_i32_1 = arith.constant 0 : i32
    return %c0_i32, %c0_i32_0 : i32, i32
  }
  func.func @transform_2(%arg0: i32) -> (i32, i32) {
    %c0_i32 = arith.constant 0 : i32
    %c0_i32_0 = arith.constant 0 : i32
    %c0_i32_1 = arith.constant 0 : i32
    return %c0_i32, %c0_i32_0 : i32, i32
  }
  func.func @transform_3(%arg0: i32) -> (i32, i32) {
    %c0_i32 = arith.constant 0 : i32
    %c0_i32_0 = arith.constant 0 : i32
    return %arg0, %c0_i32 : i32, i32
  }
  func.func @transform_4(%arg0: i32) -> (i32, i32) {
    %c0_i32 = arith.constant 0 : i32
    %c0_i32_0 = arith.constant 0 : i32
    return %arg0, %c0_i32 : i32, i32
  }
}

</mosaic_0001>

<llo_original>
// kernel: ms_block.8
$region0: #{ms_block.8}
  #allocation0 [shape = 'u32[]', space=smem, size = 0x4, offset = 0x4, fixed_abs, tag = 'smem constant byte address 0x4 - core index']
  #allocation1 [shape = 'u32[144,128]{1,0:T(1,128)}', space=vmem, size = 0x12000, scoped, tag = 'internal scratch']
  #allocation2 [shape = 'f32[128,32]{1,0:T(8,128)}', space=vmem, size = 0x10000, scoped, tag = 'scratch operand']
  %s0 = inlined_call_operand.vmem [shape: f32[2,128,32], index: 0, kind: input, shape index: {}]
  %s1 = inlined_call_operand.vmem [shape: bf16[32,96], index: 1, kind: input, shape index: {}]
  %s2 = inlined_call_operand.vmem [shape: f32[1,96], index: 2, kind: input, shape index: {}]
  %s3 = inlined_call_operand.vmem [shape: f32[2,128,96], index: 3, kind: output, shape index: {}]
  %s4 = sld [smem:[#allocation0]]
  $region49: #{ms_block.8} parent=0
    _
  %s6 = ssub.s32 1, %s4
  %s7 = scalar_select 0, %s6, %s4
  loop: start=0, step=1, limit=4
  $region2: #{ms_block.8} parent=0 // loop_pre_header
    _
  $region3: #{ms_block.8} parent=0 // loop_header
    %s9 = sphi 0, %s13
    %p10 = scmp.ge.s32.totalorder %s9, 4
    %s16 = sphi 0, %s28
    %s17 = sphi 0, %s24
    %s18 = sphi 0, %s16
    %s19 = sphi 0, %s17
    %s20 = sphi 0, %s18
    %s21 = sphi 0, %s19
    %s33 = sphi 0, %s35
    %s36 = sphi 0, %s33
    %s37 = sphi 0, %s36
    %s53 = sphi 0, %s37
    %s57 = sphi 0, %s57
    %s59 = sphi 0, %s57
    %s60 = sphi 0, %s59
    %s74 = sphi 0, %s60
    %s78 = sphi 0, %s78
    %s80 = sphi 0, %s78
    %s81 = sphi 0, %s80
    %s95 = sphi 0, %s81
    %s103 = sphi 0, %s105
    %s106 = sphi 0, %s103
    %s107 = sphi 0, %s106
    %s123 = sphi 0, %s107
  $region4: #{ms_block.8} parent=0 // loop_header_branch
    %12 = sbr.rel (%p10) target = $region8
  $region5: #{ms_block.8} parent=0 // loop_body
    %s14 = ssub.s32 %s9, 1
    %s15 = ssub.s32 %s9, 2
    %s22 = sadd.s32 1, %s17
    %p23 = scmp.ge.s32.totalorder %s22, 2
    %s24 = scalar_select %p23, 0, %s22
    %s25 = sadd.s32 1, %s16
    %s26 = scalar_select %p23, %s25, %s16
    %p27 = scmp.ge.s32.totalorder %s26, 1
    %s28 = scalar_select %p27, 0, %s26
    %s29 = ssub.s32 %s17, %s24
    %s30 = ssub.s32 %s16, %s28
    %s31 = sor.u32 %s29, %s30
    %p32 = scmp.eq.s32.totalorder %s31, 0
    %s34 = sadd.s32 %s33, 1
    %s35 = scalar_select %p32, %s33, %s34
    %p38 = pneg %p32
    %p39 = scmp.eq.s32.totalorder %s9, 1
    %p40 = por %p38, %p39
    %p41 = scmp.ne.s32.totalorder %s33, %s36
    %p42 = scmp.eq.s32.totalorder %s9, 0
    %p43 = por %p41, %p42
    %p44 = scmp.ne.s32.totalorder %s33, %s36
    %p45 = scmp.eq.s32.totalorder %s14, 1
    %p46 = por %p44, %p45
    %p47 = scmp.ne.s32.totalorder %s36, %s37
    %p48 = scmp.eq.s32.totalorder %s14, 0
    %p49 = por %p47, %p48
    %p50 = scmp.ne.s32.totalorder %s36, %s37
    %p51 = scmp.eq.s32.totalorder %s15, 1
    %p52 = por %p50, %p51
    %p54 = scmp.ne.s32.totalorder %s37, %s53
    %p55 = scmp.eq.s32.totalorder %s15, 0
    %p56 = por %p54, %p55
    %s58 = sadd.s32 %s57, 1
    %p61 = scmp.eq.s32.totalorder %s9, 1
    %p62 = scmp.ne.s32.totalorder %s57, %s59
    %p63 = scmp.eq.s32.totalorder %s9, 0
    %p64 = por %p62, %p63
    %p65 = scmp.ne.s32.totalorder %s57, %s59
    %p66 = scmp.eq.s32.totalorder %s14, 1
    %p67 = por %p65, %p66
    %p68 = scmp.ne.s32.totalorder %s59, %s60
    %p69 = scmp.eq.s32.totalorder %s14, 0
    %p70 = por %p68, %p69
    %p71 = scmp.ne.s32.totalorder %s59, %s60
    %p72 = scmp.eq.s32.totalorder %s15, 1
    %p73 = por %p71, %p72
    %p75 = scmp.ne.s32.totalorder %s60, %s74
    %p76 = scmp.eq.s32.totalorder %s15, 0
    %p77 = por %p75, %p76
    %s79 = sadd.s32 %s78, 1
    %p82 = scmp.eq.s32.totalorder %s9, 1
    %p83 = scmp.ne.s32.totalorder %s78, %s80
    %p84 = scmp.eq.s32.totalorder %s9, 0
    %p85 = por %p83, %p84
    %p86 = scmp.ne.s32.totalorder %s78, %s80
    %p87 = scmp.eq.s32.totalorder %s14, 1
    %p88 = por %p86, %p87
    %p89 = scmp.ne.s32.totalorder %s80, %s81
    %p90 = scmp.eq.s32.totalorder %s14, 0
    %p91 = por %p89, %p90
    %p92 = scmp.ne.s32.totalorder %s80, %s81
    %p93 = scmp.eq.s32.totalorder %s15, 1
    %p94 = por %p92, %p93
    %p96 = scmp.ne.s32.totalorder %s81, %s95
    %p97 = scmp.eq.s32.totalorder %s15, 0
    %p98 = por %p96, %p97
    %s99 = ssub.s32 %s17, %s24
    %s100 = ssub.s32 %s16, %s28
    %s101 = sor.u32 %s99, %s100
    %p102 = scmp.eq.s32.totalorder %s101, 0
    %s104 = sadd.s32 %s103, 1
    %s105 = scalar_select %p102, %s103, %s104
    %p108 = pneg %p102
    %p109 = scmp.eq.s32.totalorder %s9, 1
    %p110 = por %p108, %p109
    %p111 = scmp.ne.s32.totalorder %s103, %s106
    %p112 = scmp.eq.s32.totalorder %s9, 0
    %p113 = por %p111, %p112
    %p114 = scmp.ne.s32.totalorder %s103, %s106
    %p115 = scmp.eq.s32.totalorder %s14, 1
    %p116 = por %p114, %p115
    %p117 = scmp.ne.s32.totalorder %s106, %s107
    %p118 = scmp.eq.s32.totalorder %s14, 0
    %p119 = por %p117, %p118
    %p120 = scmp.ne.s32.totalorder %s106, %s107
    %p121 = scmp.eq.s32.totalorder %s15, 1
    %p122 = por %p120, %p121
    %p124 = scmp.ne.s32.totalorder %s107, %s123
    %p125 = scmp.eq.s32.totalorder %s15, 0
    %p126 = por %p124, %p125
    %p127 = scmp.le.s32.totalorder 1, %s9
    %p128 = scmp.lt.s32.totalorder %s9, 3
    %p129 = pnand %p127, %p128
    %p130 = pneg %p129
    // Predicated region
    $region9: #{ms_block.8} parent=5 // pred_check
      _
    $region10: #{ms_block.8} parent=5 // pred_check_branch
      %132 = sbr.rel (%p129) target = $region12
    $region11: #{ms_block.8} parent=5 // pred_region
      %s133 = ssub.s32 %s9, 1
      // Predicated region
      $region13: #{ms_block.8} parent=11 // pred_check
        %p134 = pneg %p70
      $region14: #{ms_block.8} parent=11 // pred_check_branch
        %136 = sbr.rel (%p134) target = $region16
      $region15: #{ms_block.8} parent=11 // pred_region
        _
      $region16: #{ms_block.8} parent=11 // pred_fallthru
        _
      // Predicated region
      $region17: #{ms_block.8} parent=11 // pred_check
        %p137 = pneg %p91
      $region18: #{ms_block.8} parent=11 // pred_check_branch
        %139 = sbr.rel (%p137) target = $region20
      $region19: #{ms_block.8} parent=11 // pred_region
        _
      $region20: #{ms_block.8} parent=11 // pred_fallthru
        _
    $region12: #{ms_block.8} parent=5 // pred_fallthru
      _
    %p140 = scmp.lt.s32.totalorder %s9, 2
    // Predicated region
    $region21: #{ms_block.8} parent=5 // pred_check
      %p141 = pneg %p140
    $region22: #{ms_block.8} parent=5 // pred_check_branch
      %143 = sbr.rel (%p141) target = $region24
    $region23: #{ms_block.8} parent=5 // pred_region
      // Predicated region
      $region25: #{ms_block.8} parent=23 // pred_check
        %p144 = pneg %p43
      $region26: #{ms_block.8} parent=23 // pred_check_branch
        %146 = sbr.rel (%p144) target = $region28
      $region27: #{ms_block.8} parent=23 // pred_region
        %s147 = smul.u32 16, %s16
        %p148 = scmp.lt.s32.totalorder %s17, 1
        %s149 = scalar_select %p148, %s17, 1
        %p150 = scmp.lt.s32.totalorder %s147, 15
        %s151 = scalar_select %p150, %s147, 15
        %s152 = smul.addr %s149, 16
        %s153 = sadd.s32 %s151, %s152
        %s154 = smul.addr %s153, 8
        %s155 = scalar_lea.vmem %s0, %s154
        %s156 = smul.u32 16, %s16
      $region28: #{ms_block.8} parent=23 // pred_fallthru
        _
    $region24: #{ms_block.8} parent=5 // pred_fallthru
      _
    %p157 = scmp.le.s32.totalorder 1, %s9
    %p158 = scmp.lt.s32.totalorder %s9, 3
    %p159 = pnand %p157, %p158
    %p160 = pneg %p159
    // Predicated region
    $region29: #{ms_block.8} parent=5 // pred_check
      _
    $region30: #{ms_block.8} parent=5 // pred_check_branch
      %162 = sbr.rel (%p159) target = $region32
    $region31: #{ms_block.8} parent=5 // pred_region
      %s163 = ssub.s32 %s9, 1
      %s164 = smul.u32 16, %s18
      %p165 = scmp.lt.s32.totalorder %s19, 1
      %s166 = scalar_select %p165, %s19, 1
      %p167 = scmp.lt.s32.totalorder %s164, 15
      %s168 = scalar_select %p167, %s164, 15
      %s169 = smul.addr %s166, 16
      %s170 = sadd.s32 %s168, %s169
      %s171 = smul.addr %s170, 8
      %s172 = scalar_lea.vmem %s0, %s171
      %p173 = pneg %p49
      %p174 = pneg %p46
      %p175 = pneg %p70
      %p176 = pneg %p67
      %p177 = pneg %p91
      %p178 = pneg %p88
      %p179 = pneg %p119
      %p180 = pneg %p116
      %s181 = smul.u32 16, %s18
      %p182 = scmp.lt.s32.totalorder %s19, 1
      %s183 = scalar_select %p182, %s19, 1
      %p184 = scmp.lt.s32.totalorder %s181, 15
      %s185 = scalar_select %p184, %s181, 15
      %s186 = smul.addr %s183, 16
      %s187 = sadd.s32 %s185, %s186
      %s188 = smul.addr %s187, 8
      %s189 = scalar_lea.vmem %s3, %s188
      %s190 = smul.u32 16, %s18
      %p191 = scmp.lt.s32.totalorder %s19, 1
      %s192 = scalar_select %p191, %s19, 1
      %p193 = scmp.lt.s32.totalorder %s190, 15
      %s194 = scalar_select %p193, %s190, 15
      %s195 = smul.addr %s192, 16
      %s196 = sadd.s32 %s194, %s195
      %s197 = smul.addr %s196, 8
      %s198 = scalar_lea.vmem %s0, %s197
      %s199 = smul.u32 16, %s18
      %s200 = smul.u32 16, %s18
      %p201 = scmp.lt.s32.totalorder %s19, 1
      %s202 = scalar_select %p201, %s19, 1
      %p203 = scmp.lt.s32.totalorder %s200, 15
      %s204 = scalar_select %p203, %s200, 15
      %s205 = smul.addr %s202, 16
      %s206 = sadd.s32 %s204, %s205
      %s207 = smul.addr %s206, 8
      %s208 = scalar_lea.vmem %s3, %s207
      %s209 = smul.u32 16, %s18
      %p211 = scmp.eq.s32.totalorder %s19, 0
      // Predicated region
      $region33: #{ms_block.8} parent=31 // pred_check
        %p212 = pneg %p211
      $region34: #{ms_block.8} parent=31 // pred_check_branch
        %214 = sbr.rel (%p212) target = $region36
      $region35: #{ms_block.8} parent=31 // pred_region
        %vm215 = vcmask 261120
        %216 = vst.msk [vmem:[#allocation2] sm:$0xff] %vm215, 0.0
        %217 = vst.msk [vmem:[#allocation2 + $0x8] sm:$0xff] %vm215, 0.0
        %218 = vst.msk [vmem:[#allocation2 + $0x10] sm:$0xff] %vm215, 0.0
        %219 = vst.msk [vmem:[#allocation2 + $0x18] sm:$0xff] %vm215, 0.0
        %220 = vst.msk [vmem:[#allocation2 + $0x20] sm:$0xff] %vm215, 0.0
        %221 = vst.msk [vmem:[#allocation2 + $0x28] sm:$0xff] %vm215, 0.0
        %222 = vst.msk [vmem:[#allocation2 + $0x30] sm:$0xff] %vm215, 0.0
        %223 = vst.msk [vmem:[#allocation2 + $0x38] sm:$0xff] %vm215, 0.0
        %224 = vst.msk [vmem:[#allocation2 + $0x40] sm:$0xff] %vm215, 0.0
        %225 = vst.msk [vmem:[#allocation2 + $0x48] sm:$0xff] %vm215, 0.0
        %226 = vst.msk [vmem:[#allocation2 + $0x50] sm:$0xff] %vm215, 0.0
        %227 = vst.msk [vmem:[#allocation2 + $0x58] sm:$0xff] %vm215, 0.0
        %228 = vst.msk [vmem:[#allocation2 + $0x60] sm:$0xff] %vm215, 0.0
        %229 = vst.msk [vmem:[#allocation2 + $0x68] sm:$0xff] %vm215, 0.0
        %230 = vst.msk [vmem:[#allocation2 + $0x70] sm:$0xff] %vm215, 0.0
        %231 = vst.msk [vmem:[#allocation2 + $0x78] sm:$0xff] %vm215, 0.0
      $region36: #{ms_block.8} parent=31 // pred_fallthru
        _
      %v232 = vld [vmem:[%s198] sm:$0xff]
      %v233 = vld [vmem:[%s198 + $0x8] sm:$0xff]
      %v234 = vld [vmem:[%s198 + $0x10] sm:$0xff]
      %v235 = vld [vmem:[%s198 + $0x18] sm:$0xff]
      %v236 = vld [vmem:[%s198 + $0x20] sm:$0xff]
      %v237 = vld [vmem:[%s198 + $0x28] sm:$0xff]
      %v238 = vld [vmem:[%s198 + $0x30] sm:$0xff]
      %v239 = vld [vmem:[%s198 + $0x38] sm:$0xff]
      %v240 = vld [vmem:[%s198 + $0x40] sm:$0xff]
      %v241 = vld [vmem:[%s198 + $0x48] sm:$0xff]
      %v242 = vld [vmem:[%s198 + $0x50] sm:$0xff]
      %v243 = vld [vmem:[%s198 + $0x58] sm:$0xff]
      %v244 = vld [vmem:[%s198 + $0x60] sm:$0xff]
      %v245 = vld [vmem:[%s198 + $0x68] sm:$0xff]
      %v246 = vld [vmem:[%s198 + $0x70] sm:$0xff]
      %v247 = vld [vmem:[%s198 + $0x78] sm:$0xff]
      %v248 = vld [vmem:[#allocation2] sm:$0xff]
      %v249 = vld [vmem:[#allocation2 + $0x8] sm:$0xff]
      %v250 = vld [vmem:[#allocation2 + $0x10] sm:$0xff]
      %v251 = vld [vmem:[#allocation2 + $0x18] sm:$0xff]
      %v252 = vld [vmem:[#allocation2 + $0x20] sm:$0xff]
      %v253 = vld [vmem:[#allocation2 + $0x28] sm:$0xff]
      %v254 = vld [vmem:[#allocation2 + $0x30] sm:$0xff]
      %v255 = vld [vmem:[#allocation2 + $0x38] sm:$0xff]
      %v256 = vld [vmem:[#allocation2 + $0x40] sm:$0xff]
      %v257 = vld [vmem:[#allocation2 + $0x48] sm:$0xff]
      %v258 = vld [vmem:[#allocation2 + $0x50] sm:$0xff]
      %v259 = vld [vmem:[#allocation2 + $0x58] sm:$0xff]
      %v260 = vld [vmem:[#allocation2 + $0x60] sm:$0xff]
      %v261 = vld [vmem:[#allocation2 + $0x68] sm:$0xff]
      %v262 = vld [vmem:[#allocation2 + $0x70] sm:$0xff]
      %v263 = vld [vmem:[#allocation2 + $0x78] sm:$0xff]
      %v264 = vsub.f32 %v232, %v248
      %v265 = vsub.f32 %v233, %v249
      %v266 = vsub.f32 %v234, %v250
      %v267 = vsub.f32 %v235, %v251
      %v268 = vsub.f32 %v236, %v252
      %v269 = vsub.f32 %v237, %v253
      %v270 = vsub.f32 %v238, %v254
      %v271 = vsub.f32 %v239, %v255
      %v272 = vsub.f32 %v240, %v256
      %v273 = vsub.f32 %v241, %v257
      %v274 = vsub.f32 %v242, %v258
      %v275 = vsub.f32 %v243, %v259
      %v276 = vsub.f32 %v244, %v260
      %v277 = vsub.f32 %v245, %v261
      %v278 = vsub.f32 %v246, %v262
      %v279 = vsub.f32 %v247, %v263
      %v280 = vmul.f32 %v264, 0.5
      %v281 = vmul.f32 %v265, 0.5
      %v282 = vmul.f32 %v266, 0.5
      %v283 = vmul.f32 %v267, 0.5
      %v284 = vmul.f32 %v268, 0.5
      %v285 = vmul.f32 %v269, 0.5
      %v286 = vmul.f32 %v270, 0.5
      %v287 = vmul.f32 %v271, 0.5
      %v288 = vmul.f32 %v272, 0.5
      %v289 = vmul.f32 %v273, 0.5
      %v290 = vmul.f32 %v274, 0.5
      %v291 = vmul.f32 %v275, 0.5
      %v292 = vmul.f32 %v276, 0.5
      %v293 = vmul.f32 %v277, 0.5
      %v294 = vmul.f32 %v278, 0.5
      %v295 = vmul.f32 %v279, 0.5
      %v296 = vadd.f32 %v248, %v280
      %v297 = vadd.f32 %v249, %v281
      %v298 = vadd.f32 %v250, %v282
      %v299 = vadd.f32 %v251, %v283
      %v300 = vadd.f32 %v252, %v284
      %v301 = vadd.f32 %v253, %v285
      %v302 = vadd.f32 %v254, %v286
      %v303 = vadd.f32 %v255, %v287
      %v304 = vadd.f32 %v256, %v288
      %v305 = vadd.f32 %v257, %v289
      %v306 = vadd.f32 %v258, %v290
      %v307 = vadd.f32 %v259, %v291
      %v308 = vadd.f32 %v260, %v292
      %v309 = vadd.f32 %v261, %v293
      %v310 = vadd.f32 %v262, %v294
      %v311 = vadd.f32 %v263, %v295
      %vm312 = vcmp.ge.f32.partialorder %v296, 1.0
      %vm313 = vcmp.ge.f32.partialorder %v297, 1.0
      %vm314 = vcmp.ge.f32.partialorder %v298, 1.0
      %vm315 = vcmp.ge.f32.partialorder %v299, 1.0
      %vm316 = vcmp.ge.f32.partialorder %v300, 1.0
      %vm317 = vcmp.ge.f32.partialorder %v301, 1.0
      %vm318 = vcmp.ge.f32.partialorder %v302, 1.0
      %vm319 = vcmp.ge.f32.partialorder %v303, 1.0
      %vm320 = vcmp.ge.f32.partialorder %v304, 1.0
      %vm321 = vcmp.ge.f32.partialorder %v305, 1.0
      %vm322 = vcmp.ge.f32.partialorder %v306, 1.0
      %vm323 = vcmp.ge.f32.partialorder %v307, 1.0
      %vm324 = vcmp.ge.f32.partialorder %v308, 1.0
      %vm325 = vcmp.ge.f32.partialorder %v309, 1.0
      %vm326 = vcmp.ge.f32.partialorder %v310, 1.0
      %vm327 = vcmp.ge.f32.partialorder %v311, 1.0
      %v328 = vsel %vm312, 1, 0
      %v329 = vsel %vm313, 1, 0
      %v330 = vsel %vm314, 1, 0
      %v331 = vsel %vm315, 1, 0
      %v332 = vsel %vm316, 1, 0
      %v333 = vsel %vm317, 1, 0
      %v334 = vsel %vm318, 1, 0
      %v335 = vsel %vm319, 1, 0
      %v336 = vsel %vm320, 1, 0
      %v337 = vsel %vm321, 1, 0
      %v338 = vsel %vm322, 1, 0
      %v339 = vsel %vm323, 1, 0
      %v340 = vsel %vm324, 1, 0
      %v341 = vsel %vm325, 1, 0
      %v342 = vsel %vm326, 1, 0
      %v343 = vsel %vm327, 1, 0
      %v344 = vcvt.s32.f32 %v328
      %v345 = vcvt.s32.f32 %v329
      %v346 = vcvt.s32.f32 %v330
      %v347 = vcvt.s32.f32 %v331
      %v348 = vcvt.s32.f32 %v332
      %v349 = vcvt.s32.f32 %v333
      %v350 = vcvt.s32.f32 %v334
      %v351 = vcvt.s32.f32 %v335
      %v352 = vcvt.s32.f32 %v336
      %v353 = vcvt.s32.f32 %v337
      %v354 = vcvt.s32.f32 %v338
      %v355 = vcvt.s32.f32 %v339
      %v356 = vcvt.s32.f32 %v340
      %v357 = vcvt.s32.f32 %v341
      %v358 = vcvt.s32.f32 %v342
      %v359 = vcvt.s32.f32 %v343
      %v360 = vsub.f32 1.0, %v344
      %v361 = vsub.f32 1.0, %v345
      %v362 = vsub.f32 1.0, %v346
      %v363 = vsub.f32 1.0, %v347
      %v364 = vsub.f32 1.0, %v348
      %v365 = vsub.f32 1.0, %v349
      %v366 = vsub.f32 1.0, %v350
      %v367 = vsub.f32 1.0, %v351
      %v368 = vsub.f32 1.0, %v352
      %v369 = vsub.f32 1.0, %v353
      %v370 = vsub.f32 1.0, %v354
      %v371 = vsub.f32 1.0, %v355
      %v372 = vsub.f32 1.0, %v356
      %v373 = vsub.f32 1.0, %v357
      %v374 = vsub.f32 1.0, %v358
      %v375 = vsub.f32 1.0, %v359
      %v376 = vmul.f32 %v296, %v360
      %v377 = vmul.f32 %v297, %v361
      %v378 = vmul.f32 %v298, %v362
      %v379 = vmul.f32 %v299, %v363
      %v380 = vmul.f32 %v300, %v364
      %v381 = vmul.f32 %v301, %v365
      %v382 = vmul.f32 %v302, %v366
      %v383 = vmul.f32 %v303, %v367
      %v384 = vmul.f32 %v304, %v368
      %v385 = vmul.f32 %v305, %v369
      %v386 = vmul.f32 %v306, %v370
      %v387 = vmul.f32 %v307, %v371
      %v388 = vmul.f32 %v308, %v372
      %v389 = vmul.f32 %v309, %v373
      %v390 = vmul.f32 %v310, %v374
      %v391 = vmul.f32 %v311, %v375
      %vm392 = vcmask 261120
      %393 = vst.msk [vmem:[#allocation2] sm:$0xff] %vm392, %v376
      %394 = vst.msk [vmem:[#allocation2 + $0x8] sm:$0xff] %vm392, %v377
      %395 = vst.msk [vmem:[#allocation2 + $0x10] sm:$0xff] %vm392, %v378
      %396 = vst.msk [vmem:[#allocation2 + $0x18] sm:$0xff] %vm392, %v379
      %397 = vst.msk [vmem:[#allocation2 + $0x20] sm:$0xff] %vm392, %v380
      %398 = vst.msk [vmem:[#allocation2 + $0x28] sm:$0xff] %vm392, %v381
      %399 = vst.msk [vmem:[#allocation2 + $0x30] sm:$0xff] %vm392, %v382
      %400 = vst.msk [vmem:[#allocation2 + $0x38] sm:$0xff] %vm392, %v383
      %401 = vst.msk [vmem:[#allocation2 + $0x40] sm:$0xff] %vm392, %v384
      %402 = vst.msk [vmem:[#allocation2 + $0x48] sm:$0xff] %vm392, %v385
      %403 = vst.msk [vmem:[#allocation2 + $0x50] sm:$0xff] %vm392, %v386
      %404 = vst.msk [vmem:[#allocation2 + $0x58] sm:$0xff] %vm392, %v387
      %405 = vst.msk [vmem:[#allocation2 + $0x60] sm:$0xff] %vm392, %v388
      %406 = vst.msk [vmem:[#allocation2 + $0x68] sm:$0xff] %vm392, %v389
      %407 = vst.msk [vmem:[#allocation2 + $0x70] sm:$0xff] %vm392, %v390
      %408 = vst.msk [vmem:[#allocation2 + $0x78] sm:$0xff] %vm392, %v391
      %v409 = vpack.c.bf16 %v345, %v344
      %v410 = vpack.c.bf16 %v347, %v346
      %v411 = vpack.c.bf16 %v349, %v348
      %v412 = vpack.c.bf16 %v351, %v350
      %v413 = vpack.c.bf16 %v353, %v352
      %v414 = vpack.c.bf16 %v355, %v354
      %v415 = vpack.c.bf16 %v357, %v356
      %v416 = vpack.c.bf16 %v359, %v358
      %v417 = vld [vmem:[%s1] sm:$0xf]
      %v418 = vld [vmem:[%s1 + $0x4] sm:$0xf]
      %v419 = vld [vmem:[%s1 + $0x8] sm:$0xf]
      %v420 = vld [vmem:[%s1 + $0xc] sm:$0xf]
      %v421 = vld [vmem:[%s2] sm:$0x1]
      %v423 = vlaneseq
      %v424 = vshrl.u32 %v423, 7
      %v425 = vsub.s32 0, %v424
      %v426 = vrot.slane %v421, %v425
      %v432 = vunpack.c.l.b16 %v417
      %v433 = vunpack.c.l.b16 %v418
      %v434 = vunpack.c.l.b16 %v419
      %v435 = vunpack.c.l.b16 %v420
      %v436 = vpack.c.b16 %v433, %v432
      %v437 = vpack.c.b16 %v435, %v434
      %v441 = vsel %vm392, %v409, 0
      %v444 = vsel %vm392, %v410, 0
      %v447 = vsel %vm392, %v411, 0
      %v450 = vsel %vm392, %v412, 0
      %v453 = vsel %vm392, %v413, 0
      %v456 = vsel %vm392, %v414, 0
      %v459 = vsel %vm392, %v415, 0
      %v462 = vsel %vm392, %v416, 0
      %464 = vmatprep.subr.bf16.mxu0 0
      %465 = vmatpush1.bf16.msra.mxu0 %v436
      %466 = vmatprep.subr.bf16.mxu0 0
      %467 = vmatpush1.bf16.msra.mxu0 %v437
      %468 = vmatprep.subr.bf16.mxu0 0
      %469 = vmatpush1.bf16.msra.mxu0 0
      %470 = vmatprep.subr.bf16.mxu0 0
      %471 = vmatpush1.bf16.msra.mxu0 0
      %472 = vmatprep.subr.bf16.mxu0 0
      %473 = vmatpush1.bf16.msra.mxu0 0
      %474 = vmatprep.subr.bf16.mxu0 0
      %475 = vmatpush1.bf16.msra.mxu0 0
      %476 = vmatprep.subr.bf16.mxu0 0
      %477 = vmatpush1.bf16.msra.mxu0 0
      %478 = vmatprep.subr.bf16.mxu0 0
      %479 = vmatpush1.bf16.msra.mxu0 0
      %480 = vmatprep.subr.bf16.mxu0 0
      %481 = vmatpush1.bf16.msra.mxu0 0
      %482 = vmatprep.subr.bf16.mxu0 0
      %483 = vmatpush1.bf16.msra.mxu0 0
      %484 = vmatprep.subr.bf16.mxu0 0
      %485 = vmatpush1.bf16.msra.mxu0 0
      %486 = vmatprep.subr.bf16.mxu0 0
      %487 = vmatpush1.bf16.msra.mxu0 0
      %488 = vmatprep.subr.bf16.mxu0 0
      %489 = vmatpush1.bf16.msra.mxu0 0
      %490 = vmatprep.subr.bf16.mxu0 0
      %491 = vmatpush1.bf16.msra.mxu0 0
      %492 = vmatprep.subr.bf16.mxu0 0
      %493 = vmatpush1.bf16.msra.mxu0 0
      %494 = vmatprep.subr.bf16.mxu0 0
      %495 = vmatpush1.bf16.msra.mxu0 0
      %496 = vmatprep.mubr.bf16.mxu0 0
      %497 = vmatmul.mubr.bf16.gmra.mrb[0].mxu0 %v441
      %v498 = vpop.f32.mrb[0].mxu0
      %v499 = vadd.f32 %v426, %v498
      %v500 = vpop.f32.mrb[0].mxu0
      %v501 = vpop.f32.mrb[0].mxu0
      %v502 = vadd.f32 %v426, %v501
      %v503 = vpop.f32.mrb[0].mxu0
      %504 = vmatprep.mubr.bf16.mxu0 0
      %505 = vmatmul.mubr.bf16.gmra.mrb[0].mxu0 %v444
      %v506 = vpop.f32.mrb[0].mxu0
      %v507 = vadd.f32 %v426, %v506
      %v508 = vpop.f32.mrb[0].mxu0
      %v509 = vpop.f32.mrb[0].mxu0
      %v510 = vadd.f32 %v426, %v509
      %v511 = vpop.f32.mrb[0].mxu0
      %512 = vmatprep.mubr.bf16.mxu0 0
      %513 = vmatmul.mubr.bf16.gmra.mrb[0].mxu0 %v447
      %v514 = vpop.f32.mrb[0].mxu0
      %v515 = vadd.f32 %v426, %v514
      %v516 = vpop.f32.mrb[0].mxu0
      %v517 = vpop.f32.mrb[0].mxu0
      %v518 = vadd.f32 %v426, %v517
      %v519 = vpop.f32.mrb[0].mxu0
      %520 = vmatprep.mubr.bf16.mxu0 0
      %521 = vmatmul.mubr.bf16.gmra.mrb[0].mxu0 %v450
      %v522 = vpop.f32.mrb[0].mxu0
      %v523 = vadd.f32 %v426, %v522
      %v524 = vpop.f32.mrb[0].mxu0
      %v525 = vpop.f32.mrb[0].mxu0
      %v526 = vadd.f32 %v426, %v525
      %v527 = vpop.f32.mrb[0].mxu0
      %528 = vmatprep.mubr.bf16.mxu0 0
      %529 = vmatmul.mubr.bf16.gmra.mrb[0].mxu0 %v453
      %v530 = vpop.f32.mrb[0].mxu0
      %v531 = vadd.f32 %v426, %v530
      %v532 = vpop.f32.mrb[0].mxu0
      %v533 = vpop.f32.mrb[0].mxu0
      %v534 = vadd.f32 %v426, %v533
      %v535 = vpop.f32.mrb[0].mxu0
      %536 = vmatprep.mubr.bf16.mxu0 0
      %537 = vmatmul.mubr.bf16.gmra.mrb[0].mxu0 %v456
      %v538 = vpop.f32.mrb[0].mxu0
      %v539 = vadd.f32 %v426, %v538
      %v540 = vpop.f32.mrb[0].mxu0
      %v541 = vpop.f32.mrb[0].mxu0
      %v542 = vadd.f32 %v426, %v541
      %v543 = vpop.f32.mrb[0].mxu0
      %544 = vmatprep.mubr.bf16.mxu0 0
      %545 = vmatmul.mubr.bf16.gmra.mrb[0].mxu0 %v459
      %v546 = vpop.f32.mrb[0].mxu0
      %v547 = vadd.f32 %v426, %v546
      %v548 = vpop.f32.mrb[0].mxu0
      %v549 = vpop.f32.mrb[0].mxu0
      %v550 = vadd.f32 %v426, %v549
      %v551 = vpop.f32.mrb[0].mxu0
      %552 = vmatprep.mubr.bf16.mxu0 0
      %553 = vmatmul.mubr.bf16.gmra.mrb[0].mxu0 %v462
      %v554 = vpop.f32.mrb[0].mxu0
      %v555 = vadd.f32 %v426, %v554
      %v556 = vpop.f32.mrb[0].mxu0
      %v557 = vpop.f32.mrb[0].mxu0
      %v558 = vadd.f32 %v426, %v557
      %v559 = vpop.f32.mrb[0].mxu0
      %560 = vdwg.mxu0
      %vm561 = vcmask 785408
      %562 = vst.msk [vmem:[%s208] sm:$0xff] %vm561, %v499
      %563 = vst.msk [vmem:[%s208 + $0x8] sm:$0xff] %vm561, %v502
      %564 = vst.msk [vmem:[%s208 + $0x10] sm:$0xff] %vm561, %v507
      %565 = vst.msk [vmem:[%s208 + $0x18] sm:$0xff] %vm561, %v510
      %566 = vst.msk [vmem:[%s208 + $0x20] sm:$0xff] %vm561, %v515
      %567 = vst.msk [vmem:[%s208 + $0x28] sm:$0xff] %vm561, %v518
      %568 = vst.msk [vmem:[%s208 + $0x30] sm:$0xff] %vm561, %v523
      %569 = vst.msk [vmem:[%s208 + $0x38] sm:$0xff] %vm561, %v526
      %570 = vst.msk [vmem:[%s208 + $0x40] sm:$0xff] %vm561, %v531
      %571 = vst.msk [vmem:[%s208 + $0x48] sm:$0xff] %vm561, %v534
      %572 = vst.msk [vmem:[%s208 + $0x50] sm:$0xff] %vm561, %v539
      %573 = vst.msk [vmem:[%s208 + $0x58] sm:$0xff] %vm561, %v542
      %574 = vst.msk [vmem:[%s208 + $0x60] sm:$0xff] %vm561, %v547
      %575 = vst.msk [vmem:[%s208 + $0x68] sm:$0xff] %vm561, %v550
      %576 = vst.msk [vmem:[%s208 + $0x70] sm:$0xff] %vm561, %v555
      %577 = vst.msk [vmem:[%s208 + $0x78] sm:$0xff] %vm561, %v558
      %s578 = smul.u32 16, %s18
      %p579 = scmp.lt.s32.totalorder %s19, 1
      %s580 = scalar_select %p579, %s19, 1
      %p581 = scmp.lt.s32.totalorder %s578, 15
      %s582 = scalar_select %p581, %s578, 15
      %s583 = smul.addr %s580, 16
      %s584 = sadd.s32 %s582, %s583
      %s585 = smul.addr %s584, 8
      %s586 = scalar_lea.vmem %s3, %s585
      // Predicated region
      $region37: #{ms_block.8} parent=31 // pred_check
        %p587 = pneg %p116
      $region38: #{ms_block.8} parent=31 // pred_check_branch
        %589 = sbr.rel (%p587) target = $region40
      $region39: #{ms_block.8} parent=31 // pred_region
        %s590 = smul.u32 16, %s18
      $region40: #{ms_block.8} parent=31 // pred_fallthru
        _
    $region32: #{ms_block.8} parent=5 // pred_fallthru
      _
    %p591 = scmp.le.s32.totalorder 2, %s9
    // Predicated region
    $region41: #{ms_block.8} parent=5 // pred_check
      %p592 = pneg %p591
    $region42: #{ms_block.8} parent=5 // pred_check_branch
      %594 = sbr.rel (%p592) target = $region44
    $region43: #{ms_block.8} parent=5 // pred_region
      %s595 = ssub.s32 %s9, 2
      // Predicated region
      $region45: #{ms_block.8} parent=43 // pred_check
        %p596 = pneg %p122
      $region46: #{ms_block.8} parent=43 // pred_check_branch
        %598 = sbr.rel (%p596) target = $region48
      $region47: #{ms_block.8} parent=43 // pred_region
        %s599 = smul.u32 16, %s20
        %p600 = scmp.lt.s32.totalorder %s21, 1
        %s601 = scalar_select %p600, %s21, 1
        %p602 = scmp.lt.s32.totalorder %s599, 15
        %s603 = scalar_select %p602, %s599, 15
        %s604 = smul.addr %s601, 16
        %s605 = sadd.s32 %s603, %s604
        %s606 = smul.addr %s605, 8
        %s607 = scalar_lea.vmem %s3, %s606
      $region48: #{ms_block.8} parent=43 // pred_fallthru
        _
    $region44: #{ms_block.8} parent=5 // pred_fallthru
      _
  $region6: #{ms_block.8} parent=0 // loop_footer
    %s13 = sadd.s32 1, %s9
  $region7: #{ms_block.8} parent=0 // loop_footer_branch
    %8 = sbr.rel target = $region3
  $region8: #{ms_block.8} parent=0 // loop_exit
    _

// kernel: ms_block.11
$region0: #{ms_block.11}
  #allocation0 [shape = 'u32[]', space=smem, size = 0x4, offset = 0x4, fixed_abs, tag = 'smem constant byte address 0x4 - core index']
  #allocation1 [shape = 'u32[144,128]{1,0:T(1,128)}', space=vmem, size = 0x12000, scoped, tag = 'internal scratch']
  #allocation2 [shape = 'f32[64,32]{1,0:T(8,128)}', space=vmem, size = 0x8000, scoped, tag = 'scratch operand']
  %s0 = inlined_call_operand.vmem [shape: bf16[2,2,64,96], index: 0, kind: input, shape index: {}]
  %s1 = inlined_call_operand.vmem [shape: f32[32,32], index: 1, kind: input, shape index: {}]
  %s2 = inlined_call_operand.vmem [shape: bf16[32,32], index: 2, kind: input, shape index: {}]
  %s3 = inlined_call_operand.vmem [shape: f32[2,2,64,32], index: 3, kind: output, shape index: {}]
  %s4 = sld [smem:[#allocation0]]
  $region49: #{ms_block.11} parent=0
    _
  %s6 = ssub.s32 1, %s4
  %s7 = scalar_select 0, %s6, %s4
  loop: start=0, step=1, limit=6
  $region2: #{ms_block.11} parent=0 // loop_pre_header
    _
  $region3: #{ms_block.11} parent=0 // loop_header
    %s9 = sphi 0, %s13
    %p10 = scmp.ge.s32.totalorder %s9, 6
    %s16 = sphi 0, %s28
    %s17 = sphi 0, %s24
    %s18 = sphi 0, %s16
    %s19 = sphi 0, %s17
    %s20 = sphi 0, %s18
    %s21 = sphi 0, %s19
    %s33 = sphi 0, %s35
    %s36 = sphi 0, %s33
    %s37 = sphi 0, %s36
    %s53 = sphi 0, %s37
    %s57 = sphi 0, %s57
    %s59 = sphi 0, %s57
    %s60 = sphi 0, %s59
    %s74 = sphi 0, %s60
    %s78 = sphi 0, %s78
    %s80 = sphi 0, %s78
    %s81 = sphi 0, %s80
    %s95 = sphi 0, %s81
    %s103 = sphi 0, %s105
    %s106 = sphi 0, %s103
    %s107 = sphi 0, %s106
    %s123 = sphi 0, %s107
  $region4: #{ms_block.11} parent=0 // loop_header_branch
    %12 = sbr.rel (%p10) target = $region8
  $region5: #{ms_block.11} parent=0 // loop_body
    %s14 = ssub.s32 %s9, 1
    %s15 = ssub.s32 %s9, 2
    %s22 = sadd.s32 1, %s17
    %p23 = scmp.ge.s32.totalorder %s22, 2
    %s24 = scalar_select %p23, 0, %s22
    %s25 = sadd.s32 1, %s16
    %s26 = scalar_select %p23, %s25, %s16
    %p27 = scmp.ge.s32.totalorder %s26, 2
    %s28 = scalar_select %p27, 0, %s26
    %s29 = ssub.s32 %s17, %s24
    %s30 = ssub.s32 %s16, %s28
    %s31 = sor.u32 %s29, %s30
    %p32 = scmp.eq.s32.totalorder %s31, 0
    %s34 = sadd.s32 %s33, 1
    %s35 = scalar_select %p32, %s33, %s34
    %p38 = pneg %p32
    %p39 = scmp.eq.s32.totalorder %s9, 3
    %p40 = por %p38, %p39
    %p41 = scmp.ne.s32.totalorder %s33, %s36
    %p42 = scmp.eq.s32.totalorder %s9, 0
    %p43 = por %p41, %p42
    %p44 = scmp.ne.s32.totalorder %s33, %s36
    %p45 = scmp.eq.s32.totalorder %s14, 3
    %p46 = por %p44, %p45
    %p47 = scmp.ne.s32.totalorder %s36, %s37
    %p48 = scmp.eq.s32.totalorder %s14, 0
    %p49 = por %p47, %p48
    %p50 = scmp.ne.s32.totalorder %s36, %s37
    %p51 = scmp.eq.s32.totalorder %s15, 3
    %p52 = por %p50, %p51
    %p54 = scmp.ne.s32.totalorder %s37, %s53
    %p55 = scmp.eq.s32.totalorder %s15, 0
    %p56 = por %p54, %p55
    %s58 = sadd.s32 %s57, 1
    %p61 = scmp.eq.s32.totalorder %s9, 3
    %p62 = scmp.ne.s32.totalorder %s57, %s59
    %p63 = scmp.eq.s32.totalorder %s9, 0
    %p64 = por %p62, %p63
    %p65 = scmp.ne.s32.totalorder %s57, %s59
    %p66 = scmp.eq.s32.totalorder %s14, 3
    %p67 = por %p65, %p66
    %p68 = scmp.ne.s32.totalorder %s59, %s60
    %p69 = scmp.eq.s32.totalorder %s14, 0
    %p70 = por %p68, %p69
    %p71 = scmp.ne.s32.totalorder %s59, %s60
    %p72 = scmp.eq.s32.totalorder %s15, 3
    %p73 = por %p71, %p72
    %p75 = scmp.ne.s32.totalorder %s60, %s74
    %p76 = scmp.eq.s32.totalorder %s15, 0
    %p77 = por %p75, %p76
    %s79 = sadd.s32 %s78, 1
    %p82 = scmp.eq.s32.totalorder %s9, 3
    %p83 = scmp.ne.s32.totalorder %s78, %s80
    %p84 = scmp.eq.s32.totalorder %s9, 0
    %p85 = por %p83, %p84
    %p86 = scmp.ne.s32.totalorder %s78, %s80
    %p87 = scmp.eq.s32.totalorder %s14, 3
    %p88 = por %p86, %p87
    %p89 = scmp.ne.s32.totalorder %s80, %s81
    %p90 = scmp.eq.s32.totalorder %s14, 0
    %p91 = por %p89, %p90
    %p92 = scmp.ne.s32.totalorder %s80, %s81
    %p93 = scmp.eq.s32.totalorder %s15, 3
    %p94 = por %p92, %p93
    %p96 = scmp.ne.s32.totalorder %s81, %s95
    %p97 = scmp.eq.s32.totalorder %s15, 0
    %p98 = por %p96, %p97
    %s99 = ssub.s32 %s17, %s24
    %s100 = ssub.s32 %s16, %s28
    %s101 = sor.u32 %s99, %s100
    %p102 = scmp.eq.s32.totalorder %s101, 0
    %s104 = sadd.s32 %s103, 1
    %s105 = scalar_select %p102, %s103, %s104
    %p108 = pneg %p102
    %p109 = scmp.eq.s32.totalorder %s9, 3
    %p110 = por %p108, %p109
    %p111 = scmp.ne.s32.totalorder %s103, %s106
    %p112 = scmp.eq.s32.totalorder %s9, 0
    %p113 = por %p111, %p112
    %p114 = scmp.ne.s32.totalorder %s103, %s106
    %p115 = scmp.eq.s32.totalorder %s14, 3
    %p116 = por %p114, %p115
    %p117 = scmp.ne.s32.totalorder %s106, %s107
    %p118 = scmp.eq.s32.totalorder %s14, 0
    %p119 = por %p117, %p118
    %p120 = scmp.ne.s32.totalorder %s106, %s107
    %p121 = scmp.eq.s32.totalorder %s15, 3
    %p122 = por %p120, %p121
    %p124 = scmp.ne.s32.totalorder %s107, %s123
    %p125 = scmp.eq.s32.totalorder %s15, 0
    %p126 = por %p124, %p125
    %p127 = scmp.le.s32.totalorder 1, %s9
    %p128 = scmp.lt.s32.totalorder %s9, 5
    %p129 = pnand %p127, %p128
    %p130 = pneg %p129
    // Predicated region
    $region9: #{ms_block.11} parent=5 // pred_check
      _
    $region10: #{ms_block.11} parent=5 // pred_check_branch
      %132 = sbr.rel (%p129) target = $region12
    $region11: #{ms_block.11} parent=5 // pred_region
      %s133 = ssub.s32 %s9, 1
      // Predicated region
      $region13: #{ms_block.11} parent=11 // pred_check
        %p134 = pneg %p70
      $region14: #{ms_block.11} parent=11 // pred_check_branch
        %136 = sbr.rel (%p134) target = $region16
      $region15: #{ms_block.11} parent=11 // pred_region
        _
      $region16: #{ms_block.11} parent=11 // pred_fallthru
        _
      // Predicated region
      $region17: #{ms_block.11} parent=11 // pred_check
        %p137 = pneg %p91
      $region18: #{ms_block.11} parent=11 // pred_check_branch
        %139 = sbr.rel (%p137) target = $region20
      $region19: #{ms_block.11} parent=11 // pred_region
        _
      $region20: #{ms_block.11} parent=11 // pred_fallthru
        _
    $region12: #{ms_block.11} parent=5 // pred_fallthru
      _
    %p140 = scmp.lt.s32.totalorder %s9, 4
    // Predicated region
    $region21: #{ms_block.11} parent=5 // pred_check
      %p141 = pneg %p140
    $region22: #{ms_block.11} parent=5 // pred_check_branch
      %143 = sbr.rel (%p141) target = $region24
    $region23: #{ms_block.11} parent=5 // pred_region
      // Predicated region
      $region25: #{ms_block.11} parent=23 // pred_check
        %p144 = pneg %p43
      $region26: #{ms_block.11} parent=23 // pred_check_branch
        %146 = sbr.rel (%p144) target = $region28
      $region27: #{ms_block.11} parent=23 // pred_region
        %p147 = scmp.lt.s32.totalorder %s17, 1
        %s148 = scalar_select %p147, %s17, 1
        %p149 = scmp.lt.s32.totalorder %s16, 1
        %s150 = scalar_select %p149, %s16, 1
        %s151 = smul.addr %s150, 8
        %s152 = smul.addr %s148, 16
        %s153 = sadd.s32 %s151, %s152
        %s154 = smul.addr %s153, 4
        %s155 = scalar_lea.vmem %s0, %s154
      $region28: #{ms_block.11} parent=23 // pred_fallthru
        _
    $region24: #{ms_block.11} parent=5 // pred_fallthru
      _
    %p156 = scmp.le.s32.totalorder 1, %s9
    %p157 = scmp.lt.s32.totalorder %s9, 5
    %p158 = pnand %p156, %p157
    %p159 = pneg %p158
    // Predicated region
    $region29: #{ms_block.11} parent=5 // pred_check
      _
    $region30: #{ms_block.11} parent=5 // pred_check_branch
      %161 = sbr.rel (%p158) target = $region32
    $region31: #{ms_block.11} parent=5 // pred_region
      %s162 = ssub.s32 %s9, 1
      %p163 = scmp.lt.s32.totalorder %s19, 1
      %s164 = scalar_select %p163, %s19, 1
      %p165 = scmp.lt.s32.totalorder %s18, 1
      %s166 = scalar_select %p165, %s18, 1
      %s167 = smul.addr %s166, 8
      %s168 = smul.addr %s164, 16
      %s169 = sadd.s32 %s167, %s168
      %s170 = smul.addr %s169, 4
      %s171 = scalar_lea.vmem %s0, %s170
      %p172 = pneg %p49
      %p173 = pneg %p46
      %p174 = pneg %p70
      %p175 = pneg %p67
      %p176 = pneg %p91
      %p177 = pneg %p88
      %p178 = pneg %p119
      %p179 = pneg %p116
      %p180 = scmp.lt.s32.totalorder %s19, 1
      %s181 = scalar_select %p180, %s19, 1
      %p182 = scmp.lt.s32.totalorder %s18, 1
      %s183 = scalar_select %p182, %s18, 1
      %s184 = smul.addr %s183, 8
      %s185 = smul.addr %s181, 16
      %s186 = sadd.s32 %s184, %s185
      %s187 = smul.addr %s186, 8
      %s188 = scalar_lea.vmem %s3, %s187
      %p189 = scmp.lt.s32.totalorder %s19, 1
      %s190 = scalar_select %p189, %s19, 1
      %p191 = scmp.lt.s32.totalorder %s18, 1
      %s192 = scalar_select %p191, %s18, 1
      %s193 = smul.addr %s192, 8
      %s194 = smul.addr %s190, 16
      %s195 = sadd.s32 %s193, %s194
      %s196 = smul.addr %s195, 4
      %s197 = scalar_lea.vmem %s0, %s196
      %p198 = scmp.lt.s32.totalorder %s19, 1
      %s199 = scalar_select %p198, %s19, 1
      %p200 = scmp.lt.s32.totalorder %s18, 1
      %s201 = scalar_select %p200, %s18, 1
      %s202 = smul.addr %s201, 8
      %s203 = smul.addr %s199, 16
      %s204 = sadd.s32 %s202, %s203
      %s205 = smul.addr %s204, 8
      %s206 = scalar_lea.vmem %s3, %s205
      %p208 = scmp.eq.s32.totalorder %s19, 0
      // Predicated region
      $region33: #{ms_block.11} parent=31 // pred_check
        %p209 = pneg %p208
      $region34: #{ms_block.11} parent=31 // pred_check_branch
        %211 = sbr.rel (%p209) target = $region36
      $region35: #{ms_block.11} parent=31 // pred_region
        %vm212 = vcmask 261120
        %213 = vst.msk [vmem:[#allocation2] sm:$0xff] %vm212, 0.0
        %214 = vst.msk [vmem:[#allocation2 + $0x8] sm:$0xff] %vm212, 0.0
        %215 = vst.msk [vmem:[#allocation2 + $0x10] sm:$0xff] %vm212, 0.0
        %216 = vst.msk [vmem:[#allocation2 + $0x18] sm:$0xff] %vm212, 0.0
        %217 = vst.msk [vmem:[#allocation2 + $0x20] sm:$0xff] %vm212, 0.0
        %218 = vst.msk [vmem:[#allocation2 + $0x28] sm:$0xff] %vm212, 0.0
        %219 = vst.msk [vmem:[#allocation2 + $0x30] sm:$0xff] %vm212, 0.0
        %220 = vst.msk [vmem:[#allocation2 + $0x38] sm:$0xff] %vm212, 0.0
      $region36: #{ms_block.11} parent=31 // pred_fallthru
        _
      %v221 = vld [vmem:[%s197] sm:$0xf]
      %v222 = vld [vmem:[%s197 + $0x4] sm:$0xf]
      %v223 = vld [vmem:[%s197 + $0x8] sm:$0xf]
      %v224 = vld [vmem:[%s197 + $0xc] sm:$0xf]
      %v225 = vld [vmem:[%s197 + $0x10] sm:$0xf]
      %v226 = vld [vmem:[%s197 + $0x14] sm:$0xf]
      %v227 = vld [vmem:[%s197 + $0x18] sm:$0xf]
      %v228 = vld [vmem:[%s197 + $0x1c] sm:$0xf]
      %v237 = vunpack.c.l.b16 %v221
      %v238 = vunpack.c.l.b16 %v222
      %v239 = vunpack.c.l.b16 %v223
      %v240 = vunpack.c.l.b16 %v224
      %v241 = vunpack.c.l.b16 %v225
      %v242 = vunpack.c.l.b16 %v226
      %v243 = vunpack.c.l.b16 %v227
      %v244 = vunpack.c.l.b16 %v228
      %v245 = vpack.c.b16 %v238, %v237
      %v246 = vpack.c.b16 %v240, %v239
      %v247 = vpack.c.b16 %v242, %v241
      %v248 = vpack.c.b16 %v244, %v243
      %249 = vrot.lane.b32.xlu0 %v245, 96
      %v250 = vpop.permute.xlu0 %249
      %251 = vrot.lane.b32.xlu0 %v246, 96
      %v252 = vpop.permute.xlu0 %251
      %253 = vrot.lane.b32.xlu0 %v247, 96
      %v254 = vpop.permute.xlu0 %253
      %255 = vrot.lane.b32.xlu0 %v248, 96
      %v256 = vpop.permute.xlu0 %255
      %261 = vxpose.xlu0.c.b16.start [1/8] %v250, 128
      %262 = vxpose.xlu0.c.b16.cont [2/8] %v252, 128
      %263 = vxpose.xlu0.c.b16.cont [3/8] %v254, 128
      %264 = vxpose.xlu0.c.b16.cont [4/8] %v256, 128
      %265 = vxpose.xlu0.c.b16.cont [5/8] 0, 128
      %266 = vxpose.xlu0.c.b16.cont [6/8] 0, 128
      %267 = vxpose.xlu0.c.b16.cont [7/8] 0, 128
      %268 = vxpose.xlu0.c.b16.end [8/8] 0, 128
      %v269 = vpop.trf.xlu0
      %v270 = vpop.trf.xlu0
      %v271 = vpop.trf.xlu0
      %v272 = vpop.trf.xlu0
      %v273 = vpop.trf.xlu0
      %v274 = vpop.trf.xlu0
      %v275 = vpop.trf.xlu0
      %v276 = vpop.trf.xlu0
      %277 = vrot.lane.b32.xlu0 %v245, 64
      %v278 = vpop.permute.xlu0 %277
      %279 = vrot.lane.b32.xlu0 %v246, 64
      %v280 = vpop.permute.xlu0 %279
      %281 = vrot.lane.b32.xlu0 %v247, 64
      %v282 = vpop.permute.xlu0 %281
      %283 = vrot.lane.b32.xlu0 %v248, 64
      %v284 = vpop.permute.xlu0 %283
      %vm289 = vcmask 523264
      %v291 = vsel %vm289, %v269, 0
      %v294 = vsel %vm289, %v270, 0
      %296 = vmatprep.subr.bf16.mxu0 0
      %297 = vmatpush1.bf16.msra.mxu0 %v278
      %298 = vmatprep.subr.bf16.mxu0 0
      %299 = vmatpush1.bf16.msra.mxu0 %v280
      %300 = vmatprep.subr.bf16.mxu0 0
      %301 = vmatpush1.bf16.msra.mxu0 %v282
      %302 = vmatprep.subr.bf16.mxu0 0
      %303 = vmatpush1.bf16.msra.mxu0 %v284
      %304 = vmatprep.subr.bf16.mxu0 0
      %305 = vmatpush1.bf16.msra.mxu0 0
      %306 = vmatprep.subr.bf16.mxu0 0
      %307 = vmatpush1.bf16.msra.mxu0 0
      %308 = vmatprep.subr.bf16.mxu0 0
      %309 = vmatpush1.bf16.msra.mxu0 0
      %310 = vmatprep.subr.bf16.mxu0 0
      %311 = vmatpush1.bf16.msra.mxu0 0
      %312 = vmatprep.subr.bf16.mxu0 0
      %313 = vmatpush1.bf16.msra.mxu0 0
      %314 = vmatprep.subr.bf16.mxu0 0
      %315 = vmatpush1.bf16.msra.mxu0 0
      %316 = vmatprep.subr.bf16.mxu0 0
      %317 = vmatpush1.bf16.msra.mxu0 0
      %318 = vmatprep.subr.bf16.mxu0 0
      %319 = vmatpush1.bf16.msra.mxu0 0
      %320 = vmatprep.subr.bf16.mxu0 0
      %321 = vmatpush1.bf16.msra.mxu0 0
      %322 = vmatprep.subr.bf16.mxu0 0
      %323 = vmatpush1.bf16.msra.mxu0 0
      %324 = vmatprep.subr.bf16.mxu0 0
      %325 = vmatpush1.bf16.msra.mxu0 0
      %326 = vmatprep.subr.bf16.mxu0 0
      %327 = vmatpush1.bf16.msra.mxu0 0
      %328 = vmatprep.mubr.bf16.mxu0 0
      %329 = vmatmul.mubr.bf16.gmra.mrb[0].mxu0 %v291
      %v330 = vpop.f32.mrb[0].mxu0
      %v331 = vadd.f32 0.0, %v330
      %v332 = vpop.f32.mrb[0].mxu0
      %v333 = vpop.f32.mrb[0].mxu0
      %v334 = vadd.f32 0.0, %v333
      %v335 = vpop.f32.mrb[0].mxu0
      %336 = vmatprep.mubr.bf16.mxu0 0
      %337 = vmatmul.mubr.bf16.gmra.mrb[0].mxu0 %v294
      %v338 = vpop.f32.mrb[0].mxu0
      %v339 = vadd.f32 0.0, %v338
      %v340 = vpop.f32.mrb[0].mxu0
      %v341 = vpop.f32.mrb[0].mxu0
      %v342 = vadd.f32 0.0, %v341
      %v343 = vpop.f32.mrb[0].mxu0
      %344 = vdwg.mxu0
      %v345 = vld [vmem:[%s1] sm:$0xff]
      %v346 = vld [vmem:[%s1 + $0x8] sm:$0xff]
      %v347 = vld [vmem:[%s1 + $0x10] sm:$0xff]
      %v348 = vld [vmem:[%s1 + $0x18] sm:$0xff]
      %v349 = vmul.f32 %v331, %v345
      %v350 = vmul.f32 %v334, %v346
      %v351 = vmul.f32 %v339, %v347
      %v352 = vmul.f32 %v342, %v348
      %v353 = vpack.c.bf16 %v350, %v349
      %v354 = vpack.c.bf16 %v352, %v351
      %vm355 = vcmask 261120
      %v357 = vsel %vm355, %v245, 0
      %v360 = vsel %vm355, %v246, 0
      %v363 = vsel %vm355, %v247, 0
      %v366 = vsel %vm355, %v248, 0
      %368 = vmatprep.subr.bf16.mxu0 0
      %369 = vmatpush1.bf16.msra.mxu0 %v353
      %370 = vmatprep.subr.bf16.mxu0 0
      %371 = vmatpush1.bf16.msra.mxu0 %v354
      %372 = vmatprep.subr.bf16.mxu0 0
      %373 = vmatpush1.bf16.msra.mxu0 0
      %374 = vmatprep.subr.bf16.mxu0 0
      %375 = vmatpush1.bf16.msra.mxu0 0
      %376 = vmatprep.subr.bf16.mxu0 0
      %377 = vmatpush1.bf16.msra.mxu0 0
      %378 = vmatprep.subr.bf16.mxu0 0
      %379 = vmatpush1.bf16.msra.mxu0 0
      %380 = vmatprep.subr.bf16.mxu0 0
      %381 = vmatpush1.bf16.msra.mxu0 0
      %382 = vmatprep.subr.bf16.mxu0 0
      %383 = vmatpush1.bf16.msra.mxu0 0
      %384 = vmatprep.subr.bf16.mxu0 0
      %385 = vmatpush1.bf16.msra.mxu0 0
      %386 = vmatprep.subr.bf16.mxu0 0
      %387 = vmatpush1.bf16.msra.mxu0 0
      %388 = vmatprep.subr.bf16.mxu0 0
      %389 = vmatpush1.bf16.msra.mxu0 0
      %390 = vmatprep.subr.bf16.mxu0 0
      %391 = vmatpush1.bf16.msra.mxu0 0
      %392 = vmatprep.subr.bf16.mxu0 0
      %393 = vmatpush1.bf16.msra.mxu0 0
      %394 = vmatprep.subr.bf16.mxu0 0
      %395 = vmatpush1.bf16.msra.mxu0 0
      %396 = vmatprep.subr.bf16.mxu0 0
      %397 = vmatpush1.bf16.msra.mxu0 0
      %398 = vmatprep.subr.bf16.mxu0 0
      %399 = vmatpush1.bf16.msra.mxu0 0
      %400 = vmatprep.mubr.bf16.mxu0 0
      %401 = vmatmul.mubr.bf16.gmra.mrb[0].mxu0 %v357
      %v402 = vpop.f32.mrb[0].mxu0
      %v403 = vadd.f32 0.0, %v402
      %v404 = vpop.f32.mrb[0].mxu0
      %v405 = vpop.f32.mrb[0].mxu0
      %v406 = vadd.f32 0.0, %v405
      %v407 = vpop.f32.mrb[0].mxu0
      %408 = vmatprep.mubr.bf16.mxu0 0
      %409 = vmatmul.mubr.bf16.gmra.mrb[0].mxu0 %v360
      %v410 = vpop.f32.mrb[0].mxu0
      %v411 = vadd.f32 0.0, %v410
      %v412 = vpop.f32.mrb[0].mxu0
      %v413 = vpop.f32.mrb[0].mxu0
      %v414 = vadd.f32 0.0, %v413
      %v415 = vpop.f32.mrb[0].mxu0
      %416 = vmatprep.mubr.bf16.mxu0 0
      %417 = vmatmul.mubr.bf16.gmra.mrb[0].mxu0 %v363
      %v418 = vpop.f32.mrb[0].mxu0
      %v419 = vadd.f32 0.0, %v418
      %v420 = vpop.f32.mrb[0].mxu0
      %v421 = vpop.f32.mrb[0].mxu0
      %v422 = vadd.f32 0.0, %v421
      %v423 = vpop.f32.mrb[0].mxu0
      %424 = vmatprep.mubr.bf16.mxu0 0
      %425 = vmatmul.mubr.bf16.gmra.mrb[0].mxu0 %v366
      %v426 = vpop.f32.mrb[0].mxu0
      %v427 = vadd.f32 0.0, %v426
      %v428 = vpop.f32.mrb[0].mxu0
      %v429 = vpop.f32.mrb[0].mxu0
      %v430 = vadd.f32 0.0, %v429
      %v431 = vpop.f32.mrb[0].mxu0
      %432 = vdwg.mxu0
      %v433 = vmul.f32 %v403, 0.125
      %v434 = vmul.f32 %v406, 0.125
      %v435 = vmul.f32 %v411, 0.125
      %v436 = vmul.f32 %v414, 0.125
      %v437 = vmul.f32 %v419, 0.125
      %v438 = vmul.f32 %v422, 0.125
      %v439 = vmul.f32 %v427, 0.125
      %v440 = vmul.f32 %v430, 0.125
      %v441 = vld [vmem:[#allocation2] sm:$0xff]
      %v442 = vld [vmem:[#allocation2 + $0x8] sm:$0xff]
      %v443 = vld [vmem:[#allocation2 + $0x10] sm:$0xff]
      %v444 = vld [vmem:[#allocation2 + $0x18] sm:$0xff]
      %v445 = vld [vmem:[#allocation2 + $0x20] sm:$0xff]
      %v446 = vld [vmem:[#allocation2 + $0x28] sm:$0xff]
      %v447 = vld [vmem:[#allocation2 + $0x30] sm:$0xff]
      %v448 = vld [vmem:[#allocation2 + $0x38] sm:$0xff]
      %v449 = vsub.f32 %v433, %v441
      %v450 = vsub.f32 %v434, %v442
      %v451 = vsub.f32 %v435, %v443
      %v452 = vsub.f32 %v436, %v444
      %v453 = vsub.f32 %v437, %v445
      %v454 = vsub.f32 %v438, %v446
      %v455 = vsub.f32 %v439, %v447
      %v456 = vsub.f32 %v440, %v448
      %v457 = vmul.f32 %v449, 0.5
      %v458 = vmul.f32 %v450, 0.5
      %v459 = vmul.f32 %v451, 0.5
      %v460 = vmul.f32 %v452, 0.5
      %v461 = vmul.f32 %v453, 0.5
      %v462 = vmul.f32 %v454, 0.5
      %v463 = vmul.f32 %v455, 0.5
      %v464 = vmul.f32 %v456, 0.5
      %v465 = vadd.f32 %v441, %v457
      %v466 = vadd.f32 %v442, %v458
      %v467 = vadd.f32 %v443, %v459
      %v468 = vadd.f32 %v444, %v460
      %v469 = vadd.f32 %v445, %v461
      %v470 = vadd.f32 %v446, %v462
      %v471 = vadd.f32 %v447, %v463
      %v472 = vadd.f32 %v448, %v464
      %vm473 = vcmp.ge.f32.partialorder %v465, 0.5
      %vm474 = vcmp.ge.f32.partialorder %v466, 0.5
      %vm475 = vcmp.ge.f32.partialorder %v467, 0.5
      %vm476 = vcmp.ge.f32.partialorder %v468, 0.5
      %vm477 = vcmp.ge.f32.partialorder %v469, 0.5
      %vm478 = vcmp.ge.f32.partialorder %v470, 0.5
      %vm479 = vcmp.ge.f32.partialorder %v471, 0.5
      %vm480 = vcmp.ge.f32.partialorder %v472, 0.5
      %v481 = vsel %vm473, 1, 0
      %v482 = vsel %vm474, 1, 0
      %v483 = vsel %vm475, 1, 0
      %v484 = vsel %vm476, 1, 0
      %v485 = vsel %vm477, 1, 0
      %v486 = vsel %vm478, 1, 0
      %v487 = vsel %vm479, 1, 0
      %v488 = vsel %vm480, 1, 0
      %v489 = vcvt.s32.f32 %v481
      %v490 = vcvt.s32.f32 %v482
      %v491 = vcvt.s32.f32 %v483
      %v492 = vcvt.s32.f32 %v484
      %v493 = vcvt.s32.f32 %v485
      %v494 = vcvt.s32.f32 %v486
      %v495 = vcvt.s32.f32 %v487
      %v496 = vcvt.s32.f32 %v488
      %v497 = vsub.f32 1.0, %v489
      %v498 = vsub.f32 1.0, %v490
      %v499 = vsub.f32 1.0, %v491
      %v500 = vsub.f32 1.0, %v492
      %v501 = vsub.f32 1.0, %v493
      %v502 = vsub.f32 1.0, %v494
      %v503 = vsub.f32 1.0, %v495
      %v504 = vsub.f32 1.0, %v496
      %v505 = vmul.f32 %v465, %v497
      %v506 = vmul.f32 %v466, %v498
      %v507 = vmul.f32 %v467, %v499
      %v508 = vmul.f32 %v468, %v500
      %v509 = vmul.f32 %v469, %v501
      %v510 = vmul.f32 %v470, %v502
      %v511 = vmul.f32 %v471, %v503
      %v512 = vmul.f32 %v472, %v504
      %513 = vst.msk [vmem:[#allocation2] sm:$0xff] %vm355, %v505
      %514 = vst.msk [vmem:[#allocation2 + $0x8] sm:$0xff] %vm355, %v506
      %515 = vst.msk [vmem:[#allocation2 + $0x10] sm:$0xff] %vm355, %v507
      %516 = vst.msk [vmem:[#allocation2 + $0x18] sm:$0xff] %vm355, %v508
      %517 = vst.msk [vmem:[#allocation2 + $0x20] sm:$0xff] %vm355, %v509
      %518 = vst.msk [vmem:[#allocation2 + $0x28] sm:$0xff] %vm355, %v510
      %519 = vst.msk [vmem:[#allocation2 + $0x30] sm:$0xff] %vm355, %v511
      %520 = vst.msk [vmem:[#allocation2 + $0x38] sm:$0xff] %vm355, %v512
      %v521 = vpack.c.bf16 %v490, %v489
      %v522 = vpack.c.bf16 %v492, %v491
      %v523 = vpack.c.bf16 %v494, %v493
      %v524 = vpack.c.bf16 %v496, %v495
      %v525 = vld [vmem:[%s2] sm:$0xf]
      %v526 = vld [vmem:[%s2 + $0x4] sm:$0xf]
      %v527 = vld [vmem:[%s2 + $0x8] sm:$0xf]
      %v528 = vld [vmem:[%s2 + $0xc] sm:$0xf]
      %v533 = vunpack.c.l.b16 %v525
      %v534 = vunpack.c.l.b16 %v526
      %v535 = vunpack.c.l.b16 %v527
      %v536 = vunpack.c.l.b16 %v528
      %v537 = vpack.c.b16 %v534, %v533
      %v538 = vpack.c.b16 %v536, %v535
      %v542 = vsel %vm355, %v521, 0
      %v545 = vsel %vm355, %v522, 0
      %v548 = vsel %vm355, %v523, 0
      %v551 = vsel %vm355, %v524, 0
      %553 = vmatprep.subr.bf16.mxu0 0
      %554 = vmatpush1.bf16.msra.mxu0 %v537
      %555 = vmatprep.subr.bf16.mxu0 0
      %556 = vmatpush1.bf16.msra.mxu0 %v538
      %557 = vmatprep.subr.bf16.mxu0 0
      %558 = vmatpush1.bf16.msra.mxu0 0
      %559 = vmatprep.subr.bf16.mxu0 0
      %560 = vmatpush1.bf16.msra.mxu0 0
      %561 = vmatprep.subr.bf16.mxu0 0
      %562 = vmatpush1.bf16.msra.mxu0 0
      %563 = vmatprep.subr.bf16.mxu0 0
      %564 = vmatpush1.bf16.msra.mxu0 0
      %565 = vmatprep.subr.bf16.mxu0 0
      %566 = vmatpush1.bf16.msra.mxu0 0
      %567 = vmatprep.subr.bf16.mxu0 0
      %568 = vmatpush1.bf16.msra.mxu0 0
      %569 = vmatprep.subr.bf16.mxu0 0
      %570 = vmatpush1.bf16.msra.mxu0 0
      %571 = vmatprep.subr.bf16.mxu0 0
      %572 = vmatpush1.bf16.msra.mxu0 0
      %573 = vmatprep.subr.bf16.mxu0 0
      %574 = vmatpush1.bf16.msra.mxu0 0
      %575 = vmatprep.subr.bf16.mxu0 0
      %576 = vmatpush1.bf16.msra.mxu0 0
      %577 = vmatprep.subr.bf16.mxu0 0
      %578 = vmatpush1.bf16.msra.mxu0 0
      %579 = vmatprep.subr.bf16.mxu0 0
      %580 = vmatpush1.bf16.msra.mxu0 0
      %581 = vmatprep.subr.bf16.mxu0 0
      %582 = vmatpush1.bf16.msra.mxu0 0
      %583 = vmatprep.subr.bf16.mxu0 0
      %584 = vmatpush1.bf16.msra.mxu0 0
      %585 = vmatprep.mubr.bf16.mxu0 0
      %586 = vmatmul.mubr.bf16.gmra.mrb[0].mxu0 %v542
      %v587 = vpop.f32.mrb[0].mxu0
      %v588 = vadd.f32 0.0, %v587
      %v589 = vpop.f32.mrb[0].mxu0
      %v590 = vpop.f32.mrb[0].mxu0
      %v591 = vadd.f32 0.0, %v590
      %v592 = vpop.f32.mrb[0].mxu0
      %593 = vmatprep.mubr.bf16.mxu0 0
      %594 = vmatmul.mubr.bf16.gmra.mrb[0].mxu0 %v545
      %v595 = vpop.f32.mrb[0].mxu0
      %v596 = vadd.f32 0.0, %v595
      %v597 = vpop.f32.mrb[0].mxu0
      %v598 = vpop.f32.mrb[0].mxu0
      %v599 = vadd.f32 0.0, %v598
      %v600 = vpop.f32.mrb[0].mxu0
      %601 = vmatprep.mubr.bf16.mxu0 0
      %602 = vmatmul.mubr.bf16.gmra.mrb[0].mxu0 %v548
      %v603 = vpop.f32.mrb[0].mxu0
      %v604 = vadd.f32 0.0, %v603
      %v605 = vpop.f32.mrb[0].mxu0
      %v606 = vpop.f32.mrb[0].mxu0
      %v607 = vadd.f32 0.0, %v606
      %v608 = vpop.f32.mrb[0].mxu0
      %609 = vmatprep.mubr.bf16.mxu0 0
      %610 = vmatmul.mubr.bf16.gmra.mrb[0].mxu0 %v551
      %v611 = vpop.f32.mrb[0].mxu0
      %v612 = vadd.f32 0.0, %v611
      %v613 = vpop.f32.mrb[0].mxu0
      %v614 = vpop.f32.mrb[0].mxu0
      %v615 = vadd.f32 0.0, %v614
      %v616 = vpop.f32.mrb[0].mxu0
      %617 = vdwg.mxu0
      %618 = vst.msk [vmem:[%s206] sm:$0xff] %vm355, %v588
      %619 = vst.msk [vmem:[%s206 + $0x8] sm:$0xff] %vm355, %v591
      %620 = vst.msk [vmem:[%s206 + $0x10] sm:$0xff] %vm355, %v596
      %621 = vst.msk [vmem:[%s206 + $0x18] sm:$0xff] %vm355, %v599
      %622 = vst.msk [vmem:[%s206 + $0x20] sm:$0xff] %vm355, %v604
      %623 = vst.msk [vmem:[%s206 + $0x28] sm:$0xff] %vm355, %v607
      %624 = vst.msk [vmem:[%s206 + $0x30] sm:$0xff] %vm355, %v612
      %625 = vst.msk [vmem:[%s206 + $0x38] sm:$0xff] %vm355, %v615
      %p626 = scmp.lt.s32.totalorder %s19, 1
      %s627 = scalar_select %p626, %s19, 1
      %p628 = scmp.lt.s32.totalorder %s18, 1
      %s629 = scalar_select %p628, %s18, 1
      %s630 = smul.addr %s629, 8
      %s631 = smul.addr %s627, 16
      %s632 = sadd.s32 %s630, %s631
      %s633 = smul.addr %s632, 8
      %s634 = scalar_lea.vmem %s3, %s633
      // Predicated region
      $region37: #{ms_block.11} parent=31 // pred_check
        %p635 = pneg %p116
      $region38: #{ms_block.11} parent=31 // pred_check_branch
        %637 = sbr.rel (%p635) target = $region40
      $region39: #{ms_block.11} parent=31 // pred_region
        _
      $region40: #{ms_block.11} parent=31 // pred_fallthru
        _
    $region32: #{ms_block.11} parent=5 // pred_fallthru
      _
    %p638 = scmp.le.s32.totalorder 2, %s9
    // Predicated region
    $region41: #{ms_block.11} parent=5 // pred_check
      %p639 = pneg %p638
    $region42: #{ms_block.11} parent=5 // pred_check_branch
      %641 = sbr.rel (%p639) target = $region44
    $region43: #{ms_block.11} parent=5 // pred_region
      %s642 = ssub.s32 %s9, 2
      // Predicated region
      $region45: #{ms_block.11} parent=43 // pred_check
        %p643 = pneg %p122
      $region46: #{ms_block.11} parent=43 // pred_check_branch
        %645 = sbr.rel (%p643) target = $region48
      $region47: #{ms_block.11} parent=43 // pred_region
        %p646 = scmp.lt.s32.totalorder %s21, 1
        %s647 = scalar_select %p646, %s21, 1
        %p648 = scmp.lt.s32.totalorder %s20, 1
        %s649 = scalar_select %p648, %s20, 1
        %s650 = smul.addr %s649, 8
        %s651 = smul.addr %s647, 16
        %s652 = sadd.s32 %s650, %s651
        %s653 = smul.addr %s652, 8
        %s654 = scalar_lea.vmem %s3, %s653
      $region48: #{ms_block.11} parent=43 // pred_fallthru
        _
    $region44: #{ms_block.11} parent=5 // pred_fallthru
      _
  $region6: #{ms_block.11} parent=0 // loop_footer
    %s13 = sadd.s32 1, %s9
  $region7: #{ms_block.11} parent=0 // loop_footer_branch
    %8 = sbr.rel target = $region3
  $region8: #{ms_block.11} parent=0 // loop_exit
    _

// kernel: ms_block.10
$region0: #{ms_block.10}
  #allocation0 [shape = 'u32[]', space=smem, size = 0x4, offset = 0x4, fixed_abs, tag = 'smem constant byte address 0x4 - core index']
  #allocation1 [shape = 'u32[144,128]{1,0:T(1,128)}', space=vmem, size = 0x12000, scoped, tag = 'internal scratch']
  #allocation2 [shape = 'f32[128,96]{1,0:T(8,128)}', space=vmem, size = 0x10000, scoped, tag = 'scratch operand']
  %s0 = inlined_call_operand.vmem [shape: bf16[2,128,96], index: 0, kind: input, shape index: {}]
  %s1 = inlined_call_operand.vmem [shape: bf16[96,96], index: 1, kind: input, shape index: {}]
  %s2 = inlined_call_operand.vmem [shape: f32[1,96], index: 2, kind: input, shape index: {}]
  %s3 = inlined_call_operand.vmem [shape: bf16[2,128,96], index: 3, kind: output, shape index: {}]
  %s4 = sld [smem:[#allocation0]]
  $region49: #{ms_block.10} parent=0
    _
  %s6 = ssub.s32 1, %s4
  %s7 = scalar_select 0, %s6, %s4
  loop: start=0, step=1, limit=4
  $region2: #{ms_block.10} parent=0 // loop_pre_header
    _
  $region3: #{ms_block.10} parent=0 // loop_header
    %s9 = sphi 0, %s13
    %p10 = scmp.ge.s32.totalorder %s9, 4
    %s16 = sphi 0, %s28
    %s17 = sphi 0, %s24
    %s18 = sphi 0, %s16
    %s19 = sphi 0, %s17
    %s20 = sphi 0, %s18
    %s21 = sphi 0, %s19
    %s33 = sphi 0, %s35
    %s36 = sphi 0, %s33
    %s37 = sphi 0, %s36
    %s53 = sphi 0, %s37
    %s57 = sphi 0, %s57
    %s59 = sphi 0, %s57
    %s60 = sphi 0, %s59
    %s74 = sphi 0, %s60
    %s78 = sphi 0, %s78
    %s80 = sphi 0, %s78
    %s81 = sphi 0, %s80
    %s95 = sphi 0, %s81
    %s103 = sphi 0, %s105
    %s106 = sphi 0, %s103
    %s107 = sphi 0, %s106
    %s123 = sphi 0, %s107
  $region4: #{ms_block.10} parent=0 // loop_header_branch
    %12 = sbr.rel (%p10) target = $region8
  $region5: #{ms_block.10} parent=0 // loop_body
    %s14 = ssub.s32 %s9, 1
    %s15 = ssub.s32 %s9, 2
    %s22 = sadd.s32 1, %s17
    %p23 = scmp.ge.s32.totalorder %s22, 2
    %s24 = scalar_select %p23, 0, %s22
    %s25 = sadd.s32 1, %s16
    %s26 = scalar_select %p23, %s25, %s16
    %p27 = scmp.ge.s32.totalorder %s26, 1
    %s28 = scalar_select %p27, 0, %s26
    %s29 = ssub.s32 %s17, %s24
    %s30 = ssub.s32 %s16, %s28
    %s31 = sor.u32 %s29, %s30
    %p32 = scmp.eq.s32.totalorder %s31, 0
    %s34 = sadd.s32 %s33, 1
    %s35 = scalar_select %p32, %s33, %s34
    %p38 = pneg %p32
    %p39 = scmp.eq.s32.totalorder %s9, 1
    %p40 = por %p38, %p39
    %p41 = scmp.ne.s32.totalorder %s33, %s36
    %p42 = scmp.eq.s32.totalorder %s9, 0
    %p43 = por %p41, %p42
    %p44 = scmp.ne.s32.totalorder %s33, %s36
    %p45 = scmp.eq.s32.totalorder %s14, 1
    %p46 = por %p44, %p45
    %p47 = scmp.ne.s32.totalorder %s36, %s37
    %p48 = scmp.eq.s32.totalorder %s14, 0
    %p49 = por %p47, %p48
    %p50 = scmp.ne.s32.totalorder %s36, %s37
    %p51 = scmp.eq.s32.totalorder %s15, 1
    %p52 = por %p50, %p51
    %p54 = scmp.ne.s32.totalorder %s37, %s53
    %p55 = scmp.eq.s32.totalorder %s15, 0
    %p56 = por %p54, %p55
    %s58 = sadd.s32 %s57, 1
    %p61 = scmp.eq.s32.totalorder %s9, 1
    %p62 = scmp.ne.s32.totalorder %s57, %s59
    %p63 = scmp.eq.s32.totalorder %s9, 0
    %p64 = por %p62, %p63
    %p65 = scmp.ne.s32.totalorder %s57, %s59
    %p66 = scmp.eq.s32.totalorder %s14, 1
    %p67 = por %p65, %p66
    %p68 = scmp.ne.s32.totalorder %s59, %s60
    %p69 = scmp.eq.s32.totalorder %s14, 0
    %p70 = por %p68, %p69
    %p71 = scmp.ne.s32.totalorder %s59, %s60
    %p72 = scmp.eq.s32.totalorder %s15, 1
    %p73 = por %p71, %p72
    %p75 = scmp.ne.s32.totalorder %s60, %s74
    %p76 = scmp.eq.s32.totalorder %s15, 0
    %p77 = por %p75, %p76
    %s79 = sadd.s32 %s78, 1
    %p82 = scmp.eq.s32.totalorder %s9, 1
    %p83 = scmp.ne.s32.totalorder %s78, %s80
    %p84 = scmp.eq.s32.totalorder %s9, 0
    %p85 = por %p83, %p84
    %p86 = scmp.ne.s32.totalorder %s78, %s80
    %p87 = scmp.eq.s32.totalorder %s14, 1
    %p88 = por %p86, %p87
    %p89 = scmp.ne.s32.totalorder %s80, %s81
    %p90 = scmp.eq.s32.totalorder %s14, 0
    %p91 = por %p89, %p90
    %p92 = scmp.ne.s32.totalorder %s80, %s81
    %p93 = scmp.eq.s32.totalorder %s15, 1
    %p94 = por %p92, %p93
    %p96 = scmp.ne.s32.totalorder %s81, %s95
    %p97 = scmp.eq.s32.totalorder %s15, 0
    %p98 = por %p96, %p97
    %s99 = ssub.s32 %s17, %s24
    %s100 = ssub.s32 %s16, %s28
    %s101 = sor.u32 %s99, %s100
    %p102 = scmp.eq.s32.totalorder %s101, 0
    %s104 = sadd.s32 %s103, 1
    %s105 = scalar_select %p102, %s103, %s104
    %p108 = pneg %p102
    %p109 = scmp.eq.s32.totalorder %s9, 1
    %p110 = por %p108, %p109
    %p111 = scmp.ne.s32.totalorder %s103, %s106
    %p112 = scmp.eq.s32.totalorder %s9, 0
    %p113 = por %p111, %p112
    %p114 = scmp.ne.s32.totalorder %s103, %s106
    %p115 = scmp.eq.s32.totalorder %s14, 1
    %p116 = por %p114, %p115
    %p117 = scmp.ne.s32.totalorder %s106, %s107
    %p118 = scmp.eq.s32.totalorder %s14, 0
    %p119 = por %p117, %p118
    %p120 = scmp.ne.s32.totalorder %s106, %s107
    %p121 = scmp.eq.s32.totalorder %s15, 1
    %p122 = por %p120, %p121
    %p124 = scmp.ne.s32.totalorder %s107, %s123
    %p125 = scmp.eq.s32.totalorder %s15, 0
    %p126 = por %p124, %p125
    %p127 = scmp.le.s32.totalorder 1, %s9
    %p128 = scmp.lt.s32.totalorder %s9, 3
    %p129 = pnand %p127, %p128
    %p130 = pneg %p129
    // Predicated region
    $region9: #{ms_block.10} parent=5 // pred_check
      _
    $region10: #{ms_block.10} parent=5 // pred_check_branch
      %132 = sbr.rel (%p129) target = $region12
    $region11: #{ms_block.10} parent=5 // pred_region
      %s133 = ssub.s32 %s9, 1
      // Predicated region
      $region13: #{ms_block.10} parent=11 // pred_check
        %p134 = pneg %p70
      $region14: #{ms_block.10} parent=11 // pred_check_branch
        %136 = sbr.rel (%p134) target = $region16
      $region15: #{ms_block.10} parent=11 // pred_region
        _
      $region16: #{ms_block.10} parent=11 // pred_fallthru
        _
      // Predicated region
      $region17: #{ms_block.10} parent=11 // pred_check
        %p137 = pneg %p91
      $region18: #{ms_block.10} parent=11 // pred_check_branch
        %139 = sbr.rel (%p137) target = $region20
      $region19: #{ms_block.10} parent=11 // pred_region
        _
      $region20: #{ms_block.10} parent=11 // pred_fallthru
        _
    $region12: #{ms_block.10} parent=5 // pred_fallthru
      _
    %p140 = scmp.lt.s32.totalorder %s9, 2
    // Predicated region
    $region21: #{ms_block.10} parent=5 // pred_check
      %p141 = pneg %p140
    $region22: #{ms_block.10} parent=5 // pred_check_branch
      %143 = sbr.rel (%p141) target = $region24
    $region23: #{ms_block.10} parent=5 // pred_region
      // Predicated region
      $region25: #{ms_block.10} parent=23 // pred_check
        %p144 = pneg %p43
      $region26: #{ms_block.10} parent=23 // pred_check_branch
        %146 = sbr.rel (%p144) target = $region28
      $region27: #{ms_block.10} parent=23 // pred_region
        %s147 = smul.u32 16, %s16
        %p148 = scmp.lt.s32.totalorder %s17, 1
        %s149 = scalar_select %p148, %s17, 1
        %p150 = scmp.lt.s32.totalorder %s147, 15
        %s151 = scalar_select %p150, %s147, 15
        %s152 = smul.addr %s149, 16
        %s153 = sadd.s32 %s151, %s152
        %s154 = smul.addr %s153, 4
        %s155 = scalar_lea.vmem %s0, %s154
        %s156 = smul.u32 16, %s16
      $region28: #{ms_block.10} parent=23 // pred_fallthru
        _
    $region24: #{ms_block.10} parent=5 // pred_fallthru
      _
    %p157 = scmp.le.s32.totalorder 1, %s9
    %p158 = scmp.lt.s32.totalorder %s9, 3
    %p159 = pnand %p157, %p158
    %p160 = pneg %p159
    // Predicated region
    $region29: #{ms_block.10} parent=5 // pred_check
      _
    $region30: #{ms_block.10} parent=5 // pred_check_branch
      %162 = sbr.rel (%p159) target = $region32
    $region31: #{ms_block.10} parent=5 // pred_region
      %s163 = ssub.s32 %s9, 1
      %s164 = smul.u32 16, %s18
      %p165 = scmp.lt.s32.totalorder %s19, 1
      %s166 = scalar_select %p165, %s19, 1
      %p167 = scmp.lt.s32.totalorder %s164, 15
      %s168 = scalar_select %p167, %s164, 15
      %s169 = smul.addr %s166, 16
      %s170 = sadd.s32 %s168, %s169
      %s171 = smul.addr %s170, 4
      %s172 = scalar_lea.vmem %s0, %s171
      %p173 = pneg %p49
      %p174 = pneg %p46
      %p175 = pneg %p70
      %p176 = pneg %p67
      %p177 = pneg %p91
      %p178 = pneg %p88
      %p179 = pneg %p119
      %p180 = pneg %p116
      %s181 = smul.u32 16, %s18
      %p182 = scmp.lt.s32.totalorder %s19, 1
      %s183 = scalar_select %p182, %s19, 1
      %p184 = scmp.lt.s32.totalorder %s181, 15
      %s185 = scalar_select %p184, %s181, 15
      %s186 = smul.addr %s183, 16
      %s187 = sadd.s32 %s185, %s186
      %s188 = smul.addr %s187, 4
      %s189 = scalar_lea.vmem %s3, %s188
      %s190 = smul.u32 16, %s18
      %p191 = scmp.lt.s32.totalorder %s19, 1
      %s192 = scalar_select %p191, %s19, 1
      %p193 = scmp.lt.s32.totalorder %s190, 15
      %s194 = scalar_select %p193, %s190, 15
      %s195 = smul.addr %s192, 16
      %s196 = sadd.s32 %s194, %s195
      %s197 = smul.addr %s196, 4
      %s198 = scalar_lea.vmem %s0, %s197
      %s199 = smul.u32 16, %s18
      %s200 = smul.u32 16, %s18
      %p201 = scmp.lt.s32.totalorder %s19, 1
      %s202 = scalar_select %p201, %s19, 1
      %p203 = scmp.lt.s32.totalorder %s200, 15
      %s204 = scalar_select %p203, %s200, 15
      %s205 = smul.addr %s202, 16
      %s206 = sadd.s32 %s204, %s205
      %s207 = smul.addr %s206, 4
      %s208 = scalar_lea.vmem %s3, %s207
      %s209 = smul.u32 16, %s18
      %p211 = scmp.eq.s32.totalorder %s19, 0
      // Predicated region
      $region33: #{ms_block.10} parent=31 // pred_check
        %p212 = pneg %p211
      $region34: #{ms_block.10} parent=31 // pred_check_branch
        %214 = sbr.rel (%p212) target = $region36
      $region35: #{ms_block.10} parent=31 // pred_region
        %vm215 = vcmask 785408
        %216 = vst.msk [vmem:[#allocation2] sm:$0xff] %vm215, 0.0
        %217 = vst.msk [vmem:[#allocation2 + $0x8] sm:$0xff] %vm215, 0.0
        %218 = vst.msk [vmem:[#allocation2 + $0x10] sm:$0xff] %vm215, 0.0
        %219 = vst.msk [vmem:[#allocation2 + $0x18] sm:$0xff] %vm215, 0.0
        %220 = vst.msk [vmem:[#allocation2 + $0x20] sm:$0xff] %vm215, 0.0
        %221 = vst.msk [vmem:[#allocation2 + $0x28] sm:$0xff] %vm215, 0.0
        %222 = vst.msk [vmem:[#allocation2 + $0x30] sm:$0xff] %vm215, 0.0
        %223 = vst.msk [vmem:[#allocation2 + $0x38] sm:$0xff] %vm215, 0.0
        %224 = vst.msk [vmem:[#allocation2 + $0x40] sm:$0xff] %vm215, 0.0
        %225 = vst.msk [vmem:[#allocation2 + $0x48] sm:$0xff] %vm215, 0.0
        %226 = vst.msk [vmem:[#allocation2 + $0x50] sm:$0xff] %vm215, 0.0
        %227 = vst.msk [vmem:[#allocation2 + $0x58] sm:$0xff] %vm215, 0.0
        %228 = vst.msk [vmem:[#allocation2 + $0x60] sm:$0xff] %vm215, 0.0
        %229 = vst.msk [vmem:[#allocation2 + $0x68] sm:$0xff] %vm215, 0.0
        %230 = vst.msk [vmem:[#allocation2 + $0x70] sm:$0xff] %vm215, 0.0
        %231 = vst.msk [vmem:[#allocation2 + $0x78] sm:$0xff] %vm215, 0.0
      $region36: #{ms_block.10} parent=31 // pred_fallthru
        _
      %v232 = vld [vmem:[%s198] sm:$0xf]
      %v233 = vld [vmem:[%s198 + $0x4] sm:$0xf]
      %v234 = vld [vmem:[%s198 + $0x8] sm:$0xf]
      %v235 = vld [vmem:[%s198 + $0xc] sm:$0xf]
      %v236 = vld [vmem:[%s198 + $0x10] sm:$0xf]
      %v237 = vld [vmem:[%s198 + $0x14] sm:$0xf]
      %v238 = vld [vmem:[%s198 + $0x18] sm:$0xf]
      %v239 = vld [vmem:[%s198 + $0x1c] sm:$0xf]
      %v240 = vld [vmem:[%s198 + $0x20] sm:$0xf]
      %v241 = vld [vmem:[%s198 + $0x24] sm:$0xf]
      %v242 = vld [vmem:[%s198 + $0x28] sm:$0xf]
      %v243 = vld [vmem:[%s198 + $0x2c] sm:$0xf]
      %v244 = vld [vmem:[%s198 + $0x30] sm:$0xf]
      %v245 = vld [vmem:[%s198 + $0x34] sm:$0xf]
      %v246 = vld [vmem:[%s198 + $0x38] sm:$0xf]
      %v247 = vld [vmem:[%s198 + $0x3c] sm:$0xf]
      %v248 = vld [vmem:[%s1] sm:$0xf]
      %v249 = vld [vmem:[%s1 + $0x4] sm:$0xf]
      %v250 = vld [vmem:[%s1 + $0x8] sm:$0xf]
      %v251 = vld [vmem:[%s1 + $0xc] sm:$0xf]
      %v252 = vld [vmem:[%s1 + $0x10] sm:$0xf]
      %v253 = vld [vmem:[%s1 + $0x14] sm:$0xf]
      %v254 = vld [vmem:[%s1 + $0x18] sm:$0xf]
      %v255 = vld [vmem:[%s1 + $0x1c] sm:$0xf]
      %v256 = vld [vmem:[%s1 + $0x20] sm:$0xf]
      %v257 = vld [vmem:[%s1 + $0x24] sm:$0xf]
      %v258 = vld [vmem:[%s1 + $0x28] sm:$0xf]
      %v259 = vld [vmem:[%s1 + $0x2c] sm:$0xf]
      %v260 = vld [vmem:[%s2] sm:$0x1]
      %v262 = vlaneseq
      %v263 = vshrl.u32 %v262, 7
      %v264 = vsub.s32 0, %v263
      %v265 = vrot.slane %v260, %v264
      %v283 = vunpack.c.l.b16 %v232
      %v284 = vunpack.c.l.b16 %v233
      %v285 = vunpack.c.l.b16 %v234
      %v286 = vunpack.c.l.b16 %v235
      %v287 = vunpack.c.l.b16 %v236
      %v288 = vunpack.c.l.b16 %v237
      %v289 = vunpack.c.l.b16 %v238
      %v290 = vunpack.c.l.b16 %v239
      %v291 = vunpack.c.l.b16 %v240
      %v292 = vunpack.c.l.b16 %v241
      %v293 = vunpack.c.l.b16 %v242
      %v294 = vunpack.c.l.b16 %v243
      %v295 = vunpack.c.l.b16 %v244
      %v296 = vunpack.c.l.b16 %v245
      %v297 = vunpack.c.l.b16 %v246
      %v298 = vunpack.c.l.b16 %v247
      %v299 = vpack.c.b16 %v284, %v283
      %v300 = vpack.c.b16 %v286, %v285
      %v301 = vpack.c.b16 %v288, %v287
      %v302 = vpack.c.b16 %v290, %v289
      %v303 = vpack.c.b16 %v292, %v291
      %v304 = vpack.c.b16 %v294, %v293
      %v305 = vpack.c.b16 %v296, %v295
      %v306 = vpack.c.b16 %v298, %v297
      %v319 = vunpack.c.l.b16 %v248
      %v320 = vunpack.c.l.b16 %v249
      %v321 = vunpack.c.l.b16 %v250
      %v322 = vunpack.c.l.b16 %v251
      %v323 = vunpack.c.l.b16 %v252
      %v324 = vunpack.c.l.b16 %v253
      %v325 = vunpack.c.l.b16 %v254
      %v326 = vunpack.c.l.b16 %v255
      %v327 = vunpack.c.l.b16 %v256
      %v328 = vunpack.c.l.b16 %v257
      %v329 = vunpack.c.l.b16 %v258
      %v330 = vunpack.c.l.b16 %v259
      %v331 = vpack.c.b16 %v320, %v319
      %v332 = vpack.c.b16 %v322, %v321
      %v333 = vpack.c.b16 %v324, %v323
      %v334 = vpack.c.b16 %v326, %v325
      %v335 = vpack.c.b16 %v328, %v327
      %v336 = vpack.c.b16 %v330, %v329
      %vm343 = vcmask 785408
      %v345 = vsel %vm343, %v299, 0
      %v348 = vsel %vm343, %v300, 0
      %v351 = vsel %vm343, %v301, 0
      %v354 = vsel %vm343, %v302, 0
      %v357 = vsel %vm343, %v303, 0
      %v360 = vsel %vm343, %v304, 0
      %v363 = vsel %vm343, %v305, 0
      %v366 = vsel %vm343, %v306, 0
      %368 = vmatprep.subr.bf16.mxu0 0
      %369 = vmatpush1.bf16.msra.mxu0 %v331
      %370 = vmatprep.subr.bf16.mxu0 0
      %371 = vmatpush1.bf16.msra.mxu0 %v332
      %372 = vmatprep.subr.bf16.mxu0 0
      %373 = vmatpush1.bf16.msra.mxu0 %v333
      %374 = vmatprep.subr.bf16.mxu0 0
      %375 = vmatpush1.bf16.msra.mxu0 %v334
      %376 = vmatprep.subr.bf16.mxu0 0
      %377 = vmatpush1.bf16.msra.mxu0 %v335
      %378 = vmatprep.subr.bf16.mxu0 0
      %379 = vmatpush1.bf16.msra.mxu0 %v336
      %380 = vmatprep.subr.bf16.mxu0 0
      %381 = vmatpush1.bf16.msra.mxu0 0
      %382 = vmatprep.subr.bf16.mxu0 0
      %383 = vmatpush1.bf16.msra.mxu0 0
      %384 = vmatprep.subr.bf16.mxu0 0
      %385 = vmatpush1.bf16.msra.mxu0 0
      %386 = vmatprep.subr.bf16.mxu0 0
      %387 = vmatpush1.bf16.msra.mxu0 0
      %388 = vmatprep.subr.bf16.mxu0 0
      %389 = vmatpush1.bf16.msra.mxu0 0
      %390 = vmatprep.subr.bf16.mxu0 0
      %391 = vmatpush1.bf16.msra.mxu0 0
      %392 = vmatprep.subr.bf16.mxu0 0
      %393 = vmatpush1.bf16.msra.mxu0 0
      %394 = vmatprep.subr.bf16.mxu0 0
      %395 = vmatpush1.bf16.msra.mxu0 0
      %396 = vmatprep.subr.bf16.mxu0 0
      %397 = vmatpush1.bf16.msra.mxu0 0
      %398 = vmatprep.subr.bf16.mxu0 0
      %399 = vmatpush1.bf16.msra.mxu0 0
      %400 = vmatprep.mubr.bf16.mxu0 0
      %401 = vmatmul.mubr.bf16.gmra.mrb[0].mxu0 %v345
      %v402 = vpop.f32.mrb[0].mxu0
      %v403 = vadd.f32 %v265, %v402
      %v404 = vpop.f32.mrb[0].mxu0
      %v405 = vpop.f32.mrb[0].mxu0
      %v406 = vadd.f32 %v265, %v405
      %v407 = vpop.f32.mrb[0].mxu0
      %408 = vmatprep.mubr.bf16.mxu0 0
      %409 = vmatmul.mubr.bf16.gmra.mrb[0].mxu0 %v348
      %v410 = vpop.f32.mrb[0].mxu0
      %v411 = vadd.f32 %v265, %v410
      %v412 = vpop.f32.mrb[0].mxu0
      %v413 = vpop.f32.mrb[0].mxu0
      %v414 = vadd.f32 %v265, %v413
      %v415 = vpop.f32.mrb[0].mxu0
      %416 = vmatprep.mubr.bf16.mxu0 0
      %417 = vmatmul.mubr.bf16.gmra.mrb[0].mxu0 %v351
      %v418 = vpop.f32.mrb[0].mxu0
      %v419 = vadd.f32 %v265, %v418
      %v420 = vpop.f32.mrb[0].mxu0
      %v421 = vpop.f32.mrb[0].mxu0
      %v422 = vadd.f32 %v265, %v421
      %v423 = vpop.f32.mrb[0].mxu0
      %424 = vmatprep.mubr.bf16.mxu0 0
      %425 = vmatmul.mubr.bf16.gmra.mrb[0].mxu0 %v354
      %v426 = vpop.f32.mrb[0].mxu0
      %v427 = vadd.f32 %v265, %v426
      %v428 = vpop.f32.mrb[0].mxu0
      %v429 = vpop.f32.mrb[0].mxu0
      %v430 = vadd.f32 %v265, %v429
      %v431 = vpop.f32.mrb[0].mxu0
      %432 = vmatprep.mubr.bf16.mxu0 0
      %433 = vmatmul.mubr.bf16.gmra.mrb[0].mxu0 %v357
      %v434 = vpop.f32.mrb[0].mxu0
      %v435 = vadd.f32 %v265, %v434
      %v436 = vpop.f32.mrb[0].mxu0
      %v437 = vpop.f32.mrb[0].mxu0
      %v438 = vadd.f32 %v265, %v437
      %v439 = vpop.f32.mrb[0].mxu0
      %440 = vmatprep.mubr.bf16.mxu0 0
      %441 = vmatmul.mubr.bf16.gmra.mrb[0].mxu0 %v360
      %v442 = vpop.f32.mrb[0].mxu0
      %v443 = vadd.f32 %v265, %v442
      %v444 = vpop.f32.mrb[0].mxu0
      %v445 = vpop.f32.mrb[0].mxu0
      %v446 = vadd.f32 %v265, %v445
      %v447 = vpop.f32.mrb[0].mxu0
      %448 = vmatprep.mubr.bf16.mxu0 0
      %449 = vmatmul.mubr.bf16.gmra.mrb[0].mxu0 %v363
      %v450 = vpop.f32.mrb[0].mxu0
      %v451 = vadd.f32 %v265, %v450
      %v452 = vpop.f32.mrb[0].mxu0
      %v453 = vpop.f32.mrb[0].mxu0
      %v454 = vadd.f32 %v265, %v453
      %v455 = vpop.f32.mrb[0].mxu0
      %456 = vmatprep.mubr.bf16.mxu0 0
      %457 = vmatmul.mubr.bf16.gmra.mrb[0].mxu0 %v366
      %v458 = vpop.f32.mrb[0].mxu0
      %v459 = vadd.f32 %v265, %v458
      %v460 = vpop.f32.mrb[0].mxu0
      %v461 = vpop.f32.mrb[0].mxu0
      %v462 = vadd.f32 %v265, %v461
      %v463 = vpop.f32.mrb[0].mxu0
      %464 = vdwg.mxu0
      %v465 = vld [vmem:[#allocation2] sm:$0xff]
      %v466 = vld [vmem:[#allocation2 + $0x8] sm:$0xff]
      %v467 = vld [vmem:[#allocation2 + $0x10] sm:$0xff]
      %v468 = vld [vmem:[#allocation2 + $0x18] sm:$0xff]
      %v469 = vld [vmem:[#allocation2 + $0x20] sm:$0xff]
      %v470 = vld [vmem:[#allocation2 + $0x28] sm:$0xff]
      %v471 = vld [vmem:[#allocation2 + $0x30] sm:$0xff]
      %v472 = vld [vmem:[#allocation2 + $0x38] sm:$0xff]
      %v473 = vld [vmem:[#allocation2 + $0x40] sm:$0xff]
      %v474 = vld [vmem:[#allocation2 + $0x48] sm:$0xff]
      %v475 = vld [vmem:[#allocation2 + $0x50] sm:$0xff]
      %v476 = vld [vmem:[#allocation2 + $0x58] sm:$0xff]
      %v477 = vld [vmem:[#allocation2 + $0x60] sm:$0xff]
      %v478 = vld [vmem:[#allocation2 + $0x68] sm:$0xff]
      %v479 = vld [vmem:[#allocation2 + $0x70] sm:$0xff]
      %v480 = vld [vmem:[#allocation2 + $0x78] sm:$0xff]
      %v481 = vsub.f32 %v403, %v465
      %v482 = vsub.f32 %v406, %v466
      %v483 = vsub.f32 %v411, %v467
      %v484 = vsub.f32 %v414, %v468
      %v485 = vsub.f32 %v419, %v469
      %v486 = vsub.f32 %v422, %v470
      %v487 = vsub.f32 %v427, %v471
      %v488 = vsub.f32 %v430, %v472
      %v489 = vsub.f32 %v435, %v473
      %v490 = vsub.f32 %v438, %v474
      %v491 = vsub.f32 %v443, %v475
      %v492 = vsub.f32 %v446, %v476
      %v493 = vsub.f32 %v451, %v477
      %v494 = vsub.f32 %v454, %v478
      %v495 = vsub.f32 %v459, %v479
      %v496 = vsub.f32 %v462, %v480
      %v497 = vmul.f32 %v481, 0.5
      %v498 = vmul.f32 %v482, 0.5
      %v499 = vmul.f32 %v483, 0.5
      %v500 = vmul.f32 %v484, 0.5
      %v501 = vmul.f32 %v485, 0.5
      %v502 = vmul.f32 %v486, 0.5
      %v503 = vmul.f32 %v487, 0.5
      %v504 = vmul.f32 %v488, 0.5
      %v505 = vmul.f32 %v489, 0.5
      %v506 = vmul.f32 %v490, 0.5
      %v507 = vmul.f32 %v491, 0.5
      %v508 = vmul.f32 %v492, 0.5
      %v509 = vmul.f32 %v493, 0.5
      %v510 = vmul.f32 %v494, 0.5
      %v511 = vmul.f32 %v495, 0.5
      %v512 = vmul.f32 %v496, 0.5
      %v513 = vadd.f32 %v465, %v497
      %v514 = vadd.f32 %v466, %v498
      %v515 = vadd.f32 %v467, %v499
      %v516 = vadd.f32 %v468, %v500
      %v517 = vadd.f32 %v469, %v501
      %v518 = vadd.f32 %v470, %v502
      %v519 = vadd.f32 %v471, %v503
      %v520 = vadd.f32 %v472, %v504
      %v521 = vadd.f32 %v473, %v505
      %v522 = vadd.f32 %v474, %v506
      %v523 = vadd.f32 %v475, %v507
      %v524 = vadd.f32 %v476, %v508
      %v525 = vadd.f32 %v477, %v509
      %v526 = vadd.f32 %v478, %v510
      %v527 = vadd.f32 %v479, %v511
      %v528 = vadd.f32 %v480, %v512
      %vm529 = vcmp.ge.f32.partialorder %v513, 1.0
      %vm530 = vcmp.ge.f32.partialorder %v514, 1.0
      %vm531 = vcmp.ge.f32.partialorder %v515, 1.0
      %vm532 = vcmp.ge.f32.partialorder %v516, 1.0
      %vm533 = vcmp.ge.f32.partialorder %v517, 1.0
      %vm534 = vcmp.ge.f32.partialorder %v518, 1.0
      %vm535 = vcmp.ge.f32.partialorder %v519, 1.0
      %vm536 = vcmp.ge.f32.partialorder %v520, 1.0
      %vm537 = vcmp.ge.f32.partialorder %v521, 1.0
      %vm538 = vcmp.ge.f32.partialorder %v522, 1.0
      %vm539 = vcmp.ge.f32.partialorder %v523, 1.0
      %vm540 = vcmp.ge.f32.partialorder %v524, 1.0
      %vm541 = vcmp.ge.f32.partialorder %v525, 1.0
      %vm542 = vcmp.ge.f32.partialorder %v526, 1.0
      %vm543 = vcmp.ge.f32.partialorder %v527, 1.0
      %vm544 = vcmp.ge.f32.partialorder %v528, 1.0
      %v545 = vsel %vm529, 1, 0
      %v546 = vsel %vm530, 1, 0
      %v547 = vsel %vm531, 1, 0
      %v548 = vsel %vm532, 1, 0
      %v549 = vsel %vm533, 1, 0
      %v550 = vsel %vm534, 1, 0
      %v551 = vsel %vm535, 1, 0
      %v552 = vsel %vm536, 1, 0
      %v553 = vsel %vm537, 1, 0
      %v554 = vsel %vm538, 1, 0
      %v555 = vsel %vm539, 1, 0
      %v556 = vsel %vm540, 1, 0
      %v557 = vsel %vm541, 1, 0
      %v558 = vsel %vm542, 1, 0
      %v559 = vsel %vm543, 1, 0
      %v560 = vsel %vm544, 1, 0
      %v561 = vcvt.s32.f32 %v545
      %v562 = vcvt.s32.f32 %v546
      %v563 = vcvt.s32.f32 %v547
      %v564 = vcvt.s32.f32 %v548
      %v565 = vcvt.s32.f32 %v549
      %v566 = vcvt.s32.f32 %v550
      %v567 = vcvt.s32.f32 %v551
      %v568 = vcvt.s32.f32 %v552
      %v569 = vcvt.s32.f32 %v553
      %v570 = vcvt.s32.f32 %v554
      %v571 = vcvt.s32.f32 %v555
      %v572 = vcvt.s32.f32 %v556
      %v573 = vcvt.s32.f32 %v557
      %v574 = vcvt.s32.f32 %v558
      %v575 = vcvt.s32.f32 %v559
      %v576 = vcvt.s32.f32 %v560
      %v577 = vsub.f32 1.0, %v561
      %v578 = vsub.f32 1.0, %v562
      %v579 = vsub.f32 1.0, %v563
      %v580 = vsub.f32 1.0, %v564
      %v581 = vsub.f32 1.0, %v565
      %v582 = vsub.f32 1.0, %v566
      %v583 = vsub.f32 1.0, %v567
      %v584 = vsub.f32 1.0, %v568
      %v585 = vsub.f32 1.0, %v569
      %v586 = vsub.f32 1.0, %v570
      %v587 = vsub.f32 1.0, %v571
      %v588 = vsub.f32 1.0, %v572
      %v589 = vsub.f32 1.0, %v573
      %v590 = vsub.f32 1.0, %v574
      %v591 = vsub.f32 1.0, %v575
      %v592 = vsub.f32 1.0, %v576
      %v593 = vmul.f32 %v513, %v577
      %v594 = vmul.f32 %v514, %v578
      %v595 = vmul.f32 %v515, %v579
      %v596 = vmul.f32 %v516, %v580
      %v597 = vmul.f32 %v517, %v581
      %v598 = vmul.f32 %v518, %v582
      %v599 = vmul.f32 %v519, %v583
      %v600 = vmul.f32 %v520, %v584
      %v601 = vmul.f32 %v521, %v585
      %v602 = vmul.f32 %v522, %v586
      %v603 = vmul.f32 %v523, %v587
      %v604 = vmul.f32 %v524, %v588
      %v605 = vmul.f32 %v525, %v589
      %v606 = vmul.f32 %v526, %v590
      %v607 = vmul.f32 %v527, %v591
      %v608 = vmul.f32 %v528, %v592
      %609 = vst.msk [vmem:[#allocation2] sm:$0xff] %vm343, %v593
      %610 = vst.msk [vmem:[#allocation2 + $0x8] sm:$0xff] %vm343, %v594
      %611 = vst.msk [vmem:[#allocation2 + $0x10] sm:$0xff] %vm343, %v595
      %612 = vst.msk [vmem:[#allocation2 + $0x18] sm:$0xff] %vm343, %v596
      %613 = vst.msk [vmem:[#allocation2 + $0x20] sm:$0xff] %vm343, %v597
      %614 = vst.msk [vmem:[#allocation2 + $0x28] sm:$0xff] %vm343, %v598
      %615 = vst.msk [vmem:[#allocation2 + $0x30] sm:$0xff] %vm343, %v599
      %616 = vst.msk [vmem:[#allocation2 + $0x38] sm:$0xff] %vm343, %v600
      %617 = vst.msk [vmem:[#allocation2 + $0x40] sm:$0xff] %vm343, %v601
      %618 = vst.msk [vmem:[#allocation2 + $0x48] sm:$0xff] %vm343, %v602
      %619 = vst.msk [vmem:[#allocation2 + $0x50] sm:$0xff] %vm343, %v603
      %620 = vst.msk [vmem:[#allocation2 + $0x58] sm:$0xff] %vm343, %v604
      %621 = vst.msk [vmem:[#allocation2 + $0x60] sm:$0xff] %vm343, %v605
      %622 = vst.msk [vmem:[#allocation2 + $0x68] sm:$0xff] %vm343, %v606
      %623 = vst.msk [vmem:[#allocation2 + $0x70] sm:$0xff] %vm343, %v607
      %624 = vst.msk [vmem:[#allocation2 + $0x78] sm:$0xff] %vm343, %v608
      %v625 = vpack.c.bf16 %v562, %v561
      %v626 = vpack.c.bf16 %v564, %v563
      %v627 = vpack.c.bf16 %v566, %v565
      %v628 = vpack.c.bf16 %v568, %v567
      %v629 = vpack.c.bf16 %v570, %v569
      %v630 = vpack.c.bf16 %v572, %v571
      %v631 = vpack.c.bf16 %v574, %v573
      %v632 = vpack.c.bf16 %v576, %v575
      %v641 = vunpack.c.l.b16 %v625
      %v642 = vunpack.c.h.b16 %v625
      %v643 = vunpack.c.l.b16 %v626
      %v644 = vunpack.c.h.b16 %v626
      %v645 = vunpack.c.l.b16 %v627
      %v646 = vunpack.c.h.b16 %v627
      %v647 = vunpack.c.l.b16 %v628
      %v648 = vunpack.c.h.b16 %v628
      %v649 = vunpack.c.l.b16 %v629
      %v650 = vunpack.c.h.b16 %v629
      %v651 = vunpack.c.l.b16 %v630
      %v652 = vunpack.c.h.b16 %v630
      %v653 = vunpack.c.l.b16 %v631
      %v654 = vunpack.c.h.b16 %v631
      %v655 = vunpack.c.l.b16 %v632
      %v656 = vunpack.c.h.b16 %v632
      %v657 = vpack.c.b16 %v641, %v641
      %v658 = vpack.c.b16 %v642, %v642
      %v659 = vpack.c.b16 %v643, %v643
      %v660 = vpack.c.b16 %v644, %v644
      %v661 = vpack.c.b16 %v645, %v645
      %v662 = vpack.c.b16 %v646, %v646
      %v663 = vpack.c.b16 %v647, %v647
      %v664 = vpack.c.b16 %v648, %v648
      %v665 = vpack.c.b16 %v649, %v649
      %v666 = vpack.c.b16 %v650, %v650
      %v667 = vpack.c.b16 %v651, %v651
      %v668 = vpack.c.b16 %v652, %v652
      %v669 = vpack.c.b16 %v653, %v653
      %v670 = vpack.c.b16 %v654, %v654
      %v671 = vpack.c.b16 %v655, %v655
      %v672 = vpack.c.b16 %v656, %v656
      %vm689 = vcmask 781312
      %690 = vst.msk [vmem:[%s208] sm:$0xf] %vm689, %v657
      %691 = vst.msk [vmem:[%s208 + $0x4] sm:$0xf] %vm689, %v658
      %692 = vst.msk [vmem:[%s208 + $0x8] sm:$0xf] %vm689, %v659
      %693 = vst.msk [vmem:[%s208 + $0xc] sm:$0xf] %vm689, %v660
      %694 = vst.msk [vmem:[%s208 + $0x10] sm:$0xf] %vm689, %v661
      %695 = vst.msk [vmem:[%s208 + $0x14] sm:$0xf] %vm689, %v662
      %696 = vst.msk [vmem:[%s208 + $0x18] sm:$0xf] %vm689, %v663
      %697 = vst.msk [vmem:[%s208 + $0x1c] sm:$0xf] %vm689, %v664
      %698 = vst.msk [vmem:[%s208 + $0x20] sm:$0xf] %vm689, %v665
      %699 = vst.msk [vmem:[%s208 + $0x24] sm:$0xf] %vm689, %v666
      %700 = vst.msk [vmem:[%s208 + $0x28] sm:$0xf] %vm689, %v667
      %701 = vst.msk [vmem:[%s208 + $0x2c] sm:$0xf] %vm689, %v668
      %702 = vst.msk [vmem:[%s208 + $0x30] sm:$0xf] %vm689, %v669
      %703 = vst.msk [vmem:[%s208 + $0x34] sm:$0xf] %vm689, %v670
      %704 = vst.msk [vmem:[%s208 + $0x38] sm:$0xf] %vm689, %v671
      %705 = vst.msk [vmem:[%s208 + $0x3c] sm:$0xf] %vm689, %v672
      %s706 = smul.u32 16, %s18
      %p707 = scmp.lt.s32.totalorder %s19, 1
      %s708 = scalar_select %p707, %s19, 1
      %p709 = scmp.lt.s32.totalorder %s706, 15
      %s710 = scalar_select %p709, %s706, 15
      %s711 = smul.addr %s708, 16
      %s712 = sadd.s32 %s710, %s711
      %s713 = smul.addr %s712, 4
      %s714 = scalar_lea.vmem %s3, %s713
      // Predicated region
      $region37: #{ms_block.10} parent=31 // pred_check
        %p715 = pneg %p116
      $region38: #{ms_block.10} parent=31 // pred_check_branch
        %717 = sbr.rel (%p715) target = $region40
      $region39: #{ms_block.10} parent=31 // pred_region
        %s718 = smul.u32 16, %s18
      $region40: #{ms_block.10} parent=31 // pred_fallthru
        _
    $region32: #{ms_block.10} parent=5 // pred_fallthru
      _
    %p719 = scmp.le.s32.totalorder 2, %s9
    // Predicated region
    $region41: #{ms_block.10} parent=5 // pred_check
      %p720 = pneg %p719
    $region42: #{ms_block.10} parent=5 // pred_check_branch
      %722 = sbr.rel (%p720) target = $region44
    $region43: #{ms_block.10} parent=5 // pred_region
      %s723 = ssub.s32 %s9, 2
      // Predicated region
      $region45: #{ms_block.10} parent=43 // pred_check
        %p724 = pneg %p122
      $region46: #{ms_block.10} parent=43 // pred_check_branch
        %726 = sbr.rel (%p724) target = $region48
      $region47: #{ms_block.10} parent=43 // pred_region
        %s727 = smul.u32 16, %s20
        %p728 = scmp.lt.s32.totalorder %s21, 1
        %s729 = scalar_select %p728, %s21, 1
        %p730 = scmp.lt.s32.totalorder %s727, 15
        %s731 = scalar_select %p730, %s727, 15
        %s732 = smul.addr %s729, 16
        %s733 = sadd.s32 %s731, %s732
        %s734 = smul.addr %s733, 4
        %s735 = scalar_lea.vmem %s3, %s734
      $region48: #{ms_block.10} parent=43 // pred_fallthru
        _
    $region44: #{ms_block.10} parent=5 // pred_fallthru
      _
  $region6: #{ms_block.10} parent=0 // loop_footer
    %s13 = sadd.s32 1, %s9
  $region7: #{ms_block.10} parent=0 // loop_footer_branch
    %8 = sbr.rel target = $region3
  $region8: #{ms_block.10} parent=0 // loop_exit
    _

// kernel: ms_block.9
$region0: #{ms_block.9}
  #allocation0 [shape = 'u32[]', space=smem, size = 0x4, offset = 0x4, fixed_abs, tag = 'smem constant byte address 0x4 - core index']
  #allocation1 [shape = 'u32[144,128]{1,0:T(1,128)}', space=vmem, size = 0x12000, scoped, tag = 'internal scratch']
  #allocation2 [shape = 'f32[4,10,10,96]{3,2,1,0:T(8,128)}', space=vmem, size = 0x50000, scoped, tag = 'scratch operand']
  %s0 = inlined_call_operand.vmem [shape: f32[4,8,8,96], index: 0, kind: input, shape index: {}]
  %s1 = inlined_call_operand.vmem [shape: f32[3,3,96], index: 1, kind: input, shape index: {}]
  %s2 = inlined_call_operand.vmem [shape: bf16[4,8,8,96], index: 2, kind: output, shape index: {}]
  %s3 = sld [smem:[#allocation0]]
  $region18: #{ms_block.9} parent=0
    _
  %s5 = ssub.s32 1, %s3
  %s6 = scalar_select 0, %s5, %s3
  // Predicated region
  $region2: #{ms_block.9} parent=0 // pred_check
    _
  $region3: #{ms_block.9} parent=0 // pred_check_branch
    %8 = sbr.rel (0) target = $region5
  $region4: #{ms_block.9} parent=0 // pred_region
    _
  $region5: #{ms_block.9} parent=0 // pred_fallthru
    _
  // Predicated region
  $region6: #{ms_block.9} parent=0 // pred_check
    _
  $region7: #{ms_block.9} parent=0 // pred_check_branch
    %10 = sbr.rel (0) target = $region9
  $region8: #{ms_block.9} parent=0 // pred_region
    _
  $region9: #{ms_block.9} parent=0 // pred_fallthru
    _
  %vm11 = vcmask 785408
  %12 = vst.msk [vmem:[#allocation2] sm:$0xff] %vm11, 0.0
  %vm13 = vcmask 779264
  %14 = vst.msk [vmem:[#allocation2 + $0x8] sm:$0x3] %vm13, 0.0
  %15 = vst.msk [vmem:[#allocation2 + $0x10] sm:$0xff] %vm11, 0.0
  %16 = vst.msk [vmem:[#allocation2 + $0x18] sm:$0x3] %vm13, 0.0
  %17 = vst.msk [vmem:[#allocation2 + $0x20] sm:$0xff] %vm11, 0.0
  %18 = vst.msk [vmem:[#allocation2 + $0x28] sm:$0x3] %vm13, 0.0
  %19 = vst.msk [vmem:[#allocation2 + $0x30] sm:$0xff] %vm11, 0.0
  %20 = vst.msk [vmem:[#allocation2 + $0x38] sm:$0x3] %vm13, 0.0
  %21 = vst.msk [vmem:[#allocation2 + $0x40] sm:$0xff] %vm11, 0.0
  %22 = vst.msk [vmem:[#allocation2 + $0x48] sm:$0x3] %vm13, 0.0
  %23 = vst.msk [vmem:[#allocation2 + $0x50] sm:$0xff] %vm11, 0.0
  %24 = vst.msk [vmem:[#allocation2 + $0x58] sm:$0x3] %vm13, 0.0
  %25 = vst.msk [vmem:[#allocation2 + $0x60] sm:$0xff] %vm11, 0.0
  %26 = vst.msk [vmem:[#allocation2 + $0x68] sm:$0x3] %vm13, 0.0
  %27 = vst.msk [vmem:[#allocation2 + $0x70] sm:$0xff] %vm11, 0.0
  %28 = vst.msk [vmem:[#allocation2 + $0x78] sm:$0x3] %vm13, 0.0
  %29 = vst.msk [vmem:[#allocation2 + $0x80] sm:$0xff] %vm11, 0.0
  %30 = vst.msk [vmem:[#allocation2 + $0x88] sm:$0x3] %vm13, 0.0
  %31 = vst.msk [vmem:[#allocation2 + $0x90] sm:$0xff] %vm11, 0.0
  %32 = vst.msk [vmem:[#allocation2 + $0x98] sm:$0x3] %vm13, 0.0
  %33 = vst.msk [vmem:[#allocation2 + $0xa0] sm:$0xff] %vm11, 0.0
  %34 = vst.msk [vmem:[#allocation2 + $0xa8] sm:$0x3] %vm13, 0.0
  %35 = vst.msk [vmem:[#allocation2 + $0xb0] sm:$0xff] %vm11, 0.0
  %36 = vst.msk [vmem:[#allocation2 + $0xb8] sm:$0x3] %vm13, 0.0
  %37 = vst.msk [vmem:[#allocation2 + $0xc0] sm:$0xff] %vm11, 0.0
  %38 = vst.msk [vmem:[#allocation2 + $0xc8] sm:$0x3] %vm13, 0.0
  %39 = vst.msk [vmem:[#allocation2 + $0xd0] sm:$0xff] %vm11, 0.0
  %40 = vst.msk [vmem:[#allocation2 + $0xd8] sm:$0x3] %vm13, 0.0
  %41 = vst.msk [vmem:[#allocation2 + $0xe0] sm:$0xff] %vm11, 0.0
  %42 = vst.msk [vmem:[#allocation2 + $0xe8] sm:$0x3] %vm13, 0.0
  %43 = vst.msk [vmem:[#allocation2 + $0xf0] sm:$0xff] %vm11, 0.0
  %44 = vst.msk [vmem:[#allocation2 + $0xf8] sm:$0x3] %vm13, 0.0
  %45 = vst.msk [vmem:[#allocation2 + $0x100] sm:$0xff] %vm11, 0.0
  %46 = vst.msk [vmem:[#allocation2 + $0x108] sm:$0x3] %vm13, 0.0
  %47 = vst.msk [vmem:[#allocation2 + $0x110] sm:$0xff] %vm11, 0.0
  %48 = vst.msk [vmem:[#allocation2 + $0x118] sm:$0x3] %vm13, 0.0
  %49 = vst.msk [vmem:[#allocation2 + $0x120] sm:$0xff] %vm11, 0.0
  %50 = vst.msk [vmem:[#allocation2 + $0x128] sm:$0x3] %vm13, 0.0
  %51 = vst.msk [vmem:[#allocation2 + $0x130] sm:$0xff] %vm11, 0.0
  %52 = vst.msk [vmem:[#allocation2 + $0x138] sm:$0x3] %vm13, 0.0
  %53 = vst.msk [vmem:[#allocation2 + $0x140] sm:$0xff] %vm11, 0.0
  %54 = vst.msk [vmem:[#allocation2 + $0x148] sm:$0x3] %vm13, 0.0
  %55 = vst.msk [vmem:[#allocation2 + $0x150] sm:$0xff] %vm11, 0.0
  %56 = vst.msk [vmem:[#allocation2 + $0x158] sm:$0x3] %vm13, 0.0
  %57 = vst.msk [vmem:[#allocation2 + $0x160] sm:$0xff] %vm11, 0.0
  %58 = vst.msk [vmem:[#allocation2 + $0x168] sm:$0x3] %vm13, 0.0
  %59 = vst.msk [vmem:[#allocation2 + $0x170] sm:$0xff] %vm11, 0.0
  %60 = vst.msk [vmem:[#allocation2 + $0x178] sm:$0x3] %vm13, 0.0
  %61 = vst.msk [vmem:[#allocation2 + $0x180] sm:$0xff] %vm11, 0.0
  %62 = vst.msk [vmem:[#allocation2 + $0x188] sm:$0x3] %vm13, 0.0
  %63 = vst.msk [vmem:[#allocation2 + $0x190] sm:$0xff] %vm11, 0.0
  %64 = vst.msk [vmem:[#allocation2 + $0x198] sm:$0x3] %vm13, 0.0
  %65 = vst.msk [vmem:[#allocation2 + $0x1a0] sm:$0xff] %vm11, 0.0
  %66 = vst.msk [vmem:[#allocation2 + $0x1a8] sm:$0x3] %vm13, 0.0
  %67 = vst.msk [vmem:[#allocation2 + $0x1b0] sm:$0xff] %vm11, 0.0
  %68 = vst.msk [vmem:[#allocation2 + $0x1b8] sm:$0x3] %vm13, 0.0
  %69 = vst.msk [vmem:[#allocation2 + $0x1c0] sm:$0xff] %vm11, 0.0
  %70 = vst.msk [vmem:[#allocation2 + $0x1c8] sm:$0x3] %vm13, 0.0
  %71 = vst.msk [vmem:[#allocation2 + $0x1d0] sm:$0xff] %vm11, 0.0
  %72 = vst.msk [vmem:[#allocation2 + $0x1d8] sm:$0x3] %vm13, 0.0
  %73 = vst.msk [vmem:[#allocation2 + $0x1e0] sm:$0xff] %vm11, 0.0
  %74 = vst.msk [vmem:[#allocation2 + $0x1e8] sm:$0x3] %vm13, 0.0
  %75 = vst.msk [vmem:[#allocation2 + $0x1f0] sm:$0xff] %vm11, 0.0
  %76 = vst.msk [vmem:[#allocation2 + $0x1f8] sm:$0x3] %vm13, 0.0
  %77 = vst.msk [vmem:[#allocation2 + $0x200] sm:$0xff] %vm11, 0.0
  %78 = vst.msk [vmem:[#allocation2 + $0x208] sm:$0x3] %vm13, 0.0
  %79 = vst.msk [vmem:[#allocation2 + $0x210] sm:$0xff] %vm11, 0.0
  %80 = vst.msk [vmem:[#allocation2 + $0x218] sm:$0x3] %vm13, 0.0
  %81 = vst.msk [vmem:[#allocation2 + $0x220] sm:$0xff] %vm11, 0.0
  %82 = vst.msk [vmem:[#allocation2 + $0x228] sm:$0x3] %vm13, 0.0
  %83 = vst.msk [vmem:[#allocation2 + $0x230] sm:$0xff] %vm11, 0.0
  %84 = vst.msk [vmem:[#allocation2 + $0x238] sm:$0x3] %vm13, 0.0
  %85 = vst.msk [vmem:[#allocation2 + $0x240] sm:$0xff] %vm11, 0.0
  %86 = vst.msk [vmem:[#allocation2 + $0x248] sm:$0x3] %vm13, 0.0
  %87 = vst.msk [vmem:[#allocation2 + $0x250] sm:$0xff] %vm11, 0.0
  %88 = vst.msk [vmem:[#allocation2 + $0x258] sm:$0x3] %vm13, 0.0
  %89 = vst.msk [vmem:[#allocation2 + $0x260] sm:$0xff] %vm11, 0.0
  %90 = vst.msk [vmem:[#allocation2 + $0x268] sm:$0x3] %vm13, 0.0
  %91 = vst.msk [vmem:[#allocation2 + $0x270] sm:$0xff] %vm11, 0.0
  %92 = vst.msk [vmem:[#allocation2 + $0x278] sm:$0x3] %vm13, 0.0
  %v93 = vld [vmem:[%s0] sm:$0xff]
  %v94 = vld [vmem:[%s0 + $0x8] sm:$0xff]
  %v95 = vld [vmem:[%s0 + $0x10] sm:$0xff]
  %v96 = vld [vmem:[%s0 + $0x18] sm:$0xff]
  %v97 = vld [vmem:[%s0 + $0x20] sm:$0xff]
  %v98 = vld [vmem:[%s0 + $0x28] sm:$0xff]
  %v99 = vld [vmem:[%s0 + $0x30] sm:$0xff]
  %v100 = vld [vmem:[%s0 + $0x38] sm:$0xff]
  %v101 = vld [vmem:[%s0 + $0x40] sm:$0xff]
  %v102 = vld [vmem:[%s0 + $0x48] sm:$0xff]
  %v103 = vld [vmem:[%s0 + $0x50] sm:$0xff]
  %v104 = vld [vmem:[%s0 + $0x58] sm:$0xff]
  %v105 = vld [vmem:[%s0 + $0x60] sm:$0xff]
  %v106 = vld [vmem:[%s0 + $0x68] sm:$0xff]
  %v107 = vld [vmem:[%s0 + $0x70] sm:$0xff]
  %v108 = vld [vmem:[%s0 + $0x78] sm:$0xff]
  %v109 = vld [vmem:[%s0 + $0x80] sm:$0xff]
  %v110 = vld [vmem:[%s0 + $0x88] sm:$0xff]
  %v111 = vld [vmem:[%s0 + $0x90] sm:$0xff]
  %v112 = vld [vmem:[%s0 + $0x98] sm:$0xff]
  %v113 = vld [vmem:[%s0 + $0xa0] sm:$0xff]
  %v114 = vld [vmem:[%s0 + $0xa8] sm:$0xff]
  %v115 = vld [vmem:[%s0 + $0xb0] sm:$0xff]
  %v116 = vld [vmem:[%s0 + $0xb8] sm:$0xff]
  %v117 = vld [vmem:[%s0 + $0xc0] sm:$0xff]
  %v118 = vld [vmem:[%s0 + $0xc8] sm:$0xff]
  %v119 = vld [vmem:[%s0 + $0xd0] sm:$0xff]
  %v120 = vld [vmem:[%s0 + $0xd8] sm:$0xff]
  %v121 = vld [vmem:[%s0 + $0xe0] sm:$0xff]
  %v122 = vld [vmem:[%s0 + $0xe8] sm:$0xff]
  %v123 = vld [vmem:[%s0 + $0xf0] sm:$0xff]
  %v124 = vld [vmem:[%s0 + $0xf8] sm:$0xff]
  %s125 = scalar_lea.vmem [#allocation2], 16
  %126 = vst.msk [vmem:[%s125 + $0x1] sm:$0xff] %vm11, %v93
  %127 = vst.msk [vmem:[%s125 + $0x11] sm:$0xff] %vm11, %v94
  %128 = vst.msk [vmem:[%s125 + $0x21] sm:$0xff] %vm11, %v95
  %129 = vst.msk [vmem:[%s125 + $0x31] sm:$0xff] %vm11, %v96
  %130 = vst.msk [vmem:[%s125 + $0x41] sm:$0xff] %vm11, %v97
  %131 = vst.msk [vmem:[%s125 + $0x51] sm:$0xff] %vm11, %v98
  %132 = vst.msk [vmem:[%s125 + $0x61] sm:$0xff] %vm11, %v99
  %133 = vst.msk [vmem:[%s125 + $0x71] sm:$0xff] %vm11, %v100
  %134 = vst.msk [vmem:[%s125 + $0xa1] sm:$0xff] %vm11, %v101
  %135 = vst.msk [vmem:[%s125 + $0xb1] sm:$0xff] %vm11, %v102
  %136 = vst.msk [vmem:[%s125 + $0xc1] sm:$0xff] %vm11, %v103
  %137 = vst.msk [vmem:[%s125 + $0xd1] sm:$0xff] %vm11, %v104
  %138 = vst.msk [vmem:[%s125 + $0xe1] sm:$0xff] %vm11, %v105
  %139 = vst.msk [vmem:[%s125 + $0xf1] sm:$0xff] %vm11, %v106
  %140 = vst.msk [vmem:[%s125 + $0x101] sm:$0xff] %vm11, %v107
  %141 = vst.msk [vmem:[%s125 + $0x111] sm:$0xff] %vm11, %v108
  %142 = vst.msk [vmem:[%s125 + $0x141] sm:$0xff] %vm11, %v109
  %143 = vst.msk [vmem:[%s125 + $0x151] sm:$0xff] %vm11, %v110
  %144 = vst.msk [vmem:[%s125 + $0x161] sm:$0xff] %vm11, %v111
  %145 = vst.msk [vmem:[%s125 + $0x171] sm:$0xff] %vm11, %v112
  %146 = vst.msk [vmem:[%s125 + $0x181] sm:$0xff] %vm11, %v113
  %147 = vst.msk [vmem:[%s125 + $0x191] sm:$0xff] %vm11, %v114
  %148 = vst.msk [vmem:[%s125 + $0x1a1] sm:$0xff] %vm11, %v115
  %149 = vst.msk [vmem:[%s125 + $0x1b1] sm:$0xff] %vm11, %v116
  %150 = vst.msk [vmem:[%s125 + $0x1e1] sm:$0xff] %vm11, %v117
  %151 = vst.msk [vmem:[%s125 + $0x1f1] sm:$0xff] %vm11, %v118
  %152 = vst.msk [vmem:[%s125 + $0x201] sm:$0xff] %vm11, %v119
  %153 = vst.msk [vmem:[%s125 + $0x211] sm:$0xff] %vm11, %v120
  %154 = vst.msk [vmem:[%s125 + $0x221] sm:$0xff] %vm11, %v121
  %155 = vst.msk [vmem:[%s125 + $0x231] sm:$0xff] %vm11, %v122
  %156 = vst.msk [vmem:[%s125 + $0x241] sm:$0xff] %vm11, %v123
  %157 = vst.msk [vmem:[%s125 + $0x251] sm:$0xff] %vm11, %v124
  %v158 = vld [vmem:[%s1] sm:$0x1]
  %v159 = vld [vmem:[#allocation2] sm:$0xff]
  %v160 = vld [vmem:[#allocation2 + $0x10] sm:$0xff]
  %v161 = vld [vmem:[#allocation2 + $0x20] sm:$0xff]
  %v162 = vld [vmem:[#allocation2 + $0x30] sm:$0xff]
  %v163 = vld [vmem:[#allocation2 + $0x40] sm:$0xff]
  %v164 = vld [vmem:[#allocation2 + $0x50] sm:$0xff]
  %v165 = vld [vmem:[#allocation2 + $0x60] sm:$0xff]
  %v166 = vld [vmem:[#allocation2 + $0x70] sm:$0xff]
  %v167 = vld [vmem:[#allocation2 + $0xa0] sm:$0xff]
  %v168 = vld [vmem:[#allocation2 + $0xb0] sm:$0xff]
  %v169 = vld [vmem:[#allocation2 + $0xc0] sm:$0xff]
  %v170 = vld [vmem:[#allocation2 + $0xd0] sm:$0xff]
  %v171 = vld [vmem:[#allocation2 + $0xe0] sm:$0xff]
  %v172 = vld [vmem:[#allocation2 + $0xf0] sm:$0xff]
  %v173 = vld [vmem:[#allocation2 + $0x100] sm:$0xff]
  %v174 = vld [vmem:[#allocation2 + $0x110] sm:$0xff]
  %v175 = vld [vmem:[#allocation2 + $0x140] sm:$0xff]
  %v176 = vld [vmem:[#allocation2 + $0x150] sm:$0xff]
  %v177 = vld [vmem:[#allocation2 + $0x160] sm:$0xff]
  %v178 = vld [vmem:[#allocation2 + $0x170] sm:$0xff]
  %v179 = vld [vmem:[#allocation2 + $0x180] sm:$0xff]
  %v180 = vld [vmem:[#allocation2 + $0x190] sm:$0xff]
  %v181 = vld [vmem:[#allocation2 + $0x1a0] sm:$0xff]
  %v182 = vld [vmem:[#allocation2 + $0x1b0] sm:$0xff]
  %v183 = vld [vmem:[#allocation2 + $0x1e0] sm:$0xff]
  %v184 = vld [vmem:[#allocation2 + $0x1f0] sm:$0xff]
  %v185 = vld [vmem:[#allocation2 + $0x200] sm:$0xff]
  %v186 = vld [vmem:[#allocation2 + $0x210] sm:$0xff]
  %v187 = vld [vmem:[#allocation2 + $0x220] sm:$0xff]
  %v188 = vld [vmem:[#allocation2 + $0x230] sm:$0xff]
  %v189 = vld [vmem:[#allocation2 + $0x240] sm:$0xff]
  %v190 = vld [vmem:[#allocation2 + $0x250] sm:$0xff]
  %v191 = vlaneseq
  %v192 = vshrl.u32 %v191, 7
  %v193 = vsub.s32 0, %v192
  %v194 = vrot.slane %v158, %v193
  %v195 = vmul.f32 %v159, %v194
  %v196 = vmul.f32 %v160, %v194
  %v197 = vmul.f32 %v161, %v194
  %v198 = vmul.f32 %v162, %v194
  %v199 = vmul.f32 %v163, %v194
  %v200 = vmul.f32 %v164, %v194
  %v201 = vmul.f32 %v165, %v194
  %v202 = vmul.f32 %v166, %v194
  %v203 = vmul.f32 %v167, %v194
  %v204 = vmul.f32 %v168, %v194
  %v205 = vmul.f32 %v169, %v194
  %v206 = vmul.f32 %v170, %v194
  %v207 = vmul.f32 %v171, %v194
  %v208 = vmul.f32 %v172, %v194
  %v209 = vmul.f32 %v173, %v194
  %v210 = vmul.f32 %v174, %v194
  %v211 = vmul.f32 %v175, %v194
  %v212 = vmul.f32 %v176, %v194
  %v213 = vmul.f32 %v177, %v194
  %v214 = vmul.f32 %v178, %v194
  %v215 = vmul.f32 %v179, %v194
  %v216 = vmul.f32 %v180, %v194
  %v217 = vmul.f32 %v181, %v194
  %v218 = vmul.f32 %v182, %v194
  %v219 = vmul.f32 %v183, %v194
  %v220 = vmul.f32 %v184, %v194
  %v221 = vmul.f32 %v185, %v194
  %v222 = vmul.f32 %v186, %v194
  %v223 = vmul.f32 %v187, %v194
  %v224 = vmul.f32 %v188, %v194
  %v225 = vmul.f32 %v189, %v194
  %v226 = vmul.f32 %v190, %v194
  %v227 = vadd.f32 %v195, 0.0
  %v228 = vadd.f32 %v196, 0.0
  %v229 = vadd.f32 %v197, 0.0
  %v230 = vadd.f32 %v198, 0.0
  %v231 = vadd.f32 %v199, 0.0
  %v232 = vadd.f32 %v200, 0.0
  %v233 = vadd.f32 %v201, 0.0
  %v234 = vadd.f32 %v202, 0.0
  %v235 = vadd.f32 %v203, 0.0
  %v236 = vadd.f32 %v204, 0.0
  %v237 = vadd.f32 %v205, 0.0
  %v238 = vadd.f32 %v206, 0.0
  %v239 = vadd.f32 %v207, 0.0
  %v240 = vadd.f32 %v208, 0.0
  %v241 = vadd.f32 %v209, 0.0
  %v242 = vadd.f32 %v210, 0.0
  %v243 = vadd.f32 %v211, 0.0
  %v244 = vadd.f32 %v212, 0.0
  %v245 = vadd.f32 %v213, 0.0
  %v246 = vadd.f32 %v214, 0.0
  %v247 = vadd.f32 %v215, 0.0
  %v248 = vadd.f32 %v216, 0.0
  %v249 = vadd.f32 %v217, 0.0
  %v250 = vadd.f32 %v218, 0.0
  %v251 = vadd.f32 %v219, 0.0
  %v252 = vadd.f32 %v220, 0.0
  %v253 = vadd.f32 %v221, 0.0
  %v254 = vadd.f32 %v222, 0.0
  %v255 = vadd.f32 %v223, 0.0
  %v256 = vadd.f32 %v224, 0.0
  %v257 = vadd.f32 %v225, 0.0
  %v258 = vadd.f32 %v226, 0.0
  %v259 = vld [vmem:[%s1 + $0x1] sm:$0x1]
  %v260 = vld [vmem:[#allocation2 + $0x1] sm:$0xff]
  %v261 = vld [vmem:[#allocation2 + $0x11] sm:$0xff]
  %v262 = vld [vmem:[#allocation2 + $0x21] sm:$0xff]
  %v263 = vld [vmem:[#allocation2 + $0x31] sm:$0xff]
  %v264 = vld [vmem:[#allocation2 + $0x41] sm:$0xff]
  %v265 = vld [vmem:[#allocation2 + $0x51] sm:$0xff]
  %v266 = vld [vmem:[#allocation2 + $0x61] sm:$0xff]
  %v267 = vld [vmem:[#allocation2 + $0x71] sm:$0xff]
  %v268 = vld [vmem:[#allocation2 + $0xa1] sm:$0xff]
  %v269 = vld [vmem:[#allocation2 + $0xb1] sm:$0xff]
  %v270 = vld [vmem:[#allocation2 + $0xc1] sm:$0xff]
  %v271 = vld [vmem:[#allocation2 + $0xd1] sm:$0xff]
  %v272 = vld [vmem:[#allocation2 + $0xe1] sm:$0xff]
  %v273 = vld [vmem:[#allocation2 + $0xf1] sm:$0xff]
  %v274 = vld [vmem:[#allocation2 + $0x101] sm:$0xff]
  %v275 = vld [vmem:[#allocation2 + $0x111] sm:$0xff]
  %v276 = vld [vmem:[#allocation2 + $0x141] sm:$0xff]
  %v277 = vld [vmem:[#allocation2 + $0x151] sm:$0xff]
  %v278 = vld [vmem:[#allocation2 + $0x161] sm:$0xff]
  %v279 = vld [vmem:[#allocation2 + $0x171] sm:$0xff]
  %v280 = vld [vmem:[#allocation2 + $0x181] sm:$0xff]
  %v281 = vld [vmem:[#allocation2 + $0x191] sm:$0xff]
  %v282 = vld [vmem:[#allocation2 + $0x1a1] sm:$0xff]
  %v283 = vld [vmem:[#allocation2 + $0x1b1] sm:$0xff]
  %v284 = vld [vmem:[#allocation2 + $0x1e1] sm:$0xff]
  %v285 = vld [vmem:[#allocation2 + $0x1f1] sm:$0xff]
  %v286 = vld [vmem:[#allocation2 + $0x201] sm:$0xff]
  %v287 = vld [vmem:[#allocation2 + $0x211] sm:$0xff]
  %v288 = vld [vmem:[#allocation2 + $0x221] sm:$0xff]
  %v289 = vld [vmem:[#allocation2 + $0x231] sm:$0xff]
  %v290 = vld [vmem:[#allocation2 + $0x241] sm:$0xff]
  %v291 = vld [vmem:[#allocation2 + $0x251] sm:$0xff]
  %v292 = vlaneseq
  %v293 = vshrl.u32 %v292, 7
  %v294 = vsub.s32 0, %v293
  %v295 = vrot.slane %v259, %v294
  %v296 = vmul.f32 %v260, %v295
  %v297 = vmul.f32 %v261, %v295
  %v298 = vmul.f32 %v262, %v295
  %v299 = vmul.f32 %v263, %v295
  %v300 = vmul.f32 %v264, %v295
  %v301 = vmul.f32 %v265, %v295
  %v302 = vmul.f32 %v266, %v295
  %v303 = vmul.f32 %v267, %v295
  %v304 = vmul.f32 %v268, %v295
  %v305 = vmul.f32 %v269, %v295
  %v306 = vmul.f32 %v270, %v295
  %v307 = vmul.f32 %v271, %v295
  %v308 = vmul.f32 %v272, %v295
  %v309 = vmul.f32 %v273, %v295
  %v310 = vmul.f32 %v274, %v295
  %v311 = vmul.f32 %v275, %v295
  %v312 = vmul.f32 %v276, %v295
  %v313 = vmul.f32 %v277, %v295
  %v314 = vmul.f32 %v278, %v295
  %v315 = vmul.f32 %v279, %v295
  %v316 = vmul.f32 %v280, %v295
  %v317 = vmul.f32 %v281, %v295
  %v318 = vmul.f32 %v282, %v295
  %v319 = vmul.f32 %v283, %v295
  %v320 = vmul.f32 %v284, %v295
  %v321 = vmul.f32 %v285, %v295
  %v322 = vmul.f32 %v286, %v295
  %v323 = vmul.f32 %v287, %v295
  %v324 = vmul.f32 %v288, %v295
  %v325 = vmul.f32 %v289, %v295
  %v326 = vmul.f32 %v290, %v295
  %v327 = vmul.f32 %v291, %v295
  %v328 = vadd.f32 %v227, %v296
  %v329 = vadd.f32 %v228, %v297
  %v330 = vadd.f32 %v229, %v298
  %v331 = vadd.f32 %v230, %v299
  %v332 = vadd.f32 %v231, %v300
  %v333 = vadd.f32 %v232, %v301
  %v334 = vadd.f32 %v233, %v302
  %v335 = vadd.f32 %v234, %v303
  %v336 = vadd.f32 %v235, %v304
  %v337 = vadd.f32 %v236, %v305
  %v338 = vadd.f32 %v237, %v306
  %v339 = vadd.f32 %v238, %v307
  %v340 = vadd.f32 %v239, %v308
  %v341 = vadd.f32 %v240, %v309
  %v342 = vadd.f32 %v241, %v310
  %v343 = vadd.f32 %v242, %v311
  %v344 = vadd.f32 %v243, %v312
  %v345 = vadd.f32 %v244, %v313
  %v346 = vadd.f32 %v245, %v314
  %v347 = vadd.f32 %v246, %v315
  %v348 = vadd.f32 %v247, %v316
  %v349 = vadd.f32 %v248, %v317
  %v350 = vadd.f32 %v249, %v318
  %v351 = vadd.f32 %v250, %v319
  %v352 = vadd.f32 %v251, %v320
  %v353 = vadd.f32 %v252, %v321
  %v354 = vadd.f32 %v253, %v322
  %v355 = vadd.f32 %v254, %v323
  %v356 = vadd.f32 %v255, %v324
  %v357 = vadd.f32 %v256, %v325
  %v358 = vadd.f32 %v257, %v326
  %v359 = vadd.f32 %v258, %v327
  %v360 = vld [vmem:[%s1 + $0x2] sm:$0x1]
  %v361 = vld [vmem:[#allocation2 + $0x2] sm:$0xff]
  %v362 = vld [vmem:[#allocation2 + $0x12] sm:$0xff]
  %v363 = vld [vmem:[#allocation2 + $0x22] sm:$0xff]
  %v364 = vld [vmem:[#allocation2 + $0x32] sm:$0xff]
  %v365 = vld [vmem:[#allocation2 + $0x42] sm:$0xff]
  %v366 = vld [vmem:[#allocation2 + $0x52] sm:$0xff]
  %v367 = vld [vmem:[#allocation2 + $0x62] sm:$0xff]
  %v368 = vld [vmem:[#allocation2 + $0x72] sm:$0xff]
  %v369 = vld [vmem:[#allocation2 + $0xa2] sm:$0xff]
  %v370 = vld [vmem:[#allocation2 + $0xb2] sm:$0xff]
  %v371 = vld [vmem:[#allocation2 + $0xc2] sm:$0xff]
  %v372 = vld [vmem:[#allocation2 + $0xd2] sm:$0xff]
  %v373 = vld [vmem:[#allocation2 + $0xe2] sm:$0xff]
  %v374 = vld [vmem:[#allocation2 + $0xf2] sm:$0xff]
  %v375 = vld [vmem:[#allocation2 + $0x102] sm:$0xff]
  %v376 = vld [vmem:[#allocation2 + $0x112] sm:$0xff]
  %v377 = vld [vmem:[#allocation2 + $0x142] sm:$0xff]
  %v378 = vld [vmem:[#allocation2 + $0x152] sm:$0xff]
  %v379 = vld [vmem:[#allocation2 + $0x162] sm:$0xff]
  %v380 = vld [vmem:[#allocation2 + $0x172] sm:$0xff]
  %v381 = vld [vmem:[#allocation2 + $0x182] sm:$0xff]
  %v382 = vld [vmem:[#allocation2 + $0x192] sm:$0xff]
  %v383 = vld [vmem:[#allocation2 + $0x1a2] sm:$0xff]
  %v384 = vld [vmem:[#allocation2 + $0x1b2] sm:$0xff]
  %v385 = vld [vmem:[#allocation2 + $0x1e2] sm:$0xff]
  %v386 = vld [vmem:[#allocation2 + $0x1f2] sm:$0xff]
  %v387 = vld [vmem:[#allocation2 + $0x202] sm:$0xff]
  %v388 = vld [vmem:[#allocation2 + $0x212] sm:$0xff]
  %v389 = vld [vmem:[#allocation2 + $0x222] sm:$0xff]
  %v390 = vld [vmem:[#allocation2 + $0x232] sm:$0xff]
  %v391 = vld [vmem:[#allocation2 + $0x242] sm:$0xff]
  %v392 = vld [vmem:[#allocation2 + $0x252] sm:$0xff]
  %v393 = vlaneseq
  %v394 = vshrl.u32 %v393, 7
  %v395 = vsub.s32 0, %v394
  %v396 = vrot.slane %v360, %v395
  %v397 = vmul.f32 %v361, %v396
  %v398 = vmul.f32 %v362, %v396
  %v399 = vmul.f32 %v363, %v396
  %v400 = vmul.f32 %v364, %v396
  %v401 = vmul.f32 %v365, %v396
  %v402 = vmul.f32 %v366, %v396
  %v403 = vmul.f32 %v367, %v396
  %v404 = vmul.f32 %v368, %v396
  %v405 = vmul.f32 %v369, %v396
  %v406 = vmul.f32 %v370, %v396
  %v407 = vmul.f32 %v371, %v396
  %v408 = vmul.f32 %v372, %v396
  %v409 = vmul.f32 %v373, %v396
  %v410 = vmul.f32 %v374, %v396
  %v411 = vmul.f32 %v375, %v396
  %v412 = vmul.f32 %v376, %v396
  %v413 = vmul.f32 %v377, %v396
  %v414 = vmul.f32 %v378, %v396
  %v415 = vmul.f32 %v379, %v396
  %v416 = vmul.f32 %v380, %v396
  %v417 = vmul.f32 %v381, %v396
  %v418 = vmul.f32 %v382, %v396
  %v419 = vmul.f32 %v383, %v396
  %v420 = vmul.f32 %v384, %v396
  %v421 = vmul.f32 %v385, %v396
  %v422 = vmul.f32 %v386, %v396
  %v423 = vmul.f32 %v387, %v396
  %v424 = vmul.f32 %v388, %v396
  %v425 = vmul.f32 %v389, %v396
  %v426 = vmul.f32 %v390, %v396
  %v427 = vmul.f32 %v391, %v396
  %v428 = vmul.f32 %v392, %v396
  %v429 = vadd.f32 %v328, %v397
  %v430 = vadd.f32 %v329, %v398
  %v431 = vadd.f32 %v330, %v399
  %v432 = vadd.f32 %v331, %v400
  %v433 = vadd.f32 %v332, %v401
  %v434 = vadd.f32 %v333, %v402
  %v435 = vadd.f32 %v334, %v403
  %v436 = vadd.f32 %v335, %v404
  %v437 = vadd.f32 %v336, %v405
  %v438 = vadd.f32 %v337, %v406
  %v439 = vadd.f32 %v338, %v407
  %v440 = vadd.f32 %v339, %v408
  %v441 = vadd.f32 %v340, %v409
  %v442 = vadd.f32 %v341, %v410
  %v443 = vadd.f32 %v342, %v411
  %v444 = vadd.f32 %v343, %v412
  %v445 = vadd.f32 %v344, %v413
  %v446 = vadd.f32 %v345, %v414
  %v447 = vadd.f32 %v346, %v415
  %v448 = vadd.f32 %v347, %v416
  %v449 = vadd.f32 %v348, %v417
  %v450 = vadd.f32 %v349, %v418
  %v451 = vadd.f32 %v350, %v419
  %v452 = vadd.f32 %v351, %v420
  %v453 = vadd.f32 %v352, %v421
  %v454 = vadd.f32 %v353, %v422
  %v455 = vadd.f32 %v354, %v423
  %v456 = vadd.f32 %v355, %v424
  %v457 = vadd.f32 %v356, %v425
  %v458 = vadd.f32 %v357, %v426
  %v459 = vadd.f32 %v358, %v427
  %v460 = vadd.f32 %v359, %v428
  %s461 = scalar_lea.vmem %s1, 4
  %v462 = vld [vmem:[%s461] sm:$0x1]
  %v463 = vld [vmem:[%s125] sm:$0xff]
  %v464 = vld [vmem:[%s125 + $0x10] sm:$0xff]
  %v465 = vld [vmem:[%s125 + $0x20] sm:$0xff]
  %v466 = vld [vmem:[%s125 + $0x30] sm:$0xff]
  %v467 = vld [vmem:[%s125 + $0x40] sm:$0xff]
  %v468 = vld [vmem:[%s125 + $0x50] sm:$0xff]
  %v469 = vld [vmem:[%s125 + $0x60] sm:$0xff]
  %v470 = vld [vmem:[%s125 + $0x70] sm:$0xff]
  %v471 = vld [vmem:[%s125 + $0xa0] sm:$0xff]
  %v472 = vld [vmem:[%s125 + $0xb0] sm:$0xff]
  %v473 = vld [vmem:[%s125 + $0xc0] sm:$0xff]
  %v474 = vld [vmem:[%s125 + $0xd0] sm:$0xff]
  %v475 = vld [vmem:[%s125 + $0xe0] sm:$0xff]
  %v476 = vld [vmem:[%s125 + $0xf0] sm:$0xff]
  %v477 = vld [vmem:[%s125 + $0x100] sm:$0xff]
  %v478 = vld [vmem:[%s125 + $0x110] sm:$0xff]
  %v479 = vld [vmem:[%s125 + $0x140] sm:$0xff]
  %v480 = vld [vmem:[%s125 + $0x150] sm:$0xff]
  %v481 = vld [vmem:[%s125 + $0x160] sm:$0xff]
  %v482 = vld [vmem:[%s125 + $0x170] sm:$0xff]
  %v483 = vld [vmem:[%s125 + $0x180] sm:$0xff]
  %v484 = vld [vmem:[%s125 + $0x190] sm:$0xff]
  %v485 = vld [vmem:[%s125 + $0x1a0] sm:$0xff]
  %v486 = vld [vmem:[%s125 + $0x1b0] sm:$0xff]
  %v487 = vld [vmem:[%s125 + $0x1e0] sm:$0xff]
  %v488 = vld [vmem:[%s125 + $0x1f0] sm:$0xff]
  %v489 = vld [vmem:[%s125 + $0x200] sm:$0xff]
  %v490 = vld [vmem:[%s125 + $0x210] sm:$0xff]
  %v491 = vld [vmem:[%s125 + $0x220] sm:$0xff]
  %v492 = vld [vmem:[%s125 + $0x230] sm:$0xff]
  %v493 = vld [vmem:[%s125 + $0x240] sm:$0xff]
  %v494 = vld [vmem:[%s125 + $0x250] sm:$0xff]
  %v495 = vlaneseq
  %v496 = vshrl.u32 %v495, 7
  %v497 = vsub.s32 0, %v496
  %v498 = vrot.slane %v462, %v497
  %v499 = vmul.f32 %v463, %v498
  %v500 = vmul.f32 %v464, %v498
  %v501 = vmul.f32 %v465, %v498
  %v502 = vmul.f32 %v466, %v498
  %v503 = vmul.f32 %v467, %v498
  %v504 = vmul.f32 %v468, %v498
  %v505 = vmul.f32 %v469, %v498
  %v506 = vmul.f32 %v470, %v498
  %v507 = vmul.f32 %v471, %v498
  %v508 = vmul.f32 %v472, %v498
  %v509 = vmul.f32 %v473, %v498
  %v510 = vmul.f32 %v474, %v498
  %v511 = vmul.f32 %v475, %v498
  %v512 = vmul.f32 %v476, %v498
  %v513 = vmul.f32 %v477, %v498
  %v514 = vmul.f32 %v478, %v498
  %v515 = vmul.f32 %v479, %v498
  %v516 = vmul.f32 %v480, %v498
  %v517 = vmul.f32 %v481, %v498
  %v518 = vmul.f32 %v482, %v498
  %v519 = vmul.f32 %v483, %v498
  %v520 = vmul.f32 %v484, %v498
  %v521 = vmul.f32 %v485, %v498
  %v522 = vmul.f32 %v486, %v498
  %v523 = vmul.f32 %v487, %v498
  %v524 = vmul.f32 %v488, %v498
  %v525 = vmul.f32 %v489, %v498
  %v526 = vmul.f32 %v490, %v498
  %v527 = vmul.f32 %v491, %v498
  %v528 = vmul.f32 %v492, %v498
  %v529 = vmul.f32 %v493, %v498
  %v530 = vmul.f32 %v494, %v498
  %v531 = vadd.f32 %v429, %v499
  %v532 = vadd.f32 %v430, %v500
  %v533 = vadd.f32 %v431, %v501
  %v534 = vadd.f32 %v432, %v502
  %v535 = vadd.f32 %v433, %v503
  %v536 = vadd.f32 %v434, %v504
  %v537 = vadd.f32 %v435, %v505
  %v538 = vadd.f32 %v436, %v506
  %v539 = vadd.f32 %v437, %v507
  %v540 = vadd.f32 %v438, %v508
  %v541 = vadd.f32 %v439, %v509
  %v542 = vadd.f32 %v440, %v510
  %v543 = vadd.f32 %v441, %v511
  %v544 = vadd.f32 %v442, %v512
  %v545 = vadd.f32 %v443, %v513
  %v546 = vadd.f32 %v444, %v514
  %v547 = vadd.f32 %v445, %v515
  %v548 = vadd.f32 %v446, %v516
  %v549 = vadd.f32 %v447, %v517
  %v550 = vadd.f32 %v448, %v518
  %v551 = vadd.f32 %v449, %v519
  %v552 = vadd.f32 %v450, %v520
  %v553 = vadd.f32 %v451, %v521
  %v554 = vadd.f32 %v452, %v522
  %v555 = vadd.f32 %v453, %v523
  %v556 = vadd.f32 %v454, %v524
  %v557 = vadd.f32 %v455, %v525
  %v558 = vadd.f32 %v456, %v526
  %v559 = vadd.f32 %v457, %v527
  %v560 = vadd.f32 %v458, %v528
  %v561 = vadd.f32 %v459, %v529
  %v562 = vadd.f32 %v460, %v530
  %v563 = vld [vmem:[%s461 + $0x1] sm:$0x1]
  %v564 = vld [vmem:[%s125 + $0x1] sm:$0xff]
  %v565 = vld [vmem:[%s125 + $0x11] sm:$0xff]
  %v566 = vld [vmem:[%s125 + $0x21] sm:$0xff]
  %v567 = vld [vmem:[%s125 + $0x31] sm:$0xff]
  %v568 = vld [vmem:[%s125 + $0x41] sm:$0xff]
  %v569 = vld [vmem:[%s125 + $0x51] sm:$0xff]
  %v570 = vld [vmem:[%s125 + $0x61] sm:$0xff]
  %v571 = vld [vmem:[%s125 + $0x71] sm:$0xff]
  %v572 = vld [vmem:[%s125 + $0xa1] sm:$0xff]
  %v573 = vld [vmem:[%s125 + $0xb1] sm:$0xff]
  %v574 = vld [vmem:[%s125 + $0xc1] sm:$0xff]
  %v575 = vld [vmem:[%s125 + $0xd1] sm:$0xff]
  %v576 = vld [vmem:[%s125 + $0xe1] sm:$0xff]
  %v577 = vld [vmem:[%s125 + $0xf1] sm:$0xff]
  %v578 = vld [vmem:[%s125 + $0x101] sm:$0xff]
  %v579 = vld [vmem:[%s125 + $0x111] sm:$0xff]
  %v580 = vld [vmem:[%s125 + $0x141] sm:$0xff]
  %v581 = vld [vmem:[%s125 + $0x151] sm:$0xff]
  %v582 = vld [vmem:[%s125 + $0x161] sm:$0xff]
  %v583 = vld [vmem:[%s125 + $0x171] sm:$0xff]
  %v584 = vld [vmem:[%s125 + $0x181] sm:$0xff]
  %v585 = vld [vmem:[%s125 + $0x191] sm:$0xff]
  %v586 = vld [vmem:[%s125 + $0x1a1] sm:$0xff]
  %v587 = vld [vmem:[%s125 + $0x1b1] sm:$0xff]
  %v588 = vld [vmem:[%s125 + $0x1e1] sm:$0xff]
  %v589 = vld [vmem:[%s125 + $0x1f1] sm:$0xff]
  %v590 = vld [vmem:[%s125 + $0x201] sm:$0xff]
  %v591 = vld [vmem:[%s125 + $0x211] sm:$0xff]
  %v592 = vld [vmem:[%s125 + $0x221] sm:$0xff]
  %v593 = vld [vmem:[%s125 + $0x231] sm:$0xff]
  %v594 = vld [vmem:[%s125 + $0x241] sm:$0xff]
  %v595 = vld [vmem:[%s125 + $0x251] sm:$0xff]
  %v596 = vlaneseq
  %v597 = vshrl.u32 %v596, 7
  %v598 = vsub.s32 0, %v597
  %v599 = vrot.slane %v563, %v598
  %v600 = vmul.f32 %v564, %v599
  %v601 = vmul.f32 %v565, %v599
  %v602 = vmul.f32 %v566, %v599
  %v603 = vmul.f32 %v567, %v599
  %v604 = vmul.f32 %v568, %v599
  %v605 = vmul.f32 %v569, %v599
  %v606 = vmul.f32 %v570, %v599
  %v607 = vmul.f32 %v571, %v599
  %v608 = vmul.f32 %v572, %v599
  %v609 = vmul.f32 %v573, %v599
  %v610 = vmul.f32 %v574, %v599
  %v611 = vmul.f32 %v575, %v599
  %v612 = vmul.f32 %v576, %v599
  %v613 = vmul.f32 %v577, %v599
  %v614 = vmul.f32 %v578, %v599
  %v615 = vmul.f32 %v579, %v599
  %v616 = vmul.f32 %v580, %v599
  %v617 = vmul.f32 %v581, %v599
  %v618 = vmul.f32 %v582, %v599
  %v619 = vmul.f32 %v583, %v599
  %v620 = vmul.f32 %v584, %v599
  %v621 = vmul.f32 %v585, %v599
  %v622 = vmul.f32 %v586, %v599
  %v623 = vmul.f32 %v587, %v599
  %v624 = vmul.f32 %v588, %v599
  %v625 = vmul.f32 %v589, %v599
  %v626 = vmul.f32 %v590, %v599
  %v627 = vmul.f32 %v591, %v599
  %v628 = vmul.f32 %v592, %v599
  %v629 = vmul.f32 %v593, %v599
  %v630 = vmul.f32 %v594, %v599
  %v631 = vmul.f32 %v595, %v599
  %v632 = vadd.f32 %v531, %v600
  %v633 = vadd.f32 %v532, %v601
  %v634 = vadd.f32 %v533, %v602
  %v635 = vadd.f32 %v534, %v603
  %v636 = vadd.f32 %v535, %v604
  %v637 = vadd.f32 %v536, %v605
  %v638 = vadd.f32 %v537, %v606
  %v639 = vadd.f32 %v538, %v607
  %v640 = vadd.f32 %v539, %v608
  %v641 = vadd.f32 %v540, %v609
  %v642 = vadd.f32 %v541, %v610
  %v643 = vadd.f32 %v542, %v611
  %v644 = vadd.f32 %v543, %v612
  %v645 = vadd.f32 %v544, %v613
  %v646 = vadd.f32 %v545, %v614
  %v647 = vadd.f32 %v546, %v615
  %v648 = vadd.f32 %v547, %v616
  %v649 = vadd.f32 %v548, %v617
  %v650 = vadd.f32 %v549, %v618
  %v651 = vadd.f32 %v550, %v619
  %v652 = vadd.f32 %v551, %v620
  %v653 = vadd.f32 %v552, %v621
  %v654 = vadd.f32 %v553, %v622
  %v655 = vadd.f32 %v554, %v623
  %v656 = vadd.f32 %v555, %v624
  %v657 = vadd.f32 %v556, %v625
  %v658 = vadd.f32 %v557, %v626
  %v659 = vadd.f32 %v558, %v627
  %v660 = vadd.f32 %v559, %v628
  %v661 = vadd.f32 %v560, %v629
  %v662 = vadd.f32 %v561, %v630
  %v663 = vadd.f32 %v562, %v631
  %v664 = vld [vmem:[%s461 + $0x2] sm:$0x1]
  %v665 = vld [vmem:[%s125 + $0x2] sm:$0xff]
  %v666 = vld [vmem:[%s125 + $0x12] sm:$0xff]
  %v667 = vld [vmem:[%s125 + $0x22] sm:$0xff]
  %v668 = vld [vmem:[%s125 + $0x32] sm:$0xff]
  %v669 = vld [vmem:[%s125 + $0x42] sm:$0xff]
  %v670 = vld [vmem:[%s125 + $0x52] sm:$0xff]
  %v671 = vld [vmem:[%s125 + $0x62] sm:$0xff]
  %v672 = vld [vmem:[%s125 + $0x72] sm:$0xff]
  %v673 = vld [vmem:[%s125 + $0xa2] sm:$0xff]
  %v674 = vld [vmem:[%s125 + $0xb2] sm:$0xff]
  %v675 = vld [vmem:[%s125 + $0xc2] sm:$0xff]
  %v676 = vld [vmem:[%s125 + $0xd2] sm:$0xff]
  %v677 = vld [vmem:[%s125 + $0xe2] sm:$0xff]
  %v678 = vld [vmem:[%s125 + $0xf2] sm:$0xff]
  %v679 = vld [vmem:[%s125 + $0x102] sm:$0xff]
  %v680 = vld [vmem:[%s125 + $0x112] sm:$0xff]
  %v681 = vld [vmem:[%s125 + $0x142] sm:$0xff]
  %v682 = vld [vmem:[%s125 + $0x152] sm:$0xff]
  %v683 = vld [vmem:[%s125 + $0x162] sm:$0xff]
  %v684 = vld [vmem:[%s125 + $0x172] sm:$0xff]
  %v685 = vld [vmem:[%s125 + $0x182] sm:$0xff]
  %v686 = vld [vmem:[%s125 + $0x192] sm:$0xff]
  %v687 = vld [vmem:[%s125 + $0x1a2] sm:$0xff]
  %v688 = vld [vmem:[%s125 + $0x1b2] sm:$0xff]
  %v689 = vld [vmem:[%s125 + $0x1e2] sm:$0xff]
  %v690 = vld [vmem:[%s125 + $0x1f2] sm:$0xff]
  %v691 = vld [vmem:[%s125 + $0x202] sm:$0xff]
  %v692 = vld [vmem:[%s125 + $0x212] sm:$0xff]
  %v693 = vld [vmem:[%s125 + $0x222] sm:$0xff]
  %v694 = vld [vmem:[%s125 + $0x232] sm:$0xff]
  %v695 = vld [vmem:[%s125 + $0x242] sm:$0xff]
  %v696 = vld [vmem:[%s125 + $0x252] sm:$0xff]
  %v697 = vlaneseq
  %v698 = vshrl.u32 %v697, 7
  %v699 = vsub.s32 0, %v698
  %v700 = vrot.slane %v664, %v699
  %v701 = vmul.f32 %v665, %v700
  %v702 = vmul.f32 %v666, %v700
  %v703 = vmul.f32 %v667, %v700
  %v704 = vmul.f32 %v668, %v700
  %v705 = vmul.f32 %v669, %v700
  %v706 = vmul.f32 %v670, %v700
  %v707 = vmul.f32 %v671, %v700
  %v708 = vmul.f32 %v672, %v700
  %v709 = vmul.f32 %v673, %v700
  %v710 = vmul.f32 %v674, %v700
  %v711 = vmul.f32 %v675, %v700
  %v712 = vmul.f32 %v676, %v700
  %v713 = vmul.f32 %v677, %v700
  %v714 = vmul.f32 %v678, %v700
  %v715 = vmul.f32 %v679, %v700
  %v716 = vmul.f32 %v680, %v700
  %v717 = vmul.f32 %v681, %v700
  %v718 = vmul.f32 %v682, %v700
  %v719 = vmul.f32 %v683, %v700
  %v720 = vmul.f32 %v684, %v700
  %v721 = vmul.f32 %v685, %v700
  %v722 = vmul.f32 %v686, %v700
  %v723 = vmul.f32 %v687, %v700
  %v724 = vmul.f32 %v688, %v700
  %v725 = vmul.f32 %v689, %v700
  %v726 = vmul.f32 %v690, %v700
  %v727 = vmul.f32 %v691, %v700
  %v728 = vmul.f32 %v692, %v700
  %v729 = vmul.f32 %v693, %v700
  %v730 = vmul.f32 %v694, %v700
  %v731 = vmul.f32 %v695, %v700
  %v732 = vmul.f32 %v696, %v700
  %v733 = vadd.f32 %v632, %v701
  %v734 = vadd.f32 %v633, %v702
  %v735 = vadd.f32 %v634, %v703
  %v736 = vadd.f32 %v635, %v704
  %v737 = vadd.f32 %v636, %v705
  %v738 = vadd.f32 %v637, %v706
  %v739 = vadd.f32 %v638, %v707
  %v740 = vadd.f32 %v639, %v708
  %v741 = vadd.f32 %v640, %v709
  %v742 = vadd.f32 %v641, %v710
  %v743 = vadd.f32 %v642, %v711
  %v744 = vadd.f32 %v643, %v712
  %v745 = vadd.f32 %v644, %v713
  %v746 = vadd.f32 %v645, %v714
  %v747 = vadd.f32 %v646, %v715
  %v748 = vadd.f32 %v647, %v716
  %v749 = vadd.f32 %v648, %v717
  %v750 = vadd.f32 %v649, %v718
  %v751 = vadd.f32 %v650, %v719
  %v752 = vadd.f32 %v651, %v720
  %v753 = vadd.f32 %v652, %v721
  %v754 = vadd.f32 %v653, %v722
  %v755 = vadd.f32 %v654, %v723
  %v756 = vadd.f32 %v655, %v724
  %v757 = vadd.f32 %v656, %v725
  %v758 = vadd.f32 %v657, %v726
  %v759 = vadd.f32 %v658, %v727
  %v760 = vadd.f32 %v659, %v728
  %v761 = vadd.f32 %v660, %v729
  %v762 = vadd.f32 %v661, %v730
  %v763 = vadd.f32 %v662, %v731
  %v764 = vadd.f32 %v663, %v732
  %s765 = scalar_lea.vmem %s1, 8
  %v766 = vld [vmem:[%s765] sm:$0x1]
  %s767 = scalar_lea.vmem [#allocation2], 32
  %v768 = vld [vmem:[%s767] sm:$0xff]
  %v769 = vld [vmem:[%s767 + $0x10] sm:$0xff]
  %v770 = vld [vmem:[%s767 + $0x20] sm:$0xff]
  %v771 = vld [vmem:[%s767 + $0x30] sm:$0xff]
  %v772 = vld [vmem:[%s767 + $0x40] sm:$0xff]
  %v773 = vld [vmem:[%s767 + $0x50] sm:$0xff]
  %v774 = vld [vmem:[%s767 + $0x60] sm:$0xff]
  %v775 = vld [vmem:[%s767 + $0x70] sm:$0xff]
  %v776 = vld [vmem:[%s767 + $0xa0] sm:$0xff]
  %v777 = vld [vmem:[%s767 + $0xb0] sm:$0xff]
  %v778 = vld [vmem:[%s767 + $0xc0] sm:$0xff]
  %v779 = vld [vmem:[%s767 + $0xd0] sm:$0xff]
  %v780 = vld [vmem:[%s767 + $0xe0] sm:$0xff]
  %v781 = vld [vmem:[%s767 + $0xf0] sm:$0xff]
  %v782 = vld [vmem:[%s767 + $0x100] sm:$0xff]
  %v783 = vld [vmem:[%s767 + $0x110] sm:$0xff]
  %v784 = vld [vmem:[%s767 + $0x140] sm:$0xff]
  %v785 = vld [vmem:[%s767 + $0x150] sm:$0xff]
  %v786 = vld [vmem:[%s767 + $0x160] sm:$0xff]
  %v787 = vld [vmem:[%s767 + $0x170] sm:$0xff]
  %v788 = vld [vmem:[%s767 + $0x180] sm:$0xff]
  %v789 = vld [vmem:[%s767 + $0x190] sm:$0xff]
  %v790 = vld [vmem:[%s767 + $0x1a0] sm:$0xff]
  %v791 = vld [vmem:[%s767 + $0x1b0] sm:$0xff]
  %v792 = vld [vmem:[%s767 + $0x1e0] sm:$0xff]
  %v793 = vld [vmem:[%s767 + $0x1f0] sm:$0xff]
  %v794 = vld [vmem:[%s767 + $0x200] sm:$0xff]
  %v795 = vld [vmem:[%s767 + $0x210] sm:$0xff]
  %v796 = vld [vmem:[%s767 + $0x220] sm:$0xff]
  %v797 = vld [vmem:[%s767 + $0x230] sm:$0xff]
  %v798 = vld [vmem:[%s767 + $0x240] sm:$0xff]
  %v799 = vld [vmem:[%s767 + $0x250] sm:$0xff]
  %v800 = vlaneseq
  %v801 = vshrl.u32 %v800, 7
  %v802 = vsub.s32 0, %v801
  %v803 = vrot.slane %v766, %v802
  %v804 = vmul.f32 %v768, %v803
  %v805 = vmul.f32 %v769, %v803
  %v806 = vmul.f32 %v770, %v803
  %v807 = vmul.f32 %v771, %v803
  %v808 = vmul.f32 %v772, %v803
  %v809 = vmul.f32 %v773, %v803
  %v810 = vmul.f32 %v774, %v803
  %v811 = vmul.f32 %v775, %v803
  %v812 = vmul.f32 %v776, %v803
  %v813 = vmul.f32 %v777, %v803
  %v814 = vmul.f32 %v778, %v803
  %v815 = vmul.f32 %v779, %v803
  %v816 = vmul.f32 %v780, %v803
  %v817 = vmul.f32 %v781, %v803
  %v818 = vmul.f32 %v782, %v803
  %v819 = vmul.f32 %v783, %v803
  %v820 = vmul.f32 %v784, %v803
  %v821 = vmul.f32 %v785, %v803
  %v822 = vmul.f32 %v786, %v803
  %v823 = vmul.f32 %v787, %v803
  %v824 = vmul.f32 %v788, %v803
  %v825 = vmul.f32 %v789, %v803
  %v826 = vmul.f32 %v790, %v803
  %v827 = vmul.f32 %v791, %v803
  %v828 = vmul.f32 %v792, %v803
  %v829 = vmul.f32 %v793, %v803
  %v830 = vmul.f32 %v794, %v803
  %v831 = vmul.f32 %v795, %v803
  %v832 = vmul.f32 %v796, %v803
  %v833 = vmul.f32 %v797, %v803
  %v834 = vmul.f32 %v798, %v803
  %v835 = vmul.f32 %v799, %v803
  %v836 = vadd.f32 %v733, %v804
  %v837 = vadd.f32 %v734, %v805
  %v838 = vadd.f32 %v735, %v806
  %v839 = vadd.f32 %v736, %v807
  %v840 = vadd.f32 %v737, %v808
  %v841 = vadd.f32 %v738, %v809
  %v842 = vadd.f32 %v739, %v810
  %v843 = vadd.f32 %v740, %v811
  %v844 = vadd.f32 %v741, %v812
  %v845 = vadd.f32 %v742, %v813
  %v846 = vadd.f32 %v743, %v814
  %v847 = vadd.f32 %v744, %v815
  %v848 = vadd.f32 %v745, %v816
  %v849 = vadd.f32 %v746, %v817
  %v850 = vadd.f32 %v747, %v818
  %v851 = vadd.f32 %v748, %v819
  %v852 = vadd.f32 %v749, %v820
  %v853 = vadd.f32 %v750, %v821
  %v854 = vadd.f32 %v751, %v822
  %v855 = vadd.f32 %v752, %v823
  %v856 = vadd.f32 %v753, %v824
  %v857 = vadd.f32 %v754, %v825
  %v858 = vadd.f32 %v755, %v826
  %v859 = vadd.f32 %v756, %v827
  %v860 = vadd.f32 %v757, %v828
  %v861 = vadd.f32 %v758, %v829
  %v862 = vadd.f32 %v759, %v830
  %v863 = vadd.f32 %v760, %v831
  %v864 = vadd.f32 %v761, %v832
  %v865 = vadd.f32 %v762, %v833
  %v866 = vadd.f32 %v763, %v834
  %v867 = vadd.f32 %v764, %v835
  %v868 = vld [vmem:[%s765 + $0x1] sm:$0x1]
  %v869 = vld [vmem:[%s767 + $0x1] sm:$0xff]
  %v870 = vld [vmem:[%s767 + $0x11] sm:$0xff]
  %v871 = vld [vmem:[%s767 + $0x21] sm:$0xff]
  %v872 = vld [vmem:[%s767 + $0x31] sm:$0xff]
  %v873 = vld [vmem:[%s767 + $0x41] sm:$0xff]
  %v874 = vld [vmem:[%s767 + $0x51] sm:$0xff]
  %v875 = vld [vmem:[%s767 + $0x61] sm:$0xff]
  %v876 = vld [vmem:[%s767 + $0x71] sm:$0xff]
  %v877 = vld [vmem:[%s767 + $0xa1] sm:$0xff]
  %v878 = vld [vmem:[%s767 + $0xb1] sm:$0xff]
  %v879 = vld [vmem:[%s767 + $0xc1] sm:$0xff]
  %v880 = vld [vmem:[%s767 + $0xd1] sm:$0xff]
  %v881 = vld [vmem:[%s767 + $0xe1] sm:$0xff]
  %v882 = vld [vmem:[%s767 + $0xf1] sm:$0xff]
  %v883 = vld [vmem:[%s767 + $0x101] sm:$0xff]
  %v884 = vld [vmem:[%s767 + $0x111] sm:$0xff]
  %v885 = vld [vmem:[%s767 + $0x141] sm:$0xff]
  %v886 = vld [vmem:[%s767 + $0x151] sm:$0xff]
  %v887 = vld [vmem:[%s767 + $0x161] sm:$0xff]
  %v888 = vld [vmem:[%s767 + $0x171] sm:$0xff]
  %v889 = vld [vmem:[%s767 + $0x181] sm:$0xff]
  %v890 = vld [vmem:[%s767 + $0x191] sm:$0xff]
  %v891 = vld [vmem:[%s767 + $0x1a1] sm:$0xff]
  %v892 = vld [vmem:[%s767 + $0x1b1] sm:$0xff]
  %v893 = vld [vmem:[%s767 + $0x1e1] sm:$0xff]
  %v894 = vld [vmem:[%s767 + $0x1f1] sm:$0xff]
  %v895 = vld [vmem:[%s767 + $0x201] sm:$0xff]
  %v896 = vld [vmem:[%s767 + $0x211] sm:$0xff]
  %v897 = vld [vmem:[%s767 + $0x221] sm:$0xff]
  %v898 = vld [vmem:[%s767 + $0x231] sm:$0xff]
  %v899 = vld [vmem:[%s767 + $0x241] sm:$0xff]
  %v900 = vld [vmem:[%s767 + $0x251] sm:$0xff]
  %v901 = vlaneseq
  %v902 = vshrl.u32 %v901, 7
  %v903 = vsub.s32 0, %v902
  %v904 = vrot.slane %v868, %v903
  %v905 = vmul.f32 %v869, %v904
  %v906 = vmul.f32 %v870, %v904
  %v907 = vmul.f32 %v871, %v904
  %v908 = vmul.f32 %v872, %v904
  %v909 = vmul.f32 %v873, %v904
  %v910 = vmul.f32 %v874, %v904
  %v911 = vmul.f32 %v875, %v904
  %v912 = vmul.f32 %v876, %v904
  %v913 = vmul.f32 %v877, %v904
  %v914 = vmul.f32 %v878, %v904
  %v915 = vmul.f32 %v879, %v904
  %v916 = vmul.f32 %v880, %v904
  %v917 = vmul.f32 %v881, %v904
  %v918 = vmul.f32 %v882, %v904
  %v919 = vmul.f32 %v883, %v904
  %v920 = vmul.f32 %v884, %v904
  %v921 = vmul.f32 %v885, %v904
  %v922 = vmul.f32 %v886, %v904
  %v923 = vmul.f32 %v887, %v904
  %v924 = vmul.f32 %v888, %v904
  %v925 = vmul.f32 %v889, %v904
  %v926 = vmul.f32 %v890, %v904
  %v927 = vmul.f32 %v891, %v904
  %v928 = vmul.f32 %v892, %v904
  %v929 = vmul.f32 %v893, %v904
  %v930 = vmul.f32 %v894, %v904
  %v931 = vmul.f32 %v895, %v904
  %v932 = vmul.f32 %v896, %v904
  %v933 = vmul.f32 %v897, %v904
  %v934 = vmul.f32 %v898, %v904
  %v935 = vmul.f32 %v899, %v904
  %v936 = vmul.f32 %v900, %v904
  %v937 = vadd.f32 %v836, %v905
  %v938 = vadd.f32 %v837, %v906
  %v939 = vadd.f32 %v838, %v907
  %v940 = vadd.f32 %v839, %v908
  %v941 = vadd.f32 %v840, %v909
  %v942 = vadd.f32 %v841, %v910
  %v943 = vadd.f32 %v842, %v911
  %v944 = vadd.f32 %v843, %v912
  %v945 = vadd.f32 %v844, %v913
  %v946 = vadd.f32 %v845, %v914
  %v947 = vadd.f32 %v846, %v915
  %v948 = vadd.f32 %v847, %v916
  %v949 = vadd.f32 %v848, %v917
  %v950 = vadd.f32 %v849, %v918
  %v951 = vadd.f32 %v850, %v919
  %v952 = vadd.f32 %v851, %v920
  %v953 = vadd.f32 %v852, %v921
  %v954 = vadd.f32 %v853, %v922
  %v955 = vadd.f32 %v854, %v923
  %v956 = vadd.f32 %v855, %v924
  %v957 = vadd.f32 %v856, %v925
  %v958 = vadd.f32 %v857, %v926
  %v959 = vadd.f32 %v858, %v927
  %v960 = vadd.f32 %v859, %v928
  %v961 = vadd.f32 %v860, %v929
  %v962 = vadd.f32 %v861, %v930
  %v963 = vadd.f32 %v862, %v931
  %v964 = vadd.f32 %v863, %v932
  %v965 = vadd.f32 %v864, %v933
  %v966 = vadd.f32 %v865, %v934
  %v967 = vadd.f32 %v866, %v935
  %v968 = vadd.f32 %v867, %v936
  %v969 = vld [vmem:[%s765 + $0x2] sm:$0x1]
  %v970 = vld [vmem:[%s767 + $0x2] sm:$0xff]
  %v971 = vld [vmem:[%s767 + $0x12] sm:$0xff]
  %v972 = vld [vmem:[%s767 + $0x22] sm:$0xff]
  %v973 = vld [vmem:[%s767 + $0x32] sm:$0xff]
  %v974 = vld [vmem:[%s767 + $0x42] sm:$0xff]
  %v975 = vld [vmem:[%s767 + $0x52] sm:$0xff]
  %v976 = vld [vmem:[%s767 + $0x62] sm:$0xff]
  %v977 = vld [vmem:[%s767 + $0x72] sm:$0xff]
  %v978 = vld [vmem:[%s767 + $0xa2] sm:$0xff]
  %v979 = vld [vmem:[%s767 + $0xb2] sm:$0xff]
  %v980 = vld [vmem:[%s767 + $0xc2] sm:$0xff]
  %v981 = vld [vmem:[%s767 + $0xd2] sm:$0xff]
  %v982 = vld [vmem:[%s767 + $0xe2] sm:$0xff]
  %v983 = vld [vmem:[%s767 + $0xf2] sm:$0xff]
  %v984 = vld [vmem:[%s767 + $0x102] sm:$0xff]
  %v985 = vld [vmem:[%s767 + $0x112] sm:$0xff]
  %v986 = vld [vmem:[%s767 + $0x142] sm:$0xff]
  %v987 = vld [vmem:[%s767 + $0x152] sm:$0xff]
  %v988 = vld [vmem:[%s767 + $0x162] sm:$0xff]
  %v989 = vld [vmem:[%s767 + $0x172] sm:$0xff]
  %v990 = vld [vmem:[%s767 + $0x182] sm:$0xff]
  %v991 = vld [vmem:[%s767 + $0x192] sm:$0xff]
  %v992 = vld [vmem:[%s767 + $0x1a2] sm:$0xff]
  %v993 = vld [vmem:[%s767 + $0x1b2] sm:$0xff]
  %v994 = vld [vmem:[%s767 + $0x1e2] sm:$0xff]
  %v995 = vld [vmem:[%s767 + $0x1f2] sm:$0xff]
  %v996 = vld [vmem:[%s767 + $0x202] sm:$0xff]
  %v997 = vld [vmem:[%s767 + $0x212] sm:$0xff]
  %v998 = vld [vmem:[%s767 + $0x222] sm:$0xff]
  %v999 = vld [vmem:[%s767 + $0x232] sm:$0xff]
  %v1000 = vld [vmem:[%s767 + $0x242] sm:$0xff]
  %v1001 = vld [vmem:[%s767 + $0x252] sm:$0xff]
  %v1002 = vlaneseq
  %v1003 = vshrl.u32 %v1002, 7
  %v1004 = vsub.s32 0, %v1003
  %v1005 = vrot.slane %v969, %v1004
  %v1006 = vmul.f32 %v970, %v1005
  %v1007 = vmul.f32 %v971, %v1005
  %v1008 = vmul.f32 %v972, %v1005
  %v1009 = vmul.f32 %v973, %v1005
  %v1010 = vmul.f32 %v974, %v1005
  %v1011 = vmul.f32 %v975, %v1005
  %v1012 = vmul.f32 %v976, %v1005
  %v1013 = vmul.f32 %v977, %v1005
  %v1014 = vmul.f32 %v978, %v1005
  %v1015 = vmul.f32 %v979, %v1005
  %v1016 = vmul.f32 %v980, %v1005
  %v1017 = vmul.f32 %v981, %v1005
  %v1018 = vmul.f32 %v982, %v1005
  %v1019 = vmul.f32 %v983, %v1005
  %v1020 = vmul.f32 %v984, %v1005
  %v1021 = vmul.f32 %v985, %v1005
  %v1022 = vmul.f32 %v986, %v1005
  %v1023 = vmul.f32 %v987, %v1005
  %v1024 = vmul.f32 %v988, %v1005
  %v1025 = vmul.f32 %v989, %v1005
  %v1026 = vmul.f32 %v990, %v1005
  %v1027 = vmul.f32 %v991, %v1005
  %v1028 = vmul.f32 %v992, %v1005
  %v1029 = vmul.f32 %v993, %v1005
  %v1030 = vmul.f32 %v994, %v1005
  %v1031 = vmul.f32 %v995, %v1005
  %v1032 = vmul.f32 %v996, %v1005
  %v1033 = vmul.f32 %v997, %v1005
  %v1034 = vmul.f32 %v998, %v1005
  %v1035 = vmul.f32 %v999, %v1005
  %v1036 = vmul.f32 %v1000, %v1005
  %v1037 = vmul.f32 %v1001, %v1005
  %v1038 = vadd.f32 %v937, %v1006
  %v1039 = vadd.f32 %v938, %v1007
  %v1040 = vadd.f32 %v939, %v1008
  %v1041 = vadd.f32 %v940, %v1009
  %v1042 = vadd.f32 %v941, %v1010
  %v1043 = vadd.f32 %v942, %v1011
  %v1044 = vadd.f32 %v943, %v1012
  %v1045 = vadd.f32 %v944, %v1013
  %v1046 = vadd.f32 %v945, %v1014
  %v1047 = vadd.f32 %v946, %v1015
  %v1048 = vadd.f32 %v947, %v1016
  %v1049 = vadd.f32 %v948, %v1017
  %v1050 = vadd.f32 %v949, %v1018
  %v1051 = vadd.f32 %v950, %v1019
  %v1052 = vadd.f32 %v951, %v1020
  %v1053 = vadd.f32 %v952, %v1021
  %v1054 = vadd.f32 %v953, %v1022
  %v1055 = vadd.f32 %v954, %v1023
  %v1056 = vadd.f32 %v955, %v1024
  %v1057 = vadd.f32 %v956, %v1025
  %v1058 = vadd.f32 %v957, %v1026
  %v1059 = vadd.f32 %v958, %v1027
  %v1060 = vadd.f32 %v959, %v1028
  %v1061 = vadd.f32 %v960, %v1029
  %v1062 = vadd.f32 %v961, %v1030
  %v1063 = vadd.f32 %v962, %v1031
  %v1064 = vadd.f32 %v963, %v1032
  %v1065 = vadd.f32 %v964, %v1033
  %v1066 = vadd.f32 %v965, %v1034
  %v1067 = vadd.f32 %v966, %v1035
  %v1068 = vadd.f32 %v967, %v1036
  %v1069 = vadd.f32 %v968, %v1037
  %v1070 = vpack.c.bf16 %v1038, %v1038
  %v1071 = vpack.c.bf16 %v1039, %v1039
  %v1072 = vpack.c.bf16 %v1040, %v1040
  %v1073 = vpack.c.bf16 %v1041, %v1041
  %v1074 = vpack.c.bf16 %v1042, %v1042
  %v1075 = vpack.c.bf16 %v1043, %v1043
  %v1076 = vpack.c.bf16 %v1044, %v1044
  %v1077 = vpack.c.bf16 %v1045, %v1045
  %v1078 = vpack.c.bf16 %v1046, %v1046
  %v1079 = vpack.c.bf16 %v1047, %v1047
  %v1080 = vpack.c.bf16 %v1048, %v1048
  %v1081 = vpack.c.bf16 %v1049, %v1049
  %v1082 = vpack.c.bf16 %v1050, %v1050
  %v1083 = vpack.c.bf16 %v1051, %v1051
  %v1084 = vpack.c.bf16 %v1052, %v1052
  %v1085 = vpack.c.bf16 %v1053, %v1053
  %v1086 = vpack.c.bf16 %v1054, %v1054
  %v1087 = vpack.c.bf16 %v1055, %v1055
  %v1088 = vpack.c.bf16 %v1056, %v1056
  %v1089 = vpack.c.bf16 %v1057, %v1057
  %v1090 = vpack.c.bf16 %v1058, %v1058
  %v1091 = vpack.c.bf16 %v1059, %v1059
  %v1092 = vpack.c.bf16 %v1060, %v1060
  %v1093 = vpack.c.bf16 %v1061, %v1061
  %v1094 = vpack.c.bf16 %v1062, %v1062
  %v1095 = vpack.c.bf16 %v1063, %v1063
  %v1096 = vpack.c.bf16 %v1064, %v1064
  %v1097 = vpack.c.bf16 %v1065, %v1065
  %v1098 = vpack.c.bf16 %v1066, %v1066
  %v1099 = vpack.c.bf16 %v1067, %v1067
  %v1100 = vpack.c.bf16 %v1068, %v1068
  %v1101 = vpack.c.bf16 %v1069, %v1069
  %vm1102 = vcmask 781312
  %1103 = vst.msk [vmem:[%s2] sm:$0xf] %vm1102, %v1070
  %1104 = vst.msk [vmem:[%s2 + $0x4] sm:$0xf] %vm1102, %v1071
  %1105 = vst.msk [vmem:[%s2 + $0x8] sm:$0xf] %vm1102, %v1072
  %1106 = vst.msk [vmem:[%s2 + $0xc] sm:$0xf] %vm1102, %v1073
  %1107 = vst.msk [vmem:[%s2 + $0x10] sm:$0xf] %vm1102, %v1074
  %1108 = vst.msk [vmem:[%s2 + $0x14] sm:$0xf] %vm1102, %v1075
  %1109 = vst.msk [vmem:[%s2 + $0x18] sm:$0xf] %vm1102, %v1076
  %1110 = vst.msk [vmem:[%s2 + $0x1c] sm:$0xf] %vm1102, %v1077
  %1111 = vst.msk [vmem:[%s2 + $0x20] sm:$0xf] %vm1102, %v1078
  %1112 = vst.msk [vmem:[%s2 + $0x24] sm:$0xf] %vm1102, %v1079
  %1113 = vst.msk [vmem:[%s2 + $0x28] sm:$0xf] %vm1102, %v1080
  %1114 = vst.msk [vmem:[%s2 + $0x2c] sm:$0xf] %vm1102, %v1081
  %1115 = vst.msk [vmem:[%s2 + $0x30] sm:$0xf] %vm1102, %v1082
  %1116 = vst.msk [vmem:[%s2 + $0x34] sm:$0xf] %vm1102, %v1083
  %1117 = vst.msk [vmem:[%s2 + $0x38] sm:$0xf] %vm1102, %v1084
  %1118 = vst.msk [vmem:[%s2 + $0x3c] sm:$0xf] %vm1102, %v1085
  %1119 = vst.msk [vmem:[%s2 + $0x40] sm:$0xf] %vm1102, %v1086
  %1120 = vst.msk [vmem:[%s2 + $0x44] sm:$0xf] %vm1102, %v1087
  %1121 = vst.msk [vmem:[%s2 + $0x48] sm:$0xf] %vm1102, %v1088
  %1122 = vst.msk [vmem:[%s2 + $0x4c] sm:$0xf] %vm1102, %v1089
  %1123 = vst.msk [vmem:[%s2 + $0x50] sm:$0xf] %vm1102, %v1090
  %1124 = vst.msk [vmem:[%s2 + $0x54] sm:$0xf] %vm1102, %v1091
  %1125 = vst.msk [vmem:[%s2 + $0x58] sm:$0xf] %vm1102, %v1092
  %1126 = vst.msk [vmem:[%s2 + $0x5c] sm:$0xf] %vm1102, %v1093
  %1127 = vst.msk [vmem:[%s2 + $0x60] sm:$0xf] %vm1102, %v1094
  %1128 = vst.msk [vmem:[%s2 + $0x64] sm:$0xf] %vm1102, %v1095
  %1129 = vst.msk [vmem:[%s2 + $0x68] sm:$0xf] %vm1102, %v1096
  %1130 = vst.msk [vmem:[%s2 + $0x6c] sm:$0xf] %vm1102, %v1097
  %1131 = vst.msk [vmem:[%s2 + $0x70] sm:$0xf] %vm1102, %v1098
  %1132 = vst.msk [vmem:[%s2 + $0x74] sm:$0xf] %vm1102, %v1099
  %1133 = vst.msk [vmem:[%s2 + $0x78] sm:$0xf] %vm1102, %v1100
  %1134 = vst.msk [vmem:[%s2 + $0x7c] sm:$0xf] %vm1102, %v1101
  // Predicated region
  $region10: #{ms_block.9} parent=0 // pred_check
    _
  $region11: #{ms_block.9} parent=0 // pred_check_branch
    %1136 = sbr.rel (0) target = $region13
  $region12: #{ms_block.9} parent=0 // pred_region
    _
  $region13: #{ms_block.9} parent=0 // pred_fallthru
    _
  // Predicated region
  $region14: #{ms_block.9} parent=0 // pred_check
    _
  $region15: #{ms_block.9} parent=0 // pred_check_branch
    %1138 = sbr.rel (0) target = $region17
  $region16: #{ms_block.9} parent=0 // pred_region
    _
  $region17: #{ms_block.9} parent=0 // pred_fallthru
    _

// kernel: ms_block.13
$region0: #{ms_block.13}
  #allocation0 [shape = 'u32[]', space=smem, size = 0x4, offset = 0x4, fixed_abs, tag = 'smem constant byte address 0x4 - core index']
  #allocation1 [shape = 'u32[144,128]{1,0:T(1,128)}', space=vmem, size = 0x12000, scoped, tag = 'internal scratch']
  %s0 = inlined_call_operand.vmem [shape: bf16[256,32], index: 0, kind: input, shape index: {}]
  %s1 = inlined_call_operand.vmem [shape: bf16[32,32], index: 1, kind: input, shape index: {}]
  %s2 = inlined_call_operand.vmem [shape: f32[1,32], index: 2, kind: input, shape index: {}]
  %s3 = inlined_call_operand.vmem [shape: f32[256,32], index: 3, kind: input, shape index: {}]
  %s4 = inlined_call_operand.vmem [shape: f32[256,32], index: 4, kind: output, shape index: {}]
  %s5 = sld [smem:[#allocation0]]
  $region26: #{ms_block.13} parent=0
    _
  %s7 = ssub.s32 1, %s5
  %s8 = scalar_select 0, %s7, %s5
  // Predicated region
  $region2: #{ms_block.13} parent=0 // pred_check
    _
  $region3: #{ms_block.13} parent=0 // pred_check_branch
    %10 = sbr.rel (0) target = $region5
  $region4: #{ms_block.13} parent=0 // pred_region
    _
  $region5: #{ms_block.13} parent=0 // pred_fallthru
    _
  // Predicated region
  $region6: #{ms_block.13} parent=0 // pred_check
    _
  $region7: #{ms_block.13} parent=0 // pred_check_branch
    %12 = sbr.rel (0) target = $region9
  $region8: #{ms_block.13} parent=0 // pred_region
    _
  $region9: #{ms_block.13} parent=0 // pred_fallthru
    _
  // Predicated region
  $region10: #{ms_block.13} parent=0 // pred_check
    _
  $region11: #{ms_block.13} parent=0 // pred_check_branch
    %14 = sbr.rel (0) target = $region13
  $region12: #{ms_block.13} parent=0 // pred_region
    _
  $region13: #{ms_block.13} parent=0 // pred_fallthru
    _
  // Predicated region
  $region14: #{ms_block.13} parent=0 // pred_check
    _
  $region15: #{ms_block.13} parent=0 // pred_check_branch
    %16 = sbr.rel (0) target = $region17
  $region16: #{ms_block.13} parent=0 // pred_region
    _
  $region17: #{ms_block.13} parent=0 // pred_fallthru
    _
  %v18 = vld [vmem:[%s0] sm:$0xf]
  %v19 = vld [vmem:[%s0 + $0x4] sm:$0xf]
  %v20 = vld [vmem:[%s0 + $0x8] sm:$0xf]
  %v21 = vld [vmem:[%s0 + $0xc] sm:$0xf]
  %v22 = vld [vmem:[%s0 + $0x10] sm:$0xf]
  %v23 = vld [vmem:[%s0 + $0x14] sm:$0xf]
  %v24 = vld [vmem:[%s0 + $0x18] sm:$0xf]
  %v25 = vld [vmem:[%s0 + $0x1c] sm:$0xf]
  %v26 = vld [vmem:[%s0 + $0x20] sm:$0xf]
  %v27 = vld [vmem:[%s0 + $0x24] sm:$0xf]
  %v28 = vld [vmem:[%s0 + $0x28] sm:$0xf]
  %v29 = vld [vmem:[%s0 + $0x2c] sm:$0xf]
  %v30 = vld [vmem:[%s0 + $0x30] sm:$0xf]
  %v31 = vld [vmem:[%s0 + $0x34] sm:$0xf]
  %v32 = vld [vmem:[%s0 + $0x38] sm:$0xf]
  %v33 = vld [vmem:[%s0 + $0x3c] sm:$0xf]
  %v34 = vld [vmem:[%s0 + $0x40] sm:$0xf]
  %v35 = vld [vmem:[%s0 + $0x44] sm:$0xf]
  %v36 = vld [vmem:[%s0 + $0x48] sm:$0xf]
  %v37 = vld [vmem:[%s0 + $0x4c] sm:$0xf]
  %v38 = vld [vmem:[%s0 + $0x50] sm:$0xf]
  %v39 = vld [vmem:[%s0 + $0x54] sm:$0xf]
  %v40 = vld [vmem:[%s0 + $0x58] sm:$0xf]
  %v41 = vld [vmem:[%s0 + $0x5c] sm:$0xf]
  %v42 = vld [vmem:[%s0 + $0x60] sm:$0xf]
  %v43 = vld [vmem:[%s0 + $0x64] sm:$0xf]
  %v44 = vld [vmem:[%s0 + $0x68] sm:$0xf]
  %v45 = vld [vmem:[%s0 + $0x6c] sm:$0xf]
  %v46 = vld [vmem:[%s0 + $0x70] sm:$0xf]
  %v47 = vld [vmem:[%s0 + $0x74] sm:$0xf]
  %v48 = vld [vmem:[%s0 + $0x78] sm:$0xf]
  %v49 = vld [vmem:[%s0 + $0x7c] sm:$0xf]
  %v50 = vld [vmem:[%s1] sm:$0xf]
  %v51 = vld [vmem:[%s1 + $0x4] sm:$0xf]
  %v52 = vld [vmem:[%s1 + $0x8] sm:$0xf]
  %v53 = vld [vmem:[%s1 + $0xc] sm:$0xf]
  %v54 = vld [vmem:[%s2] sm:$0x1]
  %v56 = vlaneseq
  %v57 = vshrl.u32 %v56, 7
  %v58 = vsub.s32 0, %v57
  %v59 = vrot.slane %v54, %v58
  %v93 = vunpack.c.l.b16 %v18
  %v94 = vunpack.c.l.b16 %v19
  %v95 = vunpack.c.l.b16 %v20
  %v96 = vunpack.c.l.b16 %v21
  %v97 = vunpack.c.l.b16 %v22
  %v98 = vunpack.c.l.b16 %v23
  %v99 = vunpack.c.l.b16 %v24
  %v100 = vunpack.c.l.b16 %v25
  %v101 = vunpack.c.l.b16 %v26
  %v102 = vunpack.c.l.b16 %v27
  %v103 = vunpack.c.l.b16 %v28
  %v104 = vunpack.c.l.b16 %v29
  %v105 = vunpack.c.l.b16 %v30
  %v106 = vunpack.c.l.b16 %v31
  %v107 = vunpack.c.l.b16 %v32
  %v108 = vunpack.c.l.b16 %v33
  %v109 = vunpack.c.l.b16 %v34
  %v110 = vunpack.c.l.b16 %v35
  %v111 = vunpack.c.l.b16 %v36
  %v112 = vunpack.c.l.b16 %v37
  %v113 = vunpack.c.l.b16 %v38
  %v114 = vunpack.c.l.b16 %v39
  %v115 = vunpack.c.l.b16 %v40
  %v116 = vunpack.c.l.b16 %v41
  %v117 = vunpack.c.l.b16 %v42
  %v118 = vunpack.c.l.b16 %v43
  %v119 = vunpack.c.l.b16 %v44
  %v120 = vunpack.c.l.b16 %v45
  %v121 = vunpack.c.l.b16 %v46
  %v122 = vunpack.c.l.b16 %v47
  %v123 = vunpack.c.l.b16 %v48
  %v124 = vunpack.c.l.b16 %v49
  %v125 = vpack.c.b16 %v94, %v93
  %v126 = vpack.c.b16 %v96, %v95
  %v127 = vpack.c.b16 %v98, %v97
  %v128 = vpack.c.b16 %v100, %v99
  %v129 = vpack.c.b16 %v102, %v101
  %v130 = vpack.c.b16 %v104, %v103
  %v131 = vpack.c.b16 %v106, %v105
  %v132 = vpack.c.b16 %v108, %v107
  %v133 = vpack.c.b16 %v110, %v109
  %v134 = vpack.c.b16 %v112, %v111
  %v135 = vpack.c.b16 %v114, %v113
  %v136 = vpack.c.b16 %v116, %v115
  %v137 = vpack.c.b16 %v118, %v117
  %v138 = vpack.c.b16 %v120, %v119
  %v139 = vpack.c.b16 %v122, %v121
  %v140 = vpack.c.b16 %v124, %v123
  %v145 = vunpack.c.l.b16 %v50
  %v146 = vunpack.c.l.b16 %v51
  %v147 = vunpack.c.l.b16 %v52
  %v148 = vunpack.c.l.b16 %v53
  %v149 = vpack.c.b16 %v146, %v145
  %v150 = vpack.c.b16 %v148, %v147
  %vm153 = vcmask 261120
  %v155 = vsel %vm153, %v125, 0
  %v158 = vsel %vm153, %v126, 0
  %v161 = vsel %vm153, %v127, 0
  %v164 = vsel %vm153, %v128, 0
  %v167 = vsel %vm153, %v129, 0
  %v170 = vsel %vm153, %v130, 0
  %v173 = vsel %vm153, %v131, 0
  %v176 = vsel %vm153, %v132, 0
  %v179 = vsel %vm153, %v133, 0
  %v182 = vsel %vm153, %v134, 0
  %v185 = vsel %vm153, %v135, 0
  %v188 = vsel %vm153, %v136, 0
  %v191 = vsel %vm153, %v137, 0
  %v194 = vsel %vm153, %v138, 0
  %v197 = vsel %vm153, %v139, 0
  %v200 = vsel %vm153, %v140, 0
  %202 = vmatprep.subr.bf16.mxu0 0
  %203 = vmatpush1.bf16.msra.mxu0 %v149
  %204 = vmatprep.subr.bf16.mxu0 0
  %205 = vmatpush1.bf16.msra.mxu0 %v150
  %206 = vmatprep.subr.bf16.mxu0 0
  %207 = vmatpush1.bf16.msra.mxu0 0
  %208 = vmatprep.subr.bf16.mxu0 0
  %209 = vmatpush1.bf16.msra.mxu0 0
  %210 = vmatprep.subr.bf16.mxu0 0
  %211 = vmatpush1.bf16.msra.mxu0 0
  %212 = vmatprep.subr.bf16.mxu0 0
  %213 = vmatpush1.bf16.msra.mxu0 0
  %214 = vmatprep.subr.bf16.mxu0 0
  %215 = vmatpush1.bf16.msra.mxu0 0
  %216 = vmatprep.subr.bf16.mxu0 0
  %217 = vmatpush1.bf16.msra.mxu0 0
  %218 = vmatprep.subr.bf16.mxu0 0
  %219 = vmatpush1.bf16.msra.mxu0 0
  %220 = vmatprep.subr.bf16.mxu0 0
  %221 = vmatpush1.bf16.msra.mxu0 0
  %222 = vmatprep.subr.bf16.mxu0 0
  %223 = vmatpush1.bf16.msra.mxu0 0
  %224 = vmatprep.subr.bf16.mxu0 0
  %225 = vmatpush1.bf16.msra.mxu0 0
  %226 = vmatprep.subr.bf16.mxu0 0
  %227 = vmatpush1.bf16.msra.mxu0 0
  %228 = vmatprep.subr.bf16.mxu0 0
  %229 = vmatpush1.bf16.msra.mxu0 0
  %230 = vmatprep.subr.bf16.mxu0 0
  %231 = vmatpush1.bf16.msra.mxu0 0
  %232 = vmatprep.subr.bf16.mxu0 0
  %233 = vmatpush1.bf16.msra.mxu0 0
  %234 = vmatprep.mubr.bf16.mxu0 0
  %235 = vmatmul.mubr.bf16.gmra.mrb[0].mxu0 %v155
  %v236 = vpop.f32.mrb[0].mxu0
  %v237 = vadd.f32 %v59, %v236
  %v238 = vpop.f32.mrb[0].mxu0
  %v239 = vpop.f32.mrb[0].mxu0
  %v240 = vadd.f32 %v59, %v239
  %v241 = vpop.f32.mrb[0].mxu0
  %242 = vmatprep.mubr.bf16.mxu0 0
  %243 = vmatmul.mubr.bf16.gmra.mrb[0].mxu0 %v158
  %v244 = vpop.f32.mrb[0].mxu0
  %v245 = vadd.f32 %v59, %v244
  %v246 = vpop.f32.mrb[0].mxu0
  %v247 = vpop.f32.mrb[0].mxu0
  %v248 = vadd.f32 %v59, %v247
  %v249 = vpop.f32.mrb[0].mxu0
  %250 = vmatprep.mubr.bf16.mxu0 0
  %251 = vmatmul.mubr.bf16.gmra.mrb[0].mxu0 %v161
  %v252 = vpop.f32.mrb[0].mxu0
  %v253 = vadd.f32 %v59, %v252
  %v254 = vpop.f32.mrb[0].mxu0
  %v255 = vpop.f32.mrb[0].mxu0
  %v256 = vadd.f32 %v59, %v255
  %v257 = vpop.f32.mrb[0].mxu0
  %258 = vmatprep.mubr.bf16.mxu0 0
  %259 = vmatmul.mubr.bf16.gmra.mrb[0].mxu0 %v164
  %v260 = vpop.f32.mrb[0].mxu0
  %v261 = vadd.f32 %v59, %v260
  %v262 = vpop.f32.mrb[0].mxu0
  %v263 = vpop.f32.mrb[0].mxu0
  %v264 = vadd.f32 %v59, %v263
  %v265 = vpop.f32.mrb[0].mxu0
  %266 = vmatprep.mubr.bf16.mxu0 0
  %267 = vmatmul.mubr.bf16.gmra.mrb[0].mxu0 %v167
  %v268 = vpop.f32.mrb[0].mxu0
  %v269 = vadd.f32 %v59, %v268
  %v270 = vpop.f32.mrb[0].mxu0
  %v271 = vpop.f32.mrb[0].mxu0
  %v272 = vadd.f32 %v59, %v271
  %v273 = vpop.f32.mrb[0].mxu0
  %274 = vmatprep.mubr.bf16.mxu0 0
  %275 = vmatmul.mubr.bf16.gmra.mrb[0].mxu0 %v170
  %v276 = vpop.f32.mrb[0].mxu0
  %v277 = vadd.f32 %v59, %v276
  %v278 = vpop.f32.mrb[0].mxu0
  %v279 = vpop.f32.mrb[0].mxu0
  %v280 = vadd.f32 %v59, %v279
  %v281 = vpop.f32.mrb[0].mxu0
  %282 = vmatprep.mubr.bf16.mxu0 0
  %283 = vmatmul.mubr.bf16.gmra.mrb[0].mxu0 %v173
  %v284 = vpop.f32.mrb[0].mxu0
  %v285 = vadd.f32 %v59, %v284
  %v286 = vpop.f32.mrb[0].mxu0
  %v287 = vpop.f32.mrb[0].mxu0
  %v288 = vadd.f32 %v59, %v287
  %v289 = vpop.f32.mrb[0].mxu0
  %290 = vmatprep.mubr.bf16.mxu0 0
  %291 = vmatmul.mubr.bf16.gmra.mrb[0].mxu0 %v176
  %v292 = vpop.f32.mrb[0].mxu0
  %v293 = vadd.f32 %v59, %v292
  %v294 = vpop.f32.mrb[0].mxu0
  %v295 = vpop.f32.mrb[0].mxu0
  %v296 = vadd.f32 %v59, %v295
  %v297 = vpop.f32.mrb[0].mxu0
  %298 = vmatprep.mubr.bf16.mxu0 0
  %299 = vmatmul.mubr.bf16.gmra.mrb[0].mxu0 %v179
  %v300 = vpop.f32.mrb[0].mxu0
  %v301 = vadd.f32 %v59, %v300
  %v302 = vpop.f32.mrb[0].mxu0
  %v303 = vpop.f32.mrb[0].mxu0
  %v304 = vadd.f32 %v59, %v303
  %v305 = vpop.f32.mrb[0].mxu0
  %306 = vmatprep.mubr.bf16.mxu0 0
  %307 = vmatmul.mubr.bf16.gmra.mrb[0].mxu0 %v182
  %v308 = vpop.f32.mrb[0].mxu0
  %v309 = vadd.f32 %v59, %v308
  %v310 = vpop.f32.mrb[0].mxu0
  %v311 = vpop.f32.mrb[0].mxu0
  %v312 = vadd.f32 %v59, %v311
  %v313 = vpop.f32.mrb[0].mxu0
  %314 = vmatprep.mubr.bf16.mxu0 0
  %315 = vmatmul.mubr.bf16.gmra.mrb[0].mxu0 %v185
  %v316 = vpop.f32.mrb[0].mxu0
  %v317 = vadd.f32 %v59, %v316
  %v318 = vpop.f32.mrb[0].mxu0
  %v319 = vpop.f32.mrb[0].mxu0
  %v320 = vadd.f32 %v59, %v319
  %v321 = vpop.f32.mrb[0].mxu0
  %322 = vmatprep.mubr.bf16.mxu0 0
  %323 = vmatmul.mubr.bf16.gmra.mrb[0].mxu0 %v188
  %v324 = vpop.f32.mrb[0].mxu0
  %v325 = vadd.f32 %v59, %v324
  %v326 = vpop.f32.mrb[0].mxu0
  %v327 = vpop.f32.mrb[0].mxu0
  %v328 = vadd.f32 %v59, %v327
  %v329 = vpop.f32.mrb[0].mxu0
  %330 = vmatprep.mubr.bf16.mxu0 0
  %331 = vmatmul.mubr.bf16.gmra.mrb[0].mxu0 %v191
  %v332 = vpop.f32.mrb[0].mxu0
  %v333 = vadd.f32 %v59, %v332
  %v334 = vpop.f32.mrb[0].mxu0
  %v335 = vpop.f32.mrb[0].mxu0
  %v336 = vadd.f32 %v59, %v335
  %v337 = vpop.f32.mrb[0].mxu0
  %338 = vmatprep.mubr.bf16.mxu0 0
  %339 = vmatmul.mubr.bf16.gmra.mrb[0].mxu0 %v194
  %v340 = vpop.f32.mrb[0].mxu0
  %v341 = vadd.f32 %v59, %v340
  %v342 = vpop.f32.mrb[0].mxu0
  %v343 = vpop.f32.mrb[0].mxu0
  %v344 = vadd.f32 %v59, %v343
  %v345 = vpop.f32.mrb[0].mxu0
  %346 = vmatprep.mubr.bf16.mxu0 0
  %347 = vmatmul.mubr.bf16.gmra.mrb[0].mxu0 %v197
  %v348 = vpop.f32.mrb[0].mxu0
  %v349 = vadd.f32 %v59, %v348
  %v350 = vpop.f32.mrb[0].mxu0
  %v351 = vpop.f32.mrb[0].mxu0
  %v352 = vadd.f32 %v59, %v351
  %v353 = vpop.f32.mrb[0].mxu0
  %354 = vmatprep.mubr.bf16.mxu0 0
  %355 = vmatmul.mubr.bf16.gmra.mrb[0].mxu0 %v200
  %v356 = vpop.f32.mrb[0].mxu0
  %v357 = vadd.f32 %v59, %v356
  %v358 = vpop.f32.mrb[0].mxu0
  %v359 = vpop.f32.mrb[0].mxu0
  %v360 = vadd.f32 %v59, %v359
  %v361 = vpop.f32.mrb[0].mxu0
  %362 = vdwg.mxu0
  %v363 = vld [vmem:[%s3] sm:$0xff]
  %v364 = vld [vmem:[%s3 + $0x8] sm:$0xff]
  %v365 = vld [vmem:[%s3 + $0x10] sm:$0xff]
  %v366 = vld [vmem:[%s3 + $0x18] sm:$0xff]
  %v367 = vld [vmem:[%s3 + $0x20] sm:$0xff]
  %v368 = vld [vmem:[%s3 + $0x28] sm:$0xff]
  %v369 = vld [vmem:[%s3 + $0x30] sm:$0xff]
  %v370 = vld [vmem:[%s3 + $0x38] sm:$0xff]
  %v371 = vld [vmem:[%s3 + $0x40] sm:$0xff]
  %v372 = vld [vmem:[%s3 + $0x48] sm:$0xff]
  %v373 = vld [vmem:[%s3 + $0x50] sm:$0xff]
  %v374 = vld [vmem:[%s3 + $0x58] sm:$0xff]
  %v375 = vld [vmem:[%s3 + $0x60] sm:$0xff]
  %v376 = vld [vmem:[%s3 + $0x68] sm:$0xff]
  %v377 = vld [vmem:[%s3 + $0x70] sm:$0xff]
  %v378 = vld [vmem:[%s3 + $0x78] sm:$0xff]
  %v379 = vld [vmem:[%s3 + $0x80] sm:$0xff]
  %v380 = vld [vmem:[%s3 + $0x88] sm:$0xff]
  %v381 = vld [vmem:[%s3 + $0x90] sm:$0xff]
  %v382 = vld [vmem:[%s3 + $0x98] sm:$0xff]
  %v383 = vld [vmem:[%s3 + $0xa0] sm:$0xff]
  %v384 = vld [vmem:[%s3 + $0xa8] sm:$0xff]
  %v385 = vld [vmem:[%s3 + $0xb0] sm:$0xff]
  %v386 = vld [vmem:[%s3 + $0xb8] sm:$0xff]
  %v387 = vld [vmem:[%s3 + $0xc0] sm:$0xff]
  %v388 = vld [vmem:[%s3 + $0xc8] sm:$0xff]
  %v389 = vld [vmem:[%s3 + $0xd0] sm:$0xff]
  %v390 = vld [vmem:[%s3 + $0xd8] sm:$0xff]
  %v391 = vld [vmem:[%s3 + $0xe0] sm:$0xff]
  %v392 = vld [vmem:[%s3 + $0xe8] sm:$0xff]
  %v393 = vld [vmem:[%s3 + $0xf0] sm:$0xff]
  %v394 = vld [vmem:[%s3 + $0xf8] sm:$0xff]
  %v395 = vadd.f32 %v237, %v363
  %v396 = vadd.f32 %v240, %v364
  %v397 = vadd.f32 %v245, %v365
  %v398 = vadd.f32 %v248, %v366
  %v399 = vadd.f32 %v253, %v367
  %v400 = vadd.f32 %v256, %v368
  %v401 = vadd.f32 %v261, %v369
  %v402 = vadd.f32 %v264, %v370
  %v403 = vadd.f32 %v269, %v371
  %v404 = vadd.f32 %v272, %v372
  %v405 = vadd.f32 %v277, %v373
  %v406 = vadd.f32 %v280, %v374
  %v407 = vadd.f32 %v285, %v375
  %v408 = vadd.f32 %v288, %v376
  %v409 = vadd.f32 %v293, %v377
  %v410 = vadd.f32 %v296, %v378
  %v411 = vadd.f32 %v301, %v379
  %v412 = vadd.f32 %v304, %v380
  %v413 = vadd.f32 %v309, %v381
  %v414 = vadd.f32 %v312, %v382
  %v415 = vadd.f32 %v317, %v383
  %v416 = vadd.f32 %v320, %v384
  %v417 = vadd.f32 %v325, %v385
  %v418 = vadd.f32 %v328, %v386
  %v419 = vadd.f32 %v333, %v387
  %v420 = vadd.f32 %v336, %v388
  %v421 = vadd.f32 %v341, %v389
  %v422 = vadd.f32 %v344, %v390
  %v423 = vadd.f32 %v349, %v391
  %v424 = vadd.f32 %v352, %v392
  %v425 = vadd.f32 %v357, %v393
  %v426 = vadd.f32 %v360, %v394
  %427 = vst.msk [vmem:[%s4] sm:$0xff] %vm153, %v395
  %428 = vst.msk [vmem:[%s4 + $0x8] sm:$0xff] %vm153, %v396
  %429 = vst.msk [vmem:[%s4 + $0x10] sm:$0xff] %vm153, %v397
  %430 = vst.msk [vmem:[%s4 + $0x18] sm:$0xff] %vm153, %v398
  %431 = vst.msk [vmem:[%s4 + $0x20] sm:$0xff] %vm153, %v399
  %432 = vst.msk [vmem:[%s4 + $0x28] sm:$0xff] %vm153, %v400
  %433 = vst.msk [vmem:[%s4 + $0x30] sm:$0xff] %vm153, %v401
  %434 = vst.msk [vmem:[%s4 + $0x38] sm:$0xff] %vm153, %v402
  %435 = vst.msk [vmem:[%s4 + $0x40] sm:$0xff] %vm153, %v403
  %436 = vst.msk [vmem:[%s4 + $0x48] sm:$0xff] %vm153, %v404
  %437 = vst.msk [vmem:[%s4 + $0x50] sm:$0xff] %vm153, %v405
  %438 = vst.msk [vmem:[%s4 + $0x58] sm:$0xff] %vm153, %v406
  %439 = vst.msk [vmem:[%s4 + $0x60] sm:$0xff] %vm153, %v407
  %440 = vst.msk [vmem:[%s4 + $0x68] sm:$0xff] %vm153, %v408
  %441 = vst.msk [vmem:[%s4 + $0x70] sm:$0xff] %vm153, %v409
  %442 = vst.msk [vmem:[%s4 + $0x78] sm:$0xff] %vm153, %v410
  %443 = vst.msk [vmem:[%s4 + $0x80] sm:$0xff] %vm153, %v411
  %444 = vst.msk [vmem:[%s4 + $0x88] sm:$0xff] %vm153, %v412
  %445 = vst.msk [vmem:[%s4 + $0x90] sm:$0xff] %vm153, %v413
  %446 = vst.msk [vmem:[%s4 + $0x98] sm:$0xff] %vm153, %v414
  %447 = vst.msk [vmem:[%s4 + $0xa0] sm:$0xff] %vm153, %v415
  %448 = vst.msk [vmem:[%s4 + $0xa8] sm:$0xff] %vm153, %v416
  %449 = vst.msk [vmem:[%s4 + $0xb0] sm:$0xff] %vm153, %v417
  %450 = vst.msk [vmem:[%s4 + $0xb8] sm:$0xff] %vm153, %v418
  %451 = vst.msk [vmem:[%s4 + $0xc0] sm:$0xff] %vm153, %v419
  %452 = vst.msk [vmem:[%s4 + $0xc8] sm:$0xff] %vm153, %v420
  %453 = vst.msk [vmem:[%s4 + $0xd0] sm:$0xff] %vm153, %v421
  %454 = vst.msk [vmem:[%s4 + $0xd8] sm:$0xff] %vm153, %v422
  %455 = vst.msk [vmem:[%s4 + $0xe0] sm:$0xff] %vm153, %v423
  %456 = vst.msk [vmem:[%s4 + $0xe8] sm:$0xff] %vm153, %v424
  %457 = vst.msk [vmem:[%s4 + $0xf0] sm:$0xff] %vm153, %v425
  %458 = vst.msk [vmem:[%s4 + $0xf8] sm:$0xff] %vm153, %v426
  // Predicated region
  $region18: #{ms_block.13} parent=0 // pred_check
    _
  $region19: #{ms_block.13} parent=0 // pred_check_branch
    %460 = sbr.rel (0) target = $region21
  $region20: #{ms_block.13} parent=0 // pred_region
    _
  $region21: #{ms_block.13} parent=0 // pred_fallthru
    _
  // Predicated region
  $region22: #{ms_block.13} parent=0 // pred_check
    _
  $region23: #{ms_block.13} parent=0 // pred_check_branch
    %462 = sbr.rel (0) target = $region25
  $region24: #{ms_block.13} parent=0 // pred_region
    _
  $region25: #{ms_block.13} parent=0 // pred_fallthru
    _

// kernel: ms_block.14
$region0: #{ms_block.14}
  #allocation0 [shape = 'u32[]', space=smem, size = 0x4, offset = 0x4, fixed_abs, tag = 'smem constant byte address 0x4 - core index']
  #allocation1 [shape = 'u32[144,128]{1,0:T(1,128)}', space=vmem, size = 0x12000, scoped, tag = 'internal scratch']
  #allocation2 [shape = 'f32[128,32]{1,0:T(8,128)}', space=vmem, size = 0x10000, scoped, tag = 'scratch operand']
  #allocation3 [shape = 'f32[128,128]{1,0:T(8,128)}', space=vmem, size = 0x10000, scoped, tag = 'scratch operand']
  %s0 = inlined_call_operand.vmem [shape: f32[2,128,32], index: 0, kind: input, shape index: {}]
  %s1 = inlined_call_operand.vmem [shape: bf16[32,128], index: 1, kind: input, shape index: {}]
  %s2 = inlined_call_operand.vmem [shape: f32[1,128], index: 2, kind: input, shape index: {}]
  %s3 = inlined_call_operand.vmem [shape: bf16[2,128,128], index: 3, kind: output, shape index: {}]
  %s4 = sld [smem:[#allocation0]]
  $region49: #{ms_block.14} parent=0
    _
  %s6 = ssub.s32 1, %s4
  %s7 = scalar_select 0, %s6, %s4
  loop: start=0, step=1, limit=4
  $region2: #{ms_block.14} parent=0 // loop_pre_header
    _
  $region3: #{ms_block.14} parent=0 // loop_header
    %s9 = sphi 0, %s13
    %p10 = scmp.ge.s32.totalorder %s9, 4
    %s16 = sphi 0, %s28
    %s17 = sphi 0, %s24
    %s18 = sphi 0, %s16
    %s19 = sphi 0, %s17
    %s20 = sphi 0, %s18
    %s21 = sphi 0, %s19
    %s33 = sphi 0, %s35
    %s36 = sphi 0, %s33
    %s37 = sphi 0, %s36
    %s53 = sphi 0, %s37
    %s57 = sphi 0, %s57
    %s59 = sphi 0, %s57
    %s60 = sphi 0, %s59
    %s74 = sphi 0, %s60
    %s78 = sphi 0, %s78
    %s80 = sphi 0, %s78
    %s81 = sphi 0, %s80
    %s95 = sphi 0, %s81
    %s103 = sphi 0, %s105
    %s106 = sphi 0, %s103
    %s107 = sphi 0, %s106
    %s123 = sphi 0, %s107
  $region4: #{ms_block.14} parent=0 // loop_header_branch
    %12 = sbr.rel (%p10) target = $region8
  $region5: #{ms_block.14} parent=0 // loop_body
    %s14 = ssub.s32 %s9, 1
    %s15 = ssub.s32 %s9, 2
    %s22 = sadd.s32 1, %s17
    %p23 = scmp.ge.s32.totalorder %s22, 2
    %s24 = scalar_select %p23, 0, %s22
    %s25 = sadd.s32 1, %s16
    %s26 = scalar_select %p23, %s25, %s16
    %p27 = scmp.ge.s32.totalorder %s26, 1
    %s28 = scalar_select %p27, 0, %s26
    %s29 = ssub.s32 %s17, %s24
    %s30 = ssub.s32 %s16, %s28
    %s31 = sor.u32 %s29, %s30
    %p32 = scmp.eq.s32.totalorder %s31, 0
    %s34 = sadd.s32 %s33, 1
    %s35 = scalar_select %p32, %s33, %s34
    %p38 = pneg %p32
    %p39 = scmp.eq.s32.totalorder %s9, 1
    %p40 = por %p38, %p39
    %p41 = scmp.ne.s32.totalorder %s33, %s36
    %p42 = scmp.eq.s32.totalorder %s9, 0
    %p43 = por %p41, %p42
    %p44 = scmp.ne.s32.totalorder %s33, %s36
    %p45 = scmp.eq.s32.totalorder %s14, 1
    %p46 = por %p44, %p45
    %p47 = scmp.ne.s32.totalorder %s36, %s37
    %p48 = scmp.eq.s32.totalorder %s14, 0
    %p49 = por %p47, %p48
    %p50 = scmp.ne.s32.totalorder %s36, %s37
    %p51 = scmp.eq.s32.totalorder %s15, 1
    %p52 = por %p50, %p51
    %p54 = scmp.ne.s32.totalorder %s37, %s53
    %p55 = scmp.eq.s32.totalorder %s15, 0
    %p56 = por %p54, %p55
    %s58 = sadd.s32 %s57, 1
    %p61 = scmp.eq.s32.totalorder %s9, 1
    %p62 = scmp.ne.s32.totalorder %s57, %s59
    %p63 = scmp.eq.s32.totalorder %s9, 0
    %p64 = por %p62, %p63
    %p65 = scmp.ne.s32.totalorder %s57, %s59
    %p66 = scmp.eq.s32.totalorder %s14, 1
    %p67 = por %p65, %p66
    %p68 = scmp.ne.s32.totalorder %s59, %s60
    %p69 = scmp.eq.s32.totalorder %s14, 0
    %p70 = por %p68, %p69
    %p71 = scmp.ne.s32.totalorder %s59, %s60
    %p72 = scmp.eq.s32.totalorder %s15, 1
    %p73 = por %p71, %p72
    %p75 = scmp.ne.s32.totalorder %s60, %s74
    %p76 = scmp.eq.s32.totalorder %s15, 0
    %p77 = por %p75, %p76
    %s79 = sadd.s32 %s78, 1
    %p82 = scmp.eq.s32.totalorder %s9, 1
    %p83 = scmp.ne.s32.totalorder %s78, %s80
    %p84 = scmp.eq.s32.totalorder %s9, 0
    %p85 = por %p83, %p84
    %p86 = scmp.ne.s32.totalorder %s78, %s80
    %p87 = scmp.eq.s32.totalorder %s14, 1
    %p88 = por %p86, %p87
    %p89 = scmp.ne.s32.totalorder %s80, %s81
    %p90 = scmp.eq.s32.totalorder %s14, 0
    %p91 = por %p89, %p90
    %p92 = scmp.ne.s32.totalorder %s80, %s81
    %p93 = scmp.eq.s32.totalorder %s15, 1
    %p94 = por %p92, %p93
    %p96 = scmp.ne.s32.totalorder %s81, %s95
    %p97 = scmp.eq.s32.totalorder %s15, 0
    %p98 = por %p96, %p97
    %s99 = ssub.s32 %s17, %s24
    %s100 = ssub.s32 %s16, %s28
    %s101 = sor.u32 %s99, %s100
    %p102 = scmp.eq.s32.totalorder %s101, 0
    %s104 = sadd.s32 %s103, 1
    %s105 = scalar_select %p102, %s103, %s104
    %p108 = pneg %p102
    %p109 = scmp.eq.s32.totalorder %s9, 1
    %p110 = por %p108, %p109
    %p111 = scmp.ne.s32.totalorder %s103, %s106
    %p112 = scmp.eq.s32.totalorder %s9, 0
    %p113 = por %p111, %p112
    %p114 = scmp.ne.s32.totalorder %s103, %s106
    %p115 = scmp.eq.s32.totalorder %s14, 1
    %p116 = por %p114, %p115
    %p117 = scmp.ne.s32.totalorder %s106, %s107
    %p118 = scmp.eq.s32.totalorder %s14, 0
    %p119 = por %p117, %p118
    %p120 = scmp.ne.s32.totalorder %s106, %s107
    %p121 = scmp.eq.s32.totalorder %s15, 1
    %p122 = por %p120, %p121
    %p124 = scmp.ne.s32.totalorder %s107, %s123
    %p125 = scmp.eq.s32.totalorder %s15, 0
    %p126 = por %p124, %p125
    %p127 = scmp.le.s32.totalorder 1, %s9
    %p128 = scmp.lt.s32.totalorder %s9, 3
    %p129 = pnand %p127, %p128
    %p130 = pneg %p129
    // Predicated region
    $region9: #{ms_block.14} parent=5 // pred_check
      _
    $region10: #{ms_block.14} parent=5 // pred_check_branch
      %132 = sbr.rel (%p129) target = $region12
    $region11: #{ms_block.14} parent=5 // pred_region
      %s133 = ssub.s32 %s9, 1
      // Predicated region
      $region13: #{ms_block.14} parent=11 // pred_check
        %p134 = pneg %p70
      $region14: #{ms_block.14} parent=11 // pred_check_branch
        %136 = sbr.rel (%p134) target = $region16
      $region15: #{ms_block.14} parent=11 // pred_region
        _
      $region16: #{ms_block.14} parent=11 // pred_fallthru
        _
      // Predicated region
      $region17: #{ms_block.14} parent=11 // pred_check
        %p137 = pneg %p91
      $region18: #{ms_block.14} parent=11 // pred_check_branch
        %139 = sbr.rel (%p137) target = $region20
      $region19: #{ms_block.14} parent=11 // pred_region
        _
      $region20: #{ms_block.14} parent=11 // pred_fallthru
        _
    $region12: #{ms_block.14} parent=5 // pred_fallthru
      _
    %p140 = scmp.lt.s32.totalorder %s9, 2
    // Predicated region
    $region21: #{ms_block.14} parent=5 // pred_check
      %p141 = pneg %p140
    $region22: #{ms_block.14} parent=5 // pred_check_branch
      %143 = sbr.rel (%p141) target = $region24
    $region23: #{ms_block.14} parent=5 // pred_region
      // Predicated region
      $region25: #{ms_block.14} parent=23 // pred_check
        %p144 = pneg %p43
      $region26: #{ms_block.14} parent=23 // pred_check_branch
        %146 = sbr.rel (%p144) target = $region28
      $region27: #{ms_block.14} parent=23 // pred_region
        %s147 = smul.u32 16, %s16
        %p148 = scmp.lt.s32.totalorder %s17, 1
        %s149 = scalar_select %p148, %s17, 1
        %p150 = scmp.lt.s32.totalorder %s147, 15
        %s151 = scalar_select %p150, %s147, 15
        %s152 = smul.addr %s149, 16
        %s153 = sadd.s32 %s151, %s152
        %s154 = smul.addr %s153, 8
        %s155 = scalar_lea.vmem %s0, %s154
        %s156 = smul.u32 16, %s16
      $region28: #{ms_block.14} parent=23 // pred_fallthru
        _
    $region24: #{ms_block.14} parent=5 // pred_fallthru
      _
    %p157 = scmp.le.s32.totalorder 1, %s9
    %p158 = scmp.lt.s32.totalorder %s9, 3
    %p159 = pnand %p157, %p158
    %p160 = pneg %p159
    // Predicated region
    $region29: #{ms_block.14} parent=5 // pred_check
      _
    $region30: #{ms_block.14} parent=5 // pred_check_branch
      %162 = sbr.rel (%p159) target = $region32
    $region31: #{ms_block.14} parent=5 // pred_region
      %s163 = ssub.s32 %s9, 1
      %s164 = smul.u32 16, %s18
      %p165 = scmp.lt.s32.totalorder %s19, 1
      %s166 = scalar_select %p165, %s19, 1
      %p167 = scmp.lt.s32.totalorder %s164, 15
      %s168 = scalar_select %p167, %s164, 15
      %s169 = smul.addr %s166, 16
      %s170 = sadd.s32 %s168, %s169
      %s171 = smul.addr %s170, 8
      %s172 = scalar_lea.vmem %s0, %s171
      %p173 = pneg %p49
      %p174 = pneg %p46
      %p175 = pneg %p70
      %p176 = pneg %p67
      %p177 = pneg %p91
      %p178 = pneg %p88
      %p179 = pneg %p119
      %p180 = pneg %p116
      %s181 = smul.u32 16, %s18
      %p182 = scmp.lt.s32.totalorder %s19, 1
      %s183 = scalar_select %p182, %s19, 1
      %p184 = scmp.lt.s32.totalorder %s181, 15
      %s185 = scalar_select %p184, %s181, 15
      %s186 = smul.addr %s183, 16
      %s187 = sadd.s32 %s185, %s186
      %s188 = smul.addr %s187, 4
      %s189 = scalar_lea.vmem %s3, %s188
      %s190 = smul.u32 16, %s18
      %p191 = scmp.lt.s32.totalorder %s19, 1
      %s192 = scalar_select %p191, %s19, 1
      %p193 = scmp.lt.s32.totalorder %s190, 15
      %s194 = scalar_select %p193, %s190, 15
      %s195 = smul.addr %s192, 16
      %s196 = sadd.s32 %s194, %s195
      %s197 = smul.addr %s196, 8
      %s198 = scalar_lea.vmem %s0, %s197
      %s199 = smul.u32 16, %s18
      %s200 = smul.u32 16, %s18
      %p201 = scmp.lt.s32.totalorder %s19, 1
      %s202 = scalar_select %p201, %s19, 1
      %p203 = scmp.lt.s32.totalorder %s200, 15
      %s204 = scalar_select %p203, %s200, 15
      %s205 = smul.addr %s202, 16
      %s206 = sadd.s32 %s204, %s205
      %s207 = smul.addr %s206, 4
      %s208 = scalar_lea.vmem %s3, %s207
      %s209 = smul.u32 16, %s18
      %p211 = scmp.eq.s32.totalorder %s19, 0
      // Predicated region
      $region33: #{ms_block.14} parent=31 // pred_check
        %p212 = pneg %p211
      $region34: #{ms_block.14} parent=31 // pred_check_branch
        %214 = sbr.rel (%p212) target = $region36
      $region35: #{ms_block.14} parent=31 // pred_region
        %vm215 = vcmask 261120
        %216 = vst.msk [vmem:[#allocation2] sm:$0xff] %vm215, 0.0
        %217 = vst.msk [vmem:[#allocation2 + $0x8] sm:$0xff] %vm215, 0.0
        %218 = vst.msk [vmem:[#allocation2 + $0x10] sm:$0xff] %vm215, 0.0
        %219 = vst.msk [vmem:[#allocation2 + $0x18] sm:$0xff] %vm215, 0.0
        %220 = vst.msk [vmem:[#allocation2 + $0x20] sm:$0xff] %vm215, 0.0
        %221 = vst.msk [vmem:[#allocation2 + $0x28] sm:$0xff] %vm215, 0.0
        %222 = vst.msk [vmem:[#allocation2 + $0x30] sm:$0xff] %vm215, 0.0
        %223 = vst.msk [vmem:[#allocation2 + $0x38] sm:$0xff] %vm215, 0.0
        %224 = vst.msk [vmem:[#allocation2 + $0x40] sm:$0xff] %vm215, 0.0
        %225 = vst.msk [vmem:[#allocation2 + $0x48] sm:$0xff] %vm215, 0.0
        %226 = vst.msk [vmem:[#allocation2 + $0x50] sm:$0xff] %vm215, 0.0
        %227 = vst.msk [vmem:[#allocation2 + $0x58] sm:$0xff] %vm215, 0.0
        %228 = vst.msk [vmem:[#allocation2 + $0x60] sm:$0xff] %vm215, 0.0
        %229 = vst.msk [vmem:[#allocation2 + $0x68] sm:$0xff] %vm215, 0.0
        %230 = vst.msk [vmem:[#allocation2 + $0x70] sm:$0xff] %vm215, 0.0
        %231 = vst.msk [vmem:[#allocation2 + $0x78] sm:$0xff] %vm215, 0.0
        %232 = vst [vmem:[#allocation3] sm:$0xff] 0.0
        %233 = vst [vmem:[#allocation3 + $0x8] sm:$0xff] 0.0
        %234 = vst [vmem:[#allocation3 + $0x10] sm:$0xff] 0.0
        %235 = vst [vmem:[#allocation3 + $0x18] sm:$0xff] 0.0
        %236 = vst [vmem:[#allocation3 + $0x20] sm:$0xff] 0.0
        %237 = vst [vmem:[#allocation3 + $0x28] sm:$0xff] 0.0
        %238 = vst [vmem:[#allocation3 + $0x30] sm:$0xff] 0.0
        %239 = vst [vmem:[#allocation3 + $0x38] sm:$0xff] 0.0
        %240 = vst [vmem:[#allocation3 + $0x40] sm:$0xff] 0.0
        %241 = vst [vmem:[#allocation3 + $0x48] sm:$0xff] 0.0
        %242 = vst [vmem:[#allocation3 + $0x50] sm:$0xff] 0.0
        %243 = vst [vmem:[#allocation3 + $0x58] sm:$0xff] 0.0
        %244 = vst [vmem:[#allocation3 + $0x60] sm:$0xff] 0.0
        %245 = vst [vmem:[#allocation3 + $0x68] sm:$0xff] 0.0
        %246 = vst [vmem:[#allocation3 + $0x70] sm:$0xff] 0.0
        %247 = vst [vmem:[#allocation3 + $0x78] sm:$0xff] 0.0
      $region36: #{ms_block.14} parent=31 // pred_fallthru
        _
      %v248 = vld [vmem:[%s198] sm:$0xff]
      %v249 = vld [vmem:[%s198 + $0x8] sm:$0xff]
      %v250 = vld [vmem:[%s198 + $0x10] sm:$0xff]
      %v251 = vld [vmem:[%s198 + $0x18] sm:$0xff]
      %v252 = vld [vmem:[%s198 + $0x20] sm:$0xff]
      %v253 = vld [vmem:[%s198 + $0x28] sm:$0xff]
      %v254 = vld [vmem:[%s198 + $0x30] sm:$0xff]
      %v255 = vld [vmem:[%s198 + $0x38] sm:$0xff]
      %v256 = vld [vmem:[%s198 + $0x40] sm:$0xff]
      %v257 = vld [vmem:[%s198 + $0x48] sm:$0xff]
      %v258 = vld [vmem:[%s198 + $0x50] sm:$0xff]
      %v259 = vld [vmem:[%s198 + $0x58] sm:$0xff]
      %v260 = vld [vmem:[%s198 + $0x60] sm:$0xff]
      %v261 = vld [vmem:[%s198 + $0x68] sm:$0xff]
      %v262 = vld [vmem:[%s198 + $0x70] sm:$0xff]
      %v263 = vld [vmem:[%s198 + $0x78] sm:$0xff]
      %v264 = vld [vmem:[#allocation2] sm:$0xff]
      %v265 = vld [vmem:[#allocation2 + $0x8] sm:$0xff]
      %v266 = vld [vmem:[#allocation2 + $0x10] sm:$0xff]
      %v267 = vld [vmem:[#allocation2 + $0x18] sm:$0xff]
      %v268 = vld [vmem:[#allocation2 + $0x20] sm:$0xff]
      %v269 = vld [vmem:[#allocation2 + $0x28] sm:$0xff]
      %v270 = vld [vmem:[#allocation2 + $0x30] sm:$0xff]
      %v271 = vld [vmem:[#allocation2 + $0x38] sm:$0xff]
      %v272 = vld [vmem:[#allocation2 + $0x40] sm:$0xff]
      %v273 = vld [vmem:[#allocation2 + $0x48] sm:$0xff]
      %v274 = vld [vmem:[#allocation2 + $0x50] sm:$0xff]
      %v275 = vld [vmem:[#allocation2 + $0x58] sm:$0xff]
      %v276 = vld [vmem:[#allocation2 + $0x60] sm:$0xff]
      %v277 = vld [vmem:[#allocation2 + $0x68] sm:$0xff]
      %v278 = vld [vmem:[#allocation2 + $0x70] sm:$0xff]
      %v279 = vld [vmem:[#allocation2 + $0x78] sm:$0xff]
      %v280 = vsub.f32 %v248, %v264
      %v281 = vsub.f32 %v249, %v265
      %v282 = vsub.f32 %v250, %v266
      %v283 = vsub.f32 %v251, %v267
      %v284 = vsub.f32 %v252, %v268
      %v285 = vsub.f32 %v253, %v269
      %v286 = vsub.f32 %v254, %v270
      %v287 = vsub.f32 %v255, %v271
      %v288 = vsub.f32 %v256, %v272
      %v289 = vsub.f32 %v257, %v273
      %v290 = vsub.f32 %v258, %v274
      %v291 = vsub.f32 %v259, %v275
      %v292 = vsub.f32 %v260, %v276
      %v293 = vsub.f32 %v261, %v277
      %v294 = vsub.f32 %v262, %v278
      %v295 = vsub.f32 %v263, %v279
      %v296 = vmul.f32 %v280, 0.5
      %v297 = vmul.f32 %v281, 0.5
      %v298 = vmul.f32 %v282, 0.5
      %v299 = vmul.f32 %v283, 0.5
      %v300 = vmul.f32 %v284, 0.5
      %v301 = vmul.f32 %v285, 0.5
      %v302 = vmul.f32 %v286, 0.5
      %v303 = vmul.f32 %v287, 0.5
      %v304 = vmul.f32 %v288, 0.5
      %v305 = vmul.f32 %v289, 0.5
      %v306 = vmul.f32 %v290, 0.5
      %v307 = vmul.f32 %v291, 0.5
      %v308 = vmul.f32 %v292, 0.5
      %v309 = vmul.f32 %v293, 0.5
      %v310 = vmul.f32 %v294, 0.5
      %v311 = vmul.f32 %v295, 0.5
      %v312 = vadd.f32 %v264, %v296
      %v313 = vadd.f32 %v265, %v297
      %v314 = vadd.f32 %v266, %v298
      %v315 = vadd.f32 %v267, %v299
      %v316 = vadd.f32 %v268, %v300
      %v317 = vadd.f32 %v269, %v301
      %v318 = vadd.f32 %v270, %v302
      %v319 = vadd.f32 %v271, %v303
      %v320 = vadd.f32 %v272, %v304
      %v321 = vadd.f32 %v273, %v305
      %v322 = vadd.f32 %v274, %v306
      %v323 = vadd.f32 %v275, %v307
      %v324 = vadd.f32 %v276, %v308
      %v325 = vadd.f32 %v277, %v309
      %v326 = vadd.f32 %v278, %v310
      %v327 = vadd.f32 %v279, %v311
      %vm328 = vcmp.ge.f32.partialorder %v312, 1.0
      %vm329 = vcmp.ge.f32.partialorder %v313, 1.0
      %vm330 = vcmp.ge.f32.partialorder %v314, 1.0
      %vm331 = vcmp.ge.f32.partialorder %v315, 1.0
      %vm332 = vcmp.ge.f32.partialorder %v316, 1.0
      %vm333 = vcmp.ge.f32.partialorder %v317, 1.0
      %vm334 = vcmp.ge.f32.partialorder %v318, 1.0
      %vm335 = vcmp.ge.f32.partialorder %v319, 1.0
      %vm336 = vcmp.ge.f32.partialorder %v320, 1.0
      %vm337 = vcmp.ge.f32.partialorder %v321, 1.0
      %vm338 = vcmp.ge.f32.partialorder %v322, 1.0
      %vm339 = vcmp.ge.f32.partialorder %v323, 1.0
      %vm340 = vcmp.ge.f32.partialorder %v324, 1.0
      %vm341 = vcmp.ge.f32.partialorder %v325, 1.0
      %vm342 = vcmp.ge.f32.partialorder %v326, 1.0
      %vm343 = vcmp.ge.f32.partialorder %v327, 1.0
      %v344 = vsel %vm328, 1, 0
      %v345 = vsel %vm329, 1, 0
      %v346 = vsel %vm330, 1, 0
      %v347 = vsel %vm331, 1, 0
      %v348 = vsel %vm332, 1, 0
      %v349 = vsel %vm333, 1, 0
      %v350 = vsel %vm334, 1, 0
      %v351 = vsel %vm335, 1, 0
      %v352 = vsel %vm336, 1, 0
      %v353 = vsel %vm337, 1, 0
      %v354 = vsel %vm338, 1, 0
      %v355 = vsel %vm339, 1, 0
      %v356 = vsel %vm340, 1, 0
      %v357 = vsel %vm341, 1, 0
      %v358 = vsel %vm342, 1, 0
      %v359 = vsel %vm343, 1, 0
      %v360 = vcvt.s32.f32 %v344
      %v361 = vcvt.s32.f32 %v345
      %v362 = vcvt.s32.f32 %v346
      %v363 = vcvt.s32.f32 %v347
      %v364 = vcvt.s32.f32 %v348
      %v365 = vcvt.s32.f32 %v349
      %v366 = vcvt.s32.f32 %v350
      %v367 = vcvt.s32.f32 %v351
      %v368 = vcvt.s32.f32 %v352
      %v369 = vcvt.s32.f32 %v353
      %v370 = vcvt.s32.f32 %v354
      %v371 = vcvt.s32.f32 %v355
      %v372 = vcvt.s32.f32 %v356
      %v373 = vcvt.s32.f32 %v357
      %v374 = vcvt.s32.f32 %v358
      %v375 = vcvt.s32.f32 %v359
      %v376 = vsub.f32 1.0, %v360
      %v377 = vsub.f32 1.0, %v361
      %v378 = vsub.f32 1.0, %v362
      %v379 = vsub.f32 1.0, %v363
      %v380 = vsub.f32 1.0, %v364
      %v381 = vsub.f32 1.0, %v365
      %v382 = vsub.f32 1.0, %v366
      %v383 = vsub.f32 1.0, %v367
      %v384 = vsub.f32 1.0, %v368
      %v385 = vsub.f32 1.0, %v369
      %v386 = vsub.f32 1.0, %v370
      %v387 = vsub.f32 1.0, %v371
      %v388 = vsub.f32 1.0, %v372
      %v389 = vsub.f32 1.0, %v373
      %v390 = vsub.f32 1.0, %v374
      %v391 = vsub.f32 1.0, %v375
      %v392 = vmul.f32 %v312, %v376
      %v393 = vmul.f32 %v313, %v377
      %v394 = vmul.f32 %v314, %v378
      %v395 = vmul.f32 %v315, %v379
      %v396 = vmul.f32 %v316, %v380
      %v397 = vmul.f32 %v317, %v381
      %v398 = vmul.f32 %v318, %v382
      %v399 = vmul.f32 %v319, %v383
      %v400 = vmul.f32 %v320, %v384
      %v401 = vmul.f32 %v321, %v385
      %v402 = vmul.f32 %v322, %v386
      %v403 = vmul.f32 %v323, %v387
      %v404 = vmul.f32 %v324, %v388
      %v405 = vmul.f32 %v325, %v389
      %v406 = vmul.f32 %v326, %v390
      %v407 = vmul.f32 %v327, %v391
      %vm408 = vcmask 261120
      %409 = vst.msk [vmem:[#allocation2] sm:$0xff] %vm408, %v392
      %410 = vst.msk [vmem:[#allocation2 + $0x8] sm:$0xff] %vm408, %v393
      %411 = vst.msk [vmem:[#allocation2 + $0x10] sm:$0xff] %vm408, %v394
      %412 = vst.msk [vmem:[#allocation2 + $0x18] sm:$0xff] %vm408, %v395
      %413 = vst.msk [vmem:[#allocation2 + $0x20] sm:$0xff] %vm408, %v396
      %414 = vst.msk [vmem:[#allocation2 + $0x28] sm:$0xff] %vm408, %v397
      %415 = vst.msk [vmem:[#allocation2 + $0x30] sm:$0xff] %vm408, %v398
      %416 = vst.msk [vmem:[#allocation2 + $0x38] sm:$0xff] %vm408, %v399
      %417 = vst.msk [vmem:[#allocation2 + $0x40] sm:$0xff] %vm408, %v400
      %418 = vst.msk [vmem:[#allocation2 + $0x48] sm:$0xff] %vm408, %v401
      %419 = vst.msk [vmem:[#allocation2 + $0x50] sm:$0xff] %vm408, %v402
      %420 = vst.msk [vmem:[#allocation2 + $0x58] sm:$0xff] %vm408, %v403
      %421 = vst.msk [vmem:[#allocation2 + $0x60] sm:$0xff] %vm408, %v404
      %422 = vst.msk [vmem:[#allocation2 + $0x68] sm:$0xff] %vm408, %v405
      %423 = vst.msk [vmem:[#allocation2 + $0x70] sm:$0xff] %vm408, %v406
      %424 = vst.msk [vmem:[#allocation2 + $0x78] sm:$0xff] %vm408, %v407
      %v425 = vpack.c.bf16 %v361, %v360
      %v426 = vpack.c.bf16 %v363, %v362
      %v427 = vpack.c.bf16 %v365, %v364
      %v428 = vpack.c.bf16 %v367, %v366
      %v429 = vpack.c.bf16 %v369, %v368
      %v430 = vpack.c.bf16 %v371, %v370
      %v431 = vpack.c.bf16 %v373, %v372
      %v432 = vpack.c.bf16 %v375, %v374
      %v433 = vld [vmem:[%s1] sm:$0xf]
      %v434 = vld [vmem:[%s1 + $0x4] sm:$0xf]
      %v435 = vld [vmem:[%s1 + $0x8] sm:$0xf]
      %v436 = vld [vmem:[%s1 + $0xc] sm:$0xf]
      %v437 = vld [vmem:[%s2] sm:$0x1]
      %v439 = vlaneseq
      %v440 = vshrl.u32 %v439, 7
      %v441 = vsub.s32 0, %v440
      %v442 = vrot.slane %v437, %v441
      %v448 = vunpack.c.l.b16 %v433
      %v449 = vunpack.c.l.b16 %v434
      %v450 = vunpack.c.l.b16 %v435
      %v451 = vunpack.c.l.b16 %v436
      %v452 = vpack.c.b16 %v449, %v448
      %v453 = vpack.c.b16 %v451, %v450
      %v457 = vsel %vm408, %v425, 0
      %v460 = vsel %vm408, %v426, 0
      %v463 = vsel %vm408, %v427, 0
      %v466 = vsel %vm408, %v428, 0
      %v469 = vsel %vm408, %v429, 0
      %v472 = vsel %vm408, %v430, 0
      %v475 = vsel %vm408, %v431, 0
      %v478 = vsel %vm408, %v432, 0
      %480 = vmatprep.subr.bf16.mxu0 0
      %481 = vmatpush1.bf16.msra.mxu0 %v452
      %482 = vmatprep.subr.bf16.mxu0 0
      %483 = vmatpush1.bf16.msra.mxu0 %v453
      %484 = vmatprep.subr.bf16.mxu0 0
      %485 = vmatpush1.bf16.msra.mxu0 0
      %486 = vmatprep.subr.bf16.mxu0 0
      %487 = vmatpush1.bf16.msra.mxu0 0
      %488 = vmatprep.subr.bf16.mxu0 0
      %489 = vmatpush1.bf16.msra.mxu0 0
      %490 = vmatprep.subr.bf16.mxu0 0
      %491 = vmatpush1.bf16.msra.mxu0 0
      %492 = vmatprep.subr.bf16.mxu0 0
      %493 = vmatpush1.bf16.msra.mxu0 0
      %494 = vmatprep.subr.bf16.mxu0 0
      %495 = vmatpush1.bf16.msra.mxu0 0
      %496 = vmatprep.subr.bf16.mxu0 0
      %497 = vmatpush1.bf16.msra.mxu0 0
      %498 = vmatprep.subr.bf16.mxu0 0
      %499 = vmatpush1.bf16.msra.mxu0 0
      %500 = vmatprep.subr.bf16.mxu0 0
      %501 = vmatpush1.bf16.msra.mxu0 0
      %502 = vmatprep.subr.bf16.mxu0 0
      %503 = vmatpush1.bf16.msra.mxu0 0
      %504 = vmatprep.subr.bf16.mxu0 0
      %505 = vmatpush1.bf16.msra.mxu0 0
      %506 = vmatprep.subr.bf16.mxu0 0
      %507 = vmatpush1.bf16.msra.mxu0 0
      %508 = vmatprep.subr.bf16.mxu0 0
      %509 = vmatpush1.bf16.msra.mxu0 0
      %510 = vmatprep.subr.bf16.mxu0 0
      %511 = vmatpush1.bf16.msra.mxu0 0
      %512 = vmatprep.mubr.bf16.mxu0 0
      %513 = vmatmul.mubr.bf16.gmra.mrb[0].mxu0 %v457
      %v514 = vpop.f32.mrb[0].mxu0
      %v515 = vadd.f32 %v442, %v514
      %v516 = vpop.f32.mrb[0].mxu0
      %v517 = vpop.f32.mrb[0].mxu0
      %v518 = vadd.f32 %v442, %v517
      %v519 = vpop.f32.mrb[0].mxu0
      %520 = vmatprep.mubr.bf16.mxu0 0
      %521 = vmatmul.mubr.bf16.gmra.mrb[0].mxu0 %v460
      %v522 = vpop.f32.mrb[0].mxu0
      %v523 = vadd.f32 %v442, %v522
      %v524 = vpop.f32.mrb[0].mxu0
      %v525 = vpop.f32.mrb[0].mxu0
      %v526 = vadd.f32 %v442, %v525
      %v527 = vpop.f32.mrb[0].mxu0
      %528 = vmatprep.mubr.bf16.mxu0 0
      %529 = vmatmul.mubr.bf16.gmra.mrb[0].mxu0 %v463
      %v530 = vpop.f32.mrb[0].mxu0
      %v531 = vadd.f32 %v442, %v530
      %v532 = vpop.f32.mrb[0].mxu0
      %v533 = vpop.f32.mrb[0].mxu0
      %v534 = vadd.f32 %v442, %v533
      %v535 = vpop.f32.mrb[0].mxu0
      %536 = vmatprep.mubr.bf16.mxu0 0
      %537 = vmatmul.mubr.bf16.gmra.mrb[0].mxu0 %v466
      %v538 = vpop.f32.mrb[0].mxu0
      %v539 = vadd.f32 %v442, %v538
      %v540 = vpop.f32.mrb[0].mxu0
      %v541 = vpop.f32.mrb[0].mxu0
      %v542 = vadd.f32 %v442, %v541
      %v543 = vpop.f32.mrb[0].mxu0
      %544 = vmatprep.mubr.bf16.mxu0 0
      %545 = vmatmul.mubr.bf16.gmra.mrb[0].mxu0 %v469
      %v546 = vpop.f32.mrb[0].mxu0
      %v547 = vadd.f32 %v442, %v546
      %v548 = vpop.f32.mrb[0].mxu0
      %v549 = vpop.f32.mrb[0].mxu0
      %v550 = vadd.f32 %v442, %v549
      %v551 = vpop.f32.mrb[0].mxu0
      %552 = vmatprep.mubr.bf16.mxu0 0
      %553 = vmatmul.mubr.bf16.gmra.mrb[0].mxu0 %v472
      %v554 = vpop.f32.mrb[0].mxu0
      %v555 = vadd.f32 %v442, %v554
      %v556 = vpop.f32.mrb[0].mxu0
      %v557 = vpop.f32.mrb[0].mxu0
      %v558 = vadd.f32 %v442, %v557
      %v559 = vpop.f32.mrb[0].mxu0
      %560 = vmatprep.mubr.bf16.mxu0 0
      %561 = vmatmul.mubr.bf16.gmra.mrb[0].mxu0 %v475
      %v562 = vpop.f32.mrb[0].mxu0
      %v563 = vadd.f32 %v442, %v562
      %v564 = vpop.f32.mrb[0].mxu0
      %v565 = vpop.f32.mrb[0].mxu0
      %v566 = vadd.f32 %v442, %v565
      %v567 = vpop.f32.mrb[0].mxu0
      %568 = vmatprep.mubr.bf16.mxu0 0
      %569 = vmatmul.mubr.bf16.gmra.mrb[0].mxu0 %v478
      %v570 = vpop.f32.mrb[0].mxu0
      %v571 = vadd.f32 %v442, %v570
      %v572 = vpop.f32.mrb[0].mxu0
      %v573 = vpop.f32.mrb[0].mxu0
      %v574 = vadd.f32 %v442, %v573
      %v575 = vpop.f32.mrb[0].mxu0
      %576 = vdwg.mxu0
      %v577 = vld [vmem:[#allocation3] sm:$0xff]
      %v578 = vld [vmem:[#allocation3 + $0x8] sm:$0xff]
      %v579 = vld [vmem:[#allocation3 + $0x10] sm:$0xff]
      %v580 = vld [vmem:[#allocation3 + $0x18] sm:$0xff]
      %v581 = vld [vmem:[#allocation3 + $0x20] sm:$0xff]
      %v582 = vld [vmem:[#allocation3 + $0x28] sm:$0xff]
      %v583 = vld [vmem:[#allocation3 + $0x30] sm:$0xff]
      %v584 = vld [vmem:[#allocation3 + $0x38] sm:$0xff]
      %v585 = vld [vmem:[#allocation3 + $0x40] sm:$0xff]
      %v586 = vld [vmem:[#allocation3 + $0x48] sm:$0xff]
      %v587 = vld [vmem:[#allocation3 + $0x50] sm:$0xff]
      %v588 = vld [vmem:[#allocation3 + $0x58] sm:$0xff]
      %v589 = vld [vmem:[#allocation3 + $0x60] sm:$0xff]
      %v590 = vld [vmem:[#allocation3 + $0x68] sm:$0xff]
      %v591 = vld [vmem:[#allocation3 + $0x70] sm:$0xff]
      %v592 = vld [vmem:[#allocation3 + $0x78] sm:$0xff]
      %v593 = vsub.f32 %v515, %v577
      %v594 = vsub.f32 %v518, %v578
      %v595 = vsub.f32 %v523, %v579
      %v596 = vsub.f32 %v526, %v580
      %v597 = vsub.f32 %v531, %v581
      %v598 = vsub.f32 %v534, %v582
      %v599 = vsub.f32 %v539, %v583
      %v600 = vsub.f32 %v542, %v584
      %v601 = vsub.f32 %v547, %v585
      %v602 = vsub.f32 %v550, %v586
      %v603 = vsub.f32 %v555, %v587
      %v604 = vsub.f32 %v558, %v588
      %v605 = vsub.f32 %v563, %v589
      %v606 = vsub.f32 %v566, %v590
      %v607 = vsub.f32 %v571, %v591
      %v608 = vsub.f32 %v574, %v592
      %v609 = vmul.f32 %v593, 0.5
      %v610 = vmul.f32 %v594, 0.5
      %v611 = vmul.f32 %v595, 0.5
      %v612 = vmul.f32 %v596, 0.5
      %v613 = vmul.f32 %v597, 0.5
      %v614 = vmul.f32 %v598, 0.5
      %v615 = vmul.f32 %v599, 0.5
      %v616 = vmul.f32 %v600, 0.5
      %v617 = vmul.f32 %v601, 0.5
      %v618 = vmul.f32 %v602, 0.5
      %v619 = vmul.f32 %v603, 0.5
      %v620 = vmul.f32 %v604, 0.5
      %v621 = vmul.f32 %v605, 0.5
      %v622 = vmul.f32 %v606, 0.5
      %v623 = vmul.f32 %v607, 0.5
      %v624 = vmul.f32 %v608, 0.5
      %v625 = vadd.f32 %v577, %v609
      %v626 = vadd.f32 %v578, %v610
      %v627 = vadd.f32 %v579, %v611
      %v628 = vadd.f32 %v580, %v612
      %v629 = vadd.f32 %v581, %v613
      %v630 = vadd.f32 %v582, %v614
      %v631 = vadd.f32 %v583, %v615
      %v632 = vadd.f32 %v584, %v616
      %v633 = vadd.f32 %v585, %v617
      %v634 = vadd.f32 %v586, %v618
      %v635 = vadd.f32 %v587, %v619
      %v636 = vadd.f32 %v588, %v620
      %v637 = vadd.f32 %v589, %v621
      %v638 = vadd.f32 %v590, %v622
      %v639 = vadd.f32 %v591, %v623
      %v640 = vadd.f32 %v592, %v624
      %vm641 = vcmp.ge.f32.partialorder %v625, 1.0
      %vm642 = vcmp.ge.f32.partialorder %v626, 1.0
      %vm643 = vcmp.ge.f32.partialorder %v627, 1.0
      %vm644 = vcmp.ge.f32.partialorder %v628, 1.0
      %vm645 = vcmp.ge.f32.partialorder %v629, 1.0
      %vm646 = vcmp.ge.f32.partialorder %v630, 1.0
      %vm647 = vcmp.ge.f32.partialorder %v631, 1.0
      %vm648 = vcmp.ge.f32.partialorder %v632, 1.0
      %vm649 = vcmp.ge.f32.partialorder %v633, 1.0
      %vm650 = vcmp.ge.f32.partialorder %v634, 1.0
      %vm651 = vcmp.ge.f32.partialorder %v635, 1.0
      %vm652 = vcmp.ge.f32.partialorder %v636, 1.0
      %vm653 = vcmp.ge.f32.partialorder %v637, 1.0
      %vm654 = vcmp.ge.f32.partialorder %v638, 1.0
      %vm655 = vcmp.ge.f32.partialorder %v639, 1.0
      %vm656 = vcmp.ge.f32.partialorder %v640, 1.0
      %v657 = vsel %vm641, 1, 0
      %v658 = vsel %vm642, 1, 0
      %v659 = vsel %vm643, 1, 0
      %v660 = vsel %vm644, 1, 0
      %v661 = vsel %vm645, 1, 0
      %v662 = vsel %vm646, 1, 0
      %v663 = vsel %vm647, 1, 0
      %v664 = vsel %vm648, 1, 0
      %v665 = vsel %vm649, 1, 0
      %v666 = vsel %vm650, 1, 0
      %v667 = vsel %vm651, 1, 0
      %v668 = vsel %vm652, 1, 0
      %v669 = vsel %vm653, 1, 0
      %v670 = vsel %vm654, 1, 0
      %v671 = vsel %vm655, 1, 0
      %v672 = vsel %vm656, 1, 0
      %v673 = vcvt.s32.f32 %v657
      %v674 = vcvt.s32.f32 %v658
      %v675 = vcvt.s32.f32 %v659
      %v676 = vcvt.s32.f32 %v660
      %v677 = vcvt.s32.f32 %v661
      %v678 = vcvt.s32.f32 %v662
      %v679 = vcvt.s32.f32 %v663
      %v680 = vcvt.s32.f32 %v664
      %v681 = vcvt.s32.f32 %v665
      %v682 = vcvt.s32.f32 %v666
      %v683 = vcvt.s32.f32 %v667
      %v684 = vcvt.s32.f32 %v668
      %v685 = vcvt.s32.f32 %v669
      %v686 = vcvt.s32.f32 %v670
      %v687 = vcvt.s32.f32 %v671
      %v688 = vcvt.s32.f32 %v672
      %v689 = vsub.f32 1.0, %v673
      %v690 = vsub.f32 1.0, %v674
      %v691 = vsub.f32 1.0, %v675
      %v692 = vsub.f32 1.0, %v676
      %v693 = vsub.f32 1.0, %v677
      %v694 = vsub.f32 1.0, %v678
      %v695 = vsub.f32 1.0, %v679
      %v696 = vsub.f32 1.0, %v680
      %v697 = vsub.f32 1.0, %v681
      %v698 = vsub.f32 1.0, %v682
      %v699 = vsub.f32 1.0, %v683
      %v700 = vsub.f32 1.0, %v684
      %v701 = vsub.f32 1.0, %v685
      %v702 = vsub.f32 1.0, %v686
      %v703 = vsub.f32 1.0, %v687
      %v704 = vsub.f32 1.0, %v688
      %v705 = vmul.f32 %v625, %v689
      %v706 = vmul.f32 %v626, %v690
      %v707 = vmul.f32 %v627, %v691
      %v708 = vmul.f32 %v628, %v692
      %v709 = vmul.f32 %v629, %v693
      %v710 = vmul.f32 %v630, %v694
      %v711 = vmul.f32 %v631, %v695
      %v712 = vmul.f32 %v632, %v696
      %v713 = vmul.f32 %v633, %v697
      %v714 = vmul.f32 %v634, %v698
      %v715 = vmul.f32 %v635, %v699
      %v716 = vmul.f32 %v636, %v700
      %v717 = vmul.f32 %v637, %v701
      %v718 = vmul.f32 %v638, %v702
      %v719 = vmul.f32 %v639, %v703
      %v720 = vmul.f32 %v640, %v704
      %721 = vst [vmem:[#allocation3] sm:$0xff] %v705
      %722 = vst [vmem:[#allocation3 + $0x8] sm:$0xff] %v706
      %723 = vst [vmem:[#allocation3 + $0x10] sm:$0xff] %v707
      %724 = vst [vmem:[#allocation3 + $0x18] sm:$0xff] %v708
      %725 = vst [vmem:[#allocation3 + $0x20] sm:$0xff] %v709
      %726 = vst [vmem:[#allocation3 + $0x28] sm:$0xff] %v710
      %727 = vst [vmem:[#allocation3 + $0x30] sm:$0xff] %v711
      %728 = vst [vmem:[#allocation3 + $0x38] sm:$0xff] %v712
      %729 = vst [vmem:[#allocation3 + $0x40] sm:$0xff] %v713
      %730 = vst [vmem:[#allocation3 + $0x48] sm:$0xff] %v714
      %731 = vst [vmem:[#allocation3 + $0x50] sm:$0xff] %v715
      %732 = vst [vmem:[#allocation3 + $0x58] sm:$0xff] %v716
      %733 = vst [vmem:[#allocation3 + $0x60] sm:$0xff] %v717
      %734 = vst [vmem:[#allocation3 + $0x68] sm:$0xff] %v718
      %735 = vst [vmem:[#allocation3 + $0x70] sm:$0xff] %v719
      %736 = vst [vmem:[#allocation3 + $0x78] sm:$0xff] %v720
      %v737 = vpack.c.bf16 %v674, %v673
      %v738 = vpack.c.bf16 %v676, %v675
      %v739 = vpack.c.bf16 %v678, %v677
      %v740 = vpack.c.bf16 %v680, %v679
      %v741 = vpack.c.bf16 %v682, %v681
      %v742 = vpack.c.bf16 %v684, %v683
      %v743 = vpack.c.bf16 %v686, %v685
      %v744 = vpack.c.bf16 %v688, %v687
      %v753 = vunpack.c.l.b16 %v737
      %v754 = vunpack.c.h.b16 %v737
      %v755 = vunpack.c.l.b16 %v738
      %v756 = vunpack.c.h.b16 %v738
      %v757 = vunpack.c.l.b16 %v739
      %v758 = vunpack.c.h.b16 %v739
      %v759 = vunpack.c.l.b16 %v740
      %v760 = vunpack.c.h.b16 %v740
      %v761 = vunpack.c.l.b16 %v741
      %v762 = vunpack.c.h.b16 %v741
      %v763 = vunpack.c.l.b16 %v742
      %v764 = vunpack.c.h.b16 %v742
      %v765 = vunpack.c.l.b16 %v743
      %v766 = vunpack.c.h.b16 %v743
      %v767 = vunpack.c.l.b16 %v744
      %v768 = vunpack.c.h.b16 %v744
      %v769 = vpack.c.b16 %v753, %v753
      %v770 = vpack.c.b16 %v754, %v754
      %v771 = vpack.c.b16 %v755, %v755
      %v772 = vpack.c.b16 %v756, %v756
      %v773 = vpack.c.b16 %v757, %v757
      %v774 = vpack.c.b16 %v758, %v758
      %v775 = vpack.c.b16 %v759, %v759
      %v776 = vpack.c.b16 %v760, %v760
      %v777 = vpack.c.b16 %v761, %v761
      %v778 = vpack.c.b16 %v762, %v762
      %v779 = vpack.c.b16 %v763, %v763
      %v780 = vpack.c.b16 %v764, %v764
      %v781 = vpack.c.b16 %v765, %v765
      %v782 = vpack.c.b16 %v766, %v766
      %v783 = vpack.c.b16 %v767, %v767
      %v784 = vpack.c.b16 %v768, %v768
      %801 = vst [vmem:[%s208] sm:$0xf] %v769
      %802 = vst [vmem:[%s208 + $0x4] sm:$0xf] %v770
      %803 = vst [vmem:[%s208 + $0x8] sm:$0xf] %v771
      %804 = vst [vmem:[%s208 + $0xc] sm:$0xf] %v772
      %805 = vst [vmem:[%s208 + $0x10] sm:$0xf] %v773
      %806 = vst [vmem:[%s208 + $0x14] sm:$0xf] %v774
      %807 = vst [vmem:[%s208 + $0x18] sm:$0xf] %v775
      %808 = vst [vmem:[%s208 + $0x1c] sm:$0xf] %v776
      %809 = vst [vmem:[%s208 + $0x20] sm:$0xf] %v777
      %810 = vst [vmem:[%s208 + $0x24] sm:$0xf] %v778
      %811 = vst [vmem:[%s208 + $0x28] sm:$0xf] %v779
      %812 = vst [vmem:[%s208 + $0x2c] sm:$0xf] %v780
      %813 = vst [vmem:[%s208 + $0x30] sm:$0xf] %v781
      %814 = vst [vmem:[%s208 + $0x34] sm:$0xf] %v782
      %815 = vst [vmem:[%s208 + $0x38] sm:$0xf] %v783
      %816 = vst [vmem:[%s208 + $0x3c] sm:$0xf] %v784
      %s817 = smul.u32 16, %s18
      %p818 = scmp.lt.s32.totalorder %s19, 1
      %s819 = scalar_select %p818, %s19, 1
      %p820 = scmp.lt.s32.totalorder %s817, 15
      %s821 = scalar_select %p820, %s817, 15
      %s822 = smul.addr %s819, 16
      %s823 = sadd.s32 %s821, %s822
      %s824 = smul.addr %s823, 4
      %s825 = scalar_lea.vmem %s3, %s824
      // Predicated region
      $region37: #{ms_block.14} parent=31 // pred_check
        %p826 = pneg %p116
      $region38: #{ms_block.14} parent=31 // pred_check_branch
        %828 = sbr.rel (%p826) target = $region40
      $region39: #{ms_block.14} parent=31 // pred_region
        %s829 = smul.u32 16, %s18
      $region40: #{ms_block.14} parent=31 // pred_fallthru
        _
    $region32: #{ms_block.14} parent=5 // pred_fallthru
      _
    %p830 = scmp.le.s32.totalorder 2, %s9
    // Predicated region
    $region41: #{ms_block.14} parent=5 // pred_check
      %p831 = pneg %p830
    $region42: #{ms_block.14} parent=5 // pred_check_branch
      %833 = sbr.rel (%p831) target = $region44
    $region43: #{ms_block.14} parent=5 // pred_region
      %s834 = ssub.s32 %s9, 2
      // Predicated region
      $region45: #{ms_block.14} parent=43 // pred_check
        %p835 = pneg %p122
      $region46: #{ms_block.14} parent=43 // pred_check_branch
        %837 = sbr.rel (%p835) target = $region48
      $region47: #{ms_block.14} parent=43 // pred_region
        %s838 = smul.u32 16, %s20
        %p839 = scmp.lt.s32.totalorder %s21, 1
        %s840 = scalar_select %p839, %s21, 1
        %p841 = scmp.lt.s32.totalorder %s838, 15
        %s842 = scalar_select %p841, %s838, 15
        %s843 = smul.addr %s840, 16
        %s844 = sadd.s32 %s842, %s843
        %s845 = smul.addr %s844, 4
        %s846 = scalar_lea.vmem %s3, %s845
      $region48: #{ms_block.14} parent=43 // pred_fallthru
        _
    $region44: #{ms_block.14} parent=5 // pred_fallthru
      _
  $region6: #{ms_block.14} parent=0 // loop_footer
    %s13 = sadd.s32 1, %s9
  $region7: #{ms_block.14} parent=0 // loop_footer_branch
    %8 = sbr.rel target = $region3
  $region8: #{ms_block.14} parent=0 // loop_exit
    _

// kernel: ms_block.12
$region0: #{ms_block.12}
  #allocation0 [shape = 'u32[]', space=smem, size = 0x4, offset = 0x4, fixed_abs, tag = 'smem constant byte address 0x4 - core index']
  #allocation1 [shape = 'u32[144,128]{1,0:T(1,128)}', space=vmem, size = 0x12000, scoped, tag = 'internal scratch']
  #allocation2 [shape = 'f32[4,10,10,32]{3,2,1,0:T(8,128)}', space=vmem, size = 0x50000, scoped, tag = 'scratch operand']
  %s0 = inlined_call_operand.vmem [shape: f32[4,8,8,32], index: 0, kind: input, shape index: {}]
  %s1 = inlined_call_operand.vmem [shape: f32[3,3,32], index: 1, kind: input, shape index: {}]
  %s2 = inlined_call_operand.vmem [shape: bf16[4,8,8,32], index: 2, kind: output, shape index: {}]
  %s3 = sld [smem:[#allocation0]]
  $region18: #{ms_block.12} parent=0
    _
  %s5 = ssub.s32 1, %s3
  %s6 = scalar_select 0, %s5, %s3
  // Predicated region
  $region2: #{ms_block.12} parent=0 // pred_check
    _
  $region3: #{ms_block.12} parent=0 // pred_check_branch
    %8 = sbr.rel (0) target = $region5
  $region4: #{ms_block.12} parent=0 // pred_region
    _
  $region5: #{ms_block.12} parent=0 // pred_fallthru
    _
  // Predicated region
  $region6: #{ms_block.12} parent=0 // pred_check
    _
  $region7: #{ms_block.12} parent=0 // pred_check_branch
    %10 = sbr.rel (0) target = $region9
  $region8: #{ms_block.12} parent=0 // pred_region
    _
  $region9: #{ms_block.12} parent=0 // pred_fallthru
    _
  %vm11 = vcmask 261120
  %12 = vst.msk [vmem:[#allocation2] sm:$0xff] %vm11, 0.0
  %vm13 = vcmask 254976
  %14 = vst.msk [vmem:[#allocation2 + $0x8] sm:$0x3] %vm13, 0.0
  %15 = vst.msk [vmem:[#allocation2 + $0x10] sm:$0xff] %vm11, 0.0
  %16 = vst.msk [vmem:[#allocation2 + $0x18] sm:$0x3] %vm13, 0.0
  %17 = vst.msk [vmem:[#allocation2 + $0x20] sm:$0xff] %vm11, 0.0
  %18 = vst.msk [vmem:[#allocation2 + $0x28] sm:$0x3] %vm13, 0.0
  %19 = vst.msk [vmem:[#allocation2 + $0x30] sm:$0xff] %vm11, 0.0
  %20 = vst.msk [vmem:[#allocation2 + $0x38] sm:$0x3] %vm13, 0.0
  %21 = vst.msk [vmem:[#allocation2 + $0x40] sm:$0xff] %vm11, 0.0
  %22 = vst.msk [vmem:[#allocation2 + $0x48] sm:$0x3] %vm13, 0.0
  %23 = vst.msk [vmem:[#allocation2 + $0x50] sm:$0xff] %vm11, 0.0
  %24 = vst.msk [vmem:[#allocation2 + $0x58] sm:$0x3] %vm13, 0.0
  %25 = vst.msk [vmem:[#allocation2 + $0x60] sm:$0xff] %vm11, 0.0
  %26 = vst.msk [vmem:[#allocation2 + $0x68] sm:$0x3] %vm13, 0.0
  %27 = vst.msk [vmem:[#allocation2 + $0x70] sm:$0xff] %vm11, 0.0
  %28 = vst.msk [vmem:[#allocation2 + $0x78] sm:$0x3] %vm13, 0.0
  %29 = vst.msk [vmem:[#allocation2 + $0x80] sm:$0xff] %vm11, 0.0
  %30 = vst.msk [vmem:[#allocation2 + $0x88] sm:$0x3] %vm13, 0.0
  %31 = vst.msk [vmem:[#allocation2 + $0x90] sm:$0xff] %vm11, 0.0
  %32 = vst.msk [vmem:[#allocation2 + $0x98] sm:$0x3] %vm13, 0.0
  %33 = vst.msk [vmem:[#allocation2 + $0xa0] sm:$0xff] %vm11, 0.0
  %34 = vst.msk [vmem:[#allocation2 + $0xa8] sm:$0x3] %vm13, 0.0
  %35 = vst.msk [vmem:[#allocation2 + $0xb0] sm:$0xff] %vm11, 0.0
  %36 = vst.msk [vmem:[#allocation2 + $0xb8] sm:$0x3] %vm13, 0.0
  %37 = vst.msk [vmem:[#allocation2 + $0xc0] sm:$0xff] %vm11, 0.0
  %38 = vst.msk [vmem:[#allocation2 + $0xc8] sm:$0x3] %vm13, 0.0
  %39 = vst.msk [vmem:[#allocation2 + $0xd0] sm:$0xff] %vm11, 0.0
  %40 = vst.msk [vmem:[#allocation2 + $0xd8] sm:$0x3] %vm13, 0.0
  %41 = vst.msk [vmem:[#allocation2 + $0xe0] sm:$0xff] %vm11, 0.0
  %42 = vst.msk [vmem:[#allocation2 + $0xe8] sm:$0x3] %vm13, 0.0
  %43 = vst.msk [vmem:[#allocation2 + $0xf0] sm:$0xff] %vm11, 0.0
  %44 = vst.msk [vmem:[#allocation2 + $0xf8] sm:$0x3] %vm13, 0.0
  %45 = vst.msk [vmem:[#allocation2 + $0x100] sm:$0xff] %vm11, 0.0
  %46 = vst.msk [vmem:[#allocation2 + $0x108] sm:$0x3] %vm13, 0.0
  %47 = vst.msk [vmem:[#allocation2 + $0x110] sm:$0xff] %vm11, 0.0
  %48 = vst.msk [vmem:[#allocation2 + $0x118] sm:$0x3] %vm13, 0.0
  %49 = vst.msk [vmem:[#allocation2 + $0x120] sm:$0xff] %vm11, 0.0
  %50 = vst.msk [vmem:[#allocation2 + $0x128] sm:$0x3] %vm13, 0.0
  %51 = vst.msk [vmem:[#allocation2 + $0x130] sm:$0xff] %vm11, 0.0
  %52 = vst.msk [vmem:[#allocation2 + $0x138] sm:$0x3] %vm13, 0.0
  %53 = vst.msk [vmem:[#allocation2 + $0x140] sm:$0xff] %vm11, 0.0
  %54 = vst.msk [vmem:[#allocation2 + $0x148] sm:$0x3] %vm13, 0.0
  %55 = vst.msk [vmem:[#allocation2 + $0x150] sm:$0xff] %vm11, 0.0
  %56 = vst.msk [vmem:[#allocation2 + $0x158] sm:$0x3] %vm13, 0.0
  %57 = vst.msk [vmem:[#allocation2 + $0x160] sm:$0xff] %vm11, 0.0
  %58 = vst.msk [vmem:[#allocation2 + $0x168] sm:$0x3] %vm13, 0.0
  %59 = vst.msk [vmem:[#allocation2 + $0x170] sm:$0xff] %vm11, 0.0
  %60 = vst.msk [vmem:[#allocation2 + $0x178] sm:$0x3] %vm13, 0.0
  %61 = vst.msk [vmem:[#allocation2 + $0x180] sm:$0xff] %vm11, 0.0
  %62 = vst.msk [vmem:[#allocation2 + $0x188] sm:$0x3] %vm13, 0.0
  %63 = vst.msk [vmem:[#allocation2 + $0x190] sm:$0xff] %vm11, 0.0
  %64 = vst.msk [vmem:[#allocation2 + $0x198] sm:$0x3] %vm13, 0.0
  %65 = vst.msk [vmem:[#allocation2 + $0x1a0] sm:$0xff] %vm11, 0.0
  %66 = vst.msk [vmem:[#allocation2 + $0x1a8] sm:$0x3] %vm13, 0.0
  %67 = vst.msk [vmem:[#allocation2 + $0x1b0] sm:$0xff] %vm11, 0.0
  %68 = vst.msk [vmem:[#allocation2 + $0x1b8] sm:$0x3] %vm13, 0.0
  %69 = vst.msk [vmem:[#allocation2 + $0x1c0] sm:$0xff] %vm11, 0.0
  %70 = vst.msk [vmem:[#allocation2 + $0x1c8] sm:$0x3] %vm13, 0.0
  %71 = vst.msk [vmem:[#allocation2 + $0x1d0] sm:$0xff] %vm11, 0.0
  %72 = vst.msk [vmem:[#allocation2 + $0x1d8] sm:$0x3] %vm13, 0.0
  %73 = vst.msk [vmem:[#allocation2 + $0x1e0] sm:$0xff] %vm11, 0.0
  %74 = vst.msk [vmem:[#allocation2 + $0x1e8] sm:$0x3] %vm13, 0.0
  %75 = vst.msk [vmem:[#allocation2 + $0x1f0] sm:$0xff] %vm11, 0.0
  %76 = vst.msk [vmem:[#allocation2 + $0x1f8] sm:$0x3] %vm13, 0.0
  %77 = vst.msk [vmem:[#allocation2 + $0x200] sm:$0xff] %vm11, 0.0
  %78 = vst.msk [vmem:[#allocation2 + $0x208] sm:$0x3] %vm13, 0.0
  %79 = vst.msk [vmem:[#allocation2 + $0x210] sm:$0xff] %vm11, 0.0
  %80 = vst.msk [vmem:[#allocation2 + $0x218] sm:$0x3] %vm13, 0.0
  %81 = vst.msk [vmem:[#allocation2 + $0x220] sm:$0xff] %vm11, 0.0
  %82 = vst.msk [vmem:[#allocation2 + $0x228] sm:$0x3] %vm13, 0.0
  %83 = vst.msk [vmem:[#allocation2 + $0x230] sm:$0xff] %vm11, 0.0
  %84 = vst.msk [vmem:[#allocation2 + $0x238] sm:$0x3] %vm13, 0.0
  %85 = vst.msk [vmem:[#allocation2 + $0x240] sm:$0xff] %vm11, 0.0
  %86 = vst.msk [vmem:[#allocation2 + $0x248] sm:$0x3] %vm13, 0.0
  %87 = vst.msk [vmem:[#allocation2 + $0x250] sm:$0xff] %vm11, 0.0
  %88 = vst.msk [vmem:[#allocation2 + $0x258] sm:$0x3] %vm13, 0.0
  %89 = vst.msk [vmem:[#allocation2 + $0x260] sm:$0xff] %vm11, 0.0
  %90 = vst.msk [vmem:[#allocation2 + $0x268] sm:$0x3] %vm13, 0.0
  %91 = vst.msk [vmem:[#allocation2 + $0x270] sm:$0xff] %vm11, 0.0
  %92 = vst.msk [vmem:[#allocation2 + $0x278] sm:$0x3] %vm13, 0.0
  %v93 = vld [vmem:[%s0] sm:$0xff]
  %v94 = vld [vmem:[%s0 + $0x8] sm:$0xff]
  %v95 = vld [vmem:[%s0 + $0x10] sm:$0xff]
  %v96 = vld [vmem:[%s0 + $0x18] sm:$0xff]
  %v97 = vld [vmem:[%s0 + $0x20] sm:$0xff]
  %v98 = vld [vmem:[%s0 + $0x28] sm:$0xff]
  %v99 = vld [vmem:[%s0 + $0x30] sm:$0xff]
  %v100 = vld [vmem:[%s0 + $0x38] sm:$0xff]
  %v101 = vld [vmem:[%s0 + $0x40] sm:$0xff]
  %v102 = vld [vmem:[%s0 + $0x48] sm:$0xff]
  %v103 = vld [vmem:[%s0 + $0x50] sm:$0xff]
  %v104 = vld [vmem:[%s0 + $0x58] sm:$0xff]
  %v105 = vld [vmem:[%s0 + $0x60] sm:$0xff]
  %v106 = vld [vmem:[%s0 + $0x68] sm:$0xff]
  %v107 = vld [vmem:[%s0 + $0x70] sm:$0xff]
  %v108 = vld [vmem:[%s0 + $0x78] sm:$0xff]
  %v109 = vld [vmem:[%s0 + $0x80] sm:$0xff]
  %v110 = vld [vmem:[%s0 + $0x88] sm:$0xff]
  %v111 = vld [vmem:[%s0 + $0x90] sm:$0xff]
  %v112 = vld [vmem:[%s0 + $0x98] sm:$0xff]
  %v113 = vld [vmem:[%s0 + $0xa0] sm:$0xff]
  %v114 = vld [vmem:[%s0 + $0xa8] sm:$0xff]
  %v115 = vld [vmem:[%s0 + $0xb0] sm:$0xff]
  %v116 = vld [vmem:[%s0 + $0xb8] sm:$0xff]
  %v117 = vld [vmem:[%s0 + $0xc0] sm:$0xff]
  %v118 = vld [vmem:[%s0 + $0xc8] sm:$0xff]
  %v119 = vld [vmem:[%s0 + $0xd0] sm:$0xff]
  %v120 = vld [vmem:[%s0 + $0xd8] sm:$0xff]
  %v121 = vld [vmem:[%s0 + $0xe0] sm:$0xff]
  %v122 = vld [vmem:[%s0 + $0xe8] sm:$0xff]
  %v123 = vld [vmem:[%s0 + $0xf0] sm:$0xff]
  %v124 = vld [vmem:[%s0 + $0xf8] sm:$0xff]
  %s125 = scalar_lea.vmem [#allocation2], 16
  %126 = vst.msk [vmem:[%s125 + $0x1] sm:$0xff] %vm11, %v93
  %127 = vst.msk [vmem:[%s125 + $0x11] sm:$0xff] %vm11, %v94
  %128 = vst.msk [vmem:[%s125 + $0x21] sm:$0xff] %vm11, %v95
  %129 = vst.msk [vmem:[%s125 + $0x31] sm:$0xff] %vm11, %v96
  %130 = vst.msk [vmem:[%s125 + $0x41] sm:$0xff] %vm11, %v97
  %131 = vst.msk [vmem:[%s125 + $0x51] sm:$0xff] %vm11, %v98
  %132 = vst.msk [vmem:[%s125 + $0x61] sm:$0xff] %vm11, %v99
  %133 = vst.msk [vmem:[%s125 + $0x71] sm:$0xff] %vm11, %v100
  %134 = vst.msk [vmem:[%s125 + $0xa1] sm:$0xff] %vm11, %v101
  %135 = vst.msk [vmem:[%s125 + $0xb1] sm:$0xff] %vm11, %v102
  %136 = vst.msk [vmem:[%s125 + $0xc1] sm:$0xff] %vm11, %v103
  %137 = vst.msk [vmem:[%s125 + $0xd1] sm:$0xff] %vm11, %v104
  %138 = vst.msk [vmem:[%s125 + $0xe1] sm:$0xff] %vm11, %v105
  %139 = vst.msk [vmem:[%s125 + $0xf1] sm:$0xff] %vm11, %v106
  %140 = vst.msk [vmem:[%s125 + $0x101] sm:$0xff] %vm11, %v107
  %141 = vst.msk [vmem:[%s125 + $0x111] sm:$0xff] %vm11, %v108
  %142 = vst.msk [vmem:[%s125 + $0x141] sm:$0xff] %vm11, %v109
  %143 = vst.msk [vmem:[%s125 + $0x151] sm:$0xff] %vm11, %v110
  %144 = vst.msk [vmem:[%s125 + $0x161] sm:$0xff] %vm11, %v111
  %145 = vst.msk [vmem:[%s125 + $0x171] sm:$0xff] %vm11, %v112
  %146 = vst.msk [vmem:[%s125 + $0x181] sm:$0xff] %vm11, %v113
  %147 = vst.msk [vmem:[%s125 + $0x191] sm:$0xff] %vm11, %v114
  %148 = vst.msk [vmem:[%s125 + $0x1a1] sm:$0xff] %vm11, %v115
  %149 = vst.msk [vmem:[%s125 + $0x1b1] sm:$0xff] %vm11, %v116
  %150 = vst.msk [vmem:[%s125 + $0x1e1] sm:$0xff] %vm11, %v117
  %151 = vst.msk [vmem:[%s125 + $0x1f1] sm:$0xff] %vm11, %v118
  %152 = vst.msk [vmem:[%s125 + $0x201] sm:$0xff] %vm11, %v119
  %153 = vst.msk [vmem:[%s125 + $0x211] sm:$0xff] %vm11, %v120
  %154 = vst.msk [vmem:[%s125 + $0x221] sm:$0xff] %vm11, %v121
  %155 = vst.msk [vmem:[%s125 + $0x231] sm:$0xff] %vm11, %v122
  %156 = vst.msk [vmem:[%s125 + $0x241] sm:$0xff] %vm11, %v123
  %157 = vst.msk [vmem:[%s125 + $0x251] sm:$0xff] %vm11, %v124
  %v158 = vld [vmem:[%s1] sm:$0x1]
  %v159 = vld [vmem:[#allocation2] sm:$0xff]
  %v160 = vld [vmem:[#allocation2 + $0x10] sm:$0xff]
  %v161 = vld [vmem:[#allocation2 + $0x20] sm:$0xff]
  %v162 = vld [vmem:[#allocation2 + $0x30] sm:$0xff]
  %v163 = vld [vmem:[#allocation2 + $0x40] sm:$0xff]
  %v164 = vld [vmem:[#allocation2 + $0x50] sm:$0xff]
  %v165 = vld [vmem:[#allocation2 + $0x60] sm:$0xff]
  %v166 = vld [vmem:[#allocation2 + $0x70] sm:$0xff]
  %v167 = vld [vmem:[#allocation2 + $0xa0] sm:$0xff]
  %v168 = vld [vmem:[#allocation2 + $0xb0] sm:$0xff]
  %v169 = vld [vmem:[#allocation2 + $0xc0] sm:$0xff]
  %v170 = vld [vmem:[#allocation2 + $0xd0] sm:$0xff]
  %v171 = vld [vmem:[#allocation2 + $0xe0] sm:$0xff]
  %v172 = vld [vmem:[#allocation2 + $0xf0] sm:$0xff]
  %v173 = vld [vmem:[#allocation2 + $0x100] sm:$0xff]
  %v174 = vld [vmem:[#allocation2 + $0x110] sm:$0xff]
  %v175 = vld [vmem:[#allocation2 + $0x140] sm:$0xff]
  %v176 = vld [vmem:[#allocation2 + $0x150] sm:$0xff]
  %v177 = vld [vmem:[#allocation2 + $0x160] sm:$0xff]
  %v178 = vld [vmem:[#allocation2 + $0x170] sm:$0xff]
  %v179 = vld [vmem:[#allocation2 + $0x180] sm:$0xff]
  %v180 = vld [vmem:[#allocation2 + $0x190] sm:$0xff]
  %v181 = vld [vmem:[#allocation2 + $0x1a0] sm:$0xff]
  %v182 = vld [vmem:[#allocation2 + $0x1b0] sm:$0xff]
  %v183 = vld [vmem:[#allocation2 + $0x1e0] sm:$0xff]
  %v184 = vld [vmem:[#allocation2 + $0x1f0] sm:$0xff]
  %v185 = vld [vmem:[#allocation2 + $0x200] sm:$0xff]
  %v186 = vld [vmem:[#allocation2 + $0x210] sm:$0xff]
  %v187 = vld [vmem:[#allocation2 + $0x220] sm:$0xff]
  %v188 = vld [vmem:[#allocation2 + $0x230] sm:$0xff]
  %v189 = vld [vmem:[#allocation2 + $0x240] sm:$0xff]
  %v190 = vld [vmem:[#allocation2 + $0x250] sm:$0xff]
  %v191 = vlaneseq
  %v192 = vshrl.u32 %v191, 7
  %v193 = vsub.s32 0, %v192
  %v194 = vrot.slane %v158, %v193
  %v195 = vmul.f32 %v159, %v194
  %v196 = vmul.f32 %v160, %v194
  %v197 = vmul.f32 %v161, %v194
  %v198 = vmul.f32 %v162, %v194
  %v199 = vmul.f32 %v163, %v194
  %v200 = vmul.f32 %v164, %v194
  %v201 = vmul.f32 %v165, %v194
  %v202 = vmul.f32 %v166, %v194
  %v203 = vmul.f32 %v167, %v194
  %v204 = vmul.f32 %v168, %v194
  %v205 = vmul.f32 %v169, %v194
  %v206 = vmul.f32 %v170, %v194
  %v207 = vmul.f32 %v171, %v194
  %v208 = vmul.f32 %v172, %v194
  %v209 = vmul.f32 %v173, %v194
  %v210 = vmul.f32 %v174, %v194
  %v211 = vmul.f32 %v175, %v194
  %v212 = vmul.f32 %v176, %v194
  %v213 = vmul.f32 %v177, %v194
  %v214 = vmul.f32 %v178, %v194
  %v215 = vmul.f32 %v179, %v194
  %v216 = vmul.f32 %v180, %v194
  %v217 = vmul.f32 %v181, %v194
  %v218 = vmul.f32 %v182, %v194
  %v219 = vmul.f32 %v183, %v194
  %v220 = vmul.f32 %v184, %v194
  %v221 = vmul.f32 %v185, %v194
  %v222 = vmul.f32 %v186, %v194
  %v223 = vmul.f32 %v187, %v194
  %v224 = vmul.f32 %v188, %v194
  %v225 = vmul.f32 %v189, %v194
  %v226 = vmul.f32 %v190, %v194
  %v227 = vadd.f32 %v195, 0.0
  %v228 = vadd.f32 %v196, 0.0
  %v229 = vadd.f32 %v197, 0.0
  %v230 = vadd.f32 %v198, 0.0
  %v231 = vadd.f32 %v199, 0.0
  %v232 = vadd.f32 %v200, 0.0
  %v233 = vadd.f32 %v201, 0.0
  %v234 = vadd.f32 %v202, 0.0
  %v235 = vadd.f32 %v203, 0.0
  %v236 = vadd.f32 %v204, 0.0
  %v237 = vadd.f32 %v205, 0.0
  %v238 = vadd.f32 %v206, 0.0
  %v239 = vadd.f32 %v207, 0.0
  %v240 = vadd.f32 %v208, 0.0
  %v241 = vadd.f32 %v209, 0.0
  %v242 = vadd.f32 %v210, 0.0
  %v243 = vadd.f32 %v211, 0.0
  %v244 = vadd.f32 %v212, 0.0
  %v245 = vadd.f32 %v213, 0.0
  %v246 = vadd.f32 %v214, 0.0
  %v247 = vadd.f32 %v215, 0.0
  %v248 = vadd.f32 %v216, 0.0
  %v249 = vadd.f32 %v217, 0.0
  %v250 = vadd.f32 %v218, 0.0
  %v251 = vadd.f32 %v219, 0.0
  %v252 = vadd.f32 %v220, 0.0
  %v253 = vadd.f32 %v221, 0.0
  %v254 = vadd.f32 %v222, 0.0
  %v255 = vadd.f32 %v223, 0.0
  %v256 = vadd.f32 %v224, 0.0
  %v257 = vadd.f32 %v225, 0.0
  %v258 = vadd.f32 %v226, 0.0
  %v259 = vld [vmem:[%s1 + $0x1] sm:$0x1]
  %v260 = vld [vmem:[#allocation2 + $0x1] sm:$0xff]
  %v261 = vld [vmem:[#allocation2 + $0x11] sm:$0xff]
  %v262 = vld [vmem:[#allocation2 + $0x21] sm:$0xff]
  %v263 = vld [vmem:[#allocation2 + $0x31] sm:$0xff]
  %v264 = vld [vmem:[#allocation2 + $0x41] sm:$0xff]
  %v265 = vld [vmem:[#allocation2 + $0x51] sm:$0xff]
  %v266 = vld [vmem:[#allocation2 + $0x61] sm:$0xff]
  %v267 = vld [vmem:[#allocation2 + $0x71] sm:$0xff]
  %v268 = vld [vmem:[#allocation2 + $0xa1] sm:$0xff]
  %v269 = vld [vmem:[#allocation2 + $0xb1] sm:$0xff]
  %v270 = vld [vmem:[#allocation2 + $0xc1] sm:$0xff]
  %v271 = vld [vmem:[#allocation2 + $0xd1] sm:$0xff]
  %v272 = vld [vmem:[#allocation2 + $0xe1] sm:$0xff]
  %v273 = vld [vmem:[#allocation2 + $0xf1] sm:$0xff]
  %v274 = vld [vmem:[#allocation2 + $0x101] sm:$0xff]
  %v275 = vld [vmem:[#allocation2 + $0x111] sm:$0xff]
  %v276 = vld [vmem:[#allocation2 + $0x141] sm:$0xff]
  %v277 = vld [vmem:[#allocation2 + $0x151] sm:$0xff]
  %v278 = vld [vmem:[#allocation2 + $0x161] sm:$0xff]
  %v279 = vld [vmem:[#allocation2 + $0x171] sm:$0xff]
  %v280 = vld [vmem:[#allocation2 + $0x181] sm:$0xff]
  %v281 = vld [vmem:[#allocation2 + $0x191] sm:$0xff]
  %v282 = vld [vmem:[#allocation2 + $0x1a1] sm:$0xff]
  %v283 = vld [vmem:[#allocation2 + $0x1b1] sm:$0xff]
  %v284 = vld [vmem:[#allocation2 + $0x1e1] sm:$0xff]
  %v285 = vld [vmem:[#allocation2 + $0x1f1] sm:$0xff]
  %v286 = vld [vmem:[#allocation2 + $0x201] sm:$0xff]
  %v287 = vld [vmem:[#allocation2 + $0x211] sm:$0xff]
  %v288 = vld [vmem:[#allocation2 + $0x221] sm:$0xff]
  %v289 = vld [vmem:[#allocation2 + $0x231] sm:$0xff]
  %v290 = vld [vmem:[#allocation2 + $0x241] sm:$0xff]
  %v291 = vld [vmem:[#allocation2 + $0x251] sm:$0xff]
  %v292 = vlaneseq
  %v293 = vshrl.u32 %v292, 7
  %v294 = vsub.s32 0, %v293
  %v295 = vrot.slane %v259, %v294
  %v296 = vmul.f32 %v260, %v295
  %v297 = vmul.f32 %v261, %v295
  %v298 = vmul.f32 %v262, %v295
  %v299 = vmul.f32 %v263, %v295
  %v300 = vmul.f32 %v264, %v295
  %v301 = vmul.f32 %v265, %v295
  %v302 = vmul.f32 %v266, %v295
  %v303 = vmul.f32 %v267, %v295
  %v304 = vmul.f32 %v268, %v295
  %v305 = vmul.f32 %v269, %v295
  %v306 = vmul.f32 %v270, %v295
  %v307 = vmul.f32 %v271, %v295
  %v308 = vmul.f32 %v272, %v295
  %v309 = vmul.f32 %v273, %v295
  %v310 = vmul.f32 %v274, %v295
  %v311 = vmul.f32 %v275, %v295
  %v312 = vmul.f32 %v276, %v295
  %v313 = vmul.f32 %v277, %v295
  %v314 = vmul.f32 %v278, %v295
  %v315 = vmul.f32 %v279, %v295
  %v316 = vmul.f32 %v280, %v295
  %v317 = vmul.f32 %v281, %v295
  %v318 = vmul.f32 %v282, %v295
  %v319 = vmul.f32 %v283, %v295
  %v320 = vmul.f32 %v284, %v295
  %v321 = vmul.f32 %v285, %v295
  %v322 = vmul.f32 %v286, %v295
  %v323 = vmul.f32 %v287, %v295
  %v324 = vmul.f32 %v288, %v295
  %v325 = vmul.f32 %v289, %v295
  %v326 = vmul.f32 %v290, %v295
  %v327 = vmul.f32 %v291, %v295
  %v328 = vadd.f32 %v227, %v296
  %v329 = vadd.f32 %v228, %v297
  %v330 = vadd.f32 %v229, %v298
  %v331 = vadd.f32 %v230, %v299
  %v332 = vadd.f32 %v231, %v300
  %v333 = vadd.f32 %v232, %v301
  %v334 = vadd.f32 %v233, %v302
  %v335 = vadd.f32 %v234, %v303
  %v336 = vadd.f32 %v235, %v304
  %v337 = vadd.f32 %v236, %v305
  %v338 = vadd.f32 %v237, %v306
  %v339 = vadd.f32 %v238, %v307
  %v340 = vadd.f32 %v239, %v308
  %v341 = vadd.f32 %v240, %v309
  %v342 = vadd.f32 %v241, %v310
  %v343 = vadd.f32 %v242, %v311
  %v344 = vadd.f32 %v243, %v312
  %v345 = vadd.f32 %v244, %v313
  %v346 = vadd.f32 %v245, %v314
  %v347 = vadd.f32 %v246, %v315
  %v348 = vadd.f32 %v247, %v316
  %v349 = vadd.f32 %v248, %v317
  %v350 = vadd.f32 %v249, %v318
  %v351 = vadd.f32 %v250, %v319
  %v352 = vadd.f32 %v251, %v320
  %v353 = vadd.f32 %v252, %v321
  %v354 = vadd.f32 %v253, %v322
  %v355 = vadd.f32 %v254, %v323
  %v356 = vadd.f32 %v255, %v324
  %v357 = vadd.f32 %v256, %v325
  %v358 = vadd.f32 %v257, %v326
  %v359 = vadd.f32 %v258, %v327
  %v360 = vld [vmem:[%s1 + $0x2] sm:$0x1]
  %v361 = vld [vmem:[#allocation2 + $0x2] sm:$0xff]
  %v362 = vld [vmem:[#allocation2 + $0x12] sm:$0xff]
  %v363 = vld [vmem:[#allocation2 + $0x22] sm:$0xff]
  %v364 = vld [vmem:[#allocation2 + $0x32] sm:$0xff]
  %v365 = vld [vmem:[#allocation2 + $0x42] sm:$0xff]
  %v366 = vld [vmem:[#allocation2 + $0x52] sm:$0xff]
  %v367 = vld [vmem:[#allocation2 + $0x62] sm:$0xff]
  %v368 = vld [vmem:[#allocation2 + $0x72] sm:$0xff]
  %v369 = vld [vmem:[#allocation2 + $0xa2] sm:$0xff]
  %v370 = vld [vmem:[#allocation2 + $0xb2] sm:$0xff]
  %v371 = vld [vmem:[#allocation2 + $0xc2] sm:$0xff]
  %v372 = vld [vmem:[#allocation2 + $0xd2] sm:$0xff]
  %v373 = vld [vmem:[#allocation2 + $0xe2] sm:$0xff]
  %v374 = vld [vmem:[#allocation2 + $0xf2] sm:$0xff]
  %v375 = vld [vmem:[#allocation2 + $0x102] sm:$0xff]
  %v376 = vld [vmem:[#allocation2 + $0x112] sm:$0xff]
  %v377 = vld [vmem:[#allocation2 + $0x142] sm:$0xff]
  %v378 = vld [vmem:[#allocation2 + $0x152] sm:$0xff]
  %v379 = vld [vmem:[#allocation2 + $0x162] sm:$0xff]
  %v380 = vld [vmem:[#allocation2 + $0x172] sm:$0xff]
  %v381 = vld [vmem:[#allocation2 + $0x182] sm:$0xff]
  %v382 = vld [vmem:[#allocation2 + $0x192] sm:$0xff]
  %v383 = vld [vmem:[#allocation2 + $0x1a2] sm:$0xff]
  %v384 = vld [vmem:[#allocation2 + $0x1b2] sm:$0xff]
  %v385 = vld [vmem:[#allocation2 + $0x1e2] sm:$0xff]
  %v386 = vld [vmem:[#allocation2 + $0x1f2] sm:$0xff]
  %v387 = vld [vmem:[#allocation2 + $0x202] sm:$0xff]
  %v388 = vld [vmem:[#allocation2 + $0x212] sm:$0xff]
  %v389 = vld [vmem:[#allocation2 + $0x222] sm:$0xff]
  %v390 = vld [vmem:[#allocation2 + $0x232] sm:$0xff]
  %v391 = vld [vmem:[#allocation2 + $0x242] sm:$0xff]
  %v392 = vld [vmem:[#allocation2 + $0x252] sm:$0xff]
  %v393 = vlaneseq
  %v394 = vshrl.u32 %v393, 7
  %v395 = vsub.s32 0, %v394
  %v396 = vrot.slane %v360, %v395
  %v397 = vmul.f32 %v361, %v396
  %v398 = vmul.f32 %v362, %v396
  %v399 = vmul.f32 %v363, %v396
  %v400 = vmul.f32 %v364, %v396
  %v401 = vmul.f32 %v365, %v396
  %v402 = vmul.f32 %v366, %v396
  %v403 = vmul.f32 %v367, %v396
  %v404 = vmul.f32 %v368, %v396
  %v405 = vmul.f32 %v369, %v396
  %v406 = vmul.f32 %v370, %v396
  %v407 = vmul.f32 %v371, %v396
  %v408 = vmul.f32 %v372, %v396
  %v409 = vmul.f32 %v373, %v396
  %v410 = vmul.f32 %v374, %v396
  %v411 = vmul.f32 %v375, %v396
  %v412 = vmul.f32 %v376, %v396
  %v413 = vmul.f32 %v377, %v396
  %v414 = vmul.f32 %v378, %v396
  %v415 = vmul.f32 %v379, %v396
  %v416 = vmul.f32 %v380, %v396
  %v417 = vmul.f32 %v381, %v396
  %v418 = vmul.f32 %v382, %v396
  %v419 = vmul.f32 %v383, %v396
  %v420 = vmul.f32 %v384, %v396
  %v421 = vmul.f32 %v385, %v396
  %v422 = vmul.f32 %v386, %v396
  %v423 = vmul.f32 %v387, %v396
  %v424 = vmul.f32 %v388, %v396
  %v425 = vmul.f32 %v389, %v396
  %v426 = vmul.f32 %v390, %v396
  %v427 = vmul.f32 %v391, %v396
  %v428 = vmul.f32 %v392, %v396
  %v429 = vadd.f32 %v328, %v397
  %v430 = vadd.f32 %v329, %v398
  %v431 = vadd.f32 %v330, %v399
  %v432 = vadd.f32 %v331, %v400
  %v433 = vadd.f32 %v332, %v401
  %v434 = vadd.f32 %v333, %v402
  %v435 = vadd.f32 %v334, %v403
  %v436 = vadd.f32 %v335, %v404
  %v437 = vadd.f32 %v336, %v405
  %v438 = vadd.f32 %v337, %v406
  %v439 = vadd.f32 %v338, %v407
  %v440 = vadd.f32 %v339, %v408
  %v441 = vadd.f32 %v340, %v409
  %v442 = vadd.f32 %v341, %v410
  %v443 = vadd.f32 %v342, %v411
  %v444 = vadd.f32 %v343, %v412
  %v445 = vadd.f32 %v344, %v413
  %v446 = vadd.f32 %v345, %v414
  %v447 = vadd.f32 %v346, %v415
  %v448 = vadd.f32 %v347, %v416
  %v449 = vadd.f32 %v348, %v417
  %v450 = vadd.f32 %v349, %v418
  %v451 = vadd.f32 %v350, %v419
  %v452 = vadd.f32 %v351, %v420
  %v453 = vadd.f32 %v352, %v421
  %v454 = vadd.f32 %v353, %v422
  %v455 = vadd.f32 %v354, %v423
  %v456 = vadd.f32 %v355, %v424
  %v457 = vadd.f32 %v356, %v425
  %v458 = vadd.f32 %v357, %v426
  %v459 = vadd.f32 %v358, %v427
  %v460 = vadd.f32 %v359, %v428
  %s461 = scalar_lea.vmem %s1, 4
  %v462 = vld [vmem:[%s461] sm:$0x1]
  %v463 = vld [vmem:[%s125] sm:$0xff]
  %v464 = vld [vmem:[%s125 + $0x10] sm:$0xff]
  %v465 = vld [vmem:[%s125 + $0x20] sm:$0xff]
  %v466 = vld [vmem:[%s125 + $0x30] sm:$0xff]
  %v467 = vld [vmem:[%s125 + $0x40] sm:$0xff]
  %v468 = vld [vmem:[%s125 + $0x50] sm:$0xff]
  %v469 = vld [vmem:[%s125 + $0x60] sm:$0xff]
  %v470 = vld [vmem:[%s125 + $0x70] sm:$0xff]
  %v471 = vld [vmem:[%s125 + $0xa0] sm:$0xff]
  %v472 = vld [vmem:[%s125 + $0xb0] sm:$0xff]
  %v473 = vld [vmem:[%s125 + $0xc0] sm:$0xff]
  %v474 = vld [vmem:[%s125 + $0xd0] sm:$0xff]
  %v475 = vld [vmem:[%s125 + $0xe0] sm:$0xff]
  %v476 = vld [vmem:[%s125 + $0xf0] sm:$0xff]
  %v477 = vld [vmem:[%s125 + $0x100] sm:$0xff]
  %v478 = vld [vmem:[%s125 + $0x110] sm:$0xff]
  %v479 = vld [vmem:[%s125 + $0x140] sm:$0xff]
  %v480 = vld [vmem:[%s125 + $0x150] sm:$0xff]
  %v481 = vld [vmem:[%s125 + $0x160] sm:$0xff]
  %v482 = vld [vmem:[%s125 + $0x170] sm:$0xff]
  %v483 = vld [vmem:[%s125 + $0x180] sm:$0xff]
  %v484 = vld [vmem:[%s125 + $0x190] sm:$0xff]
  %v485 = vld [vmem:[%s125 + $0x1a0] sm:$0xff]
  %v486 = vld [vmem:[%s125 + $0x1b0] sm:$0xff]
  %v487 = vld [vmem:[%s125 + $0x1e0] sm:$0xff]
  %v488 = vld [vmem:[%s125 + $0x1f0] sm:$0xff]
  %v489 = vld [vmem:[%s125 + $0x200] sm:$0xff]
  %v490 = vld [vmem:[%s125 + $0x210] sm:$0xff]
  %v491 = vld [vmem:[%s125 + $0x220] sm:$0xff]
  %v492 = vld [vmem:[%s125 + $0x230] sm:$0xff]
  %v493 = vld [vmem:[%s125 + $0x240] sm:$0xff]
  %v494 = vld [vmem:[%s125 + $0x250] sm:$0xff]
  %v495 = vlaneseq
  %v496 = vshrl.u32 %v495, 7
  %v497 = vsub.s32 0, %v496
  %v498 = vrot.slane %v462, %v497
  %v499 = vmul.f32 %v463, %v498
  %v500 = vmul.f32 %v464, %v498
  %v501 = vmul.f32 %v465, %v498
  %v502 = vmul.f32 %v466, %v498
  %v503 = vmul.f32 %v467, %v498
  %v504 = vmul.f32 %v468, %v498
  %v505 = vmul.f32 %v469, %v498
  %v506 = vmul.f32 %v470, %v498
  %v507 = vmul.f32 %v471, %v498
  %v508 = vmul.f32 %v472, %v498
  %v509 = vmul.f32 %v473, %v498
  %v510 = vmul.f32 %v474, %v498
  %v511 = vmul.f32 %v475, %v498
  %v512 = vmul.f32 %v476, %v498
  %v513 = vmul.f32 %v477, %v498
  %v514 = vmul.f32 %v478, %v498
  %v515 = vmul.f32 %v479, %v498
  %v516 = vmul.f32 %v480, %v498
  %v517 = vmul.f32 %v481, %v498
  %v518 = vmul.f32 %v482, %v498
  %v519 = vmul.f32 %v483, %v498
  %v520 = vmul.f32 %v484, %v498
  %v521 = vmul.f32 %v485, %v498
  %v522 = vmul.f32 %v486, %v498
  %v523 = vmul.f32 %v487, %v498
  %v524 = vmul.f32 %v488, %v498
  %v525 = vmul.f32 %v489, %v498
  %v526 = vmul.f32 %v490, %v498
  %v527 = vmul.f32 %v491, %v498
  %v528 = vmul.f32 %v492, %v498
  %v529 = vmul.f32 %v493, %v498
  %v530 = vmul.f32 %v494, %v498
  %v531 = vadd.f32 %v429, %v499
  %v532 = vadd.f32 %v430, %v500
  %v533 = vadd.f32 %v431, %v501
  %v534 = vadd.f32 %v432, %v502
  %v535 = vadd.f32 %v433, %v503
  %v536 = vadd.f32 %v434, %v504
  %v537 = vadd.f32 %v435, %v505
  %v538 = vadd.f32 %v436, %v506
  %v539 = vadd.f32 %v437, %v507
  %v540 = vadd.f32 %v438, %v508
  %v541 = vadd.f32 %v439, %v509
  %v542 = vadd.f32 %v440, %v510
  %v543 = vadd.f32 %v441, %v511
  %v544 = vadd.f32 %v442, %v512
  %v545 = vadd.f32 %v443, %v513
  %v546 = vadd.f32 %v444, %v514
  %v547 = vadd.f32 %v445, %v515
  %v548 = vadd.f32 %v446, %v516
  %v549 = vadd.f32 %v447, %v517
  %v550 = vadd.f32 %v448, %v518
  %v551 = vadd.f32 %v449, %v519
  %v552 = vadd.f32 %v450, %v520
  %v553 = vadd.f32 %v451, %v521
  %v554 = vadd.f32 %v452, %v522
  %v555 = vadd.f32 %v453, %v523
  %v556 = vadd.f32 %v454, %v524
  %v557 = vadd.f32 %v455, %v525
  %v558 = vadd.f32 %v456, %v526
  %v559 = vadd.f32 %v457, %v527
  %v560 = vadd.f32 %v458, %v528
  %v561 = vadd.f32 %v459, %v529
  %v562 = vadd.f32 %v460, %v530
  %v563 = vld [vmem:[%s461 + $0x1] sm:$0x1]
  %v564 = vld [vmem:[%s125 + $0x1] sm:$0xff]
  %v565 = vld [vmem:[%s125 + $0x11] sm:$0xff]
  %v566 = vld [vmem:[%s125 + $0x21] sm:$0xff]
  %v567 = vld [vmem:[%s125 + $0x31] sm:$0xff]
  %v568 = vld [vmem:[%s125 + $0x41] sm:$0xff]
  %v569 = vld [vmem:[%s125 + $0x51] sm:$0xff]
  %v570 = vld [vmem:[%s125 + $0x61] sm:$0xff]
  %v571 = vld [vmem:[%s125 + $0x71] sm:$0xff]
  %v572 = vld [vmem:[%s125 + $0xa1] sm:$0xff]
  %v573 = vld [vmem:[%s125 + $0xb1] sm:$0xff]
  %v574 = vld [vmem:[%s125 + $0xc1] sm:$0xff]
  %v575 = vld [vmem:[%s125 + $0xd1] sm:$0xff]
  %v576 = vld [vmem:[%s125 + $0xe1] sm:$0xff]
  %v577 = vld [vmem:[%s125 + $0xf1] sm:$0xff]
  %v578 = vld [vmem:[%s125 + $0x101] sm:$0xff]
  %v579 = vld [vmem:[%s125 + $0x111] sm:$0xff]
  %v580 = vld [vmem:[%s125 + $0x141] sm:$0xff]
  %v581 = vld [vmem:[%s125 + $0x151] sm:$0xff]
  %v582 = vld [vmem:[%s125 + $0x161] sm:$0xff]
  %v583 = vld [vmem:[%s125 + $0x171] sm:$0xff]
  %v584 = vld [vmem:[%s125 + $0x181] sm:$0xff]
  %v585 = vld [vmem:[%s125 + $0x191] sm:$0xff]
  %v586 = vld [vmem:[%s125 + $0x1a1] sm:$0xff]
  %v587 = vld [vmem:[%s125 + $0x1b1] sm:$0xff]
  %v588 = vld [vmem:[%s125 + $0x1e1] sm:$0xff]
  %v589 = vld [vmem:[%s125 + $0x1f1] sm:$0xff]
  %v590 = vld [vmem:[%s125 + $0x201] sm:$0xff]
  %v591 = vld [vmem:[%s125 + $0x211] sm:$0xff]
  %v592 = vld [vmem:[%s125 + $0x221] sm:$0xff]
  %v593 = vld [vmem:[%s125 + $0x231] sm:$0xff]
  %v594 = vld [vmem:[%s125 + $0x241] sm:$0xff]
  %v595 = vld [vmem:[%s125 + $0x251] sm:$0xff]
  %v596 = vlaneseq
  %v597 = vshrl.u32 %v596, 7
  %v598 = vsub.s32 0, %v597
  %v599 = vrot.slane %v563, %v598
  %v600 = vmul.f32 %v564, %v599
  %v601 = vmul.f32 %v565, %v599
  %v602 = vmul.f32 %v566, %v599
  %v603 = vmul.f32 %v567, %v599
  %v604 = vmul.f32 %v568, %v599
  %v605 = vmul.f32 %v569, %v599
  %v606 = vmul.f32 %v570, %v599
  %v607 = vmul.f32 %v571, %v599
  %v608 = vmul.f32 %v572, %v599
  %v609 = vmul.f32 %v573, %v599
  %v610 = vmul.f32 %v574, %v599
  %v611 = vmul.f32 %v575, %v599
  %v612 = vmul.f32 %v576, %v599
  %v613 = vmul.f32 %v577, %v599
  %v614 = vmul.f32 %v578, %v599
  %v615 = vmul.f32 %v579, %v599
  %v616 = vmul.f32 %v580, %v599
  %v617 = vmul.f32 %v581, %v599
  %v618 = vmul.f32 %v582, %v599
  %v619 = vmul.f32 %v583, %v599
  %v620 = vmul.f32 %v584, %v599
  %v621 = vmul.f32 %v585, %v599
  %v622 = vmul.f32 %v586, %v599
  %v623 = vmul.f32 %v587, %v599
  %v624 = vmul.f32 %v588, %v599
  %v625 = vmul.f32 %v589, %v599
  %v626 = vmul.f32 %v590, %v599
  %v627 = vmul.f32 %v591, %v599
  %v628 = vmul.f32 %v592, %v599
  %v629 = vmul.f32 %v593, %v599
  %v630 = vmul.f32 %v594, %v599
  %v631 = vmul.f32 %v595, %v599
  %v632 = vadd.f32 %v531, %v600
  %v633 = vadd.f32 %v532, %v601
  %v634 = vadd.f32 %v533, %v602
  %v635 = vadd.f32 %v534, %v603
  %v636 = vadd.f32 %v535, %v604
  %v637 = vadd.f32 %v536, %v605
  %v638 = vadd.f32 %v537, %v606
  %v639 = vadd.f32 %v538, %v607
  %v640 = vadd.f32 %v539, %v608
  %v641 = vadd.f32 %v540, %v609
  %v642 = vadd.f32 %v541, %v610
  %v643 = vadd.f32 %v542, %v611
  %v644 = vadd.f32 %v543, %v612
  %v645 = vadd.f32 %v544, %v613
  %v646 = vadd.f32 %v545, %v614
  %v647 = vadd.f32 %v546, %v615
  %v648 = vadd.f32 %v547, %v616
  %v649 = vadd.f32 %v548, %v617
  %v650 = vadd.f32 %v549, %v618
  %v651 = vadd.f32 %v550, %v619
  %v652 = vadd.f32 %v551, %v620
  %v653 = vadd.f32 %v552, %v621
  %v654 = vadd.f32 %v553, %v622
  %v655 = vadd.f32 %v554, %v623
  %v656 = vadd.f32 %v555, %v624
  %v657 = vadd.f32 %v556, %v625
  %v658 = vadd.f32 %v557, %v626
  %v659 = vadd.f32 %v558, %v627
  %v660 = vadd.f32 %v559, %v628
  %v661 = vadd.f32 %v560, %v629
  %v662 = vadd.f32 %v561, %v630
  %v663 = vadd.f32 %v562, %v631
  %v664 = vld [vmem:[%s461 + $0x2] sm:$0x1]
  %v665 = vld [vmem:[%s125 + $0x2] sm:$0xff]
  %v666 = vld [vmem:[%s125 + $0x12] sm:$0xff]
  %v667 = vld [vmem:[%s125 + $0x22] sm:$0xff]
  %v668 = vld [vmem:[%s125 + $0x32] sm:$0xff]
  %v669 = vld [vmem:[%s125 + $0x42] sm:$0xff]
  %v670 = vld [vmem:[%s125 + $0x52] sm:$0xff]
  %v671 = vld [vmem:[%s125 + $0x62] sm:$0xff]
  %v672 = vld [vmem:[%s125 + $0x72] sm:$0xff]
  %v673 = vld [vmem:[%s125 + $0xa2] sm:$0xff]
  %v674 = vld [vmem:[%s125 + $0xb2] sm:$0xff]
  %v675 = vld [vmem:[%s125 + $0xc2] sm:$0xff]
  %v676 = vld [vmem:[%s125 + $0xd2] sm:$0xff]
  %v677 = vld [vmem:[%s125 + $0xe2] sm:$0xff]
  %v678 = vld [vmem:[%s125 + $0xf2] sm:$0xff]
  %v679 = vld [vmem:[%s125 + $0x102] sm:$0xff]
  %v680 = vld [vmem:[%s125 + $0x112] sm:$0xff]
  %v681 = vld [vmem:[%s125 + $0x142] sm:$0xff]
  %v682 = vld [vmem:[%s125 + $0x152] sm:$0xff]
  %v683 = vld [vmem:[%s125 + $0x162] sm:$0xff]
  %v684 = vld [vmem:[%s125 + $0x172] sm:$0xff]
  %v685 = vld [vmem:[%s125 + $0x182] sm:$0xff]
  %v686 = vld [vmem:[%s125 + $0x192] sm:$0xff]
  %v687 = vld [vmem:[%s125 + $0x1a2] sm:$0xff]
  %v688 = vld [vmem:[%s125 + $0x1b2] sm:$0xff]
  %v689 = vld [vmem:[%s125 + $0x1e2] sm:$0xff]
  %v690 = vld [vmem:[%s125 + $0x1f2] sm:$0xff]
  %v691 = vld [vmem:[%s125 + $0x202] sm:$0xff]
  %v692 = vld [vmem:[%s125 + $0x212] sm:$0xff]
  %v693 = vld [vmem:[%s125 + $0x222] sm:$0xff]
  %v694 = vld [vmem:[%s125 + $0x232] sm:$0xff]
  %v695 = vld [vmem:[%s125 + $0x242] sm:$0xff]
  %v696 = vld [vmem:[%s125 + $0x252] sm:$0xff]
  %v697 = vlaneseq
  %v698 = vshrl.u32 %v697, 7
  %v699 = vsub.s32 0, %v698
  %v700 = vrot.slane %v664, %v699
  %v701 = vmul.f32 %v665, %v700
  %v702 = vmul.f32 %v666, %v700
  %v703 = vmul.f32 %v667, %v700
  %v704 = vmul.f32 %v668, %v700
  %v705 = vmul.f32 %v669, %v700
  %v706 = vmul.f32 %v670, %v700
  %v707 = vmul.f32 %v671, %v700
  %v708 = vmul.f32 %v672, %v700
  %v709 = vmul.f32 %v673, %v700
  %v710 = vmul.f32 %v674, %v700
  %v711 = vmul.f32 %v675, %v700
  %v712 = vmul.f32 %v676, %v700
  %v713 = vmul.f32 %v677, %v700
  %v714 = vmul.f32 %v678, %v700
  %v715 = vmul.f32 %v679, %v700
  %v716 = vmul.f32 %v680, %v700
  %v717 = vmul.f32 %v681, %v700
  %v718 = vmul.f32 %v682, %v700
  %v719 = vmul.f32 %v683, %v700
  %v720 = vmul.f32 %v684, %v700
  %v721 = vmul.f32 %v685, %v700
  %v722 = vmul.f32 %v686, %v700
  %v723 = vmul.f32 %v687, %v700
  %v724 = vmul.f32 %v688, %v700
  %v725 = vmul.f32 %v689, %v700
  %v726 = vmul.f32 %v690, %v700
  %v727 = vmul.f32 %v691, %v700
  %v728 = vmul.f32 %v692, %v700
  %v729 = vmul.f32 %v693, %v700
  %v730 = vmul.f32 %v694, %v700
  %v731 = vmul.f32 %v695, %v700
  %v732 = vmul.f32 %v696, %v700
  %v733 = vadd.f32 %v632, %v701
  %v734 = vadd.f32 %v633, %v702
  %v735 = vadd.f32 %v634, %v703
  %v736 = vadd.f32 %v635, %v704
  %v737 = vadd.f32 %v636, %v705
  %v738 = vadd.f32 %v637, %v706
  %v739 = vadd.f32 %v638, %v707
  %v740 = vadd.f32 %v639, %v708
  %v741 = vadd.f32 %v640, %v709
  %v742 = vadd.f32 %v641, %v710
  %v743 = vadd.f32 %v642, %v711
  %v744 = vadd.f32 %v643, %v712
  %v745 = vadd.f32 %v644, %v713
  %v746 = vadd.f32 %v645, %v714
  %v747 = vadd.f32 %v646, %v715
  %v748 = vadd.f32 %v647, %v716
  %v749 = vadd.f32 %v648, %v717
  %v750 = vadd.f32 %v649, %v718
  %v751 = vadd.f32 %v650, %v719
  %v752 = vadd.f32 %v651, %v720
  %v753 = vadd.f32 %v652, %v721
  %v754 = vadd.f32 %v653, %v722
  %v755 = vadd.f32 %v654, %v723
  %v756 = vadd.f32 %v655, %v724
  %v757 = vadd.f32 %v656, %v725
  %v758 = vadd.f32 %v657, %v726
  %v759 = vadd.f32 %v658, %v727
  %v760 = vadd.f32 %v659, %v728
  %v761 = vadd.f32 %v660, %v729
  %v762 = vadd.f32 %v661, %v730
  %v763 = vadd.f32 %v662, %v731
  %v764 = vadd.f32 %v663, %v732
  %s765 = scalar_lea.vmem %s1, 8
  %v766 = vld [vmem:[%s765] sm:$0x1]
  %s767 = scalar_lea.vmem [#allocation2], 32
  %v768 = vld [vmem:[%s767] sm:$0xff]
  %v769 = vld [vmem:[%s767 + $0x10] sm:$0xff]
  %v770 = vld [vmem:[%s767 + $0x20] sm:$0xff]
  %v771 = vld [vmem:[%s767 + $0x30] sm:$0xff]
  %v772 = vld [vmem:[%s767 + $0x40] sm:$0xff]
  %v773 = vld [vmem:[%s767 + $0x50] sm:$0xff]
  %v774 = vld [vmem:[%s767 + $0x60] sm:$0xff]
  %v775 = vld [vmem:[%s767 + $0x70] sm:$0xff]
  %v776 = vld [vmem:[%s767 + $0xa0] sm:$0xff]
  %v777 = vld [vmem:[%s767 + $0xb0] sm:$0xff]
  %v778 = vld [vmem:[%s767 + $0xc0] sm:$0xff]
  %v779 = vld [vmem:[%s767 + $0xd0] sm:$0xff]
  %v780 = vld [vmem:[%s767 + $0xe0] sm:$0xff]
  %v781 = vld [vmem:[%s767 + $0xf0] sm:$0xff]
  %v782 = vld [vmem:[%s767 + $0x100] sm:$0xff]
  %v783 = vld [vmem:[%s767 + $0x110] sm:$0xff]
  %v784 = vld [vmem:[%s767 + $0x140] sm:$0xff]
  %v785 = vld [vmem:[%s767 + $0x150] sm:$0xff]
  %v786 = vld [vmem:[%s767 + $0x160] sm:$0xff]
  %v787 = vld [vmem:[%s767 + $0x170] sm:$0xff]
  %v788 = vld [vmem:[%s767 + $0x180] sm:$0xff]
  %v789 = vld [vmem:[%s767 + $0x190] sm:$0xff]
  %v790 = vld [vmem:[%s767 + $0x1a0] sm:$0xff]
  %v791 = vld [vmem:[%s767 + $0x1b0] sm:$0xff]
  %v792 = vld [vmem:[%s767 + $0x1e0] sm:$0xff]
  %v793 = vld [vmem:[%s767 + $0x1f0] sm:$0xff]
  %v794 = vld [vmem:[%s767 + $0x200] sm:$0xff]
  %v795 = vld [vmem:[%s767 + $0x210] sm:$0xff]
  %v796 = vld [vmem:[%s767 + $0x220] sm:$0xff]
  %v797 = vld [vmem:[%s767 + $0x230] sm:$0xff]
  %v798 = vld [vmem:[%s767 + $0x240] sm:$0xff]
  %v799 = vld [vmem:[%s767 + $0x250] sm:$0xff]
  %v800 = vlaneseq
  %v801 = vshrl.u32 %v800, 7
  %v802 = vsub.s32 0, %v801
  %v803 = vrot.slane %v766, %v802
  %v804 = vmul.f32 %v768, %v803
  %v805 = vmul.f32 %v769, %v803
  %v806 = vmul.f32 %v770, %v803
  %v807 = vmul.f32 %v771, %v803
  %v808 = vmul.f32 %v772, %v803
  %v809 = vmul.f32 %v773, %v803
  %v810 = vmul.f32 %v774, %v803
  %v811 = vmul.f32 %v775, %v803
  %v812 = vmul.f32 %v776, %v803
  %v813 = vmul.f32 %v777, %v803
  %v814 = vmul.f32 %v778, %v803
  %v815 = vmul.f32 %v779, %v803
  %v816 = vmul.f32 %v780, %v803
  %v817 = vmul.f32 %v781, %v803
  %v818 = vmul.f32 %v782, %v803
  %v819 = vmul.f32 %v783, %v803
  %v820 = vmul.f32 %v784, %v803
  %v821 = vmul.f32 %v785, %v803
  %v822 = vmul.f32 %v786, %v803
  %v823 = vmul.f32 %v787, %v803
  %v824 = vmul.f32 %v788, %v803
  %v825 = vmul.f32 %v789, %v803
  %v826 = vmul.f32 %v790, %v803
  %v827 = vmul.f32 %v791, %v803
  %v828 = vmul.f32 %v792, %v803
  %v829 = vmul.f32 %v793, %v803
  %v830 = vmul.f32 %v794, %v803
  %v831 = vmul.f32 %v795, %v803
  %v832 = vmul.f32 %v796, %v803
  %v833 = vmul.f32 %v797, %v803
  %v834 = vmul.f32 %v798, %v803
  %v835 = vmul.f32 %v799, %v803
  %v836 = vadd.f32 %v733, %v804
  %v837 = vadd.f32 %v734, %v805
  %v838 = vadd.f32 %v735, %v806
  %v839 = vadd.f32 %v736, %v807
  %v840 = vadd.f32 %v737, %v808
  %v841 = vadd.f32 %v738, %v809
  %v842 = vadd.f32 %v739, %v810
  %v843 = vadd.f32 %v740, %v811
  %v844 = vadd.f32 %v741, %v812
  %v845 = vadd.f32 %v742, %v813
  %v846 = vadd.f32 %v743, %v814
  %v847 = vadd.f32 %v744, %v815
  %v848 = vadd.f32 %v745, %v816
  %v849 = vadd.f32 %v746, %v817
  %v850 = vadd.f32 %v747, %v818
  %v851 = vadd.f32 %v748, %v819
  %v852 = vadd.f32 %v749, %v820
  %v853 = vadd.f32 %v750, %v821
  %v854 = vadd.f32 %v751, %v822
  %v855 = vadd.f32 %v752, %v823
  %v856 = vadd.f32 %v753, %v824
  %v857 = vadd.f32 %v754, %v825
  %v858 = vadd.f32 %v755, %v826
  %v859 = vadd.f32 %v756, %v827
  %v860 = vadd.f32 %v757, %v828
  %v861 = vadd.f32 %v758, %v829
  %v862 = vadd.f32 %v759, %v830
  %v863 = vadd.f32 %v760, %v831
  %v864 = vadd.f32 %v761, %v832
  %v865 = vadd.f32 %v762, %v833
  %v866 = vadd.f32 %v763, %v834
  %v867 = vadd.f32 %v764, %v835
  %v868 = vld [vmem:[%s765 + $0x1] sm:$0x1]
  %v869 = vld [vmem:[%s767 + $0x1] sm:$0xff]
  %v870 = vld [vmem:[%s767 + $0x11] sm:$0xff]
  %v871 = vld [vmem:[%s767 + $0x21] sm:$0xff]
  %v872 = vld [vmem:[%s767 + $0x31] sm:$0xff]
  %v873 = vld [vmem:[%s767 + $0x41] sm:$0xff]
  %v874 = vld [vmem:[%s767 + $0x51] sm:$0xff]
  %v875 = vld [vmem:[%s767 + $0x61] sm:$0xff]
  %v876 = vld [vmem:[%s767 + $0x71] sm:$0xff]
  %v877 = vld [vmem:[%s767 + $0xa1] sm:$0xff]
  %v878 = vld [vmem:[%s767 + $0xb1] sm:$0xff]
  %v879 = vld [vmem:[%s767 + $0xc1] sm:$0xff]
  %v880 = vld [vmem:[%s767 + $0xd1] sm:$0xff]
  %v881 = vld [vmem:[%s767 + $0xe1] sm:$0xff]
  %v882 = vld [vmem:[%s767 + $0xf1] sm:$0xff]
  %v883 = vld [vmem:[%s767 + $0x101] sm:$0xff]
  %v884 = vld [vmem:[%s767 + $0x111] sm:$0xff]
  %v885 = vld [vmem:[%s767 + $0x141] sm:$0xff]
  %v886 = vld [vmem:[%s767 + $0x151] sm:$0xff]
  %v887 = vld [vmem:[%s767 + $0x161] sm:$0xff]
  %v888 = vld [vmem:[%s767 + $0x171] sm:$0xff]
  %v889 = vld [vmem:[%s767 + $0x181] sm:$0xff]
  %v890 = vld [vmem:[%s767 + $0x191] sm:$0xff]
  %v891 = vld [vmem:[%s767 + $0x1a1] sm:$0xff]
  %v892 = vld [vmem:[%s767 + $0x1b1] sm:$0xff]
  %v893 = vld [vmem:[%s767 + $0x1e1] sm:$0xff]
  %v894 = vld [vmem:[%s767 + $0x1f1] sm:$0xff]
  %v895 = vld [vmem:[%s767 + $0x201] sm:$0xff]
  %v896 = vld [vmem:[%s767 + $0x211] sm:$0xff]
  %v897 = vld [vmem:[%s767 + $0x221] sm:$0xff]
  %v898 = vld [vmem:[%s767 + $0x231] sm:$0xff]
  %v899 = vld [vmem:[%s767 + $0x241] sm:$0xff]
  %v900 = vld [vmem:[%s767 + $0x251] sm:$0xff]
  %v901 = vlaneseq
  %v902 = vshrl.u32 %v901, 7
  %v903 = vsub.s32 0, %v902
  %v904 = vrot.slane %v868, %v903
  %v905 = vmul.f32 %v869, %v904
  %v906 = vmul.f32 %v870, %v904
  %v907 = vmul.f32 %v871, %v904
  %v908 = vmul.f32 %v872, %v904
  %v909 = vmul.f32 %v873, %v904
  %v910 = vmul.f32 %v874, %v904
  %v911 = vmul.f32 %v875, %v904
  %v912 = vmul.f32 %v876, %v904
  %v913 = vmul.f32 %v877, %v904
  %v914 = vmul.f32 %v878, %v904
  %v915 = vmul.f32 %v879, %v904
  %v916 = vmul.f32 %v880, %v904
  %v917 = vmul.f32 %v881, %v904
  %v918 = vmul.f32 %v882, %v904
  %v919 = vmul.f32 %v883, %v904
  %v920 = vmul.f32 %v884, %v904
  %v921 = vmul.f32 %v885, %v904
  %v922 = vmul.f32 %v886, %v904
  %v923 = vmul.f32 %v887, %v904
  %v924 = vmul.f32 %v888, %v904
  %v925 = vmul.f32 %v889, %v904
  %v926 = vmul.f32 %v890, %v904
  %v927 = vmul.f32 %v891, %v904
  %v928 = vmul.f32 %v892, %v904
  %v929 = vmul.f32 %v893, %v904
  %v930 = vmul.f32 %v894, %v904
  %v931 = vmul.f32 %v895, %v904
  %v932 = vmul.f32 %v896, %v904
  %v933 = vmul.f32 %v897, %v904
  %v934 = vmul.f32 %v898, %v904
  %v935 = vmul.f32 %v899, %v904
  %v936 = vmul.f32 %v900, %v904
  %v937 = vadd.f32 %v836, %v905
  %v938 = vadd.f32 %v837, %v906
  %v939 = vadd.f32 %v838, %v907
  %v940 = vadd.f32 %v839, %v908
  %v941 = vadd.f32 %v840, %v909
  %v942 = vadd.f32 %v841, %v910
  %v943 = vadd.f32 %v842, %v911
  %v944 = vadd.f32 %v843, %v912
  %v945 = vadd.f32 %v844, %v913
  %v946 = vadd.f32 %v845, %v914
  %v947 = vadd.f32 %v846, %v915
  %v948 = vadd.f32 %v847, %v916
  %v949 = vadd.f32 %v848, %v917
  %v950 = vadd.f32 %v849, %v918
  %v951 = vadd.f32 %v850, %v919
  %v952 = vadd.f32 %v851, %v920
  %v953 = vadd.f32 %v852, %v921
  %v954 = vadd.f32 %v853, %v922
  %v955 = vadd.f32 %v854, %v923
  %v956 = vadd.f32 %v855, %v924
  %v957 = vadd.f32 %v856, %v925
  %v958 = vadd.f32 %v857, %v926
  %v959 = vadd.f32 %v858, %v927
  %v960 = vadd.f32 %v859, %v928
  %v961 = vadd.f32 %v860, %v929
  %v962 = vadd.f32 %v861, %v930
  %v963 = vadd.f32 %v862, %v931
  %v964 = vadd.f32 %v863, %v932
  %v965 = vadd.f32 %v864, %v933
  %v966 = vadd.f32 %v865, %v934
  %v967 = vadd.f32 %v866, %v935
  %v968 = vadd.f32 %v867, %v936
  %v969 = vld [vmem:[%s765 + $0x2] sm:$0x1]
  %v970 = vld [vmem:[%s767 + $0x2] sm:$0xff]
  %v971 = vld [vmem:[%s767 + $0x12] sm:$0xff]
  %v972 = vld [vmem:[%s767 + $0x22] sm:$0xff]
  %v973 = vld [vmem:[%s767 + $0x32] sm:$0xff]
  %v974 = vld [vmem:[%s767 + $0x42] sm:$0xff]
  %v975 = vld [vmem:[%s767 + $0x52] sm:$0xff]
  %v976 = vld [vmem:[%s767 + $0x62] sm:$0xff]
  %v977 = vld [vmem:[%s767 + $0x72] sm:$0xff]
  %v978 = vld [vmem:[%s767 + $0xa2] sm:$0xff]
  %v979 = vld [vmem:[%s767 + $0xb2] sm:$0xff]
  %v980 = vld [vmem:[%s767 + $0xc2] sm:$0xff]
  %v981 = vld [vmem:[%s767 + $0xd2] sm:$0xff]
  %v982 = vld [vmem:[%s767 + $0xe2] sm:$0xff]
  %v983 = vld [vmem:[%s767 + $0xf2] sm:$0xff]
  %v984 = vld [vmem:[%s767 + $0x102] sm:$0xff]
  %v985 = vld [vmem:[%s767 + $0x112] sm:$0xff]
  %v986 = vld [vmem:[%s767 + $0x142] sm:$0xff]
  %v987 = vld [vmem:[%s767 + $0x152] sm:$0xff]
  %v988 = vld [vmem:[%s767 + $0x162] sm:$0xff]
  %v989 = vld [vmem:[%s767 + $0x172] sm:$0xff]
  %v990 = vld [vmem:[%s767 + $0x182] sm:$0xff]
  %v991 = vld [vmem:[%s767 + $0x192] sm:$0xff]
  %v992 = vld [vmem:[%s767 + $0x1a2] sm:$0xff]
  %v993 = vld [vmem:[%s767 + $0x1b2] sm:$0xff]
  %v994 = vld [vmem:[%s767 + $0x1e2] sm:$0xff]
  %v995 = vld [vmem:[%s767 + $0x1f2] sm:$0xff]
  %v996 = vld [vmem:[%s767 + $0x202] sm:$0xff]
  %v997 = vld [vmem:[%s767 + $0x212] sm:$0xff]
  %v998 = vld [vmem:[%s767 + $0x222] sm:$0xff]
  %v999 = vld [vmem:[%s767 + $0x232] sm:$0xff]
  %v1000 = vld [vmem:[%s767 + $0x242] sm:$0xff]
  %v1001 = vld [vmem:[%s767 + $0x252] sm:$0xff]
  %v1002 = vlaneseq
  %v1003 = vshrl.u32 %v1002, 7
  %v1004 = vsub.s32 0, %v1003
  %v1005 = vrot.slane %v969, %v1004
  %v1006 = vmul.f32 %v970, %v1005
  %v1007 = vmul.f32 %v971, %v1005
  %v1008 = vmul.f32 %v972, %v1005
  %v1009 = vmul.f32 %v973, %v1005
  %v1010 = vmul.f32 %v974, %v1005
  %v1011 = vmul.f32 %v975, %v1005
  %v1012 = vmul.f32 %v976, %v1005
  %v1013 = vmul.f32 %v977, %v1005
  %v1014 = vmul.f32 %v978, %v1005
  %v1015 = vmul.f32 %v979, %v1005
  %v1016 = vmul.f32 %v980, %v1005
  %v1017 = vmul.f32 %v981, %v1005
  %v1018 = vmul.f32 %v982, %v1005
  %v1019 = vmul.f32 %v983, %v1005
  %v1020 = vmul.f32 %v984, %v1005
  %v1021 = vmul.f32 %v985, %v1005
  %v1022 = vmul.f32 %v986, %v1005
  %v1023 = vmul.f32 %v987, %v1005
  %v1024 = vmul.f32 %v988, %v1005
  %v1025 = vmul.f32 %v989, %v1005
  %v1026 = vmul.f32 %v990, %v1005
  %v1027 = vmul.f32 %v991, %v1005
  %v1028 = vmul.f32 %v992, %v1005
  %v1029 = vmul.f32 %v993, %v1005
  %v1030 = vmul.f32 %v994, %v1005
  %v1031 = vmul.f32 %v995, %v1005
  %v1032 = vmul.f32 %v996, %v1005
  %v1033 = vmul.f32 %v997, %v1005
  %v1034 = vmul.f32 %v998, %v1005
  %v1035 = vmul.f32 %v999, %v1005
  %v1036 = vmul.f32 %v1000, %v1005
  %v1037 = vmul.f32 %v1001, %v1005
  %v1038 = vadd.f32 %v937, %v1006
  %v1039 = vadd.f32 %v938, %v1007
  %v1040 = vadd.f32 %v939, %v1008
  %v1041 = vadd.f32 %v940, %v1009
  %v1042 = vadd.f32 %v941, %v1010
  %v1043 = vadd.f32 %v942, %v1011
  %v1044 = vadd.f32 %v943, %v1012
  %v1045 = vadd.f32 %v944, %v1013
  %v1046 = vadd.f32 %v945, %v1014
  %v1047 = vadd.f32 %v946, %v1015
  %v1048 = vadd.f32 %v947, %v1016
  %v1049 = vadd.f32 %v948, %v1017
  %v1050 = vadd.f32 %v949, %v1018
  %v1051 = vadd.f32 %v950, %v1019
  %v1052 = vadd.f32 %v951, %v1020
  %v1053 = vadd.f32 %v952, %v1021
  %v1054 = vadd.f32 %v953, %v1022
  %v1055 = vadd.f32 %v954, %v1023
  %v1056 = vadd.f32 %v955, %v1024
  %v1057 = vadd.f32 %v956, %v1025
  %v1058 = vadd.f32 %v957, %v1026
  %v1059 = vadd.f32 %v958, %v1027
  %v1060 = vadd.f32 %v959, %v1028
  %v1061 = vadd.f32 %v960, %v1029
  %v1062 = vadd.f32 %v961, %v1030
  %v1063 = vadd.f32 %v962, %v1031
  %v1064 = vadd.f32 %v963, %v1032
  %v1065 = vadd.f32 %v964, %v1033
  %v1066 = vadd.f32 %v965, %v1034
  %v1067 = vadd.f32 %v966, %v1035
  %v1068 = vadd.f32 %v967, %v1036
  %v1069 = vadd.f32 %v968, %v1037
  %v1070 = vpack.c.bf16 %v1038, %v1038
  %v1071 = vpack.c.bf16 %v1039, %v1039
  %v1072 = vpack.c.bf16 %v1040, %v1040
  %v1073 = vpack.c.bf16 %v1041, %v1041
  %v1074 = vpack.c.bf16 %v1042, %v1042
  %v1075 = vpack.c.bf16 %v1043, %v1043
  %v1076 = vpack.c.bf16 %v1044, %v1044
  %v1077 = vpack.c.bf16 %v1045, %v1045
  %v1078 = vpack.c.bf16 %v1046, %v1046
  %v1079 = vpack.c.bf16 %v1047, %v1047
  %v1080 = vpack.c.bf16 %v1048, %v1048
  %v1081 = vpack.c.bf16 %v1049, %v1049
  %v1082 = vpack.c.bf16 %v1050, %v1050
  %v1083 = vpack.c.bf16 %v1051, %v1051
  %v1084 = vpack.c.bf16 %v1052, %v1052
  %v1085 = vpack.c.bf16 %v1053, %v1053
  %v1086 = vpack.c.bf16 %v1054, %v1054
  %v1087 = vpack.c.bf16 %v1055, %v1055
  %v1088 = vpack.c.bf16 %v1056, %v1056
  %v1089 = vpack.c.bf16 %v1057, %v1057
  %v1090 = vpack.c.bf16 %v1058, %v1058
  %v1091 = vpack.c.bf16 %v1059, %v1059
  %v1092 = vpack.c.bf16 %v1060, %v1060
  %v1093 = vpack.c.bf16 %v1061, %v1061
  %v1094 = vpack.c.bf16 %v1062, %v1062
  %v1095 = vpack.c.bf16 %v1063, %v1063
  %v1096 = vpack.c.bf16 %v1064, %v1064
  %v1097 = vpack.c.bf16 %v1065, %v1065
  %v1098 = vpack.c.bf16 %v1066, %v1066
  %v1099 = vpack.c.bf16 %v1067, %v1067
  %v1100 = vpack.c.bf16 %v1068, %v1068
  %v1101 = vpack.c.bf16 %v1069, %v1069
  %vm1102 = vcmask 257024
  %1103 = vst.msk [vmem:[%s2] sm:$0xf] %vm1102, %v1070
  %1104 = vst.msk [vmem:[%s2 + $0x4] sm:$0xf] %vm1102, %v1071
  %1105 = vst.msk [vmem:[%s2 + $0x8] sm:$0xf] %vm1102, %v1072
  %1106 = vst.msk [vmem:[%s2 + $0xc] sm:$0xf] %vm1102, %v1073
  %1107 = vst.msk [vmem:[%s2 + $0x10] sm:$0xf] %vm1102, %v1074
  %1108 = vst.msk [vmem:[%s2 + $0x14] sm:$0xf] %vm1102, %v1075
  %1109 = vst.msk [vmem:[%s2 + $0x18] sm:$0xf] %vm1102, %v1076
  %1110 = vst.msk [vmem:[%s2 + $0x1c] sm:$0xf] %vm1102, %v1077
  %1111 = vst.msk [vmem:[%s2 + $0x20] sm:$0xf] %vm1102, %v1078
  %1112 = vst.msk [vmem:[%s2 + $0x24] sm:$0xf] %vm1102, %v1079
  %1113 = vst.msk [vmem:[%s2 + $0x28] sm:$0xf] %vm1102, %v1080
  %1114 = vst.msk [vmem:[%s2 + $0x2c] sm:$0xf] %vm1102, %v1081
  %1115 = vst.msk [vmem:[%s2 + $0x30] sm:$0xf] %vm1102, %v1082
  %1116 = vst.msk [vmem:[%s2 + $0x34] sm:$0xf] %vm1102, %v1083
  %1117 = vst.msk [vmem:[%s2 + $0x38] sm:$0xf] %vm1102, %v1084
  %1118 = vst.msk [vmem:[%s2 + $0x3c] sm:$0xf] %vm1102, %v1085
  %1119 = vst.msk [vmem:[%s2 + $0x40] sm:$0xf] %vm1102, %v1086
  %1120 = vst.msk [vmem:[%s2 + $0x44] sm:$0xf] %vm1102, %v1087
  %1121 = vst.msk [vmem:[%s2 + $0x48] sm:$0xf] %vm1102, %v1088
  %1122 = vst.msk [vmem:[%s2 + $0x4c] sm:$0xf] %vm1102, %v1089
  %1123 = vst.msk [vmem:[%s2 + $0x50] sm:$0xf] %vm1102, %v1090
  %1124 = vst.msk [vmem:[%s2 + $0x54] sm:$0xf] %vm1102, %v1091
  %1125 = vst.msk [vmem:[%s2 + $0x58] sm:$0xf] %vm1102, %v1092
  %1126 = vst.msk [vmem:[%s2 + $0x5c] sm:$0xf] %vm1102, %v1093
  %1127 = vst.msk [vmem:[%s2 + $0x60] sm:$0xf] %vm1102, %v1094
  %1128 = vst.msk [vmem:[%s2 + $0x64] sm:$0xf] %vm1102, %v1095
  %1129 = vst.msk [vmem:[%s2 + $0x68] sm:$0xf] %vm1102, %v1096
  %1130 = vst.msk [vmem:[%s2 + $0x6c] sm:$0xf] %vm1102, %v1097
  %1131 = vst.msk [vmem:[%s2 + $0x70] sm:$0xf] %vm1102, %v1098
  %1132 = vst.msk [vmem:[%s2 + $0x74] sm:$0xf] %vm1102, %v1099
  %1133 = vst.msk [vmem:[%s2 + $0x78] sm:$0xf] %vm1102, %v1100
  %1134 = vst.msk [vmem:[%s2 + $0x7c] sm:$0xf] %vm1102, %v1101
  // Predicated region
  $region10: #{ms_block.12} parent=0 // pred_check
    _
  $region11: #{ms_block.12} parent=0 // pred_check_branch
    %1136 = sbr.rel (0) target = $region13
  $region12: #{ms_block.12} parent=0 // pred_region
    _
  $region13: #{ms_block.12} parent=0 // pred_fallthru
    _
  // Predicated region
  $region14: #{ms_block.12} parent=0 // pred_check
    _
  $region15: #{ms_block.12} parent=0 // pred_check_branch
    %1138 = sbr.rel (0) target = $region17
  $region16: #{ms_block.12} parent=0 // pred_region
    _
  $region17: #{ms_block.12} parent=0 // pred_fallthru
    _

// kernel: ms_block.15
$region0: #{ms_block.15}
  #allocation0 [shape = 'u32[]', space=smem, size = 0x4, offset = 0x4, fixed_abs, tag = 'smem constant byte address 0x4 - core index']
  #allocation1 [shape = 'u32[144,128]{1,0:T(1,128)}', space=vmem, size = 0x12000, scoped, tag = 'internal scratch']
  %s0 = inlined_call_operand.vmem [shape: bf16[256,128], index: 0, kind: input, shape index: {}]
  %s1 = inlined_call_operand.vmem [shape: bf16[128,32], index: 1, kind: input, shape index: {}]
  %s2 = inlined_call_operand.vmem [shape: f32[1,32], index: 2, kind: input, shape index: {}]
  %s3 = inlined_call_operand.vmem [shape: f32[256,32], index: 3, kind: input, shape index: {}]
  %s4 = inlined_call_operand.hbm [shape: f32[256,32], index: 4, kind: output, shape index: {}]
  %s5 = sld [smem:[#allocation0]]
  $region26: #{ms_block.15} parent=0
    _
  %s7 = ssub.s32 1, %s5
  %s8 = scalar_select 0, %s7, %s5
  $region1: #{ms_block.15} parent=0
    #allocation2 [shape = 'u8[131072]{0}', space=vmem, size = 0x20000, scoped, tag = 'output window, operand 0, single buffered']
    #allocation3 [shape = 's32[1]{0}', space=sflag, size = 0x4, scoped, tag = 'scoped memory for ms_block.15']
    %9 = vsyncpa [#allocation3], 0
    // Predicated region
    $region2: #{ms_block.15} parent=1 // pred_check
      _
    $region3: #{ms_block.15} parent=1 // pred_check_branch
      %11 = sbr.rel (0) target = $region5
    $region4: #{ms_block.15} parent=1 // pred_region
      _
    $region5: #{ms_block.15} parent=1 // pred_fallthru
      _
    // Predicated region
    $region6: #{ms_block.15} parent=1 // pred_check
      _
    $region7: #{ms_block.15} parent=1 // pred_check_branch
      %13 = sbr.rel (0) target = $region9
    $region8: #{ms_block.15} parent=1 // pred_region
      _
    $region9: #{ms_block.15} parent=1 // pred_fallthru
      _
    // Predicated region
    $region10: #{ms_block.15} parent=1 // pred_check
      _
    $region11: #{ms_block.15} parent=1 // pred_check_branch
      %15 = sbr.rel (0) target = $region13
    $region12: #{ms_block.15} parent=1 // pred_region
      _
    $region13: #{ms_block.15} parent=1 // pred_fallthru
      _
    // Predicated region
    $region14: #{ms_block.15} parent=1 // pred_check
      _
    $region15: #{ms_block.15} parent=1 // pred_check_branch
      %17 = sbr.rel (0) target = $region17
    $region16: #{ms_block.15} parent=1 // pred_region
      _
    $region17: #{ms_block.15} parent=1 // pred_fallthru
      _
    %v19 = vld [vmem:[%s0] sm:$0xf]
    %v20 = vld [vmem:[%s0 + $0x4] sm:$0xf]
    %v21 = vld [vmem:[%s0 + $0x8] sm:$0xf]
    %v22 = vld [vmem:[%s0 + $0xc] sm:$0xf]
    %v23 = vld [vmem:[%s0 + $0x10] sm:$0xf]
    %v24 = vld [vmem:[%s0 + $0x14] sm:$0xf]
    %v25 = vld [vmem:[%s0 + $0x18] sm:$0xf]
    %v26 = vld [vmem:[%s0 + $0x1c] sm:$0xf]
    %v27 = vld [vmem:[%s0 + $0x20] sm:$0xf]
    %v28 = vld [vmem:[%s0 + $0x24] sm:$0xf]
    %v29 = vld [vmem:[%s0 + $0x28] sm:$0xf]
    %v30 = vld [vmem:[%s0 + $0x2c] sm:$0xf]
    %v31 = vld [vmem:[%s0 + $0x30] sm:$0xf]
    %v32 = vld [vmem:[%s0 + $0x34] sm:$0xf]
    %v33 = vld [vmem:[%s0 + $0x38] sm:$0xf]
    %v34 = vld [vmem:[%s0 + $0x3c] sm:$0xf]
    %v35 = vld [vmem:[%s0 + $0x40] sm:$0xf]
    %v36 = vld [vmem:[%s0 + $0x44] sm:$0xf]
    %v37 = vld [vmem:[%s0 + $0x48] sm:$0xf]
    %v38 = vld [vmem:[%s0 + $0x4c] sm:$0xf]
    %v39 = vld [vmem:[%s0 + $0x50] sm:$0xf]
    %v40 = vld [vmem:[%s0 + $0x54] sm:$0xf]
    %v41 = vld [vmem:[%s0 + $0x58] sm:$0xf]
    %v42 = vld [vmem:[%s0 + $0x5c] sm:$0xf]
    %v43 = vld [vmem:[%s0 + $0x60] sm:$0xf]
    %v44 = vld [vmem:[%s0 + $0x64] sm:$0xf]
    %v45 = vld [vmem:[%s0 + $0x68] sm:$0xf]
    %v46 = vld [vmem:[%s0 + $0x6c] sm:$0xf]
    %v47 = vld [vmem:[%s0 + $0x70] sm:$0xf]
    %v48 = vld [vmem:[%s0 + $0x74] sm:$0xf]
    %v49 = vld [vmem:[%s0 + $0x78] sm:$0xf]
    %v50 = vld [vmem:[%s0 + $0x7c] sm:$0xf]
    %v51 = vld [vmem:[%s1] sm:$0xf]
    %v52 = vld [vmem:[%s1 + $0x4] sm:$0xf]
    %v53 = vld [vmem:[%s1 + $0x8] sm:$0xf]
    %v54 = vld [vmem:[%s1 + $0xc] sm:$0xf]
    %v55 = vld [vmem:[%s1 + $0x10] sm:$0xf]
    %v56 = vld [vmem:[%s1 + $0x14] sm:$0xf]
    %v57 = vld [vmem:[%s1 + $0x18] sm:$0xf]
    %v58 = vld [vmem:[%s1 + $0x1c] sm:$0xf]
    %v59 = vld [vmem:[%s1 + $0x20] sm:$0xf]
    %v60 = vld [vmem:[%s1 + $0x24] sm:$0xf]
    %v61 = vld [vmem:[%s1 + $0x28] sm:$0xf]
    %v62 = vld [vmem:[%s1 + $0x2c] sm:$0xf]
    %v63 = vld [vmem:[%s1 + $0x30] sm:$0xf]
    %v64 = vld [vmem:[%s1 + $0x34] sm:$0xf]
    %v65 = vld [vmem:[%s1 + $0x38] sm:$0xf]
    %v66 = vld [vmem:[%s1 + $0x3c] sm:$0xf]
    %v67 = vld [vmem:[%s2] sm:$0x1]
    %v69 = vlaneseq
    %v70 = vshrl.u32 %v69, 7
    %v71 = vsub.s32 0, %v70
    %v72 = vrot.slane %v67, %v71
    %v106 = vunpack.c.l.b16 %v19
    %v107 = vunpack.c.l.b16 %v20
    %v108 = vunpack.c.l.b16 %v21
    %v109 = vunpack.c.l.b16 %v22
    %v110 = vunpack.c.l.b16 %v23
    %v111 = vunpack.c.l.b16 %v24
    %v112 = vunpack.c.l.b16 %v25
    %v113 = vunpack.c.l.b16 %v26
    %v114 = vunpack.c.l.b16 %v27
    %v115 = vunpack.c.l.b16 %v28
    %v116 = vunpack.c.l.b16 %v29
    %v117 = vunpack.c.l.b16 %v30
    %v118 = vunpack.c.l.b16 %v31
    %v119 = vunpack.c.l.b16 %v32
    %v120 = vunpack.c.l.b16 %v33
    %v121 = vunpack.c.l.b16 %v34
    %v122 = vunpack.c.l.b16 %v35
    %v123 = vunpack.c.l.b16 %v36
    %v124 = vunpack.c.l.b16 %v37
    %v125 = vunpack.c.l.b16 %v38
    %v126 = vunpack.c.l.b16 %v39
    %v127 = vunpack.c.l.b16 %v40
    %v128 = vunpack.c.l.b16 %v41
    %v129 = vunpack.c.l.b16 %v42
    %v130 = vunpack.c.l.b16 %v43
    %v131 = vunpack.c.l.b16 %v44
    %v132 = vunpack.c.l.b16 %v45
    %v133 = vunpack.c.l.b16 %v46
    %v134 = vunpack.c.l.b16 %v47
    %v135 = vunpack.c.l.b16 %v48
    %v136 = vunpack.c.l.b16 %v49
    %v137 = vunpack.c.l.b16 %v50
    %v138 = vpack.c.b16 %v107, %v106
    %v139 = vpack.c.b16 %v109, %v108
    %v140 = vpack.c.b16 %v111, %v110
    %v141 = vpack.c.b16 %v113, %v112
    %v142 = vpack.c.b16 %v115, %v114
    %v143 = vpack.c.b16 %v117, %v116
    %v144 = vpack.c.b16 %v119, %v118
    %v145 = vpack.c.b16 %v121, %v120
    %v146 = vpack.c.b16 %v123, %v122
    %v147 = vpack.c.b16 %v125, %v124
    %v148 = vpack.c.b16 %v127, %v126
    %v149 = vpack.c.b16 %v129, %v128
    %v150 = vpack.c.b16 %v131, %v130
    %v151 = vpack.c.b16 %v133, %v132
    %v152 = vpack.c.b16 %v135, %v134
    %v153 = vpack.c.b16 %v137, %v136
    %v186 = vunpack.c.l.b16 %v51
    %v187 = vunpack.c.l.b16 %v52
    %v188 = vunpack.c.l.b16 %v53
    %v189 = vunpack.c.l.b16 %v54
    %v190 = vunpack.c.l.b16 %v55
    %v191 = vunpack.c.l.b16 %v56
    %v192 = vunpack.c.l.b16 %v57
    %v193 = vunpack.c.l.b16 %v58
    %v194 = vunpack.c.l.b16 %v59
    %v195 = vunpack.c.l.b16 %v60
    %v196 = vunpack.c.l.b16 %v61
    %v197 = vunpack.c.l.b16 %v62
    %v198 = vunpack.c.l.b16 %v63
    %v199 = vunpack.c.l.b16 %v64
    %v200 = vunpack.c.l.b16 %v65
    %v201 = vunpack.c.l.b16 %v66
    %v202 = vpack.c.b16 %v187, %v186
    %v203 = vpack.c.b16 %v189, %v188
    %v204 = vpack.c.b16 %v191, %v190
    %v205 = vpack.c.b16 %v193, %v192
    %v206 = vpack.c.b16 %v195, %v194
    %v207 = vpack.c.b16 %v197, %v196
    %v208 = vpack.c.b16 %v199, %v198
    %v209 = vpack.c.b16 %v201, %v200
    %218 = vmatprep.subr.bf16.mxu0 0
    %219 = vmatpush1.bf16.msra.mxu0 %v202
    %220 = vmatprep.subr.bf16.mxu0 0
    %221 = vmatpush1.bf16.msra.mxu0 %v203
    %222 = vmatprep.subr.bf16.mxu0 0
    %223 = vmatpush1.bf16.msra.mxu0 %v204
    %224 = vmatprep.subr.bf16.mxu0 0
    %225 = vmatpush1.bf16.msra.mxu0 %v205
    %226 = vmatprep.subr.bf16.mxu0 0
    %227 = vmatpush1.bf16.msra.mxu0 %v206
    %228 = vmatprep.subr.bf16.mxu0 0
    %229 = vmatpush1.bf16.msra.mxu0 %v207
    %230 = vmatprep.subr.bf16.mxu0 0
    %231 = vmatpush1.bf16.msra.mxu0 %v208
    %232 = vmatprep.subr.bf16.mxu0 0
    %233 = vmatpush1.bf16.msra.mxu0 %v209
    %234 = vmatprep.subr.bf16.mxu0 0
    %235 = vmatpush1.bf16.msra.mxu0 0
    %236 = vmatprep.subr.bf16.mxu0 0
    %237 = vmatpush1.bf16.msra.mxu0 0
    %238 = vmatprep.subr.bf16.mxu0 0
    %239 = vmatpush1.bf16.msra.mxu0 0
    %240 = vmatprep.subr.bf16.mxu0 0
    %241 = vmatpush1.bf16.msra.mxu0 0
    %242 = vmatprep.subr.bf16.mxu0 0
    %243 = vmatpush1.bf16.msra.mxu0 0
    %244 = vmatprep.subr.bf16.mxu0 0
    %245 = vmatpush1.bf16.msra.mxu0 0
    %246 = vmatprep.subr.bf16.mxu0 0
    %247 = vmatpush1.bf16.msra.mxu0 0
    %248 = vmatprep.subr.bf16.mxu0 0
    %249 = vmatpush1.bf16.msra.mxu0 0
    %250 = vmatprep.mubr.bf16.mxu0 0
    %251 = vmatmul.mubr.bf16.gmra.mrb[0].mxu0 %v138
    %v252 = vpop.f32.mrb[0].mxu0
    %v253 = vadd.f32 %v72, %v252
    %v254 = vpop.f32.mrb[0].mxu0
    %v255 = vpop.f32.mrb[0].mxu0
    %v256 = vadd.f32 %v72, %v255
    %v257 = vpop.f32.mrb[0].mxu0
    %258 = vmatprep.mubr.bf16.mxu0 0
    %259 = vmatmul.mubr.bf16.gmra.mrb[0].mxu0 %v139
    %v260 = vpop.f32.mrb[0].mxu0
    %v261 = vadd.f32 %v72, %v260
    %v262 = vpop.f32.mrb[0].mxu0
    %v263 = vpop.f32.mrb[0].mxu0
    %v264 = vadd.f32 %v72, %v263
    %v265 = vpop.f32.mrb[0].mxu0
    %266 = vmatprep.mubr.bf16.mxu0 0
    %267 = vmatmul.mubr.bf16.gmra.mrb[0].mxu0 %v140
    %v268 = vpop.f32.mrb[0].mxu0
    %v269 = vadd.f32 %v72, %v268
    %v270 = vpop.f32.mrb[0].mxu0
    %v271 = vpop.f32.mrb[0].mxu0
    %v272 = vadd.f32 %v72, %v271
    %v273 = vpop.f32.mrb[0].mxu0
    %274 = vmatprep.mubr.bf16.mxu0 0
    %275 = vmatmul.mubr.bf16.gmra.mrb[0].mxu0 %v141
    %v276 = vpop.f32.mrb[0].mxu0
    %v277 = vadd.f32 %v72, %v276
    %v278 = vpop.f32.mrb[0].mxu0
    %v279 = vpop.f32.mrb[0].mxu0
    %v280 = vadd.f32 %v72, %v279
    %v281 = vpop.f32.mrb[0].mxu0
    %282 = vmatprep.mubr.bf16.mxu0 0
    %283 = vmatmul.mubr.bf16.gmra.mrb[0].mxu0 %v142
    %v284 = vpop.f32.mrb[0].mxu0
    %v285 = vadd.f32 %v72, %v284
    %v286 = vpop.f32.mrb[0].mxu0
    %v287 = vpop.f32.mrb[0].mxu0
    %v288 = vadd.f32 %v72, %v287
    %v289 = vpop.f32.mrb[0].mxu0
    %290 = vmatprep.mubr.bf16.mxu0 0
    %291 = vmatmul.mubr.bf16.gmra.mrb[0].mxu0 %v143
    %v292 = vpop.f32.mrb[0].mxu0
    %v293 = vadd.f32 %v72, %v292
    %v294 = vpop.f32.mrb[0].mxu0
    %v295 = vpop.f32.mrb[0].mxu0
    %v296 = vadd.f32 %v72, %v295
    %v297 = vpop.f32.mrb[0].mxu0
    %298 = vmatprep.mubr.bf16.mxu0 0
    %299 = vmatmul.mubr.bf16.gmra.mrb[0].mxu0 %v144
    %v300 = vpop.f32.mrb[0].mxu0
    %v301 = vadd.f32 %v72, %v300
    %v302 = vpop.f32.mrb[0].mxu0
    %v303 = vpop.f32.mrb[0].mxu0
    %v304 = vadd.f32 %v72, %v303
    %v305 = vpop.f32.mrb[0].mxu0
    %306 = vmatprep.mubr.bf16.mxu0 0
    %307 = vmatmul.mubr.bf16.gmra.mrb[0].mxu0 %v145
    %v308 = vpop.f32.mrb[0].mxu0
    %v309 = vadd.f32 %v72, %v308
    %v310 = vpop.f32.mrb[0].mxu0
    %v311 = vpop.f32.mrb[0].mxu0
    %v312 = vadd.f32 %v72, %v311
    %v313 = vpop.f32.mrb[0].mxu0
    %314 = vmatprep.mubr.bf16.mxu0 0
    %315 = vmatmul.mubr.bf16.gmra.mrb[0].mxu0 %v146
    %v316 = vpop.f32.mrb[0].mxu0
    %v317 = vadd.f32 %v72, %v316
    %v318 = vpop.f32.mrb[0].mxu0
    %v319 = vpop.f32.mrb[0].mxu0
    %v320 = vadd.f32 %v72, %v319
    %v321 = vpop.f32.mrb[0].mxu0
    %322 = vmatprep.mubr.bf16.mxu0 0
    %323 = vmatmul.mubr.bf16.gmra.mrb[0].mxu0 %v147
    %v324 = vpop.f32.mrb[0].mxu0
    %v325 = vadd.f32 %v72, %v324
    %v326 = vpop.f32.mrb[0].mxu0
    %v327 = vpop.f32.mrb[0].mxu0
    %v328 = vadd.f32 %v72, %v327
    %v329 = vpop.f32.mrb[0].mxu0
    %330 = vmatprep.mubr.bf16.mxu0 0
    %331 = vmatmul.mubr.bf16.gmra.mrb[0].mxu0 %v148
    %v332 = vpop.f32.mrb[0].mxu0
    %v333 = vadd.f32 %v72, %v332
    %v334 = vpop.f32.mrb[0].mxu0
    %v335 = vpop.f32.mrb[0].mxu0
    %v336 = vadd.f32 %v72, %v335
    %v337 = vpop.f32.mrb[0].mxu0
    %338 = vmatprep.mubr.bf16.mxu0 0
    %339 = vmatmul.mubr.bf16.gmra.mrb[0].mxu0 %v149
    %v340 = vpop.f32.mrb[0].mxu0
    %v341 = vadd.f32 %v72, %v340
    %v342 = vpop.f32.mrb[0].mxu0
    %v343 = vpop.f32.mrb[0].mxu0
    %v344 = vadd.f32 %v72, %v343
    %v345 = vpop.f32.mrb[0].mxu0
    %346 = vmatprep.mubr.bf16.mxu0 0
    %347 = vmatmul.mubr.bf16.gmra.mrb[0].mxu0 %v150
    %v348 = vpop.f32.mrb[0].mxu0
    %v349 = vadd.f32 %v72, %v348
    %v350 = vpop.f32.mrb[0].mxu0
    %v351 = vpop.f32.mrb[0].mxu0
    %v352 = vadd.f32 %v72, %v351
    %v353 = vpop.f32.mrb[0].mxu0
    %354 = vmatprep.mubr.bf16.mxu0 0
    %355 = vmatmul.mubr.bf16.gmra.mrb[0].mxu0 %v151
    %v356 = vpop.f32.mrb[0].mxu0
    %v357 = vadd.f32 %v72, %v356
    %v358 = vpop.f32.mrb[0].mxu0
    %v359 = vpop.f32.mrb[0].mxu0
    %v360 = vadd.f32 %v72, %v359
    %v361 = vpop.f32.mrb[0].mxu0
    %362 = vmatprep.mubr.bf16.mxu0 0
    %363 = vmatmul.mubr.bf16.gmra.mrb[0].mxu0 %v152
    %v364 = vpop.f32.mrb[0].mxu0
    %v365 = vadd.f32 %v72, %v364
    %v366 = vpop.f32.mrb[0].mxu0
    %v367 = vpop.f32.mrb[0].mxu0
    %v368 = vadd.f32 %v72, %v367
    %v369 = vpop.f32.mrb[0].mxu0
    %370 = vmatprep.mubr.bf16.mxu0 0
    %371 = vmatmul.mubr.bf16.gmra.mrb[0].mxu0 %v153
    %v372 = vpop.f32.mrb[0].mxu0
    %v373 = vadd.f32 %v72, %v372
    %v374 = vpop.f32.mrb[0].mxu0
    %v375 = vpop.f32.mrb[0].mxu0
    %v376 = vadd.f32 %v72, %v375
    %v377 = vpop.f32.mrb[0].mxu0
    %378 = vdwg.mxu0
    %v379 = vld [vmem:[%s3] sm:$0xff]
    %v380 = vld [vmem:[%s3 + $0x8] sm:$0xff]
    %v381 = vld [vmem:[%s3 + $0x10] sm:$0xff]
    %v382 = vld [vmem:[%s3 + $0x18] sm:$0xff]
    %v383 = vld [vmem:[%s3 + $0x20] sm:$0xff]
    %v384 = vld [vmem:[%s3 + $0x28] sm:$0xff]
    %v385 = vld [vmem:[%s3 + $0x30] sm:$0xff]
    %v386 = vld [vmem:[%s3 + $0x38] sm:$0xff]
    %v387 = vld [vmem:[%s3 + $0x40] sm:$0xff]
    %v388 = vld [vmem:[%s3 + $0x48] sm:$0xff]
    %v389 = vld [vmem:[%s3 + $0x50] sm:$0xff]
    %v390 = vld [vmem:[%s3 + $0x58] sm:$0xff]
    %v391 = vld [vmem:[%s3 + $0x60] sm:$0xff]
    %v392 = vld [vmem:[%s3 + $0x68] sm:$0xff]
    %v393 = vld [vmem:[%s3 + $0x70] sm:$0xff]
    %v394 = vld [vmem:[%s3 + $0x78] sm:$0xff]
    %v395 = vld [vmem:[%s3 + $0x80] sm:$0xff]
    %v396 = vld [vmem:[%s3 + $0x88] sm:$0xff]
    %v397 = vld [vmem:[%s3 + $0x90] sm:$0xff]
    %v398 = vld [vmem:[%s3 + $0x98] sm:$0xff]
    %v399 = vld [vmem:[%s3 + $0xa0] sm:$0xff]
    %v400 = vld [vmem:[%s3 + $0xa8] sm:$0xff]
    %v401 = vld [vmem:[%s3 + $0xb0] sm:$0xff]
    %v402 = vld [vmem:[%s3 + $0xb8] sm:$0xff]
    %v403 = vld [vmem:[%s3 + $0xc0] sm:$0xff]
    %v404 = vld [vmem:[%s3 + $0xc8] sm:$0xff]
    %v405 = vld [vmem:[%s3 + $0xd0] sm:$0xff]
    %v406 = vld [vmem:[%s3 + $0xd8] sm:$0xff]
    %v407 = vld [vmem:[%s3 + $0xe0] sm:$0xff]
    %v408 = vld [vmem:[%s3 + $0xe8] sm:$0xff]
    %v409 = vld [vmem:[%s3 + $0xf0] sm:$0xff]
    %v410 = vld [vmem:[%s3 + $0xf8] sm:$0xff]
    %v411 = vadd.f32 %v253, %v379
    %v412 = vadd.f32 %v256, %v380
    %v413 = vadd.f32 %v261, %v381
    %v414 = vadd.f32 %v264, %v382
    %v415 = vadd.f32 %v269, %v383
    %v416 = vadd.f32 %v272, %v384
    %v417 = vadd.f32 %v277, %v385
    %v418 = vadd.f32 %v280, %v386
    %v419 = vadd.f32 %v285, %v387
    %v420 = vadd.f32 %v288, %v388
    %v421 = vadd.f32 %v293, %v389
    %v422 = vadd.f32 %v296, %v390
    %v423 = vadd.f32 %v301, %v391
    %v424 = vadd.f32 %v304, %v392
    %v425 = vadd.f32 %v309, %v393
    %v426 = vadd.f32 %v312, %v394
    %v427 = vadd.f32 %v317, %v395
    %v428 = vadd.f32 %v320, %v396
    %v429 = vadd.f32 %v325, %v397
    %v430 = vadd.f32 %v328, %v398
    %v431 = vadd.f32 %v333, %v399
    %v432 = vadd.f32 %v336, %v400
    %v433 = vadd.f32 %v341, %v401
    %v434 = vadd.f32 %v344, %v402
    %v435 = vadd.f32 %v349, %v403
    %v436 = vadd.f32 %v352, %v404
    %v437 = vadd.f32 %v357, %v405
    %v438 = vadd.f32 %v360, %v406
    %v439 = vadd.f32 %v365, %v407
    %v440 = vadd.f32 %v368, %v408
    %v441 = vadd.f32 %v373, %v409
    %v442 = vadd.f32 %v376, %v410
    %vm443 = vcmask 261120
    %444 = vst.msk [vmem:[#allocation2] sm:$0xff] %vm443, %v411
    %445 = vst.msk [vmem:[#allocation2 + $0x8] sm:$0xff] %vm443, %v412
    %446 = vst.msk [vmem:[#allocation2 + $0x10] sm:$0xff] %vm443, %v413
    %447 = vst.msk [vmem:[#allocation2 + $0x18] sm:$0xff] %vm443, %v414
    %448 = vst.msk [vmem:[#allocation2 + $0x20] sm:$0xff] %vm443, %v415
    %449 = vst.msk [vmem:[#allocation2 + $0x28] sm:$0xff] %vm443, %v416
    %450 = vst.msk [vmem:[#allocation2 + $0x30] sm:$0xff] %vm443, %v417
    %451 = vst.msk [vmem:[#allocation2 + $0x38] sm:$0xff] %vm443, %v418
    %452 = vst.msk [vmem:[#allocation2 + $0x40] sm:$0xff] %vm443, %v419
    %453 = vst.msk [vmem:[#allocation2 + $0x48] sm:$0xff] %vm443, %v420
    %454 = vst.msk [vmem:[#allocation2 + $0x50] sm:$0xff] %vm443, %v421
    %455 = vst.msk [vmem:[#allocation2 + $0x58] sm:$0xff] %vm443, %v422
    %456 = vst.msk [vmem:[#allocation2 + $0x60] sm:$0xff] %vm443, %v423
    %457 = vst.msk [vmem:[#allocation2 + $0x68] sm:$0xff] %vm443, %v424
    %458 = vst.msk [vmem:[#allocation2 + $0x70] sm:$0xff] %vm443, %v425
    %459 = vst.msk [vmem:[#allocation2 + $0x78] sm:$0xff] %vm443, %v426
    %460 = vst.msk [vmem:[#allocation2 + $0x80] sm:$0xff] %vm443, %v427
    %461 = vst.msk [vmem:[#allocation2 + $0x88] sm:$0xff] %vm443, %v428
    %462 = vst.msk [vmem:[#allocation2 + $0x90] sm:$0xff] %vm443, %v429
    %463 = vst.msk [vmem:[#allocation2 + $0x98] sm:$0xff] %vm443, %v430
    %464 = vst.msk [vmem:[#allocation2 + $0xa0] sm:$0xff] %vm443, %v431
    %465 = vst.msk [vmem:[#allocation2 + $0xa8] sm:$0xff] %vm443, %v432
    %466 = vst.msk [vmem:[#allocation2 + $0xb0] sm:$0xff] %vm443, %v433
    %467 = vst.msk [vmem:[#allocation2 + $0xb8] sm:$0xff] %vm443, %v434
    %468 = vst.msk [vmem:[#allocation2 + $0xc0] sm:$0xff] %vm443, %v435
    %469 = vst.msk [vmem:[#allocation2 + $0xc8] sm:$0xff] %vm443, %v436
    %470 = vst.msk [vmem:[#allocation2 + $0xd0] sm:$0xff] %vm443, %v437
    %471 = vst.msk [vmem:[#allocation2 + $0xd8] sm:$0xff] %vm443, %v438
    %472 = vst.msk [vmem:[#allocation2 + $0xe0] sm:$0xff] %vm443, %v439
    %473 = vst.msk [vmem:[#allocation2 + $0xe8] sm:$0xff] %vm443, %v440
    %474 = vst.msk [vmem:[#allocation2 + $0xf0] sm:$0xff] %vm443, %v441
    %475 = vst.msk [vmem:[#allocation2 + $0xf8] sm:$0xff] %vm443, %v442
    // Predicated region
    $region18: #{ms_block.15} parent=1 // pred_check
      _
    $region19: #{ms_block.15} parent=1 // pred_check_branch
      %477 = sbr.rel (0) target = $region21
    $region20: #{ms_block.15} parent=1 // pred_region
      %s479 = ssub.s32 4096, 4096
      %480 = vsyncadd [#allocation3], %s479
      %s481 = sshll.u32 [#allocation2], 4
      %s482 = int_to_ptr.vmem [resolvable:$true] %s481
      %487 = dma.vmem_to_hbm [thread:$0]  %s482, 4096, %s4, [#allocation3], 128, 128, 8
    $region21: #{ms_block.15} parent=1 // pred_fallthru
      _
    // Predicated region
    $region22: #{ms_block.15} parent=1 // pred_check
      _
    $region23: #{ms_block.15} parent=1 // pred_check_branch
      %489 = sbr.rel (0) target = $region25
    $region24: #{ms_block.15} parent=1 // pred_region
      %490 = dma.done [#allocation3], 4096
    $region25: #{ms_block.15} parent=1 // pred_fallthru
      _
    %491 = vsyncpa [#allocation3], 1

</llo_original>
